<compile_context>
chip_gen: v6e
topology: v6e:2x2x1
jax: 0.10.0
libtpu: 0.0.40
codegen_flags: <defaults>
</compile_context>

<pallas_src>
import jax
import jax.numpy as jnp
from jax.experimental import pallas as pl
from jax.experimental.pallas import tpu as pltpu


# ----------------------------------------------------------------------------
# Fully fused Inceptionx5 kernel (one image block per grid step)
# ----------------------------------------------------------------------------
def _inception_kernel(x_ref, wh_ref, bh_ref, w3_ref, b3_ref,
                      w1a_ref, b1a_ref, w1b_ref, b1b_ref,
                      w1c_ref, b1c_ref, w1d_ref, b1d_ref,
                      w2a_ref, b2a_ref, w2b_ref, b2b_ref,
                      out_ref):
    H, W = out_ref.shape[1], out_ref.shape[2]
    x = x_ref[0]                               # (H, W, Cin), compute dtype, VMEM resident
    Cin = x.shape[-1]
    f32 = jnp.float32

    def mm(lhs2d, w_ref, b_ref):
        # One MXU contraction, f32 accumulation, bias added on the f32 result.
        return (jnp.dot(lhs2d.astype(w_ref.dtype), w_ref[...],
                        preferred_element_type=f32) + b_ref[...])

    def conv1d(t, w_ref, b_ref, axis):
        # Factorized 1-D conv (odd kernel K along `axis`, "same" zero padding) as a
        # SINGLE im2col contraction: lane-concatenate the K shifted taps and do ONE
        # (H*W, K*C) @ (K*C, Cout) matmul so the tap sum accumulates inside the MXU.
        t = t.astype(w_ref.dtype)
        C = t.shape[-1]
        K = w_ref.shape[0] // C
        halo = (K - 1) // 2
        zshape = list(t.shape)
        zshape[axis] = halo
        z = jnp.zeros(tuple(zshape), t.dtype)
        tp = jnp.concatenate([z, t, z], axis=axis)       # in-VMEM halo (no HBM pad)
        L = t.shape[axis]
        if axis == 0:
            taps = [tp[k:k + L] for k in range(K)]        # leading-axis slices: free
        else:
            taps = [tp[:, k:k + L, :] for k in range(K)]  # sublane slices (see TODO)
        cat = jnp.concatenate(taps, axis=-1).reshape(H * W, K * C)
        return mm(cat, w_ref, b_ref).reshape(H, W, -1)

    # ---- branch heads: ONE matmul for the three 1x1 convs (branch1/2/4) ----------
    xc = x.reshape(H * W, Cin)
    heads = mm(xc, wh_ref, bh_ref)                        # (H*W, C1+C2+C4), f32
    C1 = w1a_ref.shape[1]
    C2 = w2a_ref.shape[1]
    h1 = heads[:, :C1].reshape(H, W, C1)
    h2 = heads[:, C1:C1 + C2].reshape(H, W, C2)
    o4 = heads[:, C1 + C2:]

    # ---- branch3: AvgPool3x3(count_include_pad=True) + 1x1 folded into one matmul --
    # Separable 3x3 window sum (6 adds); the /9 is pre-folded into w3 (exact).
    zh = jnp.zeros((1, W, Cin), x.dtype)
    xh = jnp.concatenate([zh, x, zh], axis=0)             # H halo (leading axis)
    rsum = xh[0:H] + xh[1:H + 1] + xh[2:H + 2]
    zw = jnp.zeros((H, 1, Cin), x.dtype)
    rw = jnp.concatenate([zw, rsum, zw], axis=1)          # W halo
    pooled = rw[:, 0:W, :] + rw[:, 1:W + 1, :] + rw[:, 2:W + 2, :]
    o3 = mm(pooled.reshape(H * W, Cin), w3_ref, b3_ref)

    # ---- branch1: (1,7) -> (7,1) -> (1,7) -> (7,1), intermediates never leave VMEM --
    t = conv1d(h1, w1a_ref, b1a_ref, axis=1)
    t = conv1d(t, w1b_ref, b1b_ref, axis=0)
    t = conv1d(t, w1c_ref, b1c_ref, axis=1)
    o1 = conv1d(t, w1d_ref, b1d_ref, axis=0).reshape(H * W, C1)

    # ---- branch2: (1,7) -> (7,1) ----------------------------------------------------
    t = conv1d(h2, w2a_ref, b2a_ref, axis=1)
    o2 = conv1d(t, w2b_ref, b2b_ref, axis=0).reshape(H * W, C2)

    # ---- fused channel concat: one lane-dense store of the whole output block ------
    out = jnp.concatenate([o1, o2, o3, o4], axis=-1)      # (H*W, C1+C2+C3+C4)
    out_ref[0] = out.reshape(H, W, -1).astype(out_ref.dtype)


# ----------------------------------------------------------------------------
# pallas_call wrapper
# ----------------------------------------------------------------------------
def _compiler_params():
    # Per-generation VMEM budget: <= 3/4 of physical capacity (v5e/v6e: 96 MiB,
    # v7x: 48 MiB), with a conservative fallback if the query is unavailable.
    try:
        vmem_cap = pltpu.get_tpu_info().vmem_capacity_bytes
    except Exception:
        vmem_cap = 64 * 1024 * 1024
    limit = min(int(vmem_cap) * 3 // 4, 96 * 1024 * 1024)
    return pltpu.CompilerParams(
        dimension_semantics=("parallel",),   # image axis -> both TCs on v7x
        vmem_limit_bytes=limit,
    )


def _wspec(a):
    # Full-array (untiled) spec for 2-D weights/biases.
    return pl.BlockSpec(a.shape, lambda n: (0, 0))


# ---- weight/bias reformatting (PyTorch OIHW -> matmul layouts) ----------------------
def _w1x1(w):        # (Cout, Cin, 1, 1) -> (Cin, Cout)
    return jnp.transpose(w[:, :, 0, 0], (1, 0)).astype(jnp.float32)


def _w_row(w):       # (Cout, Cin, 1, K) -> (K*Cin, Cout)   [im2col layout for (1,K)]
    cout, cin, _, k = w.shape
    return jnp.transpose(w[:, :, 0, :], (2, 1, 0)).reshape(k * cin, cout).astype(jnp.float32)


def _w_col(w):       # (Cout, Cin, K, 1) -> (K*Cin, Cout)   [im2col layout for (K,1)]
    cout, cin, k, _ = w.shape
    return jnp.transpose(w[:, :, :, 0], (2, 1, 0)).reshape(k * cin, cout).astype(jnp.float32)


def _b(b):
    return b.reshape(1, -1).astype(jnp.float32)


def inceptionx5_forward(x_nchw, p, *, compute_dtype=jnp.float32):
    x = jnp.transpose(x_nchw, (0, 2, 3, 1)).astype(compute_dtype)   # NCHW -> NHWC
    N, H, W, Cin = x.shape
    cd = compute_dtype

    # Heads: concat the 1x1 weights of branch1/2/4 -> ONE matmul; pool's /9 into w3.
    w_heads = jnp.concatenate(
        [_w1x1(p['b1_w0']), _w1x1(p['b2_w0']), _w1x1(p['b4_w0'])], axis=1).astype(cd)
    b_heads = jnp.concatenate([_b(p['b1_b0']), _b(p['b2_b0']), _b(p['b4_b0'])], axis=1)
    w3 = (_w1x1(p['b3_w0']) / 9.0).astype(cd)
    b3 = _b(p['b3_b0'])

    w1a, b1a = _w_row(p['b1_w1']).astype(cd), _b(p['b1_b1'])
    w1b, b1b = _w_col(p['b1_w2']).astype(cd), _b(p['b1_b2'])
    w1c, b1c = _w_row(p['b1_w3']).astype(cd), _b(p['b1_b3'])
    w1d, b1d = _w_col(p['b1_w4']).astype(cd), _b(p['b1_b4'])
    w2a, b2a = _w_row(p['b2_w1']).astype(cd), _b(p['b2_b1'])
    w2b, b2b = _w_col(p['b2_w2']).astype(cd), _b(p['b2_b2'])

    C1, C2, C3 = w1a.shape[1], w2a.shape[1], w3.shape[1]
    C4 = w_heads.shape[1] - C1 - C2
    Ctot = C1 + C2 + C3 + C4

    weights = (w_heads, b_heads, w3, b3,
               w1a, b1a, w1b, b1b, w1c, b1c, w1d, b1d,
               w2a, b2a, w2b, b2b)

    out_nhwc = pl.pallas_call(
        _inception_kernel,
        grid=(N,),
        in_specs=[pl.BlockSpec((1, H, W, Cin), lambda n: (n, 0, 0, 0))]
                 + [_wspec(w) for w in weights],
        out_specs=pl.BlockSpec((1, H, W, Ctot), lambda n: (n, 0, 0, 0)),
        out_shape=jax.ShapeDtypeStruct((N, H, W, Ctot), jnp.float32),
        compiler_params=_compiler_params(),
    )(x, *weights)

    return jnp.transpose(out_nhwc, (0, 3, 1, 2))                     # back to NCHW


# ----------------------------------------------------------------------------
# Deterministic parameter init (shapes from the PyTorch module __init__)
# ----------------------------------------------------------------------------
def init_params(key, in_fts, out_fts, n=7):
    keys = iter(jax.random.split(key, 40))

    def conv_param(cout, cin, kh, kw):
        w = 0.1 * jax.random.normal(next(keys), (cout, cin, kh, kw), jnp.float32)
        b = 0.1 * jax.random.normal(next(keys), (cout,), jnp.float32)
        return w, b

    p = {}
    p['b1_w0'], p['b1_b0'] = conv_param(out_fts[0], in_fts, 1, 1)
    p['b1_w1'], p['b1_b1'] = conv_param(out_fts[0], out_fts[0], 1, n)
    p['b1_w2'], p['b1_b2'] = conv_param(out_fts[0], out_fts[0], n, 1)
    p['b1_w3'], p['b1_b3'] = conv_param(out_fts[0], out_fts[0], 1, n)
    p['b1_w4'], p['b1_b4'] = conv_param(out_fts[0], out_fts[0], n, 1)
    p['b2_w0'], p['b2_b0'] = conv_param(out_fts[1], in_fts, 1, 1)
    p['b2_w1'], p['b2_b1'] = conv_param(out_fts[1], out_fts[1], 1, n)
    p['b2_w2'], p['b2_b2'] = conv_param(out_fts[1], out_fts[1], n, 1)
    p['b3_w0'], p['b3_b0'] = conv_param(out_fts[2], in_fts, 1, 1)
    p['b4_w0'], p['b4_b0'] = conv_param(out_fts[3], in_fts, 1, 1)
    return p


# ----------------------------------------------------------------------------
# Pure-JAX reference (XLA convs) mirroring the PyTorch module, for correctness
# ----------------------------------------------------------------------------
def _conv_ref(x, w, b, pad_h, pad_w):
    y = jax.lax.conv_general_dilated(
        x, w, window_strides=(1, 1),
        padding=((pad_h, pad_h), (pad_w, pad_w)),
        dimension_numbers=('NCHW', 'OIHW', 'NCHW'))
    return y + b[None, :, None, None]


def _avgpool_ref(x):
    s = jax.lax.reduce_window(x, 0.0, jax.lax.add, (1, 1, 3, 3), (1, 1, 1, 1),
                              padding=((0, 0), (0, 0), (1, 1), (1, 1)))
    return s / 9.0


def inceptionx5_ref(x, p, n=7):
    h = n // 2
    o1 = _conv_ref(x, p['b1_w0'], p['b1_b0'], 0, 0)
    o1 = _conv_ref(o1, p['b1_w1'], p['b1_b1'], 0, h)
    o1 = _conv_ref(o1, p['b1_w2'], p['b1_b2'], h, 0)
    o1 = _conv_ref(o1, p['b1_w3'], p['b1_b3'], 0, h)
    o1 = _conv_ref(o1, p['b1_w4'], p['b1_b4'], h, 0)
    o2 = _conv_ref(x, p['b2_w0'], p['b2_b0'], 0, 0)
    o2 = _conv_ref(o2, p['b2_w1'], p['b2_b1'], 0, h)
    o2 = _conv_ref(o2, p['b2_w2'], p['b2_b2'], h, 0)
    o3 = _conv_ref(_avgpool_ref(x), p['b3_w0'], p['b3_b0'], 0, 0)
    o4 = _conv_ref(x, p['b4_w0'], p['b4_b0'], 0, 0)
    return jnp.concatenate([o1, o2, o3, o4], axis=1)


# ----------------------------------------------------------------------------
if __name__ == "__main__":
    in_fts = 4
    out_fts = [4, 4, 4, 4]
    N, H, W = 2, 16, 16

    key = jax.random.PRNGKey(0)
    xkey, pkey = jax.random.split(key)
    x = jax.random.normal(xkey, (N, in_fts, H, W), jnp.float32)
    params = init_params(pkey, in_fts, out_fts, n=7)

    fwd = jax.jit(lambda xx: inceptionx5_forward(xx, params))
    out = jax.block_until_ready(fwd(x))

    assert out.shape == (N, sum(out_fts), H, W), out.shape

    ref = jax.block_until_ready(inceptionx5_ref(x, params))
    max_err = float(jnp.max(jnp.abs(out - ref)))
    assert jnp.allclose(out, ref, atol=1e-4, rtol=1e-4), f"max_err={max_err}"

    print("KERNEL_OK")
</pallas_src>

<mosaic_0001>
module attributes {stable_mosaic.version = 11 : i64} {
  func.func @_inception_kernel(%arg0: i32, %arg1: memref<1x16x16x4xf32, #tpu.memory_space<vmem>>, %arg2: memref<4x12xf32, #tpu.memory_space<vmem>>, %arg3: memref<1x12xf32, #tpu.memory_space<vmem>>, %arg4: memref<4x4xf32, #tpu.memory_space<vmem>>, %arg5: memref<1x4xf32, #tpu.memory_space<vmem>>, %arg6: memref<28x4xf32, #tpu.memory_space<vmem>>, %arg7: memref<1x4xf32, #tpu.memory_space<vmem>>, %arg8: memref<28x4xf32, #tpu.memory_space<vmem>>, %arg9: memref<1x4xf32, #tpu.memory_space<vmem>>, %arg10: memref<28x4xf32, #tpu.memory_space<vmem>>, %arg11: memref<1x4xf32, #tpu.memory_space<vmem>>, %arg12: memref<28x4xf32, #tpu.memory_space<vmem>>, %arg13: memref<1x4xf32, #tpu.memory_space<vmem>>, %arg14: memref<28x4xf32, #tpu.memory_space<vmem>>, %arg15: memref<1x4xf32, #tpu.memory_space<vmem>>, %arg16: memref<28x4xf32, #tpu.memory_space<vmem>>, %arg17: memref<1x4xf32, #tpu.memory_space<vmem>>, %arg18: memref<1x16x16x16xf32, #tpu.memory_space<vmem>>) attributes {dimension_semantics = [#tpu.dimension_semantics<parallel>], iteration_bounds = array<i64: 2>, scalar_prefetch = 0 : i64, scratch_operands = 0 : i64, tpu.core_type = #tpu.core_type<tc>, window_params = [{transform_indices = @transform_0, window_bounds = array<i64: 1, 16, 16, 4>}, {pipeline_mode = #tpu.pipeline_mode<synchronous>, transform_indices = @transform_1, window_bounds = array<i64: 4, 12>}, {pipeline_mode = #tpu.pipeline_mode<synchronous>, transform_indices = @transform_2, window_bounds = array<i64: 1, 12>}, {pipeline_mode = #tpu.pipeline_mode<synchronous>, transform_indices = @transform_3, window_bounds = array<i64: 4, 4>}, {pipeline_mode = #tpu.pipeline_mode<synchronous>, transform_indices = @transform_4, window_bounds = array<i64: 1, 4>}, {pipeline_mode = #tpu.pipeline_mode<synchronous>, transform_indices = @transform_5, window_bounds = array<i64: 28, 4>}, {pipeline_mode = #tpu.pipeline_mode<synchronous>, transform_indices = @transform_6, window_bounds = array<i64: 1, 4>}, {pipeline_mode = #tpu.pipeline_mode<synchronous>, transform_indices = @transform_7, window_bounds = array<i64: 28, 4>}, {pipeline_mode = #tpu.pipeline_mode<synchronous>, transform_indices = @transform_8, window_bounds = array<i64: 1, 4>}, {pipeline_mode = #tpu.pipeline_mode<synchronous>, transform_indices = @transform_9, window_bounds = array<i64: 28, 4>}, {pipeline_mode = #tpu.pipeline_mode<synchronous>, transform_indices = @transform_10, window_bounds = array<i64: 1, 4>}, {pipeline_mode = #tpu.pipeline_mode<synchronous>, transform_indices = @transform_11, window_bounds = array<i64: 28, 4>}, {pipeline_mode = #tpu.pipeline_mode<synchronous>, transform_indices = @transform_12, window_bounds = array<i64: 1, 4>}, {pipeline_mode = #tpu.pipeline_mode<synchronous>, transform_indices = @transform_13, window_bounds = array<i64: 28, 4>}, {pipeline_mode = #tpu.pipeline_mode<synchronous>, transform_indices = @transform_14, window_bounds = array<i64: 1, 4>}, {pipeline_mode = #tpu.pipeline_mode<synchronous>, transform_indices = @transform_15, window_bounds = array<i64: 28, 4>}, {pipeline_mode = #tpu.pipeline_mode<synchronous>, transform_indices = @transform_16, window_bounds = array<i64: 1, 4>}, {transform_indices = @transform_17, window_bounds = array<i64: 1, 16, 16, 16>}]} {
    %c0 = arith.constant 0 : index
    %c0_0 = arith.constant 0 : index
    %c0_1 = arith.constant 0 : index
    %c0_2 = arith.constant 0 : index
    %0 = vector.load %arg1[%c0, %c0_0, %c0_1, %c0_2] : memref<1x16x16x4xf32, #tpu.memory_space<vmem>>, vector<1x16x16x4xf32>
    %1 = vector.shape_cast %0 : vector<1x16x16x4xf32> to vector<16x16x4xf32>
    %2 = vector.shape_cast %1 : vector<16x16x4xf32> to vector<256x4xf32>
    %c0_3 = arith.constant 0 : index
    %c0_4 = arith.constant 0 : index
    %3 = vector.load %arg2[%c0_3, %c0_4] : memref<4x12xf32, #tpu.memory_space<vmem>>, vector<4x12xf32>
    %cst = arith.constant dense<0.000000e+00> : vector<256x12xf32>
    %4 = tpu.matmul %2, %3, %cst {dimension_numbers = #tpu.dot_dimension_numbers<[1], [0], [0], [1], [0, 0, 1, 1], [], []>} : vector<256x4xf32>, vector<4x12xf32>, vector<256x12xf32> -> vector<256x12xf32>
    %c0_5 = arith.constant 0 : index
    %c0_6 = arith.constant 0 : index
    %5 = vector.load %arg3[%c0_5, %c0_6] : memref<1x12xf32, #tpu.memory_space<vmem>>, vector<1x12xf32>
    %6 = vector.broadcast %5 : vector<1x12xf32> to vector<256x12xf32>
    %7 = arith.addf %4, %6 : vector<256x12xf32>
    %8 = vector.extract_strided_slice %7 {offsets = [0, 0], sizes = [256, 4], strides = [1, 1]} : vector<256x12xf32> to vector<256x4xf32>
    %9 = vector.shape_cast %8 : vector<256x4xf32> to vector<16x16x4xf32>
    %10 = vector.extract_strided_slice %7 {offsets = [0, 4], sizes = [256, 4], strides = [1, 1]} : vector<256x12xf32> to vector<256x4xf32>
    %11 = vector.shape_cast %10 : vector<256x4xf32> to vector<16x16x4xf32>
    %12 = vector.extract_strided_slice %7 {offsets = [0, 8], sizes = [256, 4], strides = [1, 1]} : vector<256x12xf32> to vector<256x4xf32>
    %cst_7 = arith.constant 0.000000e+00 : f32
    %13 = vector.broadcast %cst_7 : f32 to vector<1x16x4xf32>
    %14 = tpu.concatenate %13, %1, %13 in 0 : vector<1x16x4xf32>, vector<16x16x4xf32>, vector<1x16x4xf32> -> vector<18x16x4xf32>
    %15 = vector.extract_strided_slice %14 {offsets = [0, 0, 0], sizes = [16, 16, 4], strides = [1, 1, 1]} : vector<18x16x4xf32> to vector<16x16x4xf32>
    %16 = vector.extract_strided_slice %14 {offsets = [1, 0, 0], sizes = [16, 16, 4], strides = [1, 1, 1]} : vector<18x16x4xf32> to vector<16x16x4xf32>
    %17 = arith.addf %15, %16 : vector<16x16x4xf32>
    %18 = vector.extract_strided_slice %14 {offsets = [2, 0, 0], sizes = [16, 16, 4], strides = [1, 1, 1]} : vector<18x16x4xf32> to vector<16x16x4xf32>
    %19 = arith.addf %17, %18 : vector<16x16x4xf32>
    %cst_8 = arith.constant 0.000000e+00 : f32
    %20 = vector.broadcast %cst_8 : f32 to vector<16x1x4xf32>
    %21 = tpu.concatenate %20, %19, %20 in 1 : vector<16x1x4xf32>, vector<16x16x4xf32>, vector<16x1x4xf32> -> vector<16x18x4xf32>
    %22 = vector.extract_strided_slice %21 {offsets = [0, 0, 0], sizes = [16, 16, 4], strides = [1, 1, 1]} : vector<16x18x4xf32> to vector<16x16x4xf32>
    %23 = vector.extract_strided_slice %21 {offsets = [0, 1, 0], sizes = [16, 16, 4], strides = [1, 1, 1]} : vector<16x18x4xf32> to vector<16x16x4xf32>
    %24 = arith.addf %22, %23 : vector<16x16x4xf32>
    %25 = vector.extract_strided_slice %21 {offsets = [0, 2, 0], sizes = [16, 16, 4], strides = [1, 1, 1]} : vector<16x18x4xf32> to vector<16x16x4xf32>
    %26 = arith.addf %24, %25 : vector<16x16x4xf32>
    %27 = vector.shape_cast %26 : vector<16x16x4xf32> to vector<256x4xf32>
    %c0_9 = arith.constant 0 : index
    %c0_10 = arith.constant 0 : index
    %28 = vector.load %arg4[%c0_9, %c0_10] : memref<4x4xf32, #tpu.memory_space<vmem>>, vector<4x4xf32>
    %cst_11 = arith.constant dense<0.000000e+00> : vector<256x4xf32>
    %29 = tpu.matmul %27, %28, %cst_11 {dimension_numbers = #tpu.dot_dimension_numbers<[1], [0], [0], [1], [0, 0, 1, 1], [], []>} : vector<256x4xf32>, vector<4x4xf32>, vector<256x4xf32> -> vector<256x4xf32>
    %c0_12 = arith.constant 0 : index
    %c0_13 = arith.constant 0 : index
    %30 = vector.load %arg5[%c0_12, %c0_13] : memref<1x4xf32, #tpu.memory_space<vmem>>, vector<1x4xf32>
    %31 = vector.broadcast %30 : vector<1x4xf32> to vector<256x4xf32>
    %32 = arith.addf %29, %31 : vector<256x4xf32>
    %cst_14 = arith.constant 0.000000e+00 : f32
    %33 = vector.broadcast %cst_14 : f32 to vector<16x3x4xf32>
    %34 = tpu.concatenate %33, %9, %33 in 1 : vector<16x3x4xf32>, vector<16x16x4xf32>, vector<16x3x4xf32> -> vector<16x22x4xf32>
    %35 = vector.extract_strided_slice %34 {offsets = [0, 0, 0], sizes = [16, 16, 4], strides = [1, 1, 1]} : vector<16x22x4xf32> to vector<16x16x4xf32>
    %36 = vector.extract_strided_slice %34 {offsets = [0, 1, 0], sizes = [16, 16, 4], strides = [1, 1, 1]} : vector<16x22x4xf32> to vector<16x16x4xf32>
    %37 = vector.extract_strided_slice %34 {offsets = [0, 2, 0], sizes = [16, 16, 4], strides = [1, 1, 1]} : vector<16x22x4xf32> to vector<16x16x4xf32>
    %38 = vector.extract_strided_slice %34 {offsets = [0, 3, 0], sizes = [16, 16, 4], strides = [1, 1, 1]} : vector<16x22x4xf32> to vector<16x16x4xf32>
    %39 = vector.extract_strided_slice %34 {offsets = [0, 4, 0], sizes = [16, 16, 4], strides = [1, 1, 1]} : vector<16x22x4xf32> to vector<16x16x4xf32>
    %40 = vector.extract_strided_slice %34 {offsets = [0, 5, 0], sizes = [16, 16, 4], strides = [1, 1, 1]} : vector<16x22x4xf32> to vector<16x16x4xf32>
    %41 = vector.extract_strided_slice %34 {offsets = [0, 6, 0], sizes = [16, 16, 4], strides = [1, 1, 1]} : vector<16x22x4xf32> to vector<16x16x4xf32>
    %42 = tpu.concatenate %35, %36, %37, %38, %39, %40, %41 in 2 : vector<16x16x4xf32>, vector<16x16x4xf32>, vector<16x16x4xf32>, vector<16x16x4xf32>, vector<16x16x4xf32>, vector<16x16x4xf32>, vector<16x16x4xf32> -> vector<16x16x28xf32>
    %43 = vector.shape_cast %42 : vector<16x16x28xf32> to vector<256x28xf32>
    %c0_15 = arith.constant 0 : index
    %c0_16 = arith.constant 0 : index
    %44 = vector.load %arg6[%c0_15, %c0_16] : memref<28x4xf32, #tpu.memory_space<vmem>>, vector<28x4xf32>
    %cst_17 = arith.constant dense<0.000000e+00> : vector<256x4xf32>
    %45 = tpu.matmul %43, %44, %cst_17 {dimension_numbers = #tpu.dot_dimension_numbers<[1], [0], [0], [1], [0, 0, 1, 1], [], []>} : vector<256x28xf32>, vector<28x4xf32>, vector<256x4xf32> -> vector<256x4xf32>
    %c0_18 = arith.constant 0 : index
    %c0_19 = arith.constant 0 : index
    %46 = vector.load %arg7[%c0_18, %c0_19] : memref<1x4xf32, #tpu.memory_space<vmem>>, vector<1x4xf32>
    %47 = vector.broadcast %46 : vector<1x4xf32> to vector<256x4xf32>
    %48 = arith.addf %45, %47 : vector<256x4xf32>
    %49 = vector.shape_cast %48 : vector<256x4xf32> to vector<16x16x4xf32>
    %cst_20 = arith.constant 0.000000e+00 : f32
    %50 = vector.broadcast %cst_20 : f32 to vector<3x16x4xf32>
    %51 = tpu.concatenate %50, %49, %50 in 0 : vector<3x16x4xf32>, vector<16x16x4xf32>, vector<3x16x4xf32> -> vector<22x16x4xf32>
    %52 = vector.extract_strided_slice %51 {offsets = [0, 0, 0], sizes = [16, 16, 4], strides = [1, 1, 1]} : vector<22x16x4xf32> to vector<16x16x4xf32>
    %53 = vector.extract_strided_slice %51 {offsets = [1, 0, 0], sizes = [16, 16, 4], strides = [1, 1, 1]} : vector<22x16x4xf32> to vector<16x16x4xf32>
    %54 = vector.extract_strided_slice %51 {offsets = [2, 0, 0], sizes = [16, 16, 4], strides = [1, 1, 1]} : vector<22x16x4xf32> to vector<16x16x4xf32>
    %55 = vector.extract_strided_slice %51 {offsets = [3, 0, 0], sizes = [16, 16, 4], strides = [1, 1, 1]} : vector<22x16x4xf32> to vector<16x16x4xf32>
    %56 = vector.extract_strided_slice %51 {offsets = [4, 0, 0], sizes = [16, 16, 4], strides = [1, 1, 1]} : vector<22x16x4xf32> to vector<16x16x4xf32>
    %57 = vector.extract_strided_slice %51 {offsets = [5, 0, 0], sizes = [16, 16, 4], strides = [1, 1, 1]} : vector<22x16x4xf32> to vector<16x16x4xf32>
    %58 = vector.extract_strided_slice %51 {offsets = [6, 0, 0], sizes = [16, 16, 4], strides = [1, 1, 1]} : vector<22x16x4xf32> to vector<16x16x4xf32>
    %59 = tpu.concatenate %52, %53, %54, %55, %56, %57, %58 in 2 : vector<16x16x4xf32>, vector<16x16x4xf32>, vector<16x16x4xf32>, vector<16x16x4xf32>, vector<16x16x4xf32>, vector<16x16x4xf32>, vector<16x16x4xf32> -> vector<16x16x28xf32>
    %60 = vector.shape_cast %59 : vector<16x16x28xf32> to vector<256x28xf32>
    %c0_21 = arith.constant 0 : index
    %c0_22 = arith.constant 0 : index
    %61 = vector.load %arg8[%c0_21, %c0_22] : memref<28x4xf32, #tpu.memory_space<vmem>>, vector<28x4xf32>
    %cst_23 = arith.constant dense<0.000000e+00> : vector<256x4xf32>
    %62 = tpu.matmul %60, %61, %cst_23 {dimension_numbers = #tpu.dot_dimension_numbers<[1], [0], [0], [1], [0, 0, 1, 1], [], []>} : vector<256x28xf32>, vector<28x4xf32>, vector<256x4xf32> -> vector<256x4xf32>
    %c0_24 = arith.constant 0 : index
    %c0_25 = arith.constant 0 : index
    %63 = vector.load %arg9[%c0_24, %c0_25] : memref<1x4xf32, #tpu.memory_space<vmem>>, vector<1x4xf32>
    %64 = vector.broadcast %63 : vector<1x4xf32> to vector<256x4xf32>
    %65 = arith.addf %62, %64 : vector<256x4xf32>
    %66 = vector.shape_cast %65 : vector<256x4xf32> to vector<16x16x4xf32>
    %cst_26 = arith.constant 0.000000e+00 : f32
    %67 = vector.broadcast %cst_26 : f32 to vector<16x3x4xf32>
    %68 = tpu.concatenate %67, %66, %67 in 1 : vector<16x3x4xf32>, vector<16x16x4xf32>, vector<16x3x4xf32> -> vector<16x22x4xf32>
    %69 = vector.extract_strided_slice %68 {offsets = [0, 0, 0], sizes = [16, 16, 4], strides = [1, 1, 1]} : vector<16x22x4xf32> to vector<16x16x4xf32>
    %70 = vector.extract_strided_slice %68 {offsets = [0, 1, 0], sizes = [16, 16, 4], strides = [1, 1, 1]} : vector<16x22x4xf32> to vector<16x16x4xf32>
    %71 = vector.extract_strided_slice %68 {offsets = [0, 2, 0], sizes = [16, 16, 4], strides = [1, 1, 1]} : vector<16x22x4xf32> to vector<16x16x4xf32>
    %72 = vector.extract_strided_slice %68 {offsets = [0, 3, 0], sizes = [16, 16, 4], strides = [1, 1, 1]} : vector<16x22x4xf32> to vector<16x16x4xf32>
    %73 = vector.extract_strided_slice %68 {offsets = [0, 4, 0], sizes = [16, 16, 4], strides = [1, 1, 1]} : vector<16x22x4xf32> to vector<16x16x4xf32>
    %74 = vector.extract_strided_slice %68 {offsets = [0, 5, 0], sizes = [16, 16, 4], strides = [1, 1, 1]} : vector<16x22x4xf32> to vector<16x16x4xf32>
    %75 = vector.extract_strided_slice %68 {offsets = [0, 6, 0], sizes = [16, 16, 4], strides = [1, 1, 1]} : vector<16x22x4xf32> to vector<16x16x4xf32>
    %76 = tpu.concatenate %69, %70, %71, %72, %73, %74, %75 in 2 : vector<16x16x4xf32>, vector<16x16x4xf32>, vector<16x16x4xf32>, vector<16x16x4xf32>, vector<16x16x4xf32>, vector<16x16x4xf32>, vector<16x16x4xf32> -> vector<16x16x28xf32>
    %77 = vector.shape_cast %76 : vector<16x16x28xf32> to vector<256x28xf32>
    %c0_27 = arith.constant 0 : index
    %c0_28 = arith.constant 0 : index
    %78 = vector.load %arg10[%c0_27, %c0_28] : memref<28x4xf32, #tpu.memory_space<vmem>>, vector<28x4xf32>
    %cst_29 = arith.constant dense<0.000000e+00> : vector<256x4xf32>
    %79 = tpu.matmul %77, %78, %cst_29 {dimension_numbers = #tpu.dot_dimension_numbers<[1], [0], [0], [1], [0, 0, 1, 1], [], []>} : vector<256x28xf32>, vector<28x4xf32>, vector<256x4xf32> -> vector<256x4xf32>
    %c0_30 = arith.constant 0 : index
    %c0_31 = arith.constant 0 : index
    %80 = vector.load %arg11[%c0_30, %c0_31] : memref<1x4xf32, #tpu.memory_space<vmem>>, vector<1x4xf32>
    %81 = vector.broadcast %80 : vector<1x4xf32> to vector<256x4xf32>
    %82 = arith.addf %79, %81 : vector<256x4xf32>
    %83 = vector.shape_cast %82 : vector<256x4xf32> to vector<16x16x4xf32>
    %cst_32 = arith.constant 0.000000e+00 : f32
    %84 = vector.broadcast %cst_32 : f32 to vector<3x16x4xf32>
    %85 = tpu.concatenate %84, %83, %84 in 0 : vector<3x16x4xf32>, vector<16x16x4xf32>, vector<3x16x4xf32> -> vector<22x16x4xf32>
    %86 = vector.extract_strided_slice %85 {offsets = [0, 0, 0], sizes = [16, 16, 4], strides = [1, 1, 1]} : vector<22x16x4xf32> to vector<16x16x4xf32>
    %87 = vector.extract_strided_slice %85 {offsets = [1, 0, 0], sizes = [16, 16, 4], strides = [1, 1, 1]} : vector<22x16x4xf32> to vector<16x16x4xf32>
    %88 = vector.extract_strided_slice %85 {offsets = [2, 0, 0], sizes = [16, 16, 4], strides = [1, 1, 1]} : vector<22x16x4xf32> to vector<16x16x4xf32>
    %89 = vector.extract_strided_slice %85 {offsets = [3, 0, 0], sizes = [16, 16, 4], strides = [1, 1, 1]} : vector<22x16x4xf32> to vector<16x16x4xf32>
    %90 = vector.extract_strided_slice %85 {offsets = [4, 0, 0], sizes = [16, 16, 4], strides = [1, 1, 1]} : vector<22x16x4xf32> to vector<16x16x4xf32>
    %91 = vector.extract_strided_slice %85 {offsets = [5, 0, 0], sizes = [16, 16, 4], strides = [1, 1, 1]} : vector<22x16x4xf32> to vector<16x16x4xf32>
    %92 = vector.extract_strided_slice %85 {offsets = [6, 0, 0], sizes = [16, 16, 4], strides = [1, 1, 1]} : vector<22x16x4xf32> to vector<16x16x4xf32>
    %93 = tpu.concatenate %86, %87, %88, %89, %90, %91, %92 in 2 : vector<16x16x4xf32>, vector<16x16x4xf32>, vector<16x16x4xf32>, vector<16x16x4xf32>, vector<16x16x4xf32>, vector<16x16x4xf32>, vector<16x16x4xf32> -> vector<16x16x28xf32>
    %94 = vector.shape_cast %93 : vector<16x16x28xf32> to vector<256x28xf32>
    %c0_33 = arith.constant 0 : index
    %c0_34 = arith.constant 0 : index
    %95 = vector.load %arg12[%c0_33, %c0_34] : memref<28x4xf32, #tpu.memory_space<vmem>>, vector<28x4xf32>
    %cst_35 = arith.constant dense<0.000000e+00> : vector<256x4xf32>
    %96 = tpu.matmul %94, %95, %cst_35 {dimension_numbers = #tpu.dot_dimension_numbers<[1], [0], [0], [1], [0, 0, 1, 1], [], []>} : vector<256x28xf32>, vector<28x4xf32>, vector<256x4xf32> -> vector<256x4xf32>
    %c0_36 = arith.constant 0 : index
    %c0_37 = arith.constant 0 : index
    %97 = vector.load %arg13[%c0_36, %c0_37] : memref<1x4xf32, #tpu.memory_space<vmem>>, vector<1x4xf32>
    %98 = vector.broadcast %97 : vector<1x4xf32> to vector<256x4xf32>
    %99 = arith.addf %96, %98 : vector<256x4xf32>
    %100 = vector.shape_cast %99 : vector<256x4xf32> to vector<16x16x4xf32>
    %101 = vector.shape_cast %100 : vector<16x16x4xf32> to vector<256x4xf32>
    %cst_38 = arith.constant 0.000000e+00 : f32
    %102 = vector.broadcast %cst_38 : f32 to vector<16x3x4xf32>
    %103 = tpu.concatenate %102, %11, %102 in 1 : vector<16x3x4xf32>, vector<16x16x4xf32>, vector<16x3x4xf32> -> vector<16x22x4xf32>
    %104 = vector.extract_strided_slice %103 {offsets = [0, 0, 0], sizes = [16, 16, 4], strides = [1, 1, 1]} : vector<16x22x4xf32> to vector<16x16x4xf32>
    %105 = vector.extract_strided_slice %103 {offsets = [0, 1, 0], sizes = [16, 16, 4], strides = [1, 1, 1]} : vector<16x22x4xf32> to vector<16x16x4xf32>
    %106 = vector.extract_strided_slice %103 {offsets = [0, 2, 0], sizes = [16, 16, 4], strides = [1, 1, 1]} : vector<16x22x4xf32> to vector<16x16x4xf32>
    %107 = vector.extract_strided_slice %103 {offsets = [0, 3, 0], sizes = [16, 16, 4], strides = [1, 1, 1]} : vector<16x22x4xf32> to vector<16x16x4xf32>
    %108 = vector.extract_strided_slice %103 {offsets = [0, 4, 0], sizes = [16, 16, 4], strides = [1, 1, 1]} : vector<16x22x4xf32> to vector<16x16x4xf32>
    %109 = vector.extract_strided_slice %103 {offsets = [0, 5, 0], sizes = [16, 16, 4], strides = [1, 1, 1]} : vector<16x22x4xf32> to vector<16x16x4xf32>
    %110 = vector.extract_strided_slice %103 {offsets = [0, 6, 0], sizes = [16, 16, 4], strides = [1, 1, 1]} : vector<16x22x4xf32> to vector<16x16x4xf32>
    %111 = tpu.concatenate %104, %105, %106, %107, %108, %109, %110 in 2 : vector<16x16x4xf32>, vector<16x16x4xf32>, vector<16x16x4xf32>, vector<16x16x4xf32>, vector<16x16x4xf32>, vector<16x16x4xf32>, vector<16x16x4xf32> -> vector<16x16x28xf32>
    %112 = vector.shape_cast %111 : vector<16x16x28xf32> to vector<256x28xf32>
    %c0_39 = arith.constant 0 : index
    %c0_40 = arith.constant 0 : index
    %113 = vector.load %arg14[%c0_39, %c0_40] : memref<28x4xf32, #tpu.memory_space<vmem>>, vector<28x4xf32>
    %cst_41 = arith.constant dense<0.000000e+00> : vector<256x4xf32>
    %114 = tpu.matmul %112, %113, %cst_41 {dimension_numbers = #tpu.dot_dimension_numbers<[1], [0], [0], [1], [0, 0, 1, 1], [], []>} : vector<256x28xf32>, vector<28x4xf32>, vector<256x4xf32> -> vector<256x4xf32>
    %c0_42 = arith.constant 0 : index
    %c0_43 = arith.constant 0 : index
    %115 = vector.load %arg15[%c0_42, %c0_43] : memref<1x4xf32, #tpu.memory_space<vmem>>, vector<1x4xf32>
    %116 = vector.broadcast %115 : vector<1x4xf32> to vector<256x4xf32>
    %117 = arith.addf %114, %116 : vector<256x4xf32>
    %118 = vector.shape_cast %117 : vector<256x4xf32> to vector<16x16x4xf32>
    %cst_44 = arith.constant 0.000000e+00 : f32
    %119 = vector.broadcast %cst_44 : f32 to vector<3x16x4xf32>
    %120 = tpu.concatenate %119, %118, %119 in 0 : vector<3x16x4xf32>, vector<16x16x4xf32>, vector<3x16x4xf32> -> vector<22x16x4xf32>
    %121 = vector.extract_strided_slice %120 {offsets = [0, 0, 0], sizes = [16, 16, 4], strides = [1, 1, 1]} : vector<22x16x4xf32> to vector<16x16x4xf32>
    %122 = vector.extract_strided_slice %120 {offsets = [1, 0, 0], sizes = [16, 16, 4], strides = [1, 1, 1]} : vector<22x16x4xf32> to vector<16x16x4xf32>
    %123 = vector.extract_strided_slice %120 {offsets = [2, 0, 0], sizes = [16, 16, 4], strides = [1, 1, 1]} : vector<22x16x4xf32> to vector<16x16x4xf32>
    %124 = vector.extract_strided_slice %120 {offsets = [3, 0, 0], sizes = [16, 16, 4], strides = [1, 1, 1]} : vector<22x16x4xf32> to vector<16x16x4xf32>
    %125 = vector.extract_strided_slice %120 {offsets = [4, 0, 0], sizes = [16, 16, 4], strides = [1, 1, 1]} : vector<22x16x4xf32> to vector<16x16x4xf32>
    %126 = vector.extract_strided_slice %120 {offsets = [5, 0, 0], sizes = [16, 16, 4], strides = [1, 1, 1]} : vector<22x16x4xf32> to vector<16x16x4xf32>
    %127 = vector.extract_strided_slice %120 {offsets = [6, 0, 0], sizes = [16, 16, 4], strides = [1, 1, 1]} : vector<22x16x4xf32> to vector<16x16x4xf32>
    %128 = tpu.concatenate %121, %122, %123, %124, %125, %126, %127 in 2 : vector<16x16x4xf32>, vector<16x16x4xf32>, vector<16x16x4xf32>, vector<16x16x4xf32>, vector<16x16x4xf32>, vector<16x16x4xf32>, vector<16x16x4xf32> -> vector<16x16x28xf32>
    %129 = vector.shape_cast %128 : vector<16x16x28xf32> to vector<256x28xf32>
    %c0_45 = arith.constant 0 : index
    %c0_46 = arith.constant 0 : index
    %130 = vector.load %arg16[%c0_45, %c0_46] : memref<28x4xf32, #tpu.memory_space<vmem>>, vector<28x4xf32>
    %cst_47 = arith.constant dense<0.000000e+00> : vector<256x4xf32>
    %131 = tpu.matmul %129, %130, %cst_47 {dimension_numbers = #tpu.dot_dimension_numbers<[1], [0], [0], [1], [0, 0, 1, 1], [], []>} : vector<256x28xf32>, vector<28x4xf32>, vector<256x4xf32> -> vector<256x4xf32>
    %c0_48 = arith.constant 0 : index
    %c0_49 = arith.constant 0 : index
    %132 = vector.load %arg17[%c0_48, %c0_49] : memref<1x4xf32, #tpu.memory_space<vmem>>, vector<1x4xf32>
    %133 = vector.broadcast %132 : vector<1x4xf32> to vector<256x4xf32>
    %134 = arith.addf %131, %133 : vector<256x4xf32>
    %135 = vector.shape_cast %134 : vector<256x4xf32> to vector<16x16x4xf32>
    %136 = vector.shape_cast %135 : vector<16x16x4xf32> to vector<256x4xf32>
    %137 = tpu.concatenate %101, %136, %32, %12 in 1 : vector<256x4xf32>, vector<256x4xf32>, vector<256x4xf32>, vector<256x4xf32> -> vector<256x16xf32>
    %138 = vector.shape_cast %137 : vector<256x16xf32> to vector<16x16x16xf32>
    %c0_50 = arith.constant 0 : index
    %c0_51 = arith.constant 0 : index
    %c0_52 = arith.constant 0 : index
    %c0_53 = arith.constant 0 : index
    %139 = vector.load %arg18[%c0_50, %c0_51, %c0_52, %c0_53] : memref<1x16x16x16xf32, #tpu.memory_space<vmem>>, vector<1x16x16x16xf32>
    %140 = vector.shape_cast %139 : vector<1x16x16x16xf32> to vector<16x16x16xf32>
    %141 = vector.shape_cast %138 : vector<16x16x16xf32> to vector<1x16x16x16xf32>
    tpu.vector_store %arg18[%c0_50, %c0_51, %c0_52, %c0_53], %141 {strides = array<i32>} : memref<1x16x16x16xf32, #tpu.memory_space<vmem>>, vector<1x16x16x16xf32>,
    return
  }
  func.func @transform_0(%arg0: i32) -> (i32, i32, i32, i32) {
    %c0_i32 = arith.constant 0 : i32
    %c0_i32_0 = arith.constant 0 : i32
    %c0_i32_1 = arith.constant 0 : i32
    %c0_i32_2 = arith.constant 0 : i32
    return %arg0, %c0_i32, %c0_i32_0, %c0_i32_1 : i32, i32, i32, i32
  }
  func.func @transform_1(%arg0: i32) -> (i32, i32) {
    %c0_i32 = arith.constant 0 : i32
    %c0_i32_0 = arith.constant 0 : i32
    %c0_i32_1 = arith.constant 0 : i32
    return %c0_i32, %c0_i32_0 : i32, i32
  }
  func.func @transform_2(%arg0: i32) -> (i32, i32) {
    %c0_i32 = arith.constant 0 : i32
    %c0_i32_0 = arith.constant 0 : i32
    %c0_i32_1 = arith.constant 0 : i32
    return %c0_i32, %c0_i32_0 : i32, i32
  }
  func.func @transform_3(%arg0: i32) -> (i32, i32) {
    %c0_i32 = arith.constant 0 : i32
    %c0_i32_0 = arith.constant 0 : i32
    %c0_i32_1 = arith.constant 0 : i32
    return %c0_i32, %c0_i32_0 : i32, i32
  }
  func.func @transform_4(%arg0: i32) -> (i32, i32) {
    %c0_i32 = arith.constant 0 : i32
    %c0_i32_0 = arith.constant 0 : i32
    %c0_i32_1 = arith.constant 0 : i32
    return %c0_i32, %c0_i32_0 : i32, i32
  }
  func.func @transform_5(%arg0: i32) -> (i32, i32) {
    %c0_i32 = arith.constant 0 : i32
    %c0_i32_0 = arith.constant 0 : i32
    %c0_i32_1 = arith.constant 0 : i32
    return %c0_i32, %c0_i32_0 : i32, i32
  }
  func.func @transform_6(%arg0: i32) -> (i32, i32) {
    %c0_i32 = arith.constant 0 : i32
    %c0_i32_0 = arith.constant 0 : i32
    %c0_i32_1 = arith.constant 0 : i32
    return %c0_i32, %c0_i32_0 : i32, i32
  }
  func.func @transform_7(%arg0: i32) -> (i32, i32) {
    %c0_i32 = arith.constant 0 : i32
    %c0_i32_0 = arith.constant 0 : i32
    %c0_i32_1 = arith.constant 0 : i32
    return %c0_i32, %c0_i32_0 : i32, i32
  }
  func.func @transform_8(%arg0: i32) -> (i32, i32) {
    %c0_i32 = arith.constant 0 : i32
    %c0_i32_0 = arith.constant 0 : i32
    %c0_i32_1 = arith.constant 0 : i32
    return %c0_i32, %c0_i32_0 : i32, i32
  }
  func.func @transform_9(%arg0: i32) -> (i32, i32) {
    %c0_i32 = arith.constant 0 : i32
    %c0_i32_0 = arith.constant 0 : i32
    %c0_i32_1 = arith.constant 0 : i32
    return %c0_i32, %c0_i32_0 : i32, i32
  }
  func.func @transform_10(%arg0: i32) -> (i32, i32) {
    %c0_i32 = arith.constant 0 : i32
    %c0_i32_0 = arith.constant 0 : i32
    %c0_i32_1 = arith.constant 0 : i32
    return %c0_i32, %c0_i32_0 : i32, i32
  }
  func.func @transform_11(%arg0: i32) -> (i32, i32) {
    %c0_i32 = arith.constant 0 : i32
    %c0_i32_0 = arith.constant 0 : i32
    %c0_i32_1 = arith.constant 0 : i32
    return %c0_i32, %c0_i32_0 : i32, i32
  }
  func.func @transform_12(%arg0: i32) -> (i32, i32) {
    %c0_i32 = arith.constant 0 : i32
    %c0_i32_0 = arith.constant 0 : i32
    %c0_i32_1 = arith.constant 0 : i32
    return %c0_i32, %c0_i32_0 : i32, i32
  }
  func.func @transform_13(%arg0: i32) -> (i32, i32) {
    %c0_i32 = arith.constant 0 : i32
    %c0_i32_0 = arith.constant 0 : i32
    %c0_i32_1 = arith.constant 0 : i32
    return %c0_i32, %c0_i32_0 : i32, i32
  }
  func.func @transform_14(%arg0: i32) -> (i32, i32) {
    %c0_i32 = arith.constant 0 : i32
    %c0_i32_0 = arith.constant 0 : i32
    %c0_i32_1 = arith.constant 0 : i32
    return %c0_i32, %c0_i32_0 : i32, i32
  }
  func.func @transform_15(%arg0: i32) -> (i32, i32) {
    %c0_i32 = arith.constant 0 : i32
    %c0_i32_0 = arith.constant 0 : i32
    %c0_i32_1 = arith.constant 0 : i32
    return %c0_i32, %c0_i32_0 : i32, i32
  }
  func.func @transform_16(%arg0: i32) -> (i32, i32) {
    %c0_i32 = arith.constant 0 : i32
    %c0_i32_0 = arith.constant 0 : i32
    %c0_i32_1 = arith.constant 0 : i32
    return %c0_i32, %c0_i32_0 : i32, i32
  }
  func.func @transform_17(%arg0: i32) -> (i32, i32, i32, i32) {
    %c0_i32 = arith.constant 0 : i32
    %c0_i32_0 = arith.constant 0 : i32
    %c0_i32_1 = arith.constant 0 : i32
    %c0_i32_2 = arith.constant 0 : i32
    return %arg0, %c0_i32, %c0_i32_0, %c0_i32_1 : i32, i32, i32, i32
  }
}

</mosaic_0001>

<llo_original>
// kernel: _lambda_.1
$region0: #{_lambda_.1}
  #allocation0 [shape = 'u32[]', space=smem, size = 0x4, offset = 0x4, fixed_abs, tag = 'smem constant byte address 0x4 - core index']
  #allocation1 [shape = 'u32[144,128]{1,0:T(1,128)}', space=vmem, size = 0x12000, scoped, tag = 'internal scratch']
  %s0 = inlined_call_operand.vmem [shape: f32[2,16,16,4], index: 0, kind: input, shape index: {}]
  %s1 = inlined_call_operand.vmem [shape: f32[4,12], index: 1, kind: input, shape index: {}]
  %s2 = inlined_call_operand.vmem [shape: f32[1,12], index: 2, kind: input, shape index: {}]
  %s3 = inlined_call_operand.vmem [shape: f32[4,4], index: 3, kind: input, shape index: {}]
  %s4 = inlined_call_operand.vmem [shape: f32[1,4], index: 4, kind: input, shape index: {}]
  %s5 = inlined_call_operand.vmem [shape: f32[28,4], index: 5, kind: input, shape index: {}]
  %s6 = inlined_call_operand.vmem [shape: f32[1,4], index: 6, kind: input, shape index: {}]
  %s7 = inlined_call_operand.vmem [shape: f32[28,4], index: 7, kind: input, shape index: {}]
  %s8 = inlined_call_operand.vmem [shape: f32[1,4], index: 8, kind: input, shape index: {}]
  %s9 = inlined_call_operand.vmem [shape: f32[28,4], index: 9, kind: input, shape index: {}]
  %s10 = inlined_call_operand.vmem [shape: f32[1,4], index: 10, kind: input, shape index: {}]
  %s11 = inlined_call_operand.vmem [shape: f32[28,4], index: 11, kind: input, shape index: {}]
  %s12 = inlined_call_operand.vmem [shape: f32[1,4], index: 12, kind: input, shape index: {}]
  %s13 = inlined_call_operand.vmem [shape: f32[28,4], index: 13, kind: input, shape index: {}]
  %s14 = inlined_call_operand.vmem [shape: f32[1,4], index: 14, kind: input, shape index: {}]
  %s15 = inlined_call_operand.vmem [shape: f32[28,4], index: 15, kind: input, shape index: {}]
  %s16 = inlined_call_operand.vmem [shape: f32[1,4], index: 16, kind: input, shape index: {}]
  %s17 = inlined_call_operand.vmem [shape: f32[2,16,16,16], index: 17, kind: output, shape index: {}]
  %s18 = sld [smem:[#allocation0]]
  $region101: #{_lambda_.1} parent=0
    _
  %s20 = ssub.s32 1, %s18
  %s21 = scalar_select 0, %s20, %s18
  loop: start=0, step=1, limit=4
  $region2: #{_lambda_.1} parent=0 // loop_pre_header
    _
  $region3: #{_lambda_.1} parent=0 // loop_header
    %s23 = sphi 0, %s27
    %p24 = scmp.ge.s32.totalorder %s23, 4
    %s33 = sphi 0, %s35
    %s36 = sphi 0, %s33
    %s37 = sphi 0, %s36
    %s53 = sphi 0, %s37
    %s57 = sphi 0, %s57
    %s59 = sphi 0, %s57
    %s60 = sphi 0, %s59
    %s74 = sphi 0, %s60
    %s78 = sphi 0, %s78
    %s80 = sphi 0, %s78
    %s81 = sphi 0, %s80
    %s95 = sphi 0, %s81
    %s99 = sphi 0, %s99
    %s101 = sphi 0, %s99
    %s102 = sphi 0, %s101
    %s116 = sphi 0, %s102
    %s120 = sphi 0, %s120
    %s122 = sphi 0, %s120
    %s123 = sphi 0, %s122
    %s137 = sphi 0, %s123
    %s141 = sphi 0, %s141
    %s143 = sphi 0, %s141
    %s144 = sphi 0, %s143
    %s158 = sphi 0, %s144
    %s162 = sphi 0, %s162
    %s164 = sphi 0, %s162
    %s165 = sphi 0, %s164
    %s179 = sphi 0, %s165
    %s183 = sphi 0, %s183
    %s185 = sphi 0, %s183
    %s186 = sphi 0, %s185
    %s200 = sphi 0, %s186
    %s204 = sphi 0, %s204
    %s206 = sphi 0, %s204
    %s207 = sphi 0, %s206
    %s221 = sphi 0, %s207
    %s225 = sphi 0, %s225
    %s227 = sphi 0, %s225
    %s228 = sphi 0, %s227
    %s242 = sphi 0, %s228
    %s246 = sphi 0, %s246
    %s248 = sphi 0, %s246
    %s249 = sphi 0, %s248
    %s263 = sphi 0, %s249
    %s267 = sphi 0, %s267
    %s269 = sphi 0, %s267
    %s270 = sphi 0, %s269
    %s284 = sphi 0, %s270
    %s288 = sphi 0, %s288
    %s290 = sphi 0, %s288
    %s291 = sphi 0, %s290
    %s305 = sphi 0, %s291
    %s309 = sphi 0, %s309
    %s311 = sphi 0, %s309
    %s312 = sphi 0, %s311
    %s326 = sphi 0, %s312
    %s330 = sphi 0, %s330
    %s332 = sphi 0, %s330
    %s333 = sphi 0, %s332
    %s347 = sphi 0, %s333
    %s351 = sphi 0, %s351
    %s353 = sphi 0, %s351
    %s354 = sphi 0, %s353
    %s368 = sphi 0, %s354
    %s372 = sphi 0, %s372
    %s374 = sphi 0, %s372
    %s375 = sphi 0, %s374
    %s389 = sphi 0, %s375
    %s395 = sphi 0, %s397
    %s398 = sphi 0, %s395
    %s399 = sphi 0, %s398
    %s415 = sphi 0, %s399
  $region4: #{_lambda_.1} parent=0 // loop_header_branch
    %26 = sbr.rel (%p24) target = $region8
  $region5: #{_lambda_.1} parent=0 // loop_body
    %s28 = ssub.s32 %s23, 1
    %s29 = ssub.s32 %s23, 2
    %s30 = sadd.s32 %s23, 1
    %s31 = ssub.s32 %s23, %s30
    %p32 = scmp.eq.s32.totalorder %s31, 0
    %s34 = sadd.s32 %s33, 1
    %s35 = scalar_select %p32, %s33, %s34
    %p38 = pneg %p32
    %p39 = scmp.eq.s32.totalorder %s23, 1
    %p40 = por %p38, %p39
    %p41 = scmp.ne.s32.totalorder %s33, %s36
    %p42 = scmp.eq.s32.totalorder %s23, 0
    %p43 = por %p41, %p42
    %p44 = scmp.ne.s32.totalorder %s33, %s36
    %p45 = scmp.eq.s32.totalorder %s28, 1
    %p46 = por %p44, %p45
    %p47 = scmp.ne.s32.totalorder %s36, %s37
    %p48 = scmp.eq.s32.totalorder %s28, 0
    %p49 = por %p47, %p48
    %p50 = scmp.ne.s32.totalorder %s36, %s37
    %p51 = scmp.eq.s32.totalorder %s29, 1
    %p52 = por %p50, %p51
    %p54 = scmp.ne.s32.totalorder %s37, %s53
    %p55 = scmp.eq.s32.totalorder %s29, 0
    %p56 = por %p54, %p55
    %s58 = sadd.s32 %s57, 1
    %p61 = scmp.eq.s32.totalorder %s23, 1
    %p62 = scmp.ne.s32.totalorder %s57, %s59
    %p63 = scmp.eq.s32.totalorder %s23, 0
    %p64 = por %p62, %p63
    %p65 = scmp.ne.s32.totalorder %s57, %s59
    %p66 = scmp.eq.s32.totalorder %s28, 1
    %p67 = por %p65, %p66
    %p68 = scmp.ne.s32.totalorder %s59, %s60
    %p69 = scmp.eq.s32.totalorder %s28, 0
    %p70 = por %p68, %p69
    %p71 = scmp.ne.s32.totalorder %s59, %s60
    %p72 = scmp.eq.s32.totalorder %s29, 1
    %p73 = por %p71, %p72
    %p75 = scmp.ne.s32.totalorder %s60, %s74
    %p76 = scmp.eq.s32.totalorder %s29, 0
    %p77 = por %p75, %p76
    %s79 = sadd.s32 %s78, 1
    %p82 = scmp.eq.s32.totalorder %s23, 1
    %p83 = scmp.ne.s32.totalorder %s78, %s80
    %p84 = scmp.eq.s32.totalorder %s23, 0
    %p85 = por %p83, %p84
    %p86 = scmp.ne.s32.totalorder %s78, %s80
    %p87 = scmp.eq.s32.totalorder %s28, 1
    %p88 = por %p86, %p87
    %p89 = scmp.ne.s32.totalorder %s80, %s81
    %p90 = scmp.eq.s32.totalorder %s28, 0
    %p91 = por %p89, %p90
    %p92 = scmp.ne.s32.totalorder %s80, %s81
    %p93 = scmp.eq.s32.totalorder %s29, 1
    %p94 = por %p92, %p93
    %p96 = scmp.ne.s32.totalorder %s81, %s95
    %p97 = scmp.eq.s32.totalorder %s29, 0
    %p98 = por %p96, %p97
    %s100 = sadd.s32 %s99, 1
    %p103 = scmp.eq.s32.totalorder %s23, 1
    %p104 = scmp.ne.s32.totalorder %s99, %s101
    %p105 = scmp.eq.s32.totalorder %s23, 0
    %p106 = por %p104, %p105
    %p107 = scmp.ne.s32.totalorder %s99, %s101
    %p108 = scmp.eq.s32.totalorder %s28, 1
    %p109 = por %p107, %p108
    %p110 = scmp.ne.s32.totalorder %s101, %s102
    %p111 = scmp.eq.s32.totalorder %s28, 0
    %p112 = por %p110, %p111
    %p113 = scmp.ne.s32.totalorder %s101, %s102
    %p114 = scmp.eq.s32.totalorder %s29, 1
    %p115 = por %p113, %p114
    %p117 = scmp.ne.s32.totalorder %s102, %s116
    %p118 = scmp.eq.s32.totalorder %s29, 0
    %p119 = por %p117, %p118
    %s121 = sadd.s32 %s120, 1
    %p124 = scmp.eq.s32.totalorder %s23, 1
    %p125 = scmp.ne.s32.totalorder %s120, %s122
    %p126 = scmp.eq.s32.totalorder %s23, 0
    %p127 = por %p125, %p126
    %p128 = scmp.ne.s32.totalorder %s120, %s122
    %p129 = scmp.eq.s32.totalorder %s28, 1
    %p130 = por %p128, %p129
    %p131 = scmp.ne.s32.totalorder %s122, %s123
    %p132 = scmp.eq.s32.totalorder %s28, 0
    %p133 = por %p131, %p132
    %p134 = scmp.ne.s32.totalorder %s122, %s123
    %p135 = scmp.eq.s32.totalorder %s29, 1
    %p136 = por %p134, %p135
    %p138 = scmp.ne.s32.totalorder %s123, %s137
    %p139 = scmp.eq.s32.totalorder %s29, 0
    %p140 = por %p138, %p139
    %s142 = sadd.s32 %s141, 1
    %p145 = scmp.eq.s32.totalorder %s23, 1
    %p146 = scmp.ne.s32.totalorder %s141, %s143
    %p147 = scmp.eq.s32.totalorder %s23, 0
    %p148 = por %p146, %p147
    %p149 = scmp.ne.s32.totalorder %s141, %s143
    %p150 = scmp.eq.s32.totalorder %s28, 1
    %p151 = por %p149, %p150
    %p152 = scmp.ne.s32.totalorder %s143, %s144
    %p153 = scmp.eq.s32.totalorder %s28, 0
    %p154 = por %p152, %p153
    %p155 = scmp.ne.s32.totalorder %s143, %s144
    %p156 = scmp.eq.s32.totalorder %s29, 1
    %p157 = por %p155, %p156
    %p159 = scmp.ne.s32.totalorder %s144, %s158
    %p160 = scmp.eq.s32.totalorder %s29, 0
    %p161 = por %p159, %p160
    %s163 = sadd.s32 %s162, 1
    %p166 = scmp.eq.s32.totalorder %s23, 1
    %p167 = scmp.ne.s32.totalorder %s162, %s164
    %p168 = scmp.eq.s32.totalorder %s23, 0
    %p169 = por %p167, %p168
    %p170 = scmp.ne.s32.totalorder %s162, %s164
    %p171 = scmp.eq.s32.totalorder %s28, 1
    %p172 = por %p170, %p171
    %p173 = scmp.ne.s32.totalorder %s164, %s165
    %p174 = scmp.eq.s32.totalorder %s28, 0
    %p175 = por %p173, %p174
    %p176 = scmp.ne.s32.totalorder %s164, %s165
    %p177 = scmp.eq.s32.totalorder %s29, 1
    %p178 = por %p176, %p177
    %p180 = scmp.ne.s32.totalorder %s165, %s179
    %p181 = scmp.eq.s32.totalorder %s29, 0
    %p182 = por %p180, %p181
    %s184 = sadd.s32 %s183, 1
    %p187 = scmp.eq.s32.totalorder %s23, 1
    %p188 = scmp.ne.s32.totalorder %s183, %s185
    %p189 = scmp.eq.s32.totalorder %s23, 0
    %p190 = por %p188, %p189
    %p191 = scmp.ne.s32.totalorder %s183, %s185
    %p192 = scmp.eq.s32.totalorder %s28, 1
    %p193 = por %p191, %p192
    %p194 = scmp.ne.s32.totalorder %s185, %s186
    %p195 = scmp.eq.s32.totalorder %s28, 0
    %p196 = por %p194, %p195
    %p197 = scmp.ne.s32.totalorder %s185, %s186
    %p198 = scmp.eq.s32.totalorder %s29, 1
    %p199 = por %p197, %p198
    %p201 = scmp.ne.s32.totalorder %s186, %s200
    %p202 = scmp.eq.s32.totalorder %s29, 0
    %p203 = por %p201, %p202
    %s205 = sadd.s32 %s204, 1
    %p208 = scmp.eq.s32.totalorder %s23, 1
    %p209 = scmp.ne.s32.totalorder %s204, %s206
    %p210 = scmp.eq.s32.totalorder %s23, 0
    %p211 = por %p209, %p210
    %p212 = scmp.ne.s32.totalorder %s204, %s206
    %p213 = scmp.eq.s32.totalorder %s28, 1
    %p214 = por %p212, %p213
    %p215 = scmp.ne.s32.totalorder %s206, %s207
    %p216 = scmp.eq.s32.totalorder %s28, 0
    %p217 = por %p215, %p216
    %p218 = scmp.ne.s32.totalorder %s206, %s207
    %p219 = scmp.eq.s32.totalorder %s29, 1
    %p220 = por %p218, %p219
    %p222 = scmp.ne.s32.totalorder %s207, %s221
    %p223 = scmp.eq.s32.totalorder %s29, 0
    %p224 = por %p222, %p223
    %s226 = sadd.s32 %s225, 1
    %p229 = scmp.eq.s32.totalorder %s23, 1
    %p230 = scmp.ne.s32.totalorder %s225, %s227
    %p231 = scmp.eq.s32.totalorder %s23, 0
    %p232 = por %p230, %p231
    %p233 = scmp.ne.s32.totalorder %s225, %s227
    %p234 = scmp.eq.s32.totalorder %s28, 1
    %p235 = por %p233, %p234
    %p236 = scmp.ne.s32.totalorder %s227, %s228
    %p237 = scmp.eq.s32.totalorder %s28, 0
    %p238 = por %p236, %p237
    %p239 = scmp.ne.s32.totalorder %s227, %s228
    %p240 = scmp.eq.s32.totalorder %s29, 1
    %p241 = por %p239, %p240
    %p243 = scmp.ne.s32.totalorder %s228, %s242
    %p244 = scmp.eq.s32.totalorder %s29, 0
    %p245 = por %p243, %p244
    %s247 = sadd.s32 %s246, 1
    %p250 = scmp.eq.s32.totalorder %s23, 1
    %p251 = scmp.ne.s32.totalorder %s246, %s248
    %p252 = scmp.eq.s32.totalorder %s23, 0
    %p253 = por %p251, %p252
    %p254 = scmp.ne.s32.totalorder %s246, %s248
    %p255 = scmp.eq.s32.totalorder %s28, 1
    %p256 = por %p254, %p255
    %p257 = scmp.ne.s32.totalorder %s248, %s249
    %p258 = scmp.eq.s32.totalorder %s28, 0
    %p259 = por %p257, %p258
    %p260 = scmp.ne.s32.totalorder %s248, %s249
    %p261 = scmp.eq.s32.totalorder %s29, 1
    %p262 = por %p260, %p261
    %p264 = scmp.ne.s32.totalorder %s249, %s263
    %p265 = scmp.eq.s32.totalorder %s29, 0
    %p266 = por %p264, %p265
    %s268 = sadd.s32 %s267, 1
    %p271 = scmp.eq.s32.totalorder %s23, 1
    %p272 = scmp.ne.s32.totalorder %s267, %s269
    %p273 = scmp.eq.s32.totalorder %s23, 0
    %p274 = por %p272, %p273
    %p275 = scmp.ne.s32.totalorder %s267, %s269
    %p276 = scmp.eq.s32.totalorder %s28, 1
    %p277 = por %p275, %p276
    %p278 = scmp.ne.s32.totalorder %s269, %s270
    %p279 = scmp.eq.s32.totalorder %s28, 0
    %p280 = por %p278, %p279
    %p281 = scmp.ne.s32.totalorder %s269, %s270
    %p282 = scmp.eq.s32.totalorder %s29, 1
    %p283 = por %p281, %p282
    %p285 = scmp.ne.s32.totalorder %s270, %s284
    %p286 = scmp.eq.s32.totalorder %s29, 0
    %p287 = por %p285, %p286
    %s289 = sadd.s32 %s288, 1
    %p292 = scmp.eq.s32.totalorder %s23, 1
    %p293 = scmp.ne.s32.totalorder %s288, %s290
    %p294 = scmp.eq.s32.totalorder %s23, 0
    %p295 = por %p293, %p294
    %p296 = scmp.ne.s32.totalorder %s288, %s290
    %p297 = scmp.eq.s32.totalorder %s28, 1
    %p298 = por %p296, %p297
    %p299 = scmp.ne.s32.totalorder %s290, %s291
    %p300 = scmp.eq.s32.totalorder %s28, 0
    %p301 = por %p299, %p300
    %p302 = scmp.ne.s32.totalorder %s290, %s291
    %p303 = scmp.eq.s32.totalorder %s29, 1
    %p304 = por %p302, %p303
    %p306 = scmp.ne.s32.totalorder %s291, %s305
    %p307 = scmp.eq.s32.totalorder %s29, 0
    %p308 = por %p306, %p307
    %s310 = sadd.s32 %s309, 1
    %p313 = scmp.eq.s32.totalorder %s23, 1
    %p314 = scmp.ne.s32.totalorder %s309, %s311
    %p315 = scmp.eq.s32.totalorder %s23, 0
    %p316 = por %p314, %p315
    %p317 = scmp.ne.s32.totalorder %s309, %s311
    %p318 = scmp.eq.s32.totalorder %s28, 1
    %p319 = por %p317, %p318
    %p320 = scmp.ne.s32.totalorder %s311, %s312
    %p321 = scmp.eq.s32.totalorder %s28, 0
    %p322 = por %p320, %p321
    %p323 = scmp.ne.s32.totalorder %s311, %s312
    %p324 = scmp.eq.s32.totalorder %s29, 1
    %p325 = por %p323, %p324
    %p327 = scmp.ne.s32.totalorder %s312, %s326
    %p328 = scmp.eq.s32.totalorder %s29, 0
    %p329 = por %p327, %p328
    %s331 = sadd.s32 %s330, 1
    %p334 = scmp.eq.s32.totalorder %s23, 1
    %p335 = scmp.ne.s32.totalorder %s330, %s332
    %p336 = scmp.eq.s32.totalorder %s23, 0
    %p337 = por %p335, %p336
    %p338 = scmp.ne.s32.totalorder %s330, %s332
    %p339 = scmp.eq.s32.totalorder %s28, 1
    %p340 = por %p338, %p339
    %p341 = scmp.ne.s32.totalorder %s332, %s333
    %p342 = scmp.eq.s32.totalorder %s28, 0
    %p343 = por %p341, %p342
    %p344 = scmp.ne.s32.totalorder %s332, %s333
    %p345 = scmp.eq.s32.totalorder %s29, 1
    %p346 = por %p344, %p345
    %p348 = scmp.ne.s32.totalorder %s333, %s347
    %p349 = scmp.eq.s32.totalorder %s29, 0
    %p350 = por %p348, %p349
    %s352 = sadd.s32 %s351, 1
    %p355 = scmp.eq.s32.totalorder %s23, 1
    %p356 = scmp.ne.s32.totalorder %s351, %s353
    %p357 = scmp.eq.s32.totalorder %s23, 0
    %p358 = por %p356, %p357
    %p359 = scmp.ne.s32.totalorder %s351, %s353
    %p360 = scmp.eq.s32.totalorder %s28, 1
    %p361 = por %p359, %p360
    %p362 = scmp.ne.s32.totalorder %s353, %s354
    %p363 = scmp.eq.s32.totalorder %s28, 0
    %p364 = por %p362, %p363
    %p365 = scmp.ne.s32.totalorder %s353, %s354
    %p366 = scmp.eq.s32.totalorder %s29, 1
    %p367 = por %p365, %p366
    %p369 = scmp.ne.s32.totalorder %s354, %s368
    %p370 = scmp.eq.s32.totalorder %s29, 0
    %p371 = por %p369, %p370
    %s373 = sadd.s32 %s372, 1
    %p376 = scmp.eq.s32.totalorder %s23, 1
    %p377 = scmp.ne.s32.totalorder %s372, %s374
    %p378 = scmp.eq.s32.totalorder %s23, 0
    %p379 = por %p377, %p378
    %p380 = scmp.ne.s32.totalorder %s372, %s374
    %p381 = scmp.eq.s32.totalorder %s28, 1
    %p382 = por %p380, %p381
    %p383 = scmp.ne.s32.totalorder %s374, %s375
    %p384 = scmp.eq.s32.totalorder %s28, 0
    %p385 = por %p383, %p384
    %p386 = scmp.ne.s32.totalorder %s374, %s375
    %p387 = scmp.eq.s32.totalorder %s29, 1
    %p388 = por %p386, %p387
    %p390 = scmp.ne.s32.totalorder %s375, %s389
    %p391 = scmp.eq.s32.totalorder %s29, 0
    %p392 = por %p390, %p391
    %s393 = ssub.s32 %s23, %s30
    %p394 = scmp.eq.s32.totalorder %s393, 0
    %s396 = sadd.s32 %s395, 1
    %s397 = scalar_select %p394, %s395, %s396
    %p400 = pneg %p394
    %p401 = scmp.eq.s32.totalorder %s23, 1
    %p402 = por %p400, %p401
    %p403 = scmp.ne.s32.totalorder %s395, %s398
    %p404 = scmp.eq.s32.totalorder %s23, 0
    %p405 = por %p403, %p404
    %p406 = scmp.ne.s32.totalorder %s395, %s398
    %p407 = scmp.eq.s32.totalorder %s28, 1
    %p408 = por %p406, %p407
    %p409 = scmp.ne.s32.totalorder %s398, %s399
    %p410 = scmp.eq.s32.totalorder %s28, 0
    %p411 = por %p409, %p410
    %p412 = scmp.ne.s32.totalorder %s398, %s399
    %p413 = scmp.eq.s32.totalorder %s29, 1
    %p414 = por %p412, %p413
    %p416 = scmp.ne.s32.totalorder %s399, %s415
    %p417 = scmp.eq.s32.totalorder %s29, 0
    %p418 = por %p416, %p417
    %p419 = scmp.le.s32.totalorder 1, %s23
    %p420 = scmp.lt.s32.totalorder %s23, 3
    %p421 = pnand %p419, %p420
    %p422 = pneg %p421
    // Predicated region
    $region9: #{_lambda_.1} parent=5 // pred_check
      _
    $region10: #{_lambda_.1} parent=5 // pred_check_branch
      %424 = sbr.rel (%p421) target = $region12
    $region11: #{_lambda_.1} parent=5 // pred_region
      %s425 = ssub.s32 %s23, 1
      // Predicated region
      $region13: #{_lambda_.1} parent=11 // pred_check
        %p426 = pneg %p70
      $region14: #{_lambda_.1} parent=11 // pred_check_branch
        %428 = sbr.rel (%p426) target = $region16
      $region15: #{_lambda_.1} parent=11 // pred_region
        _
      $region16: #{_lambda_.1} parent=11 // pred_fallthru
        _
      // Predicated region
      $region17: #{_lambda_.1} parent=11 // pred_check
        %p429 = pneg %p91
      $region18: #{_lambda_.1} parent=11 // pred_check_branch
        %431 = sbr.rel (%p429) target = $region20
      $region19: #{_lambda_.1} parent=11 // pred_region
        _
      $region20: #{_lambda_.1} parent=11 // pred_fallthru
        _
      // Predicated region
      $region21: #{_lambda_.1} parent=11 // pred_check
        %p432 = pneg %p112
      $region22: #{_lambda_.1} parent=11 // pred_check_branch
        %434 = sbr.rel (%p432) target = $region24
      $region23: #{_lambda_.1} parent=11 // pred_region
        _
      $region24: #{_lambda_.1} parent=11 // pred_fallthru
        _
      // Predicated region
      $region25: #{_lambda_.1} parent=11 // pred_check
        %p435 = pneg %p133
      $region26: #{_lambda_.1} parent=11 // pred_check_branch
        %437 = sbr.rel (%p435) target = $region28
      $region27: #{_lambda_.1} parent=11 // pred_region
        _
      $region28: #{_lambda_.1} parent=11 // pred_fallthru
        _
      // Predicated region
      $region29: #{_lambda_.1} parent=11 // pred_check
        %p438 = pneg %p154
      $region30: #{_lambda_.1} parent=11 // pred_check_branch
        %440 = sbr.rel (%p438) target = $region32
      $region31: #{_lambda_.1} parent=11 // pred_region
        _
      $region32: #{_lambda_.1} parent=11 // pred_fallthru
        _
      // Predicated region
      $region33: #{_lambda_.1} parent=11 // pred_check
        %p441 = pneg %p175
      $region34: #{_lambda_.1} parent=11 // pred_check_branch
        %443 = sbr.rel (%p441) target = $region36
      $region35: #{_lambda_.1} parent=11 // pred_region
        _
      $region36: #{_lambda_.1} parent=11 // pred_fallthru
        _
      // Predicated region
      $region37: #{_lambda_.1} parent=11 // pred_check
        %p444 = pneg %p196
      $region38: #{_lambda_.1} parent=11 // pred_check_branch
        %446 = sbr.rel (%p444) target = $region40
      $region39: #{_lambda_.1} parent=11 // pred_region
        _
      $region40: #{_lambda_.1} parent=11 // pred_fallthru
        _
      // Predicated region
      $region41: #{_lambda_.1} parent=11 // pred_check
        %p447 = pneg %p217
      $region42: #{_lambda_.1} parent=11 // pred_check_branch
        %449 = sbr.rel (%p447) target = $region44
      $region43: #{_lambda_.1} parent=11 // pred_region
        _
      $region44: #{_lambda_.1} parent=11 // pred_fallthru
        _
      // Predicated region
      $region45: #{_lambda_.1} parent=11 // pred_check
        %p450 = pneg %p238
      $region46: #{_lambda_.1} parent=11 // pred_check_branch
        %452 = sbr.rel (%p450) target = $region48
      $region47: #{_lambda_.1} parent=11 // pred_region
        _
      $region48: #{_lambda_.1} parent=11 // pred_fallthru
        _
      // Predicated region
      $region49: #{_lambda_.1} parent=11 // pred_check
        %p453 = pneg %p259
      $region50: #{_lambda_.1} parent=11 // pred_check_branch
        %455 = sbr.rel (%p453) target = $region52
      $region51: #{_lambda_.1} parent=11 // pred_region
        _
      $region52: #{_lambda_.1} parent=11 // pred_fallthru
        _
      // Predicated region
      $region53: #{_lambda_.1} parent=11 // pred_check
        %p456 = pneg %p280
      $region54: #{_lambda_.1} parent=11 // pred_check_branch
        %458 = sbr.rel (%p456) target = $region56
      $region55: #{_lambda_.1} parent=11 // pred_region
        _
      $region56: #{_lambda_.1} parent=11 // pred_fallthru
        _
      // Predicated region
      $region57: #{_lambda_.1} parent=11 // pred_check
        %p459 = pneg %p301
      $region58: #{_lambda_.1} parent=11 // pred_check_branch
        %461 = sbr.rel (%p459) target = $region60
      $region59: #{_lambda_.1} parent=11 // pred_region
        _
      $region60: #{_lambda_.1} parent=11 // pred_fallthru
        _
      // Predicated region
      $region61: #{_lambda_.1} parent=11 // pred_check
        %p462 = pneg %p322
      $region62: #{_lambda_.1} parent=11 // pred_check_branch
        %464 = sbr.rel (%p462) target = $region64
      $region63: #{_lambda_.1} parent=11 // pred_region
        _
      $region64: #{_lambda_.1} parent=11 // pred_fallthru
        _
      // Predicated region
      $region65: #{_lambda_.1} parent=11 // pred_check
        %p465 = pneg %p343
      $region66: #{_lambda_.1} parent=11 // pred_check_branch
        %467 = sbr.rel (%p465) target = $region68
      $region67: #{_lambda_.1} parent=11 // pred_region
        _
      $region68: #{_lambda_.1} parent=11 // pred_fallthru
        _
      // Predicated region
      $region69: #{_lambda_.1} parent=11 // pred_check
        %p468 = pneg %p364
      $region70: #{_lambda_.1} parent=11 // pred_check_branch
        %470 = sbr.rel (%p468) target = $region72
      $region71: #{_lambda_.1} parent=11 // pred_region
        _
      $region72: #{_lambda_.1} parent=11 // pred_fallthru
        _
      // Predicated region
      $region73: #{_lambda_.1} parent=11 // pred_check
        %p471 = pneg %p385
      $region74: #{_lambda_.1} parent=11 // pred_check_branch
        %473 = sbr.rel (%p471) target = $region76
      $region75: #{_lambda_.1} parent=11 // pred_region
        _
      $region76: #{_lambda_.1} parent=11 // pred_fallthru
        _
    $region12: #{_lambda_.1} parent=5 // pred_fallthru
      _
    %p474 = scmp.lt.s32.totalorder %s23, 2
    // Predicated region
    $region77: #{_lambda_.1} parent=5 // pred_check
      %p475 = pneg %p474
    $region78: #{_lambda_.1} parent=5 // pred_check_branch
      %477 = sbr.rel (%p475) target = $region80
    $region79: #{_lambda_.1} parent=5 // pred_region
      // Predicated region
      $region81: #{_lambda_.1} parent=79 // pred_check
        %p478 = pneg %p43
      $region82: #{_lambda_.1} parent=79 // pred_check_branch
        %480 = sbr.rel (%p478) target = $region84
      $region83: #{_lambda_.1} parent=79 // pred_region
        %p481 = scmp.lt.s32.totalorder %s23, 1
        %s482 = scalar_select %p481, %s23, 1
        %s483 = smul.addr %s482, 32
        %s484 = smul.addr %s483, 8
        %s485 = scalar_lea.vmem %s0, %s484
      $region84: #{_lambda_.1} parent=79 // pred_fallthru
        _
    $region80: #{_lambda_.1} parent=5 // pred_fallthru
      _
    %p486 = scmp.le.s32.totalorder 1, %s23
    %p487 = scmp.lt.s32.totalorder %s23, 3
    %p488 = pnand %p486, %p487
    %p489 = pneg %p488
    // Predicated region
    $region85: #{_lambda_.1} parent=5 // pred_check
      _
    $region86: #{_lambda_.1} parent=5 // pred_check_branch
      %491 = sbr.rel (%p488) target = $region88
    $region87: #{_lambda_.1} parent=5 // pred_region
      %s492 = ssub.s32 %s23, 1
      %p493 = scmp.lt.s32.totalorder %s28, 1
      %s494 = scalar_select %p493, %s28, 1
      %s495 = smul.addr %s494, 32
      %s496 = smul.addr %s495, 8
      %s497 = scalar_lea.vmem %s0, %s496
      %p498 = pneg %p49
      %p499 = pneg %p46
      %p500 = pneg %p70
      %p501 = pneg %p67
      %p502 = pneg %p91
      %p503 = pneg %p88
      %p504 = pneg %p112
      %p505 = pneg %p109
      %p506 = pneg %p133
      %p507 = pneg %p130
      %p508 = pneg %p154
      %p509 = pneg %p151
      %p510 = pneg %p175
      %p511 = pneg %p172
      %p512 = pneg %p196
      %p513 = pneg %p193
      %p514 = pneg %p217
      %p515 = pneg %p214
      %p516 = pneg %p238
      %p517 = pneg %p235
      %p518 = pneg %p259
      %p519 = pneg %p256
      %p520 = pneg %p280
      %p521 = pneg %p277
      %p522 = pneg %p301
      %p523 = pneg %p298
      %p524 = pneg %p322
      %p525 = pneg %p319
      %p526 = pneg %p343
      %p527 = pneg %p340
      %p528 = pneg %p364
      %p529 = pneg %p361
      %p530 = pneg %p385
      %p531 = pneg %p382
      %p532 = pneg %p411
      %p533 = pneg %p408
      %p534 = scmp.lt.s32.totalorder %s28, 1
      %s535 = scalar_select %p534, %s28, 1
      %s536 = smul.addr %s535, 32
      %s537 = smul.addr %s536, 8
      %s538 = scalar_lea.vmem %s17, %s537
      %p539 = scmp.lt.s32.totalorder %s28, 1
      %s540 = scalar_select %p539, %s28, 1
      %s541 = smul.addr %s540, 32
      %s542 = smul.addr %s541, 8
      %s543 = scalar_lea.vmem %s0, %s542
      %p544 = scmp.lt.s32.totalorder %s28, 1
      %s545 = scalar_select %p544, %s28, 1
      %s546 = smul.addr %s545, 32
      %s547 = smul.addr %s546, 8
      %s548 = scalar_lea.vmem %s17, %s547
      %v549 = vld [vmem:[%s543] sm:$0xff]
      %v550 = vld [vmem:[%s543 + $0x8] sm:$0xff]
      %v551 = vld [vmem:[%s543 + $0x10] sm:$0xff]
      %v552 = vld [vmem:[%s543 + $0x18] sm:$0xff]
      %v553 = vld [vmem:[%s543 + $0x20] sm:$0xff]
      %v554 = vld [vmem:[%s543 + $0x28] sm:$0xff]
      %v555 = vld [vmem:[%s543 + $0x30] sm:$0xff]
      %v556 = vld [vmem:[%s543 + $0x38] sm:$0xff]
      %v557 = vld [vmem:[%s543 + $0x40] sm:$0xff]
      %v558 = vld [vmem:[%s543 + $0x48] sm:$0xff]
      %v559 = vld [vmem:[%s543 + $0x50] sm:$0xff]
      %v560 = vld [vmem:[%s543 + $0x58] sm:$0xff]
      %v561 = vld [vmem:[%s543 + $0x60] sm:$0xff]
      %v562 = vld [vmem:[%s543 + $0x68] sm:$0xff]
      %v563 = vld [vmem:[%s543 + $0x70] sm:$0xff]
      %v564 = vld [vmem:[%s543 + $0x78] sm:$0xff]
      %v565 = vld [vmem:[%s543 + $0x80] sm:$0xff]
      %v566 = vld [vmem:[%s543 + $0x88] sm:$0xff]
      %v567 = vld [vmem:[%s543 + $0x90] sm:$0xff]
      %v568 = vld [vmem:[%s543 + $0x98] sm:$0xff]
      %v569 = vld [vmem:[%s543 + $0xa0] sm:$0xff]
      %v570 = vld [vmem:[%s543 + $0xa8] sm:$0xff]
      %v571 = vld [vmem:[%s543 + $0xb0] sm:$0xff]
      %v572 = vld [vmem:[%s543 + $0xb8] sm:$0xff]
      %v573 = vld [vmem:[%s543 + $0xc0] sm:$0xff]
      %v574 = vld [vmem:[%s543 + $0xc8] sm:$0xff]
      %v575 = vld [vmem:[%s543 + $0xd0] sm:$0xff]
      %v576 = vld [vmem:[%s543 + $0xd8] sm:$0xff]
      %v577 = vld [vmem:[%s543 + $0xe0] sm:$0xff]
      %v578 = vld [vmem:[%s543 + $0xe8] sm:$0xff]
      %v579 = vld [vmem:[%s543 + $0xf0] sm:$0xff]
      %v580 = vld [vmem:[%s543 + $0xf8] sm:$0xff]
      %v581 = vld [vmem:[%s1] sm:$0xf]
      %v582 = vld [vmem:[%s2] sm:$0x1]
      %v584 = vlaneseq
      %v585 = vshrl.u32 %v584, 7
      %v586 = vsub.s32 0, %v585
      %v587 = vrot.slane %v582, %v586
      %vm589 = vcmask 31744
      %v591 = vsel %vm589, %v549, 0
      %v594 = vsel %vm589, %v550, 0
      %v597 = vsel %vm589, %v551, 0
      %v600 = vsel %vm589, %v552, 0
      %v603 = vsel %vm589, %v553, 0
      %v606 = vsel %vm589, %v554, 0
      %v609 = vsel %vm589, %v555, 0
      %v612 = vsel %vm589, %v556, 0
      %v615 = vsel %vm589, %v557, 0
      %v618 = vsel %vm589, %v558, 0
      %v621 = vsel %vm589, %v559, 0
      %v624 = vsel %vm589, %v560, 0
      %v627 = vsel %vm589, %v561, 0
      %v630 = vsel %vm589, %v562, 0
      %v633 = vsel %vm589, %v563, 0
      %v636 = vsel %vm589, %v564, 0
      %v639 = vsel %vm589, %v565, 0
      %v642 = vsel %vm589, %v566, 0
      %v645 = vsel %vm589, %v567, 0
      %v648 = vsel %vm589, %v568, 0
      %v651 = vsel %vm589, %v569, 0
      %v654 = vsel %vm589, %v570, 0
      %v657 = vsel %vm589, %v571, 0
      %v660 = vsel %vm589, %v572, 0
      %v663 = vsel %vm589, %v573, 0
      %v666 = vsel %vm589, %v574, 0
      %v669 = vsel %vm589, %v575, 0
      %v672 = vsel %vm589, %v576, 0
      %v675 = vsel %vm589, %v577, 0
      %v678 = vsel %vm589, %v578, 0
      %v681 = vsel %vm589, %v579, 0
      %v684 = vsel %vm589, %v580, 0
      %vm686 = vcmask 1043456
      %v688 = vsel %vm686, %v581, 0
      %690 = vmatprep.subr.mxu0 0.0
      %691 = vmatpush1.msra.mxu0 0.0
      %692 = vmatprep.subr.mxu0 0.0
      %693 = vmatpush1.msra.mxu0 0.0
      %694 = vmatprep.subr.mxu0 0.0
      %695 = vmatpush1.msra.mxu0 0.0
      %696 = vmatprep.subr.mxu0 0.0
      %697 = vmatpush1.msra.mxu0 0.0
      %698 = vmatprep.subr.mxu0 0.0
      %699 = vmatpush1.msra.mxu0 0.0
      %700 = vmatprep.subr.mxu0 0.0
      %701 = vmatpush1.msra.mxu0 0.0
      %702 = vmatprep.subr.mxu0 0.0
      %703 = vmatpush1.msra.mxu0 0.0
      %704 = vmatprep.subr.mxu0 0.0
      %705 = vmatpush1.msra.mxu0 0.0
      %706 = vmatprep.subr.mxu0 0.0
      %707 = vmatpush1.msra.mxu0 0.0
      %708 = vmatprep.subr.mxu0 0.0
      %709 = vmatpush1.msra.mxu0 0.0
      %710 = vmatprep.subr.mxu0 0.0
      %711 = vmatpush1.msra.mxu0 0.0
      %712 = vmatprep.subr.mxu0 0.0
      %713 = vmatpush1.msra.mxu0 0.0
      %714 = vmatprep.subr.mxu0 0.0
      %715 = vmatpush1.msra.mxu0 0.0
      %716 = vmatprep.subr.mxu0 0.0
      %717 = vmatpush1.msra.mxu0 0.0
      %718 = vmatprep.subr.mxu0 0.0
      %719 = vmatpush1.msra.mxu0 0.0
      %720 = vmatprep.subr.mxu0 0.0
      %721 = vmatpush1.msra.mxu0 %v688
      %722 = vmatprep.subr.mxu0 0.0
      %723 = vmatpush2.msra.mxu0 0.0
      %724 = vmatprep.subr.mxu0 0.0
      %725 = vmatpush2.msra.mxu0 0.0
      %726 = vmatprep.subr.mxu0 0.0
      %727 = vmatpush2.msra.mxu0 0.0
      %728 = vmatprep.subr.mxu0 0.0
      %729 = vmatpush2.msra.mxu0 0.0
      %730 = vmatprep.subr.mxu0 0.0
      %731 = vmatpush2.msra.mxu0 0.0
      %732 = vmatprep.subr.mxu0 0.0
      %733 = vmatpush2.msra.mxu0 0.0
      %734 = vmatprep.subr.mxu0 0.0
      %735 = vmatpush2.msra.mxu0 0.0
      %736 = vmatprep.subr.mxu0 0.0
      %737 = vmatpush2.msra.mxu0 0.0
      %738 = vmatprep.subr.mxu0 0.0
      %739 = vmatpush2.msra.mxu0 0.0
      %740 = vmatprep.subr.mxu0 0.0
      %741 = vmatpush2.msra.mxu0 0.0
      %742 = vmatprep.subr.mxu0 0.0
      %743 = vmatpush2.msra.mxu0 0.0
      %744 = vmatprep.subr.mxu0 0.0
      %745 = vmatpush2.msra.mxu0 0.0
      %746 = vmatprep.subr.mxu0 0.0
      %747 = vmatpush2.msra.mxu0 0.0
      %748 = vmatprep.subr.mxu0 0.0
      %749 = vmatpush2.msra.mxu0 0.0
      %750 = vmatprep.subr.mxu0 0.0
      %751 = vmatpush2.msra.mxu0 0.0
      %752 = vmatprep.subr.mxu0 0.0
      %753 = vmatpush2.msra.mxu0 0.0
      %754 = vmatprep.mubr.f32.mxu0 0.0
      %755 = vmatmul.mubr.f32.gmra.mxu0 %v591
      %v756 = vpop.f32.mrf.mxu0
      %v757 = vadd.f32 %v587, %v756
      %v758 = vpop.f32.mrf.mxu0
      %759 = vmatprep.mubr.f32.mxu0 0.0
      %760 = vmatmul.mubr.f32.gmra.mxu0 %v594
      %v761 = vpop.f32.mrf.mxu0
      %v762 = vadd.f32 %v587, %v761
      %v763 = vpop.f32.mrf.mxu0
      %764 = vmatprep.mubr.f32.mxu0 0.0
      %765 = vmatmul.mubr.f32.gmra.mxu0 %v597
      %v766 = vpop.f32.mrf.mxu0
      %v767 = vadd.f32 %v587, %v766
      %v768 = vpop.f32.mrf.mxu0
      %769 = vmatprep.mubr.f32.mxu0 0.0
      %770 = vmatmul.mubr.f32.gmra.mxu0 %v600
      %v771 = vpop.f32.mrf.mxu0
      %v772 = vadd.f32 %v587, %v771
      %v773 = vpop.f32.mrf.mxu0
      %774 = vmatprep.mubr.f32.mxu0 0.0
      %775 = vmatmul.mubr.f32.gmra.mxu0 %v603
      %v776 = vpop.f32.mrf.mxu0
      %v777 = vadd.f32 %v587, %v776
      %v778 = vpop.f32.mrf.mxu0
      %779 = vmatprep.mubr.f32.mxu0 0.0
      %780 = vmatmul.mubr.f32.gmra.mxu0 %v606
      %v781 = vpop.f32.mrf.mxu0
      %v782 = vadd.f32 %v587, %v781
      %v783 = vpop.f32.mrf.mxu0
      %784 = vmatprep.mubr.f32.mxu0 0.0
      %785 = vmatmul.mubr.f32.gmra.mxu0 %v609
      %v786 = vpop.f32.mrf.mxu0
      %v787 = vadd.f32 %v587, %v786
      %v788 = vpop.f32.mrf.mxu0
      %789 = vmatprep.mubr.f32.mxu0 0.0
      %790 = vmatmul.mubr.f32.gmra.mxu0 %v612
      %v791 = vpop.f32.mrf.mxu0
      %v792 = vadd.f32 %v587, %v791
      %v793 = vpop.f32.mrf.mxu0
      %794 = vmatprep.mubr.f32.mxu0 0.0
      %795 = vmatmul.mubr.f32.gmra.mxu0 %v615
      %v796 = vpop.f32.mrf.mxu0
      %v797 = vadd.f32 %v587, %v796
      %v798 = vpop.f32.mrf.mxu0
      %799 = vmatprep.mubr.f32.mxu0 0.0
      %800 = vmatmul.mubr.f32.gmra.mxu0 %v618
      %v801 = vpop.f32.mrf.mxu0
      %v802 = vadd.f32 %v587, %v801
      %v803 = vpop.f32.mrf.mxu0
      %804 = vmatprep.mubr.f32.mxu0 0.0
      %805 = vmatmul.mubr.f32.gmra.mxu0 %v621
      %v806 = vpop.f32.mrf.mxu0
      %v807 = vadd.f32 %v587, %v806
      %v808 = vpop.f32.mrf.mxu0
      %809 = vmatprep.mubr.f32.mxu0 0.0
      %810 = vmatmul.mubr.f32.gmra.mxu0 %v624
      %v811 = vpop.f32.mrf.mxu0
      %v812 = vadd.f32 %v587, %v811
      %v813 = vpop.f32.mrf.mxu0
      %814 = vmatprep.mubr.f32.mxu0 0.0
      %815 = vmatmul.mubr.f32.gmra.mxu0 %v627
      %v816 = vpop.f32.mrf.mxu0
      %v817 = vadd.f32 %v587, %v816
      %v818 = vpop.f32.mrf.mxu0
      %819 = vmatprep.mubr.f32.mxu0 0.0
      %820 = vmatmul.mubr.f32.gmra.mxu0 %v630
      %v821 = vpop.f32.mrf.mxu0
      %v822 = vadd.f32 %v587, %v821
      %v823 = vpop.f32.mrf.mxu0
      %824 = vmatprep.mubr.f32.mxu0 0.0
      %825 = vmatmul.mubr.f32.gmra.mxu0 %v633
      %v826 = vpop.f32.mrf.mxu0
      %v827 = vadd.f32 %v587, %v826
      %v828 = vpop.f32.mrf.mxu0
      %829 = vmatprep.mubr.f32.mxu0 0.0
      %830 = vmatmul.mubr.f32.gmra.mxu0 %v636
      %v831 = vpop.f32.mrf.mxu0
      %v832 = vadd.f32 %v587, %v831
      %v833 = vpop.f32.mrf.mxu0
      %834 = vmatprep.mubr.f32.mxu0 0.0
      %835 = vmatmul.mubr.f32.gmra.mxu0 %v639
      %v836 = vpop.f32.mrf.mxu0
      %v837 = vadd.f32 %v587, %v836
      %v838 = vpop.f32.mrf.mxu0
      %839 = vmatprep.mubr.f32.mxu0 0.0
      %840 = vmatmul.mubr.f32.gmra.mxu0 %v642
      %v841 = vpop.f32.mrf.mxu0
      %v842 = vadd.f32 %v587, %v841
      %v843 = vpop.f32.mrf.mxu0
      %844 = vmatprep.mubr.f32.mxu0 0.0
      %845 = vmatmul.mubr.f32.gmra.mxu0 %v645
      %v846 = vpop.f32.mrf.mxu0
      %v847 = vadd.f32 %v587, %v846
      %v848 = vpop.f32.mrf.mxu0
      %849 = vmatprep.mubr.f32.mxu0 0.0
      %850 = vmatmul.mubr.f32.gmra.mxu0 %v648
      %v851 = vpop.f32.mrf.mxu0
      %v852 = vadd.f32 %v587, %v851
      %v853 = vpop.f32.mrf.mxu0
      %854 = vmatprep.mubr.f32.mxu0 0.0
      %855 = vmatmul.mubr.f32.gmra.mxu0 %v651
      %v856 = vpop.f32.mrf.mxu0
      %v857 = vadd.f32 %v587, %v856
      %v858 = vpop.f32.mrf.mxu0
      %859 = vmatprep.mubr.f32.mxu0 0.0
      %860 = vmatmul.mubr.f32.gmra.mxu0 %v654
      %v861 = vpop.f32.mrf.mxu0
      %v862 = vadd.f32 %v587, %v861
      %v863 = vpop.f32.mrf.mxu0
      %864 = vmatprep.mubr.f32.mxu0 0.0
      %865 = vmatmul.mubr.f32.gmra.mxu0 %v657
      %v866 = vpop.f32.mrf.mxu0
      %v867 = vadd.f32 %v587, %v866
      %v868 = vpop.f32.mrf.mxu0
      %869 = vmatprep.mubr.f32.mxu0 0.0
      %870 = vmatmul.mubr.f32.gmra.mxu0 %v660
      %v871 = vpop.f32.mrf.mxu0
      %v872 = vadd.f32 %v587, %v871
      %v873 = vpop.f32.mrf.mxu0
      %874 = vmatprep.mubr.f32.mxu0 0.0
      %875 = vmatmul.mubr.f32.gmra.mxu0 %v663
      %v876 = vpop.f32.mrf.mxu0
      %v877 = vadd.f32 %v587, %v876
      %v878 = vpop.f32.mrf.mxu0
      %879 = vmatprep.mubr.f32.mxu0 0.0
      %880 = vmatmul.mubr.f32.gmra.mxu0 %v666
      %v881 = vpop.f32.mrf.mxu0
      %v882 = vadd.f32 %v587, %v881
      %v883 = vpop.f32.mrf.mxu0
      %884 = vmatprep.mubr.f32.mxu0 0.0
      %885 = vmatmul.mubr.f32.gmra.mxu0 %v669
      %v886 = vpop.f32.mrf.mxu0
      %v887 = vadd.f32 %v587, %v886
      %v888 = vpop.f32.mrf.mxu0
      %889 = vmatprep.mubr.f32.mxu0 0.0
      %890 = vmatmul.mubr.f32.gmra.mxu0 %v672
      %v891 = vpop.f32.mrf.mxu0
      %v892 = vadd.f32 %v587, %v891
      %v893 = vpop.f32.mrf.mxu0
      %894 = vmatprep.mubr.f32.mxu0 0.0
      %895 = vmatmul.mubr.f32.gmra.mxu0 %v675
      %v896 = vpop.f32.mrf.mxu0
      %v897 = vadd.f32 %v587, %v896
      %v898 = vpop.f32.mrf.mxu0
      %899 = vmatprep.mubr.f32.mxu0 0.0
      %900 = vmatmul.mubr.f32.gmra.mxu0 %v678
      %v901 = vpop.f32.mrf.mxu0
      %v902 = vadd.f32 %v587, %v901
      %v903 = vpop.f32.mrf.mxu0
      %904 = vmatprep.mubr.f32.mxu0 0.0
      %905 = vmatmul.mubr.f32.gmra.mxu0 %v681
      %v906 = vpop.f32.mrf.mxu0
      %v907 = vadd.f32 %v587, %v906
      %v908 = vpop.f32.mrf.mxu0
      %909 = vmatprep.mubr.f32.mxu0 0.0
      %910 = vmatmul.mubr.f32.gmra.mxu0 %v684
      %v911 = vpop.f32.mrf.mxu0
      %v912 = vadd.f32 %v587, %v911
      %v913 = vpop.f32.mrf.mxu0
      %914 = vdwg.mxu0
      %v915 = vadd.f32 %v549, 0.0
      %v916 = vadd.f32 %v550, 0.0
      %v917 = vadd.f32 %v549, %v551
      %v918 = vadd.f32 %v550, %v552
      %v919 = vadd.f32 %v551, %v553
      %v920 = vadd.f32 %v552, %v554
      %v921 = vadd.f32 %v553, %v555
      %v922 = vadd.f32 %v554, %v556
      %v923 = vadd.f32 %v555, %v557
      %v924 = vadd.f32 %v556, %v558
      %v925 = vadd.f32 %v557, %v559
      %v926 = vadd.f32 %v558, %v560
      %v927 = vadd.f32 %v559, %v561
      %v928 = vadd.f32 %v560, %v562
      %v929 = vadd.f32 %v561, %v563
      %v930 = vadd.f32 %v562, %v564
      %v931 = vadd.f32 %v563, %v565
      %v932 = vadd.f32 %v564, %v566
      %v933 = vadd.f32 %v565, %v567
      %v934 = vadd.f32 %v566, %v568
      %v935 = vadd.f32 %v567, %v569
      %v936 = vadd.f32 %v568, %v570
      %v937 = vadd.f32 %v569, %v571
      %v938 = vadd.f32 %v570, %v572
      %v939 = vadd.f32 %v571, %v573
      %v940 = vadd.f32 %v572, %v574
      %v941 = vadd.f32 %v573, %v575
      %v942 = vadd.f32 %v574, %v576
      %v943 = vadd.f32 %v575, %v577
      %v944 = vadd.f32 %v576, %v578
      %v945 = vadd.f32 %v577, %v579
      %v946 = vadd.f32 %v578, %v580
      %v947 = vadd.f32 %v915, %v551
      %v948 = vadd.f32 %v916, %v552
      %v949 = vadd.f32 %v917, %v553
      %v950 = vadd.f32 %v918, %v554
      %v951 = vadd.f32 %v919, %v555
      %v952 = vadd.f32 %v920, %v556
      %v953 = vadd.f32 %v921, %v557
      %v954 = vadd.f32 %v922, %v558
      %v955 = vadd.f32 %v923, %v559
      %v956 = vadd.f32 %v924, %v560
      %v957 = vadd.f32 %v925, %v561
      %v958 = vadd.f32 %v926, %v562
      %v959 = vadd.f32 %v927, %v563
      %v960 = vadd.f32 %v928, %v564
      %v961 = vadd.f32 %v929, %v565
      %v962 = vadd.f32 %v930, %v566
      %v963 = vadd.f32 %v931, %v567
      %v964 = vadd.f32 %v932, %v568
      %v965 = vadd.f32 %v933, %v569
      %v966 = vadd.f32 %v934, %v570
      %v967 = vadd.f32 %v935, %v571
      %v968 = vadd.f32 %v936, %v572
      %v969 = vadd.f32 %v937, %v573
      %v970 = vadd.f32 %v938, %v574
      %v971 = vadd.f32 %v939, %v575
      %v972 = vadd.f32 %v940, %v576
      %v973 = vadd.f32 %v941, %v577
      %v974 = vadd.f32 %v942, %v578
      %v975 = vadd.f32 %v943, %v579
      %v976 = vadd.f32 %v944, %v580
      %v977 = vadd.f32 %v945, 0.0
      %v978 = vadd.f32 %v946, 0.0
      %vm1011 = vcmask 1040384
      %v1012 = vrot.slane %v947, 7
      %v1013 = vrot.slane %v948, 7
      %v1014 = vsel %vm1011, %v1012, %v1013
      %v1015 = vrot.slane %v949, 7
      %v1016 = vrot.slane %v950, 7
      %v1017 = vsel %vm1011, %v1015, %v1016
      %v1018 = vrot.slane %v951, 7
      %v1019 = vrot.slane %v952, 7
      %v1020 = vsel %vm1011, %v1018, %v1019
      %v1021 = vrot.slane %v953, 7
      %v1022 = vrot.slane %v954, 7
      %v1023 = vsel %vm1011, %v1021, %v1022
      %v1024 = vrot.slane %v955, 7
      %v1025 = vrot.slane %v956, 7
      %v1026 = vsel %vm1011, %v1024, %v1025
      %v1027 = vrot.slane %v957, 7
      %v1028 = vrot.slane %v958, 7
      %v1029 = vsel %vm1011, %v1027, %v1028
      %v1030 = vrot.slane %v959, 7
      %v1031 = vrot.slane %v960, 7
      %v1032 = vsel %vm1011, %v1030, %v1031
      %v1033 = vrot.slane %v961, 7
      %v1034 = vrot.slane %v962, 7
      %v1035 = vsel %vm1011, %v1033, %v1034
      %v1036 = vrot.slane %v963, 7
      %v1037 = vrot.slane %v964, 7
      %v1038 = vsel %vm1011, %v1036, %v1037
      %v1039 = vrot.slane %v965, 7
      %v1040 = vrot.slane %v966, 7
      %v1041 = vsel %vm1011, %v1039, %v1040
      %v1042 = vrot.slane %v967, 7
      %v1043 = vrot.slane %v968, 7
      %v1044 = vsel %vm1011, %v1042, %v1043
      %v1045 = vrot.slane %v969, 7
      %v1046 = vrot.slane %v970, 7
      %v1047 = vsel %vm1011, %v1045, %v1046
      %v1048 = vrot.slane %v971, 7
      %v1049 = vrot.slane %v972, 7
      %v1050 = vsel %vm1011, %v1048, %v1049
      %v1051 = vrot.slane %v973, 7
      %v1052 = vrot.slane %v974, 7
      %v1053 = vsel %vm1011, %v1051, %v1052
      %v1054 = vrot.slane %v975, 7
      %v1055 = vrot.slane %v976, 7
      %v1056 = vsel %vm1011, %v1054, %v1055
      %v1057 = vrot.slane %v977, 7
      %v1058 = vrot.slane %v978, 7
      %v1059 = vsel %vm1011, %v1057, %v1058
      %v1108 = vsel %vm1011, 0.0, %v1012
      %v1109 = vsel %vm1011, 0.0, %v1015
      %v1110 = vsel %vm1011, 0.0, %v1018
      %v1111 = vsel %vm1011, 0.0, %v1021
      %v1112 = vsel %vm1011, 0.0, %v1024
      %v1113 = vsel %vm1011, 0.0, %v1027
      %v1114 = vsel %vm1011, 0.0, %v1030
      %v1115 = vsel %vm1011, 0.0, %v1033
      %v1116 = vsel %vm1011, 0.0, %v1036
      %v1117 = vsel %vm1011, 0.0, %v1039
      %v1118 = vsel %vm1011, 0.0, %v1042
      %v1119 = vsel %vm1011, 0.0, %v1045
      %v1120 = vsel %vm1011, 0.0, %v1048
      %v1121 = vsel %vm1011, 0.0, %v1051
      %v1122 = vsel %vm1011, 0.0, %v1054
      %v1123 = vsel %vm1011, 0.0, %v1057
      %v1124 = vsel %vm1011, %v1013, 0.0
      %v1125 = vsel %vm1011, %v1016, 0.0
      %v1126 = vsel %vm1011, %v1019, 0.0
      %v1127 = vsel %vm1011, %v1022, 0.0
      %v1128 = vsel %vm1011, %v1025, 0.0
      %v1129 = vsel %vm1011, %v1028, 0.0
      %v1130 = vsel %vm1011, %v1031, 0.0
      %v1131 = vsel %vm1011, %v1034, 0.0
      %v1132 = vsel %vm1011, %v1037, 0.0
      %v1133 = vsel %vm1011, %v1040, 0.0
      %v1134 = vsel %vm1011, %v1043, 0.0
      %v1135 = vsel %vm1011, %v1046, 0.0
      %v1136 = vsel %vm1011, %v1049, 0.0
      %v1137 = vsel %vm1011, %v1052, 0.0
      %v1138 = vsel %vm1011, %v1055, 0.0
      %v1139 = vsel %vm1011, %v1058, 0.0
      %vm1172 = vcmask 1046528
      %v1173 = vrot.slane %v1108, 1
      %v1174 = vrot.slane %v1014, 1
      %v1175 = vsel %vm1172, %v1173, %v1174
      %v1176 = vrot.slane %v1124, 1
      %v1177 = vsel %vm1172, %v1174, %v1176
      %v1178 = vrot.slane %v1109, 1
      %v1179 = vrot.slane %v1017, 1
      %v1180 = vsel %vm1172, %v1178, %v1179
      %v1181 = vrot.slane %v1125, 1
      %v1182 = vsel %vm1172, %v1179, %v1181
      %v1183 = vrot.slane %v1110, 1
      %v1184 = vrot.slane %v1020, 1
      %v1185 = vsel %vm1172, %v1183, %v1184
      %v1186 = vrot.slane %v1126, 1
      %v1187 = vsel %vm1172, %v1184, %v1186
      %v1188 = vrot.slane %v1111, 1
      %v1189 = vrot.slane %v1023, 1
      %v1190 = vsel %vm1172, %v1188, %v1189
      %v1191 = vrot.slane %v1127, 1
      %v1192 = vsel %vm1172, %v1189, %v1191
      %v1193 = vrot.slane %v1112, 1
      %v1194 = vrot.slane %v1026, 1
      %v1195 = vsel %vm1172, %v1193, %v1194
      %v1196 = vrot.slane %v1128, 1
      %v1197 = vsel %vm1172, %v1194, %v1196
      %v1198 = vrot.slane %v1113, 1
      %v1199 = vrot.slane %v1029, 1
      %v1200 = vsel %vm1172, %v1198, %v1199
      %v1201 = vrot.slane %v1129, 1
      %v1202 = vsel %vm1172, %v1199, %v1201
      %v1203 = vrot.slane %v1114, 1
      %v1204 = vrot.slane %v1032, 1
      %v1205 = vsel %vm1172, %v1203, %v1204
      %v1206 = vrot.slane %v1130, 1
      %v1207 = vsel %vm1172, %v1204, %v1206
      %v1208 = vrot.slane %v1115, 1
      %v1209 = vrot.slane %v1035, 1
      %v1210 = vsel %vm1172, %v1208, %v1209
      %v1211 = vrot.slane %v1131, 1
      %v1212 = vsel %vm1172, %v1209, %v1211
      %v1213 = vrot.slane %v1116, 1
      %v1214 = vrot.slane %v1038, 1
      %v1215 = vsel %vm1172, %v1213, %v1214
      %v1216 = vrot.slane %v1132, 1
      %v1217 = vsel %vm1172, %v1214, %v1216
      %v1218 = vrot.slane %v1117, 1
      %v1219 = vrot.slane %v1041, 1
      %v1220 = vsel %vm1172, %v1218, %v1219
      %v1221 = vrot.slane %v1133, 1
      %v1222 = vsel %vm1172, %v1219, %v1221
      %v1223 = vrot.slane %v1118, 1
      %v1224 = vrot.slane %v1044, 1
      %v1225 = vsel %vm1172, %v1223, %v1224
      %v1226 = vrot.slane %v1134, 1
      %v1227 = vsel %vm1172, %v1224, %v1226
      %v1228 = vrot.slane %v1119, 1
      %v1229 = vrot.slane %v1047, 1
      %v1230 = vsel %vm1172, %v1228, %v1229
      %v1231 = vrot.slane %v1135, 1
      %v1232 = vsel %vm1172, %v1229, %v1231
      %v1233 = vrot.slane %v1120, 1
      %v1234 = vrot.slane %v1050, 1
      %v1235 = vsel %vm1172, %v1233, %v1234
      %v1236 = vrot.slane %v1136, 1
      %v1237 = vsel %vm1172, %v1234, %v1236
      %v1238 = vrot.slane %v1121, 1
      %v1239 = vrot.slane %v1053, 1
      %v1240 = vsel %vm1172, %v1238, %v1239
      %v1241 = vrot.slane %v1137, 1
      %v1242 = vsel %vm1172, %v1239, %v1241
      %v1243 = vrot.slane %v1122, 1
      %v1244 = vrot.slane %v1056, 1
      %v1245 = vsel %vm1172, %v1243, %v1244
      %v1246 = vrot.slane %v1138, 1
      %v1247 = vsel %vm1172, %v1244, %v1246
      %v1248 = vrot.slane %v1123, 1
      %v1249 = vrot.slane %v1059, 1
      %v1250 = vsel %vm1172, %v1248, %v1249
      %v1251 = vrot.slane %v1139, 1
      %v1252 = vsel %vm1172, %v1249, %v1251
      %v1285 = vadd.f32 %v1108, %v1175
      %v1286 = vadd.f32 %v1014, %v1177
      %v1287 = vadd.f32 %v1109, %v1180
      %v1288 = vadd.f32 %v1017, %v1182
      %v1289 = vadd.f32 %v1110, %v1185
      %v1290 = vadd.f32 %v1020, %v1187
      %v1291 = vadd.f32 %v1111, %v1190
      %v1292 = vadd.f32 %v1023, %v1192
      %v1293 = vadd.f32 %v1112, %v1195
      %v1294 = vadd.f32 %v1026, %v1197
      %v1295 = vadd.f32 %v1113, %v1200
      %v1296 = vadd.f32 %v1029, %v1202
      %v1297 = vadd.f32 %v1114, %v1205
      %v1298 = vadd.f32 %v1032, %v1207
      %v1299 = vadd.f32 %v1115, %v1210
      %v1300 = vadd.f32 %v1035, %v1212
      %v1301 = vadd.f32 %v1116, %v1215
      %v1302 = vadd.f32 %v1038, %v1217
      %v1303 = vadd.f32 %v1117, %v1220
      %v1304 = vadd.f32 %v1041, %v1222
      %v1305 = vadd.f32 %v1118, %v1225
      %v1306 = vadd.f32 %v1044, %v1227
      %v1307 = vadd.f32 %v1119, %v1230
      %v1308 = vadd.f32 %v1047, %v1232
      %v1309 = vadd.f32 %v1120, %v1235
      %v1310 = vadd.f32 %v1050, %v1237
      %v1311 = vadd.f32 %v1121, %v1240
      %v1312 = vadd.f32 %v1053, %v1242
      %v1313 = vadd.f32 %v1122, %v1245
      %v1314 = vadd.f32 %v1056, %v1247
      %v1315 = vadd.f32 %v1123, %v1250
      %v1316 = vadd.f32 %v1059, %v1252
      %vm1317 = vcmask 1045504
      %v1318 = vrot.slane %v1108, 2
      %v1319 = vrot.slane %v1014, 2
      %v1320 = vsel %vm1317, %v1318, %v1319
      %v1321 = vrot.slane %v1124, 2
      %v1322 = vsel %vm1317, %v1319, %v1321
      %v1323 = vrot.slane %v1109, 2
      %v1324 = vrot.slane %v1017, 2
      %v1325 = vsel %vm1317, %v1323, %v1324
      %v1326 = vrot.slane %v1125, 2
      %v1327 = vsel %vm1317, %v1324, %v1326
      %v1328 = vrot.slane %v1110, 2
      %v1329 = vrot.slane %v1020, 2
      %v1330 = vsel %vm1317, %v1328, %v1329
      %v1331 = vrot.slane %v1126, 2
      %v1332 = vsel %vm1317, %v1329, %v1331
      %v1333 = vrot.slane %v1111, 2
      %v1334 = vrot.slane %v1023, 2
      %v1335 = vsel %vm1317, %v1333, %v1334
      %v1336 = vrot.slane %v1127, 2
      %v1337 = vsel %vm1317, %v1334, %v1336
      %v1338 = vrot.slane %v1112, 2
      %v1339 = vrot.slane %v1026, 2
      %v1340 = vsel %vm1317, %v1338, %v1339
      %v1341 = vrot.slane %v1128, 2
      %v1342 = vsel %vm1317, %v1339, %v1341
      %v1343 = vrot.slane %v1113, 2
      %v1344 = vrot.slane %v1029, 2
      %v1345 = vsel %vm1317, %v1343, %v1344
      %v1346 = vrot.slane %v1129, 2
      %v1347 = vsel %vm1317, %v1344, %v1346
      %v1348 = vrot.slane %v1114, 2
      %v1349 = vrot.slane %v1032, 2
      %v1350 = vsel %vm1317, %v1348, %v1349
      %v1351 = vrot.slane %v1130, 2
      %v1352 = vsel %vm1317, %v1349, %v1351
      %v1353 = vrot.slane %v1115, 2
      %v1354 = vrot.slane %v1035, 2
      %v1355 = vsel %vm1317, %v1353, %v1354
      %v1356 = vrot.slane %v1131, 2
      %v1357 = vsel %vm1317, %v1354, %v1356
      %v1358 = vrot.slane %v1116, 2
      %v1359 = vrot.slane %v1038, 2
      %v1360 = vsel %vm1317, %v1358, %v1359
      %v1361 = vrot.slane %v1132, 2
      %v1362 = vsel %vm1317, %v1359, %v1361
      %v1363 = vrot.slane %v1117, 2
      %v1364 = vrot.slane %v1041, 2
      %v1365 = vsel %vm1317, %v1363, %v1364
      %v1366 = vrot.slane %v1133, 2
      %v1367 = vsel %vm1317, %v1364, %v1366
      %v1368 = vrot.slane %v1118, 2
      %v1369 = vrot.slane %v1044, 2
      %v1370 = vsel %vm1317, %v1368, %v1369
      %v1371 = vrot.slane %v1134, 2
      %v1372 = vsel %vm1317, %v1369, %v1371
      %v1373 = vrot.slane %v1119, 2
      %v1374 = vrot.slane %v1047, 2
      %v1375 = vsel %vm1317, %v1373, %v1374
      %v1376 = vrot.slane %v1135, 2
      %v1377 = vsel %vm1317, %v1374, %v1376
      %v1378 = vrot.slane %v1120, 2
      %v1379 = vrot.slane %v1050, 2
      %v1380 = vsel %vm1317, %v1378, %v1379
      %v1381 = vrot.slane %v1136, 2
      %v1382 = vsel %vm1317, %v1379, %v1381
      %v1383 = vrot.slane %v1121, 2
      %v1384 = vrot.slane %v1053, 2
      %v1385 = vsel %vm1317, %v1383, %v1384
      %v1386 = vrot.slane %v1137, 2
      %v1387 = vsel %vm1317, %v1384, %v1386
      %v1388 = vrot.slane %v1122, 2
      %v1389 = vrot.slane %v1056, 2
      %v1390 = vsel %vm1317, %v1388, %v1389
      %v1391 = vrot.slane %v1138, 2
      %v1392 = vsel %vm1317, %v1389, %v1391
      %v1393 = vrot.slane %v1123, 2
      %v1394 = vrot.slane %v1059, 2
      %v1395 = vsel %vm1317, %v1393, %v1394
      %v1396 = vrot.slane %v1139, 2
      %v1397 = vsel %vm1317, %v1394, %v1396
      %v1430 = vadd.f32 %v1285, %v1320
      %v1431 = vadd.f32 %v1286, %v1322
      %v1432 = vadd.f32 %v1287, %v1325
      %v1433 = vadd.f32 %v1288, %v1327
      %v1434 = vadd.f32 %v1289, %v1330
      %v1435 = vadd.f32 %v1290, %v1332
      %v1436 = vadd.f32 %v1291, %v1335
      %v1437 = vadd.f32 %v1292, %v1337
      %v1438 = vadd.f32 %v1293, %v1340
      %v1439 = vadd.f32 %v1294, %v1342
      %v1440 = vadd.f32 %v1295, %v1345
      %v1441 = vadd.f32 %v1296, %v1347
      %v1442 = vadd.f32 %v1297, %v1350
      %v1443 = vadd.f32 %v1298, %v1352
      %v1444 = vadd.f32 %v1299, %v1355
      %v1445 = vadd.f32 %v1300, %v1357
      %v1446 = vadd.f32 %v1301, %v1360
      %v1447 = vadd.f32 %v1302, %v1362
      %v1448 = vadd.f32 %v1303, %v1365
      %v1449 = vadd.f32 %v1304, %v1367
      %v1450 = vadd.f32 %v1305, %v1370
      %v1451 = vadd.f32 %v1306, %v1372
      %v1452 = vadd.f32 %v1307, %v1375
      %v1453 = vadd.f32 %v1308, %v1377
      %v1454 = vadd.f32 %v1309, %v1380
      %v1455 = vadd.f32 %v1310, %v1382
      %v1456 = vadd.f32 %v1311, %v1385
      %v1457 = vadd.f32 %v1312, %v1387
      %v1458 = vadd.f32 %v1313, %v1390
      %v1459 = vadd.f32 %v1314, %v1392
      %v1460 = vadd.f32 %v1315, %v1395
      %v1461 = vadd.f32 %v1316, %v1397
      %v1462 = vld [vmem:[%s3] sm:$0xf]
      %v1463 = vld [vmem:[%s4] sm:$0x1]
      %v1465 = vlaneseq
      %v1466 = vshrl.u32 %v1465, 7
      %v1467 = vsub.s32 0, %v1466
      %v1468 = vrot.slane %v1463, %v1467
      %v1471 = vsel %vm589, %v1430, 0
      %v1474 = vsel %vm589, %v1431, 0
      %v1477 = vsel %vm589, %v1432, 0
      %v1480 = vsel %vm589, %v1433, 0
      %v1483 = vsel %vm589, %v1434, 0
      %v1486 = vsel %vm589, %v1435, 0
      %v1489 = vsel %vm589, %v1436, 0
      %v1492 = vsel %vm589, %v1437, 0
      %v1495 = vsel %vm589, %v1438, 0
      %v1498 = vsel %vm589, %v1439, 0
      %v1501 = vsel %vm589, %v1440, 0
      %v1504 = vsel %vm589, %v1441, 0
      %v1507 = vsel %vm589, %v1442, 0
      %v1510 = vsel %vm589, %v1443, 0
      %v1513 = vsel %vm589, %v1444, 0
      %v1516 = vsel %vm589, %v1445, 0
      %v1519 = vsel %vm589, %v1446, 0
      %v1522 = vsel %vm589, %v1447, 0
      %v1525 = vsel %vm589, %v1448, 0
      %v1528 = vsel %vm589, %v1449, 0
      %v1531 = vsel %vm589, %v1450, 0
      %v1534 = vsel %vm589, %v1451, 0
      %v1537 = vsel %vm589, %v1452, 0
      %v1540 = vsel %vm589, %v1453, 0
      %v1543 = vsel %vm589, %v1454, 0
      %v1546 = vsel %vm589, %v1455, 0
      %v1549 = vsel %vm589, %v1456, 0
      %v1552 = vsel %vm589, %v1457, 0
      %v1555 = vsel %vm589, %v1458, 0
      %v1558 = vsel %vm589, %v1459, 0
      %v1561 = vsel %vm589, %v1460, 0
      %v1564 = vsel %vm589, %v1461, 0
      %v1567 = vsel %vm686, %v1462, 0
      %1569 = vmatprep.subr.mxu0 0.0
      %1570 = vmatpush1.msra.mxu0 0.0
      %1571 = vmatprep.subr.mxu0 0.0
      %1572 = vmatpush1.msra.mxu0 0.0
      %1573 = vmatprep.subr.mxu0 0.0
      %1574 = vmatpush1.msra.mxu0 0.0
      %1575 = vmatprep.subr.mxu0 0.0
      %1576 = vmatpush1.msra.mxu0 0.0
      %1577 = vmatprep.subr.mxu0 0.0
      %1578 = vmatpush1.msra.mxu0 0.0
      %1579 = vmatprep.subr.mxu0 0.0
      %1580 = vmatpush1.msra.mxu0 0.0
      %1581 = vmatprep.subr.mxu0 0.0
      %1582 = vmatpush1.msra.mxu0 0.0
      %1583 = vmatprep.subr.mxu0 0.0
      %1584 = vmatpush1.msra.mxu0 0.0
      %1585 = vmatprep.subr.mxu0 0.0
      %1586 = vmatpush1.msra.mxu0 0.0
      %1587 = vmatprep.subr.mxu0 0.0
      %1588 = vmatpush1.msra.mxu0 0.0
      %1589 = vmatprep.subr.mxu0 0.0
      %1590 = vmatpush1.msra.mxu0 0.0
      %1591 = vmatprep.subr.mxu0 0.0
      %1592 = vmatpush1.msra.mxu0 0.0
      %1593 = vmatprep.subr.mxu0 0.0
      %1594 = vmatpush1.msra.mxu0 0.0
      %1595 = vmatprep.subr.mxu0 0.0
      %1596 = vmatpush1.msra.mxu0 0.0
      %1597 = vmatprep.subr.mxu0 0.0
      %1598 = vmatpush1.msra.mxu0 0.0
      %1599 = vmatprep.subr.mxu0 0.0
      %1600 = vmatpush1.msra.mxu0 %v1567
      %1601 = vmatprep.subr.mxu0 0.0
      %1602 = vmatpush2.msra.mxu0 0.0
      %1603 = vmatprep.subr.mxu0 0.0
      %1604 = vmatpush2.msra.mxu0 0.0
      %1605 = vmatprep.subr.mxu0 0.0
      %1606 = vmatpush2.msra.mxu0 0.0
      %1607 = vmatprep.subr.mxu0 0.0
      %1608 = vmatpush2.msra.mxu0 0.0
      %1609 = vmatprep.subr.mxu0 0.0
      %1610 = vmatpush2.msra.mxu0 0.0
      %1611 = vmatprep.subr.mxu0 0.0
      %1612 = vmatpush2.msra.mxu0 0.0
      %1613 = vmatprep.subr.mxu0 0.0
      %1614 = vmatpush2.msra.mxu0 0.0
      %1615 = vmatprep.subr.mxu0 0.0
      %1616 = vmatpush2.msra.mxu0 0.0
      %1617 = vmatprep.subr.mxu0 0.0
      %1618 = vmatpush2.msra.mxu0 0.0
      %1619 = vmatprep.subr.mxu0 0.0
      %1620 = vmatpush2.msra.mxu0 0.0
      %1621 = vmatprep.subr.mxu0 0.0
      %1622 = vmatpush2.msra.mxu0 0.0
      %1623 = vmatprep.subr.mxu0 0.0
      %1624 = vmatpush2.msra.mxu0 0.0
      %1625 = vmatprep.subr.mxu0 0.0
      %1626 = vmatpush2.msra.mxu0 0.0
      %1627 = vmatprep.subr.mxu0 0.0
      %1628 = vmatpush2.msra.mxu0 0.0
      %1629 = vmatprep.subr.mxu0 0.0
      %1630 = vmatpush2.msra.mxu0 0.0
      %1631 = vmatprep.subr.mxu0 0.0
      %1632 = vmatpush2.msra.mxu0 0.0
      %1633 = vmatprep.mubr.f32.mxu0 0.0
      %1634 = vmatmul.mubr.f32.gmra.mxu0 %v1471
      %v1635 = vpop.f32.mrf.mxu0
      %v1636 = vadd.f32 %v1468, %v1635
      %v1637 = vpop.f32.mrf.mxu0
      %1638 = vmatprep.mubr.f32.mxu0 0.0
      %1639 = vmatmul.mubr.f32.gmra.mxu0 %v1474
      %v1640 = vpop.f32.mrf.mxu0
      %v1641 = vadd.f32 %v1468, %v1640
      %v1642 = vpop.f32.mrf.mxu0
      %1643 = vmatprep.mubr.f32.mxu0 0.0
      %1644 = vmatmul.mubr.f32.gmra.mxu0 %v1477
      %v1645 = vpop.f32.mrf.mxu0
      %v1646 = vadd.f32 %v1468, %v1645
      %v1647 = vpop.f32.mrf.mxu0
      %1648 = vmatprep.mubr.f32.mxu0 0.0
      %1649 = vmatmul.mubr.f32.gmra.mxu0 %v1480
      %v1650 = vpop.f32.mrf.mxu0
      %v1651 = vadd.f32 %v1468, %v1650
      %v1652 = vpop.f32.mrf.mxu0
      %1653 = vmatprep.mubr.f32.mxu0 0.0
      %1654 = vmatmul.mubr.f32.gmra.mxu0 %v1483
      %v1655 = vpop.f32.mrf.mxu0
      %v1656 = vadd.f32 %v1468, %v1655
      %v1657 = vpop.f32.mrf.mxu0
      %1658 = vmatprep.mubr.f32.mxu0 0.0
      %1659 = vmatmul.mubr.f32.gmra.mxu0 %v1486
      %v1660 = vpop.f32.mrf.mxu0
      %v1661 = vadd.f32 %v1468, %v1660
      %v1662 = vpop.f32.mrf.mxu0
      %1663 = vmatprep.mubr.f32.mxu0 0.0
      %1664 = vmatmul.mubr.f32.gmra.mxu0 %v1489
      %v1665 = vpop.f32.mrf.mxu0
      %v1666 = vadd.f32 %v1468, %v1665
      %v1667 = vpop.f32.mrf.mxu0
      %1668 = vmatprep.mubr.f32.mxu0 0.0
      %1669 = vmatmul.mubr.f32.gmra.mxu0 %v1492
      %v1670 = vpop.f32.mrf.mxu0
      %v1671 = vadd.f32 %v1468, %v1670
      %v1672 = vpop.f32.mrf.mxu0
      %1673 = vmatprep.mubr.f32.mxu0 0.0
      %1674 = vmatmul.mubr.f32.gmra.mxu0 %v1495
      %v1675 = vpop.f32.mrf.mxu0
      %v1676 = vadd.f32 %v1468, %v1675
      %v1677 = vpop.f32.mrf.mxu0
      %1678 = vmatprep.mubr.f32.mxu0 0.0
      %1679 = vmatmul.mubr.f32.gmra.mxu0 %v1498
      %v1680 = vpop.f32.mrf.mxu0
      %v1681 = vadd.f32 %v1468, %v1680
      %v1682 = vpop.f32.mrf.mxu0
      %1683 = vmatprep.mubr.f32.mxu0 0.0
      %1684 = vmatmul.mubr.f32.gmra.mxu0 %v1501
      %v1685 = vpop.f32.mrf.mxu0
      %v1686 = vadd.f32 %v1468, %v1685
      %v1687 = vpop.f32.mrf.mxu0
      %1688 = vmatprep.mubr.f32.mxu0 0.0
      %1689 = vmatmul.mubr.f32.gmra.mxu0 %v1504
      %v1690 = vpop.f32.mrf.mxu0
      %v1691 = vadd.f32 %v1468, %v1690
      %v1692 = vpop.f32.mrf.mxu0
      %1693 = vmatprep.mubr.f32.mxu0 0.0
      %1694 = vmatmul.mubr.f32.gmra.mxu0 %v1507
      %v1695 = vpop.f32.mrf.mxu0
      %v1696 = vadd.f32 %v1468, %v1695
      %v1697 = vpop.f32.mrf.mxu0
      %1698 = vmatprep.mubr.f32.mxu0 0.0
      %1699 = vmatmul.mubr.f32.gmra.mxu0 %v1510
      %v1700 = vpop.f32.mrf.mxu0
      %v1701 = vadd.f32 %v1468, %v1700
      %v1702 = vpop.f32.mrf.mxu0
      %1703 = vmatprep.mubr.f32.mxu0 0.0
      %1704 = vmatmul.mubr.f32.gmra.mxu0 %v1513
      %v1705 = vpop.f32.mrf.mxu0
      %v1706 = vadd.f32 %v1468, %v1705
      %v1707 = vpop.f32.mrf.mxu0
      %1708 = vmatprep.mubr.f32.mxu0 0.0
      %1709 = vmatmul.mubr.f32.gmra.mxu0 %v1516
      %v1710 = vpop.f32.mrf.mxu0
      %v1711 = vadd.f32 %v1468, %v1710
      %v1712 = vpop.f32.mrf.mxu0
      %1713 = vmatprep.mubr.f32.mxu0 0.0
      %1714 = vmatmul.mubr.f32.gmra.mxu0 %v1519
      %v1715 = vpop.f32.mrf.mxu0
      %v1716 = vadd.f32 %v1468, %v1715
      %v1717 = vpop.f32.mrf.mxu0
      %1718 = vmatprep.mubr.f32.mxu0 0.0
      %1719 = vmatmul.mubr.f32.gmra.mxu0 %v1522
      %v1720 = vpop.f32.mrf.mxu0
      %v1721 = vadd.f32 %v1468, %v1720
      %v1722 = vpop.f32.mrf.mxu0
      %1723 = vmatprep.mubr.f32.mxu0 0.0
      %1724 = vmatmul.mubr.f32.gmra.mxu0 %v1525
      %v1725 = vpop.f32.mrf.mxu0
      %v1726 = vadd.f32 %v1468, %v1725
      %v1727 = vpop.f32.mrf.mxu0
      %1728 = vmatprep.mubr.f32.mxu0 0.0
      %1729 = vmatmul.mubr.f32.gmra.mxu0 %v1528
      %v1730 = vpop.f32.mrf.mxu0
      %v1731 = vadd.f32 %v1468, %v1730
      %v1732 = vpop.f32.mrf.mxu0
      %1733 = vmatprep.mubr.f32.mxu0 0.0
      %1734 = vmatmul.mubr.f32.gmra.mxu0 %v1531
      %v1735 = vpop.f32.mrf.mxu0
      %v1736 = vadd.f32 %v1468, %v1735
      %v1737 = vpop.f32.mrf.mxu0
      %1738 = vmatprep.mubr.f32.mxu0 0.0
      %1739 = vmatmul.mubr.f32.gmra.mxu0 %v1534
      %v1740 = vpop.f32.mrf.mxu0
      %v1741 = vadd.f32 %v1468, %v1740
      %v1742 = vpop.f32.mrf.mxu0
      %1743 = vmatprep.mubr.f32.mxu0 0.0
      %1744 = vmatmul.mubr.f32.gmra.mxu0 %v1537
      %v1745 = vpop.f32.mrf.mxu0
      %v1746 = vadd.f32 %v1468, %v1745
      %v1747 = vpop.f32.mrf.mxu0
      %1748 = vmatprep.mubr.f32.mxu0 0.0
      %1749 = vmatmul.mubr.f32.gmra.mxu0 %v1540
      %v1750 = vpop.f32.mrf.mxu0
      %v1751 = vadd.f32 %v1468, %v1750
      %v1752 = vpop.f32.mrf.mxu0
      %1753 = vmatprep.mubr.f32.mxu0 0.0
      %1754 = vmatmul.mubr.f32.gmra.mxu0 %v1543
      %v1755 = vpop.f32.mrf.mxu0
      %v1756 = vadd.f32 %v1468, %v1755
      %v1757 = vpop.f32.mrf.mxu0
      %1758 = vmatprep.mubr.f32.mxu0 0.0
      %1759 = vmatmul.mubr.f32.gmra.mxu0 %v1546
      %v1760 = vpop.f32.mrf.mxu0
      %v1761 = vadd.f32 %v1468, %v1760
      %v1762 = vpop.f32.mrf.mxu0
      %1763 = vmatprep.mubr.f32.mxu0 0.0
      %1764 = vmatmul.mubr.f32.gmra.mxu0 %v1549
      %v1765 = vpop.f32.mrf.mxu0
      %v1766 = vadd.f32 %v1468, %v1765
      %v1767 = vpop.f32.mrf.mxu0
      %1768 = vmatprep.mubr.f32.mxu0 0.0
      %1769 = vmatmul.mubr.f32.gmra.mxu0 %v1552
      %v1770 = vpop.f32.mrf.mxu0
      %v1771 = vadd.f32 %v1468, %v1770
      %v1772 = vpop.f32.mrf.mxu0
      %1773 = vmatprep.mubr.f32.mxu0 0.0
      %1774 = vmatmul.mubr.f32.gmra.mxu0 %v1555
      %v1775 = vpop.f32.mrf.mxu0
      %v1776 = vadd.f32 %v1468, %v1775
      %v1777 = vpop.f32.mrf.mxu0
      %1778 = vmatprep.mubr.f32.mxu0 0.0
      %1779 = vmatmul.mubr.f32.gmra.mxu0 %v1558
      %v1780 = vpop.f32.mrf.mxu0
      %v1781 = vadd.f32 %v1468, %v1780
      %v1782 = vpop.f32.mrf.mxu0
      %1783 = vmatprep.mubr.f32.mxu0 0.0
      %1784 = vmatmul.mubr.f32.gmra.mxu0 %v1561
      %v1785 = vpop.f32.mrf.mxu0
      %v1786 = vadd.f32 %v1468, %v1785
      %v1787 = vpop.f32.mrf.mxu0
      %1788 = vmatprep.mubr.f32.mxu0 0.0
      %1789 = vmatmul.mubr.f32.gmra.mxu0 %v1564
      %v1790 = vpop.f32.mrf.mxu0
      %v1791 = vadd.f32 %v1468, %v1790
      %v1792 = vpop.f32.mrf.mxu0
      %1793 = vdwg.mxu0
      %vm1826 = vcmask 1042432
      %v1827 = vrot.slane %v757, 5
      %v1828 = vrot.slane %v762, 5
      %v1829 = vsel %vm1826, %v1827, %v1828
      %v1830 = vrot.slane %v767, 5
      %v1831 = vrot.slane %v772, 5
      %v1832 = vsel %vm1826, %v1830, %v1831
      %v1833 = vrot.slane %v777, 5
      %v1834 = vrot.slane %v782, 5
      %v1835 = vsel %vm1826, %v1833, %v1834
      %v1836 = vrot.slane %v787, 5
      %v1837 = vrot.slane %v792, 5
      %v1838 = vsel %vm1826, %v1836, %v1837
      %v1839 = vrot.slane %v797, 5
      %v1840 = vrot.slane %v802, 5
      %v1841 = vsel %vm1826, %v1839, %v1840
      %v1842 = vrot.slane %v807, 5
      %v1843 = vrot.slane %v812, 5
      %v1844 = vsel %vm1826, %v1842, %v1843
      %v1845 = vrot.slane %v817, 5
      %v1846 = vrot.slane %v822, 5
      %v1847 = vsel %vm1826, %v1845, %v1846
      %v1848 = vrot.slane %v827, 5
      %v1849 = vrot.slane %v832, 5
      %v1850 = vsel %vm1826, %v1848, %v1849
      %v1851 = vrot.slane %v837, 5
      %v1852 = vrot.slane %v842, 5
      %v1853 = vsel %vm1826, %v1851, %v1852
      %v1854 = vrot.slane %v847, 5
      %v1855 = vrot.slane %v852, 5
      %v1856 = vsel %vm1826, %v1854, %v1855
      %v1857 = vrot.slane %v857, 5
      %v1858 = vrot.slane %v862, 5
      %v1859 = vsel %vm1826, %v1857, %v1858
      %v1860 = vrot.slane %v867, 5
      %v1861 = vrot.slane %v872, 5
      %v1862 = vsel %vm1826, %v1860, %v1861
      %v1863 = vrot.slane %v877, 5
      %v1864 = vrot.slane %v882, 5
      %v1865 = vsel %vm1826, %v1863, %v1864
      %v1866 = vrot.slane %v887, 5
      %v1867 = vrot.slane %v892, 5
      %v1868 = vsel %vm1826, %v1866, %v1867
      %v1869 = vrot.slane %v897, 5
      %v1870 = vrot.slane %v902, 5
      %v1871 = vsel %vm1826, %v1869, %v1870
      %v1872 = vrot.slane %v907, 5
      %v1873 = vrot.slane %v912, 5
      %v1874 = vsel %vm1826, %v1872, %v1873
      %v1923 = vsel %vm1826, 0.0, %v1827
      %v1924 = vsel %vm1826, 0.0, %v1830
      %v1925 = vsel %vm1826, 0.0, %v1833
      %v1926 = vsel %vm1826, 0.0, %v1836
      %v1927 = vsel %vm1826, 0.0, %v1839
      %v1928 = vsel %vm1826, 0.0, %v1842
      %v1929 = vsel %vm1826, 0.0, %v1845
      %v1930 = vsel %vm1826, 0.0, %v1848
      %v1931 = vsel %vm1826, 0.0, %v1851
      %v1932 = vsel %vm1826, 0.0, %v1854
      %v1933 = vsel %vm1826, 0.0, %v1857
      %v1934 = vsel %vm1826, 0.0, %v1860
      %v1935 = vsel %vm1826, 0.0, %v1863
      %v1936 = vsel %vm1826, 0.0, %v1866
      %v1937 = vsel %vm1826, 0.0, %v1869
      %v1938 = vsel %vm1826, 0.0, %v1872
      %v1939 = vsel %vm1826, %v1828, 0.0
      %v1940 = vsel %vm1826, %v1831, 0.0
      %v1941 = vsel %vm1826, %v1834, 0.0
      %v1942 = vsel %vm1826, %v1837, 0.0
      %v1943 = vsel %vm1826, %v1840, 0.0
      %v1944 = vsel %vm1826, %v1843, 0.0
      %v1945 = vsel %vm1826, %v1846, 0.0
      %v1946 = vsel %vm1826, %v1849, 0.0
      %v1947 = vsel %vm1826, %v1852, 0.0
      %v1948 = vsel %vm1826, %v1855, 0.0
      %v1949 = vsel %vm1826, %v1858, 0.0
      %v1950 = vsel %vm1826, %v1861, 0.0
      %v1951 = vsel %vm1826, %v1864, 0.0
      %v1952 = vsel %vm1826, %v1867, 0.0
      %v1953 = vsel %vm1826, %v1870, 0.0
      %v1954 = vsel %vm1826, %v1873, 0.0
      %v1987 = vrot.slane %v1923, 1
      %v1988 = vrot.slane %v1829, 1
      %v1989 = vsel %vm1172, %v1987, %v1988
      %v1990 = vrot.slane %v1939, 1
      %v1991 = vsel %vm1172, %v1988, %v1990
      %v1992 = vrot.slane %v1924, 1
      %v1993 = vrot.slane %v1832, 1
      %v1994 = vsel %vm1172, %v1992, %v1993
      %v1995 = vrot.slane %v1940, 1
      %v1996 = vsel %vm1172, %v1993, %v1995
      %v1997 = vrot.slane %v1925, 1
      %v1998 = vrot.slane %v1835, 1
      %v1999 = vsel %vm1172, %v1997, %v1998
      %v2000 = vrot.slane %v1941, 1
      %v2001 = vsel %vm1172, %v1998, %v2000
      %v2002 = vrot.slane %v1926, 1
      %v2003 = vrot.slane %v1838, 1
      %v2004 = vsel %vm1172, %v2002, %v2003
      %v2005 = vrot.slane %v1942, 1
      %v2006 = vsel %vm1172, %v2003, %v2005
      %v2007 = vrot.slane %v1927, 1
      %v2008 = vrot.slane %v1841, 1
      %v2009 = vsel %vm1172, %v2007, %v2008
      %v2010 = vrot.slane %v1943, 1
      %v2011 = vsel %vm1172, %v2008, %v2010
      %v2012 = vrot.slane %v1928, 1
      %v2013 = vrot.slane %v1844, 1
      %v2014 = vsel %vm1172, %v2012, %v2013
      %v2015 = vrot.slane %v1944, 1
      %v2016 = vsel %vm1172, %v2013, %v2015
      %v2017 = vrot.slane %v1929, 1
      %v2018 = vrot.slane %v1847, 1
      %v2019 = vsel %vm1172, %v2017, %v2018
      %v2020 = vrot.slane %v1945, 1
      %v2021 = vsel %vm1172, %v2018, %v2020
      %v2022 = vrot.slane %v1930, 1
      %v2023 = vrot.slane %v1850, 1
      %v2024 = vsel %vm1172, %v2022, %v2023
      %v2025 = vrot.slane %v1946, 1
      %v2026 = vsel %vm1172, %v2023, %v2025
      %v2027 = vrot.slane %v1931, 1
      %v2028 = vrot.slane %v1853, 1
      %v2029 = vsel %vm1172, %v2027, %v2028
      %v2030 = vrot.slane %v1947, 1
      %v2031 = vsel %vm1172, %v2028, %v2030
      %v2032 = vrot.slane %v1932, 1
      %v2033 = vrot.slane %v1856, 1
      %v2034 = vsel %vm1172, %v2032, %v2033
      %v2035 = vrot.slane %v1948, 1
      %v2036 = vsel %vm1172, %v2033, %v2035
      %v2037 = vrot.slane %v1933, 1
      %v2038 = vrot.slane %v1859, 1
      %v2039 = vsel %vm1172, %v2037, %v2038
      %v2040 = vrot.slane %v1949, 1
      %v2041 = vsel %vm1172, %v2038, %v2040
      %v2042 = vrot.slane %v1934, 1
      %v2043 = vrot.slane %v1862, 1
      %v2044 = vsel %vm1172, %v2042, %v2043
      %v2045 = vrot.slane %v1950, 1
      %v2046 = vsel %vm1172, %v2043, %v2045
      %v2047 = vrot.slane %v1935, 1
      %v2048 = vrot.slane %v1865, 1
      %v2049 = vsel %vm1172, %v2047, %v2048
      %v2050 = vrot.slane %v1951, 1
      %v2051 = vsel %vm1172, %v2048, %v2050
      %v2052 = vrot.slane %v1936, 1
      %v2053 = vrot.slane %v1868, 1
      %v2054 = vsel %vm1172, %v2052, %v2053
      %v2055 = vrot.slane %v1952, 1
      %v2056 = vsel %vm1172, %v2053, %v2055
      %v2057 = vrot.slane %v1937, 1
      %v2058 = vrot.slane %v1871, 1
      %v2059 = vsel %vm1172, %v2057, %v2058
      %v2060 = vrot.slane %v1953, 1
      %v2061 = vsel %vm1172, %v2058, %v2060
      %v2062 = vrot.slane %v1938, 1
      %v2063 = vrot.slane %v1874, 1
      %v2064 = vsel %vm1172, %v2062, %v2063
      %v2065 = vrot.slane %v1954, 1
      %v2066 = vsel %vm1172, %v2063, %v2065
      %2067 = vrot.lane.b32.xlu0 %v1989, 4
      %v2068 = vpop.permute.xlu0 %2067
      %2069 = vrot.lane.b32.xlu0 %v1991, 4
      %v2070 = vpop.permute.xlu0 %2069
      %2071 = vrot.lane.b32.xlu0 %v1994, 4
      %v2072 = vpop.permute.xlu0 %2071
      %2073 = vrot.lane.b32.xlu0 %v1996, 4
      %v2074 = vpop.permute.xlu0 %2073
      %2075 = vrot.lane.b32.xlu0 %v1999, 4
      %v2076 = vpop.permute.xlu0 %2075
      %2077 = vrot.lane.b32.xlu0 %v2001, 4
      %v2078 = vpop.permute.xlu0 %2077
      %2079 = vrot.lane.b32.xlu0 %v2004, 4
      %v2080 = vpop.permute.xlu0 %2079
      %2081 = vrot.lane.b32.xlu0 %v2006, 4
      %v2082 = vpop.permute.xlu0 %2081
      %2083 = vrot.lane.b32.xlu0 %v2009, 4
      %v2084 = vpop.permute.xlu0 %2083
      %2085 = vrot.lane.b32.xlu0 %v2011, 4
      %v2086 = vpop.permute.xlu0 %2085
      %2087 = vrot.lane.b32.xlu0 %v2014, 4
      %v2088 = vpop.permute.xlu0 %2087
      %2089 = vrot.lane.b32.xlu0 %v2016, 4
      %v2090 = vpop.permute.xlu0 %2089
      %2091 = vrot.lane.b32.xlu0 %v2019, 4
      %v2092 = vpop.permute.xlu0 %2091
      %2093 = vrot.lane.b32.xlu0 %v2021, 4
      %v2094 = vpop.permute.xlu0 %2093
      %2095 = vrot.lane.b32.xlu0 %v2024, 4
      %v2096 = vpop.permute.xlu0 %2095
      %2097 = vrot.lane.b32.xlu0 %v2026, 4
      %v2098 = vpop.permute.xlu0 %2097
      %2099 = vrot.lane.b32.xlu0 %v2029, 4
      %v2100 = vpop.permute.xlu0 %2099
      %2101 = vrot.lane.b32.xlu0 %v2031, 4
      %v2102 = vpop.permute.xlu0 %2101
      %2103 = vrot.lane.b32.xlu0 %v2034, 4
      %v2104 = vpop.permute.xlu0 %2103
      %2105 = vrot.lane.b32.xlu0 %v2036, 4
      %v2106 = vpop.permute.xlu0 %2105
      %2107 = vrot.lane.b32.xlu0 %v2039, 4
      %v2108 = vpop.permute.xlu0 %2107
      %2109 = vrot.lane.b32.xlu0 %v2041, 4
      %v2110 = vpop.permute.xlu0 %2109
      %2111 = vrot.lane.b32.xlu0 %v2044, 4
      %v2112 = vpop.permute.xlu0 %2111
      %2113 = vrot.lane.b32.xlu0 %v2046, 4
      %v2114 = vpop.permute.xlu0 %2113
      %2115 = vrot.lane.b32.xlu0 %v2049, 4
      %v2116 = vpop.permute.xlu0 %2115
      %2117 = vrot.lane.b32.xlu0 %v2051, 4
      %v2118 = vpop.permute.xlu0 %2117
      %2119 = vrot.lane.b32.xlu0 %v2054, 4
      %v2120 = vpop.permute.xlu0 %2119
      %2121 = vrot.lane.b32.xlu0 %v2056, 4
      %v2122 = vpop.permute.xlu0 %2121
      %2123 = vrot.lane.b32.xlu0 %v2059, 4
      %v2124 = vpop.permute.xlu0 %2123
      %2125 = vrot.lane.b32.xlu0 %v2061, 4
      %v2126 = vpop.permute.xlu0 %2125
      %2127 = vrot.lane.b32.xlu0 %v2064, 4
      %v2128 = vpop.permute.xlu0 %2127
      %2129 = vrot.lane.b32.xlu0 %v2066, 4
      %v2130 = vpop.permute.xlu0 %2129
      %v2163 = vrot.slane %v1923, 2
      %v2164 = vrot.slane %v1829, 2
      %v2165 = vsel %vm1317, %v2163, %v2164
      %v2166 = vrot.slane %v1939, 2
      %v2167 = vsel %vm1317, %v2164, %v2166
      %v2168 = vrot.slane %v1924, 2
      %v2169 = vrot.slane %v1832, 2
      %v2170 = vsel %vm1317, %v2168, %v2169
      %v2171 = vrot.slane %v1940, 2
      %v2172 = vsel %vm1317, %v2169, %v2171
      %v2173 = vrot.slane %v1925, 2
      %v2174 = vrot.slane %v1835, 2
      %v2175 = vsel %vm1317, %v2173, %v2174
      %v2176 = vrot.slane %v1941, 2
      %v2177 = vsel %vm1317, %v2174, %v2176
      %v2178 = vrot.slane %v1926, 2
      %v2179 = vrot.slane %v1838, 2
      %v2180 = vsel %vm1317, %v2178, %v2179
      %v2181 = vrot.slane %v1942, 2
      %v2182 = vsel %vm1317, %v2179, %v2181
      %v2183 = vrot.slane %v1927, 2
      %v2184 = vrot.slane %v1841, 2
      %v2185 = vsel %vm1317, %v2183, %v2184
      %v2186 = vrot.slane %v1943, 2
      %v2187 = vsel %vm1317, %v2184, %v2186
      %v2188 = vrot.slane %v1928, 2
      %v2189 = vrot.slane %v1844, 2
      %v2190 = vsel %vm1317, %v2188, %v2189
      %v2191 = vrot.slane %v1944, 2
      %v2192 = vsel %vm1317, %v2189, %v2191
      %v2193 = vrot.slane %v1929, 2
      %v2194 = vrot.slane %v1847, 2
      %v2195 = vsel %vm1317, %v2193, %v2194
      %v2196 = vrot.slane %v1945, 2
      %v2197 = vsel %vm1317, %v2194, %v2196
      %v2198 = vrot.slane %v1930, 2
      %v2199 = vrot.slane %v1850, 2
      %v2200 = vsel %vm1317, %v2198, %v2199
      %v2201 = vrot.slane %v1946, 2
      %v2202 = vsel %vm1317, %v2199, %v2201
      %v2203 = vrot.slane %v1931, 2
      %v2204 = vrot.slane %v1853, 2
      %v2205 = vsel %vm1317, %v2203, %v2204
      %v2206 = vrot.slane %v1947, 2
      %v2207 = vsel %vm1317, %v2204, %v2206
      %v2208 = vrot.slane %v1932, 2
      %v2209 = vrot.slane %v1856, 2
      %v2210 = vsel %vm1317, %v2208, %v2209
      %v2211 = vrot.slane %v1948, 2
      %v2212 = vsel %vm1317, %v2209, %v2211
      %v2213 = vrot.slane %v1933, 2
      %v2214 = vrot.slane %v1859, 2
      %v2215 = vsel %vm1317, %v2213, %v2214
      %v2216 = vrot.slane %v1949, 2
      %v2217 = vsel %vm1317, %v2214, %v2216
      %v2218 = vrot.slane %v1934, 2
      %v2219 = vrot.slane %v1862, 2
      %v2220 = vsel %vm1317, %v2218, %v2219
      %v2221 = vrot.slane %v1950, 2
      %v2222 = vsel %vm1317, %v2219, %v2221
      %v2223 = vrot.slane %v1935, 2
      %v2224 = vrot.slane %v1865, 2
      %v2225 = vsel %vm1317, %v2223, %v2224
      %v2226 = vrot.slane %v1951, 2
      %v2227 = vsel %vm1317, %v2224, %v2226
      %v2228 = vrot.slane %v1936, 2
      %v2229 = vrot.slane %v1868, 2
      %v2230 = vsel %vm1317, %v2228, %v2229
      %v2231 = vrot.slane %v1952, 2
      %v2232 = vsel %vm1317, %v2229, %v2231
      %v2233 = vrot.slane %v1937, 2
      %v2234 = vrot.slane %v1871, 2
      %v2235 = vsel %vm1317, %v2233, %v2234
      %v2236 = vrot.slane %v1953, 2
      %v2237 = vsel %vm1317, %v2234, %v2236
      %v2238 = vrot.slane %v1938, 2
      %v2239 = vrot.slane %v1874, 2
      %v2240 = vsel %vm1317, %v2238, %v2239
      %v2241 = vrot.slane %v1954, 2
      %v2242 = vsel %vm1317, %v2239, %v2241
      %2243 = vrot.lane.b32.xlu0 %v2165, 8
      %v2244 = vpop.permute.xlu0 %2243
      %2245 = vrot.lane.b32.xlu0 %v2167, 8
      %v2246 = vpop.permute.xlu0 %2245
      %2247 = vrot.lane.b32.xlu0 %v2170, 8
      %v2248 = vpop.permute.xlu0 %2247
      %2249 = vrot.lane.b32.xlu0 %v2172, 8
      %v2250 = vpop.permute.xlu0 %2249
      %2251 = vrot.lane.b32.xlu0 %v2175, 8
      %v2252 = vpop.permute.xlu0 %2251
      %2253 = vrot.lane.b32.xlu0 %v2177, 8
      %v2254 = vpop.permute.xlu0 %2253
      %2255 = vrot.lane.b32.xlu0 %v2180, 8
      %v2256 = vpop.permute.xlu0 %2255
      %2257 = vrot.lane.b32.xlu0 %v2182, 8
      %v2258 = vpop.permute.xlu0 %2257
      %2259 = vrot.lane.b32.xlu0 %v2185, 8
      %v2260 = vpop.permute.xlu0 %2259
      %2261 = vrot.lane.b32.xlu0 %v2187, 8
      %v2262 = vpop.permute.xlu0 %2261
      %2263 = vrot.lane.b32.xlu0 %v2190, 8
      %v2264 = vpop.permute.xlu0 %2263
      %2265 = vrot.lane.b32.xlu0 %v2192, 8
      %v2266 = vpop.permute.xlu0 %2265
      %2267 = vrot.lane.b32.xlu0 %v2195, 8
      %v2268 = vpop.permute.xlu0 %2267
      %2269 = vrot.lane.b32.xlu0 %v2197, 8
      %v2270 = vpop.permute.xlu0 %2269
      %2271 = vrot.lane.b32.xlu0 %v2200, 8
      %v2272 = vpop.permute.xlu0 %2271
      %2273 = vrot.lane.b32.xlu0 %v2202, 8
      %v2274 = vpop.permute.xlu0 %2273
      %2275 = vrot.lane.b32.xlu0 %v2205, 8
      %v2276 = vpop.permute.xlu0 %2275
      %2277 = vrot.lane.b32.xlu0 %v2207, 8
      %v2278 = vpop.permute.xlu0 %2277
      %2279 = vrot.lane.b32.xlu0 %v2210, 8
      %v2280 = vpop.permute.xlu0 %2279
      %2281 = vrot.lane.b32.xlu0 %v2212, 8
      %v2282 = vpop.permute.xlu0 %2281
      %2283 = vrot.lane.b32.xlu0 %v2215, 8
      %v2284 = vpop.permute.xlu0 %2283
      %2285 = vrot.lane.b32.xlu0 %v2217, 8
      %v2286 = vpop.permute.xlu0 %2285
      %2287 = vrot.lane.b32.xlu0 %v2220, 8
      %v2288 = vpop.permute.xlu0 %2287
      %2289 = vrot.lane.b32.xlu0 %v2222, 8
      %v2290 = vpop.permute.xlu0 %2289
      %2291 = vrot.lane.b32.xlu0 %v2225, 8
      %v2292 = vpop.permute.xlu0 %2291
      %2293 = vrot.lane.b32.xlu0 %v2227, 8
      %v2294 = vpop.permute.xlu0 %2293
      %2295 = vrot.lane.b32.xlu0 %v2230, 8
      %v2296 = vpop.permute.xlu0 %2295
      %2297 = vrot.lane.b32.xlu0 %v2232, 8
      %v2298 = vpop.permute.xlu0 %2297
      %2299 = vrot.lane.b32.xlu0 %v2235, 8
      %v2300 = vpop.permute.xlu0 %2299
      %2301 = vrot.lane.b32.xlu0 %v2237, 8
      %v2302 = vpop.permute.xlu0 %2301
      %2303 = vrot.lane.b32.xlu0 %v2240, 8
      %v2304 = vpop.permute.xlu0 %2303
      %2305 = vrot.lane.b32.xlu0 %v2242, 8
      %v2306 = vpop.permute.xlu0 %2305
      %vm2339 = vcmask 1044480
      %v2340 = vrot.slane %v1923, 3
      %v2341 = vrot.slane %v1829, 3
      %v2342 = vsel %vm2339, %v2340, %v2341
      %v2343 = vrot.slane %v1939, 3
      %v2344 = vsel %vm2339, %v2341, %v2343
      %v2345 = vrot.slane %v1924, 3
      %v2346 = vrot.slane %v1832, 3
      %v2347 = vsel %vm2339, %v2345, %v2346
      %v2348 = vrot.slane %v1940, 3
      %v2349 = vsel %vm2339, %v2346, %v2348
      %v2350 = vrot.slane %v1925, 3
      %v2351 = vrot.slane %v1835, 3
      %v2352 = vsel %vm2339, %v2350, %v2351
      %v2353 = vrot.slane %v1941, 3
      %v2354 = vsel %vm2339, %v2351, %v2353
      %v2355 = vrot.slane %v1926, 3
      %v2356 = vrot.slane %v1838, 3
      %v2357 = vsel %vm2339, %v2355, %v2356
      %v2358 = vrot.slane %v1942, 3
      %v2359 = vsel %vm2339, %v2356, %v2358
      %v2360 = vrot.slane %v1927, 3
      %v2361 = vrot.slane %v1841, 3
      %v2362 = vsel %vm2339, %v2360, %v2361
      %v2363 = vrot.slane %v1943, 3
      %v2364 = vsel %vm2339, %v2361, %v2363
      %v2365 = vrot.slane %v1928, 3
      %v2366 = vrot.slane %v1844, 3
      %v2367 = vsel %vm2339, %v2365, %v2366
      %v2368 = vrot.slane %v1944, 3
      %v2369 = vsel %vm2339, %v2366, %v2368
      %v2370 = vrot.slane %v1929, 3
      %v2371 = vrot.slane %v1847, 3
      %v2372 = vsel %vm2339, %v2370, %v2371
      %v2373 = vrot.slane %v1945, 3
      %v2374 = vsel %vm2339, %v2371, %v2373
      %v2375 = vrot.slane %v1930, 3
      %v2376 = vrot.slane %v1850, 3
      %v2377 = vsel %vm2339, %v2375, %v2376
      %v2378 = vrot.slane %v1946, 3
      %v2379 = vsel %vm2339, %v2376, %v2378
      %v2380 = vrot.slane %v1931, 3
      %v2381 = vrot.slane %v1853, 3
      %v2382 = vsel %vm2339, %v2380, %v2381
      %v2383 = vrot.slane %v1947, 3
      %v2384 = vsel %vm2339, %v2381, %v2383
      %v2385 = vrot.slane %v1932, 3
      %v2386 = vrot.slane %v1856, 3
      %v2387 = vsel %vm2339, %v2385, %v2386
      %v2388 = vrot.slane %v1948, 3
      %v2389 = vsel %vm2339, %v2386, %v2388
      %v2390 = vrot.slane %v1933, 3
      %v2391 = vrot.slane %v1859, 3
      %v2392 = vsel %vm2339, %v2390, %v2391
      %v2393 = vrot.slane %v1949, 3
      %v2394 = vsel %vm2339, %v2391, %v2393
      %v2395 = vrot.slane %v1934, 3
      %v2396 = vrot.slane %v1862, 3
      %v2397 = vsel %vm2339, %v2395, %v2396
      %v2398 = vrot.slane %v1950, 3
      %v2399 = vsel %vm2339, %v2396, %v2398
      %v2400 = vrot.slane %v1935, 3
      %v2401 = vrot.slane %v1865, 3
      %v2402 = vsel %vm2339, %v2400, %v2401
      %v2403 = vrot.slane %v1951, 3
      %v2404 = vsel %vm2339, %v2401, %v2403
      %v2405 = vrot.slane %v1936, 3
      %v2406 = vrot.slane %v1868, 3
      %v2407 = vsel %vm2339, %v2405, %v2406
      %v2408 = vrot.slane %v1952, 3
      %v2409 = vsel %vm2339, %v2406, %v2408
      %v2410 = vrot.slane %v1937, 3
      %v2411 = vrot.slane %v1871, 3
      %v2412 = vsel %vm2339, %v2410, %v2411
      %v2413 = vrot.slane %v1953, 3
      %v2414 = vsel %vm2339, %v2411, %v2413
      %v2415 = vrot.slane %v1938, 3
      %v2416 = vrot.slane %v1874, 3
      %v2417 = vsel %vm2339, %v2415, %v2416
      %v2418 = vrot.slane %v1954, 3
      %v2419 = vsel %vm2339, %v2416, %v2418
      %2420 = vrot.lane.b32.xlu0 %v2342, 12
      %v2421 = vpop.permute.xlu0 %2420
      %2422 = vrot.lane.b32.xlu0 %v2344, 12
      %v2423 = vpop.permute.xlu0 %2422
      %2424 = vrot.lane.b32.xlu0 %v2347, 12
      %v2425 = vpop.permute.xlu0 %2424
      %2426 = vrot.lane.b32.xlu0 %v2349, 12
      %v2427 = vpop.permute.xlu0 %2426
      %2428 = vrot.lane.b32.xlu0 %v2352, 12
      %v2429 = vpop.permute.xlu0 %2428
      %2430 = vrot.lane.b32.xlu0 %v2354, 12
      %v2431 = vpop.permute.xlu0 %2430
      %2432 = vrot.lane.b32.xlu0 %v2357, 12
      %v2433 = vpop.permute.xlu0 %2432
      %2434 = vrot.lane.b32.xlu0 %v2359, 12
      %v2435 = vpop.permute.xlu0 %2434
      %2436 = vrot.lane.b32.xlu0 %v2362, 12
      %v2437 = vpop.permute.xlu0 %2436
      %2438 = vrot.lane.b32.xlu0 %v2364, 12
      %v2439 = vpop.permute.xlu0 %2438
      %2440 = vrot.lane.b32.xlu0 %v2367, 12
      %v2441 = vpop.permute.xlu0 %2440
      %2442 = vrot.lane.b32.xlu0 %v2369, 12
      %v2443 = vpop.permute.xlu0 %2442
      %2444 = vrot.lane.b32.xlu0 %v2372, 12
      %v2445 = vpop.permute.xlu0 %2444
      %2446 = vrot.lane.b32.xlu0 %v2374, 12
      %v2447 = vpop.permute.xlu0 %2446
      %2448 = vrot.lane.b32.xlu0 %v2377, 12
      %v2449 = vpop.permute.xlu0 %2448
      %2450 = vrot.lane.b32.xlu0 %v2379, 12
      %v2451 = vpop.permute.xlu0 %2450
      %2452 = vrot.lane.b32.xlu0 %v2382, 12
      %v2453 = vpop.permute.xlu0 %2452
      %2454 = vrot.lane.b32.xlu0 %v2384, 12
      %v2455 = vpop.permute.xlu0 %2454
      %2456 = vrot.lane.b32.xlu0 %v2387, 12
      %v2457 = vpop.permute.xlu0 %2456
      %2458 = vrot.lane.b32.xlu0 %v2389, 12
      %v2459 = vpop.permute.xlu0 %2458
      %2460 = vrot.lane.b32.xlu0 %v2392, 12
      %v2461 = vpop.permute.xlu0 %2460
      %2462 = vrot.lane.b32.xlu0 %v2394, 12
      %v2463 = vpop.permute.xlu0 %2462
      %2464 = vrot.lane.b32.xlu0 %v2397, 12
      %v2465 = vpop.permute.xlu0 %2464
      %2466 = vrot.lane.b32.xlu0 %v2399, 12
      %v2467 = vpop.permute.xlu0 %2466
      %2468 = vrot.lane.b32.xlu0 %v2402, 12
      %v2469 = vpop.permute.xlu0 %2468
      %2470 = vrot.lane.b32.xlu0 %v2404, 12
      %v2471 = vpop.permute.xlu0 %2470
      %2472 = vrot.lane.b32.xlu0 %v2407, 12
      %v2473 = vpop.permute.xlu0 %2472
      %2474 = vrot.lane.b32.xlu0 %v2409, 12
      %v2475 = vpop.permute.xlu0 %2474
      %2476 = vrot.lane.b32.xlu0 %v2412, 12
      %v2477 = vpop.permute.xlu0 %2476
      %2478 = vrot.lane.b32.xlu0 %v2414, 12
      %v2479 = vpop.permute.xlu0 %2478
      %2480 = vrot.lane.b32.xlu0 %v2417, 12
      %v2481 = vpop.permute.xlu0 %2480
      %2482 = vrot.lane.b32.xlu0 %v2419, 12
      %v2483 = vpop.permute.xlu0 %2482
      %v2516 = vrot.slane %v1923, 4
      %v2517 = vrot.slane %v1829, 4
      %v2518 = vsel %vm686, %v2516, %v2517
      %v2519 = vrot.slane %v1939, 4
      %v2520 = vsel %vm686, %v2517, %v2519
      %v2521 = vrot.slane %v1924, 4
      %v2522 = vrot.slane %v1832, 4
      %v2523 = vsel %vm686, %v2521, %v2522
      %v2524 = vrot.slane %v1940, 4
      %v2525 = vsel %vm686, %v2522, %v2524
      %v2526 = vrot.slane %v1925, 4
      %v2527 = vrot.slane %v1835, 4
      %v2528 = vsel %vm686, %v2526, %v2527
      %v2529 = vrot.slane %v1941, 4
      %v2530 = vsel %vm686, %v2527, %v2529
      %v2531 = vrot.slane %v1926, 4
      %v2532 = vrot.slane %v1838, 4
      %v2533 = vsel %vm686, %v2531, %v2532
      %v2534 = vrot.slane %v1942, 4
      %v2535 = vsel %vm686, %v2532, %v2534
      %v2536 = vrot.slane %v1927, 4
      %v2537 = vrot.slane %v1841, 4
      %v2538 = vsel %vm686, %v2536, %v2537
      %v2539 = vrot.slane %v1943, 4
      %v2540 = vsel %vm686, %v2537, %v2539
      %v2541 = vrot.slane %v1928, 4
      %v2542 = vrot.slane %v1844, 4
      %v2543 = vsel %vm686, %v2541, %v2542
      %v2544 = vrot.slane %v1944, 4
      %v2545 = vsel %vm686, %v2542, %v2544
      %v2546 = vrot.slane %v1929, 4
      %v2547 = vrot.slane %v1847, 4
      %v2548 = vsel %vm686, %v2546, %v2547
      %v2549 = vrot.slane %v1945, 4
      %v2550 = vsel %vm686, %v2547, %v2549
      %v2551 = vrot.slane %v1930, 4
      %v2552 = vrot.slane %v1850, 4
      %v2553 = vsel %vm686, %v2551, %v2552
      %v2554 = vrot.slane %v1946, 4
      %v2555 = vsel %vm686, %v2552, %v2554
      %v2556 = vrot.slane %v1931, 4
      %v2557 = vrot.slane %v1853, 4
      %v2558 = vsel %vm686, %v2556, %v2557
      %v2559 = vrot.slane %v1947, 4
      %v2560 = vsel %vm686, %v2557, %v2559
      %v2561 = vrot.slane %v1932, 4
      %v2562 = vrot.slane %v1856, 4
      %v2563 = vsel %vm686, %v2561, %v2562
      %v2564 = vrot.slane %v1948, 4
      %v2565 = vsel %vm686, %v2562, %v2564
      %v2566 = vrot.slane %v1933, 4
      %v2567 = vrot.slane %v1859, 4
      %v2568 = vsel %vm686, %v2566, %v2567
      %v2569 = vrot.slane %v1949, 4
      %v2570 = vsel %vm686, %v2567, %v2569
      %v2571 = vrot.slane %v1934, 4
      %v2572 = vrot.slane %v1862, 4
      %v2573 = vsel %vm686, %v2571, %v2572
      %v2574 = vrot.slane %v1950, 4
      %v2575 = vsel %vm686, %v2572, %v2574
      %v2576 = vrot.slane %v1935, 4
      %v2577 = vrot.slane %v1865, 4
      %v2578 = vsel %vm686, %v2576, %v2577
      %v2579 = vrot.slane %v1951, 4
      %v2580 = vsel %vm686, %v2577, %v2579
      %v2581 = vrot.slane %v1936, 4
      %v2582 = vrot.slane %v1868, 4
      %v2583 = vsel %vm686, %v2581, %v2582
      %v2584 = vrot.slane %v1952, 4
      %v2585 = vsel %vm686, %v2582, %v2584
      %v2586 = vrot.slane %v1937, 4
      %v2587 = vrot.slane %v1871, 4
      %v2588 = vsel %vm686, %v2586, %v2587
      %v2589 = vrot.slane %v1953, 4
      %v2590 = vsel %vm686, %v2587, %v2589
      %v2591 = vrot.slane %v1938, 4
      %v2592 = vrot.slane %v1874, 4
      %v2593 = vsel %vm686, %v2591, %v2592
      %v2594 = vrot.slane %v1954, 4
      %v2595 = vsel %vm686, %v2592, %v2594
      %2596 = vrot.lane.b32.xlu0 %v2518, 16
      %v2597 = vpop.permute.xlu0 %2596
      %2598 = vrot.lane.b32.xlu0 %v2520, 16
      %v2599 = vpop.permute.xlu0 %2598
      %2600 = vrot.lane.b32.xlu0 %v2523, 16
      %v2601 = vpop.permute.xlu0 %2600
      %2602 = vrot.lane.b32.xlu0 %v2525, 16
      %v2603 = vpop.permute.xlu0 %2602
      %2604 = vrot.lane.b32.xlu0 %v2528, 16
      %v2605 = vpop.permute.xlu0 %2604
      %2606 = vrot.lane.b32.xlu0 %v2530, 16
      %v2607 = vpop.permute.xlu0 %2606
      %2608 = vrot.lane.b32.xlu0 %v2533, 16
      %v2609 = vpop.permute.xlu0 %2608
      %2610 = vrot.lane.b32.xlu0 %v2535, 16
      %v2611 = vpop.permute.xlu0 %2610
      %2612 = vrot.lane.b32.xlu0 %v2538, 16
      %v2613 = vpop.permute.xlu0 %2612
      %2614 = vrot.lane.b32.xlu0 %v2540, 16
      %v2615 = vpop.permute.xlu0 %2614
      %2616 = vrot.lane.b32.xlu0 %v2543, 16
      %v2617 = vpop.permute.xlu0 %2616
      %2618 = vrot.lane.b32.xlu0 %v2545, 16
      %v2619 = vpop.permute.xlu0 %2618
      %2620 = vrot.lane.b32.xlu0 %v2548, 16
      %v2621 = vpop.permute.xlu0 %2620
      %2622 = vrot.lane.b32.xlu0 %v2550, 16
      %v2623 = vpop.permute.xlu0 %2622
      %2624 = vrot.lane.b32.xlu0 %v2553, 16
      %v2625 = vpop.permute.xlu0 %2624
      %2626 = vrot.lane.b32.xlu0 %v2555, 16
      %v2627 = vpop.permute.xlu0 %2626
      %2628 = vrot.lane.b32.xlu0 %v2558, 16
      %v2629 = vpop.permute.xlu0 %2628
      %2630 = vrot.lane.b32.xlu0 %v2560, 16
      %v2631 = vpop.permute.xlu0 %2630
      %2632 = vrot.lane.b32.xlu0 %v2563, 16
      %v2633 = vpop.permute.xlu0 %2632
      %2634 = vrot.lane.b32.xlu0 %v2565, 16
      %v2635 = vpop.permute.xlu0 %2634
      %2636 = vrot.lane.b32.xlu0 %v2568, 16
      %v2637 = vpop.permute.xlu0 %2636
      %2638 = vrot.lane.b32.xlu0 %v2570, 16
      %v2639 = vpop.permute.xlu0 %2638
      %2640 = vrot.lane.b32.xlu0 %v2573, 16
      %v2641 = vpop.permute.xlu0 %2640
      %2642 = vrot.lane.b32.xlu0 %v2575, 16
      %v2643 = vpop.permute.xlu0 %2642
      %2644 = vrot.lane.b32.xlu0 %v2578, 16
      %v2645 = vpop.permute.xlu0 %2644
      %2646 = vrot.lane.b32.xlu0 %v2580, 16
      %v2647 = vpop.permute.xlu0 %2646
      %2648 = vrot.lane.b32.xlu0 %v2583, 16
      %v2649 = vpop.permute.xlu0 %2648
      %2650 = vrot.lane.b32.xlu0 %v2585, 16
      %v2651 = vpop.permute.xlu0 %2650
      %2652 = vrot.lane.b32.xlu0 %v2588, 16
      %v2653 = vpop.permute.xlu0 %2652
      %2654 = vrot.lane.b32.xlu0 %v2590, 16
      %v2655 = vpop.permute.xlu0 %2654
      %2656 = vrot.lane.b32.xlu0 %v2593, 16
      %v2657 = vpop.permute.xlu0 %2656
      %2658 = vrot.lane.b32.xlu0 %v2595, 16
      %v2659 = vpop.permute.xlu0 %2658
      %v2692 = vrot.slane %v1923, 5
      %v2693 = vrot.slane %v1829, 5
      %v2694 = vsel %vm1826, %v2692, %v2693
      %v2695 = vrot.slane %v1939, 5
      %v2696 = vsel %vm1826, %v2693, %v2695
      %v2697 = vrot.slane %v1924, 5
      %v2698 = vrot.slane %v1832, 5
      %v2699 = vsel %vm1826, %v2697, %v2698
      %v2700 = vrot.slane %v1940, 5
      %v2701 = vsel %vm1826, %v2698, %v2700
      %v2702 = vrot.slane %v1925, 5
      %v2703 = vrot.slane %v1835, 5
      %v2704 = vsel %vm1826, %v2702, %v2703
      %v2705 = vrot.slane %v1941, 5
      %v2706 = vsel %vm1826, %v2703, %v2705
      %v2707 = vrot.slane %v1926, 5
      %v2708 = vrot.slane %v1838, 5
      %v2709 = vsel %vm1826, %v2707, %v2708
      %v2710 = vrot.slane %v1942, 5
      %v2711 = vsel %vm1826, %v2708, %v2710
      %v2712 = vrot.slane %v1927, 5
      %v2713 = vrot.slane %v1841, 5
      %v2714 = vsel %vm1826, %v2712, %v2713
      %v2715 = vrot.slane %v1943, 5
      %v2716 = vsel %vm1826, %v2713, %v2715
      %v2717 = vrot.slane %v1928, 5
      %v2718 = vrot.slane %v1844, 5
      %v2719 = vsel %vm1826, %v2717, %v2718
      %v2720 = vrot.slane %v1944, 5
      %v2721 = vsel %vm1826, %v2718, %v2720
      %v2722 = vrot.slane %v1929, 5
      %v2723 = vrot.slane %v1847, 5
      %v2724 = vsel %vm1826, %v2722, %v2723
      %v2725 = vrot.slane %v1945, 5
      %v2726 = vsel %vm1826, %v2723, %v2725
      %v2727 = vrot.slane %v1930, 5
      %v2728 = vrot.slane %v1850, 5
      %v2729 = vsel %vm1826, %v2727, %v2728
      %v2730 = vrot.slane %v1946, 5
      %v2731 = vsel %vm1826, %v2728, %v2730
      %v2732 = vrot.slane %v1931, 5
      %v2733 = vrot.slane %v1853, 5
      %v2734 = vsel %vm1826, %v2732, %v2733
      %v2735 = vrot.slane %v1947, 5
      %v2736 = vsel %vm1826, %v2733, %v2735
      %v2737 = vrot.slane %v1932, 5
      %v2738 = vrot.slane %v1856, 5
      %v2739 = vsel %vm1826, %v2737, %v2738
      %v2740 = vrot.slane %v1948, 5
      %v2741 = vsel %vm1826, %v2738, %v2740
      %v2742 = vrot.slane %v1933, 5
      %v2743 = vrot.slane %v1859, 5
      %v2744 = vsel %vm1826, %v2742, %v2743
      %v2745 = vrot.slane %v1949, 5
      %v2746 = vsel %vm1826, %v2743, %v2745
      %v2747 = vrot.slane %v1934, 5
      %v2748 = vrot.slane %v1862, 5
      %v2749 = vsel %vm1826, %v2747, %v2748
      %v2750 = vrot.slane %v1950, 5
      %v2751 = vsel %vm1826, %v2748, %v2750
      %v2752 = vrot.slane %v1935, 5
      %v2753 = vrot.slane %v1865, 5
      %v2754 = vsel %vm1826, %v2752, %v2753
      %v2755 = vrot.slane %v1951, 5
      %v2756 = vsel %vm1826, %v2753, %v2755
      %v2757 = vrot.slane %v1936, 5
      %v2758 = vrot.slane %v1868, 5
      %v2759 = vsel %vm1826, %v2757, %v2758
      %v2760 = vrot.slane %v1952, 5
      %v2761 = vsel %vm1826, %v2758, %v2760
      %v2762 = vrot.slane %v1937, 5
      %v2763 = vrot.slane %v1871, 5
      %v2764 = vsel %vm1826, %v2762, %v2763
      %v2765 = vrot.slane %v1953, 5
      %v2766 = vsel %vm1826, %v2763, %v2765
      %v2767 = vrot.slane %v1938, 5
      %v2768 = vrot.slane %v1874, 5
      %v2769 = vsel %vm1826, %v2767, %v2768
      %v2770 = vrot.slane %v1954, 5
      %v2771 = vsel %vm1826, %v2768, %v2770
      %2772 = vrot.lane.b32.xlu0 %v2694, 20
      %v2773 = vpop.permute.xlu0 %2772
      %2774 = vrot.lane.b32.xlu0 %v2696, 20
      %v2775 = vpop.permute.xlu0 %2774
      %2776 = vrot.lane.b32.xlu0 %v2699, 20
      %v2777 = vpop.permute.xlu0 %2776
      %2778 = vrot.lane.b32.xlu0 %v2701, 20
      %v2779 = vpop.permute.xlu0 %2778
      %2780 = vrot.lane.b32.xlu0 %v2704, 20
      %v2781 = vpop.permute.xlu0 %2780
      %2782 = vrot.lane.b32.xlu0 %v2706, 20
      %v2783 = vpop.permute.xlu0 %2782
      %2784 = vrot.lane.b32.xlu0 %v2709, 20
      %v2785 = vpop.permute.xlu0 %2784
      %2786 = vrot.lane.b32.xlu0 %v2711, 20
      %v2787 = vpop.permute.xlu0 %2786
      %2788 = vrot.lane.b32.xlu0 %v2714, 20
      %v2789 = vpop.permute.xlu0 %2788
      %2790 = vrot.lane.b32.xlu0 %v2716, 20
      %v2791 = vpop.permute.xlu0 %2790
      %2792 = vrot.lane.b32.xlu0 %v2719, 20
      %v2793 = vpop.permute.xlu0 %2792
      %2794 = vrot.lane.b32.xlu0 %v2721, 20
      %v2795 = vpop.permute.xlu0 %2794
      %2796 = vrot.lane.b32.xlu0 %v2724, 20
      %v2797 = vpop.permute.xlu0 %2796
      %2798 = vrot.lane.b32.xlu0 %v2726, 20
      %v2799 = vpop.permute.xlu0 %2798
      %2800 = vrot.lane.b32.xlu0 %v2729, 20
      %v2801 = vpop.permute.xlu0 %2800
      %2802 = vrot.lane.b32.xlu0 %v2731, 20
      %v2803 = vpop.permute.xlu0 %2802
      %2804 = vrot.lane.b32.xlu0 %v2734, 20
      %v2805 = vpop.permute.xlu0 %2804
      %2806 = vrot.lane.b32.xlu0 %v2736, 20
      %v2807 = vpop.permute.xlu0 %2806
      %2808 = vrot.lane.b32.xlu0 %v2739, 20
      %v2809 = vpop.permute.xlu0 %2808
      %2810 = vrot.lane.b32.xlu0 %v2741, 20
      %v2811 = vpop.permute.xlu0 %2810
      %2812 = vrot.lane.b32.xlu0 %v2744, 20
      %v2813 = vpop.permute.xlu0 %2812
      %2814 = vrot.lane.b32.xlu0 %v2746, 20
      %v2815 = vpop.permute.xlu0 %2814
      %2816 = vrot.lane.b32.xlu0 %v2749, 20
      %v2817 = vpop.permute.xlu0 %2816
      %2818 = vrot.lane.b32.xlu0 %v2751, 20
      %v2819 = vpop.permute.xlu0 %2818
      %2820 = vrot.lane.b32.xlu0 %v2754, 20
      %v2821 = vpop.permute.xlu0 %2820
      %2822 = vrot.lane.b32.xlu0 %v2756, 20
      %v2823 = vpop.permute.xlu0 %2822
      %2824 = vrot.lane.b32.xlu0 %v2759, 20
      %v2825 = vpop.permute.xlu0 %2824
      %2826 = vrot.lane.b32.xlu0 %v2761, 20
      %v2827 = vpop.permute.xlu0 %2826
      %2828 = vrot.lane.b32.xlu0 %v2764, 20
      %v2829 = vpop.permute.xlu0 %2828
      %2830 = vrot.lane.b32.xlu0 %v2766, 20
      %v2831 = vpop.permute.xlu0 %2830
      %2832 = vrot.lane.b32.xlu0 %v2769, 20
      %v2833 = vpop.permute.xlu0 %2832
      %2834 = vrot.lane.b32.xlu0 %v2771, 20
      %v2835 = vpop.permute.xlu0 %2834
      %vm2868 = vcmask 1041408
      %v2869 = vrot.slane %v1923, 6
      %v2870 = vrot.slane %v1829, 6
      %v2871 = vsel %vm2868, %v2869, %v2870
      %v2872 = vrot.slane %v1939, 6
      %v2873 = vsel %vm2868, %v2870, %v2872
      %v2874 = vrot.slane %v1924, 6
      %v2875 = vrot.slane %v1832, 6
      %v2876 = vsel %vm2868, %v2874, %v2875
      %v2877 = vrot.slane %v1940, 6
      %v2878 = vsel %vm2868, %v2875, %v2877
      %v2879 = vrot.slane %v1925, 6
      %v2880 = vrot.slane %v1835, 6
      %v2881 = vsel %vm2868, %v2879, %v2880
      %v2882 = vrot.slane %v1941, 6
      %v2883 = vsel %vm2868, %v2880, %v2882
      %v2884 = vrot.slane %v1926, 6
      %v2885 = vrot.slane %v1838, 6
      %v2886 = vsel %vm2868, %v2884, %v2885
      %v2887 = vrot.slane %v1942, 6
      %v2888 = vsel %vm2868, %v2885, %v2887
      %v2889 = vrot.slane %v1927, 6
      %v2890 = vrot.slane %v1841, 6
      %v2891 = vsel %vm2868, %v2889, %v2890
      %v2892 = vrot.slane %v1943, 6
      %v2893 = vsel %vm2868, %v2890, %v2892
      %v2894 = vrot.slane %v1928, 6
      %v2895 = vrot.slane %v1844, 6
      %v2896 = vsel %vm2868, %v2894, %v2895
      %v2897 = vrot.slane %v1944, 6
      %v2898 = vsel %vm2868, %v2895, %v2897
      %v2899 = vrot.slane %v1929, 6
      %v2900 = vrot.slane %v1847, 6
      %v2901 = vsel %vm2868, %v2899, %v2900
      %v2902 = vrot.slane %v1945, 6
      %v2903 = vsel %vm2868, %v2900, %v2902
      %v2904 = vrot.slane %v1930, 6
      %v2905 = vrot.slane %v1850, 6
      %v2906 = vsel %vm2868, %v2904, %v2905
      %v2907 = vrot.slane %v1946, 6
      %v2908 = vsel %vm2868, %v2905, %v2907
      %v2909 = vrot.slane %v1931, 6
      %v2910 = vrot.slane %v1853, 6
      %v2911 = vsel %vm2868, %v2909, %v2910
      %v2912 = vrot.slane %v1947, 6
      %v2913 = vsel %vm2868, %v2910, %v2912
      %v2914 = vrot.slane %v1932, 6
      %v2915 = vrot.slane %v1856, 6
      %v2916 = vsel %vm2868, %v2914, %v2915
      %v2917 = vrot.slane %v1948, 6
      %v2918 = vsel %vm2868, %v2915, %v2917
      %v2919 = vrot.slane %v1933, 6
      %v2920 = vrot.slane %v1859, 6
      %v2921 = vsel %vm2868, %v2919, %v2920
      %v2922 = vrot.slane %v1949, 6
      %v2923 = vsel %vm2868, %v2920, %v2922
      %v2924 = vrot.slane %v1934, 6
      %v2925 = vrot.slane %v1862, 6
      %v2926 = vsel %vm2868, %v2924, %v2925
      %v2927 = vrot.slane %v1950, 6
      %v2928 = vsel %vm2868, %v2925, %v2927
      %v2929 = vrot.slane %v1935, 6
      %v2930 = vrot.slane %v1865, 6
      %v2931 = vsel %vm2868, %v2929, %v2930
      %v2932 = vrot.slane %v1951, 6
      %v2933 = vsel %vm2868, %v2930, %v2932
      %v2934 = vrot.slane %v1936, 6
      %v2935 = vrot.slane %v1868, 6
      %v2936 = vsel %vm2868, %v2934, %v2935
      %v2937 = vrot.slane %v1952, 6
      %v2938 = vsel %vm2868, %v2935, %v2937
      %v2939 = vrot.slane %v1937, 6
      %v2940 = vrot.slane %v1871, 6
      %v2941 = vsel %vm2868, %v2939, %v2940
      %v2942 = vrot.slane %v1953, 6
      %v2943 = vsel %vm2868, %v2940, %v2942
      %v2944 = vrot.slane %v1938, 6
      %v2945 = vrot.slane %v1874, 6
      %v2946 = vsel %vm2868, %v2944, %v2945
      %v2947 = vrot.slane %v1954, 6
      %v2948 = vsel %vm2868, %v2945, %v2947
      %2949 = vrot.lane.b32.xlu0 %v2871, 24
      %v2950 = vpop.permute.xlu0 %2949
      %2951 = vrot.lane.b32.xlu0 %v2873, 24
      %v2952 = vpop.permute.xlu0 %2951
      %2953 = vrot.lane.b32.xlu0 %v2876, 24
      %v2954 = vpop.permute.xlu0 %2953
      %2955 = vrot.lane.b32.xlu0 %v2878, 24
      %v2956 = vpop.permute.xlu0 %2955
      %2957 = vrot.lane.b32.xlu0 %v2881, 24
      %v2958 = vpop.permute.xlu0 %2957
      %2959 = vrot.lane.b32.xlu0 %v2883, 24
      %v2960 = vpop.permute.xlu0 %2959
      %2961 = vrot.lane.b32.xlu0 %v2886, 24
      %v2962 = vpop.permute.xlu0 %2961
      %2963 = vrot.lane.b32.xlu0 %v2888, 24
      %v2964 = vpop.permute.xlu0 %2963
      %2965 = vrot.lane.b32.xlu0 %v2891, 24
      %v2966 = vpop.permute.xlu0 %2965
      %2967 = vrot.lane.b32.xlu0 %v2893, 24
      %v2968 = vpop.permute.xlu0 %2967
      %2969 = vrot.lane.b32.xlu0 %v2896, 24
      %v2970 = vpop.permute.xlu0 %2969
      %2971 = vrot.lane.b32.xlu0 %v2898, 24
      %v2972 = vpop.permute.xlu0 %2971
      %2973 = vrot.lane.b32.xlu0 %v2901, 24
      %v2974 = vpop.permute.xlu0 %2973
      %2975 = vrot.lane.b32.xlu0 %v2903, 24
      %v2976 = vpop.permute.xlu0 %2975
      %2977 = vrot.lane.b32.xlu0 %v2906, 24
      %v2978 = vpop.permute.xlu0 %2977
      %2979 = vrot.lane.b32.xlu0 %v2908, 24
      %v2980 = vpop.permute.xlu0 %2979
      %2981 = vrot.lane.b32.xlu0 %v2911, 24
      %v2982 = vpop.permute.xlu0 %2981
      %2983 = vrot.lane.b32.xlu0 %v2913, 24
      %v2984 = vpop.permute.xlu0 %2983
      %2985 = vrot.lane.b32.xlu0 %v2916, 24
      %v2986 = vpop.permute.xlu0 %2985
      %2987 = vrot.lane.b32.xlu0 %v2918, 24
      %v2988 = vpop.permute.xlu0 %2987
      %2989 = vrot.lane.b32.xlu0 %v2921, 24
      %v2990 = vpop.permute.xlu0 %2989
      %2991 = vrot.lane.b32.xlu0 %v2923, 24
      %v2992 = vpop.permute.xlu0 %2991
      %2993 = vrot.lane.b32.xlu0 %v2926, 24
      %v2994 = vpop.permute.xlu0 %2993
      %2995 = vrot.lane.b32.xlu0 %v2928, 24
      %v2996 = vpop.permute.xlu0 %2995
      %2997 = vrot.lane.b32.xlu0 %v2931, 24
      %v2998 = vpop.permute.xlu0 %2997
      %2999 = vrot.lane.b32.xlu0 %v2933, 24
      %v3000 = vpop.permute.xlu0 %2999
      %3001 = vrot.lane.b32.xlu0 %v2936, 24
      %v3002 = vpop.permute.xlu0 %3001
      %3003 = vrot.lane.b32.xlu0 %v2938, 24
      %v3004 = vpop.permute.xlu0 %3003
      %3005 = vrot.lane.b32.xlu0 %v2941, 24
      %v3006 = vpop.permute.xlu0 %3005
      %3007 = vrot.lane.b32.xlu0 %v2943, 24
      %v3008 = vpop.permute.xlu0 %3007
      %3009 = vrot.lane.b32.xlu0 %v2946, 24
      %v3010 = vpop.permute.xlu0 %3009
      %3011 = vrot.lane.b32.xlu0 %v2948, 24
      %v3012 = vpop.permute.xlu0 %3011
      %v3045 = vsel %vm589, %v1923, %v2068
      %v3046 = vsel %vm589, %v1829, %v2070
      %v3047 = vsel %vm589, %v1924, %v2072
      %v3048 = vsel %vm589, %v1832, %v2074
      %v3049 = vsel %vm589, %v1925, %v2076
      %v3050 = vsel %vm589, %v1835, %v2078
      %v3051 = vsel %vm589, %v1926, %v2080
      %v3052 = vsel %vm589, %v1838, %v2082
      %v3053 = vsel %vm589, %v1927, %v2084
      %v3054 = vsel %vm589, %v1841, %v2086
      %v3055 = vsel %vm589, %v1928, %v2088
      %v3056 = vsel %vm589, %v1844, %v2090
      %v3057 = vsel %vm589, %v1929, %v2092
      %v3058 = vsel %vm589, %v1847, %v2094
      %v3059 = vsel %vm589, %v1930, %v2096
      %v3060 = vsel %vm589, %v1850, %v2098
      %v3061 = vsel %vm589, %v1931, %v2100
      %v3062 = vsel %vm589, %v1853, %v2102
      %v3063 = vsel %vm589, %v1932, %v2104
      %v3064 = vsel %vm589, %v1856, %v2106
      %v3065 = vsel %vm589, %v1933, %v2108
      %v3066 = vsel %vm589, %v1859, %v2110
      %v3067 = vsel %vm589, %v1934, %v2112
      %v3068 = vsel %vm589, %v1862, %v2114
      %v3069 = vsel %vm589, %v1935, %v2116
      %v3070 = vsel %vm589, %v1865, %v2118
      %v3071 = vsel %vm589, %v1936, %v2120
      %v3072 = vsel %vm589, %v1868, %v2122
      %v3073 = vsel %vm589, %v1937, %v2124
      %v3074 = vsel %vm589, %v1871, %v2126
      %v3075 = vsel %vm589, %v1938, %v2128
      %v3076 = vsel %vm589, %v1874, %v2130
      %vm3077 = vcmask 64512
      %v3078 = vsel %vm3077, %v3045, %v2244
      %v3079 = vsel %vm3077, %v3046, %v2246
      %v3080 = vsel %vm3077, %v3047, %v2248
      %v3081 = vsel %vm3077, %v3048, %v2250
      %v3082 = vsel %vm3077, %v3049, %v2252
      %v3083 = vsel %vm3077, %v3050, %v2254
      %v3084 = vsel %vm3077, %v3051, %v2256
      %v3085 = vsel %vm3077, %v3052, %v2258
      %v3086 = vsel %vm3077, %v3053, %v2260
      %v3087 = vsel %vm3077, %v3054, %v2262
      %v3088 = vsel %vm3077, %v3055, %v2264
      %v3089 = vsel %vm3077, %v3056, %v2266
      %v3090 = vsel %vm3077, %v3057, %v2268
      %v3091 = vsel %vm3077, %v3058, %v2270
      %v3092 = vsel %vm3077, %v3059, %v2272
      %v3093 = vsel %vm3077, %v3060, %v2274
      %v3094 = vsel %vm3077, %v3061, %v2276
      %v3095 = vsel %vm3077, %v3062, %v2278
      %v3096 = vsel %vm3077, %v3063, %v2280
      %v3097 = vsel %vm3077, %v3064, %v2282
      %v3098 = vsel %vm3077, %v3065, %v2284
      %v3099 = vsel %vm3077, %v3066, %v2286
      %v3100 = vsel %vm3077, %v3067, %v2288
      %v3101 = vsel %vm3077, %v3068, %v2290
      %v3102 = vsel %vm3077, %v3069, %v2292
      %v3103 = vsel %vm3077, %v3070, %v2294
      %v3104 = vsel %vm3077, %v3071, %v2296
      %v3105 = vsel %vm3077, %v3072, %v2298
      %v3106 = vsel %vm3077, %v3073, %v2300
      %v3107 = vsel %vm3077, %v3074, %v2302
      %v3108 = vsel %vm3077, %v3075, %v2304
      %v3109 = vsel %vm3077, %v3076, %v2306
      %vm3110 = vcmask 97280
      %v3111 = vsel %vm3110, %v3078, %v2421
      %v3112 = vsel %vm3110, %v3079, %v2423
      %v3113 = vsel %vm3110, %v3080, %v2425
      %v3114 = vsel %vm3110, %v3081, %v2427
      %v3115 = vsel %vm3110, %v3082, %v2429
      %v3116 = vsel %vm3110, %v3083, %v2431
      %v3117 = vsel %vm3110, %v3084, %v2433
      %v3118 = vsel %vm3110, %v3085, %v2435
      %v3119 = vsel %vm3110, %v3086, %v2437
      %v3120 = vsel %vm3110, %v3087, %v2439
      %v3121 = vsel %vm3110, %v3088, %v2441
      %v3122 = vsel %vm3110, %v3089, %v2443
      %v3123 = vsel %vm3110, %v3090, %v2445
      %v3124 = vsel %vm3110, %v3091, %v2447
      %v3125 = vsel %vm3110, %v3092, %v2449
      %v3126 = vsel %vm3110, %v3093, %v2451
      %v3127 = vsel %vm3110, %v3094, %v2453
      %v3128 = vsel %vm3110, %v3095, %v2455
      %v3129 = vsel %vm3110, %v3096, %v2457
      %v3130 = vsel %vm3110, %v3097, %v2459
      %v3131 = vsel %vm3110, %v3098, %v2461
      %v3132 = vsel %vm3110, %v3099, %v2463
      %v3133 = vsel %vm3110, %v3100, %v2465
      %v3134 = vsel %vm3110, %v3101, %v2467
      %v3135 = vsel %vm3110, %v3102, %v2469
      %v3136 = vsel %vm3110, %v3103, %v2471
      %v3137 = vsel %vm3110, %v3104, %v2473
      %v3138 = vsel %vm3110, %v3105, %v2475
      %v3139 = vsel %vm3110, %v3106, %v2477
      %v3140 = vsel %vm3110, %v3107, %v2479
      %v3141 = vsel %vm3110, %v3108, %v2481
      %v3142 = vsel %vm3110, %v3109, %v2483
      %vm3143 = vcmask 130048
      %v3144 = vsel %vm3143, %v3111, %v2597
      %v3145 = vsel %vm3143, %v3112, %v2599
      %v3146 = vsel %vm3143, %v3113, %v2601
      %v3147 = vsel %vm3143, %v3114, %v2603
      %v3148 = vsel %vm3143, %v3115, %v2605
      %v3149 = vsel %vm3143, %v3116, %v2607
      %v3150 = vsel %vm3143, %v3117, %v2609
      %v3151 = vsel %vm3143, %v3118, %v2611
      %v3152 = vsel %vm3143, %v3119, %v2613
      %v3153 = vsel %vm3143, %v3120, %v2615
      %v3154 = vsel %vm3143, %v3121, %v2617
      %v3155 = vsel %vm3143, %v3122, %v2619
      %v3156 = vsel %vm3143, %v3123, %v2621
      %v3157 = vsel %vm3143, %v3124, %v2623
      %v3158 = vsel %vm3143, %v3125, %v2625
      %v3159 = vsel %vm3143, %v3126, %v2627
      %v3160 = vsel %vm3143, %v3127, %v2629
      %v3161 = vsel %vm3143, %v3128, %v2631
      %v3162 = vsel %vm3143, %v3129, %v2633
      %v3163 = vsel %vm3143, %v3130, %v2635
      %v3164 = vsel %vm3143, %v3131, %v2637
      %v3165 = vsel %vm3143, %v3132, %v2639
      %v3166 = vsel %vm3143, %v3133, %v2641
      %v3167 = vsel %vm3143, %v3134, %v2643
      %v3168 = vsel %vm3143, %v3135, %v2645
      %v3169 = vsel %vm3143, %v3136, %v2647
      %v3170 = vsel %vm3143, %v3137, %v2649
      %v3171 = vsel %vm3143, %v3138, %v2651
      %v3172 = vsel %vm3143, %v3139, %v2653
      %v3173 = vsel %vm3143, %v3140, %v2655
      %v3174 = vsel %vm3143, %v3141, %v2657
      %v3175 = vsel %vm3143, %v3142, %v2659
      %vm3176 = vcmask 162816
      %v3177 = vsel %vm3176, %v3144, %v2773
      %v3178 = vsel %vm3176, %v3145, %v2775
      %v3179 = vsel %vm3176, %v3146, %v2777
      %v3180 = vsel %vm3176, %v3147, %v2779
      %v3181 = vsel %vm3176, %v3148, %v2781
      %v3182 = vsel %vm3176, %v3149, %v2783
      %v3183 = vsel %vm3176, %v3150, %v2785
      %v3184 = vsel %vm3176, %v3151, %v2787
      %v3185 = vsel %vm3176, %v3152, %v2789
      %v3186 = vsel %vm3176, %v3153, %v2791
      %v3187 = vsel %vm3176, %v3154, %v2793
      %v3188 = vsel %vm3176, %v3155, %v2795
      %v3189 = vsel %vm3176, %v3156, %v2797
      %v3190 = vsel %vm3176, %v3157, %v2799
      %v3191 = vsel %vm3176, %v3158, %v2801
      %v3192 = vsel %vm3176, %v3159, %v2803
      %v3193 = vsel %vm3176, %v3160, %v2805
      %v3194 = vsel %vm3176, %v3161, %v2807
      %v3195 = vsel %vm3176, %v3162, %v2809
      %v3196 = vsel %vm3176, %v3163, %v2811
      %v3197 = vsel %vm3176, %v3164, %v2813
      %v3198 = vsel %vm3176, %v3165, %v2815
      %v3199 = vsel %vm3176, %v3166, %v2817
      %v3200 = vsel %vm3176, %v3167, %v2819
      %v3201 = vsel %vm3176, %v3168, %v2821
      %v3202 = vsel %vm3176, %v3169, %v2823
      %v3203 = vsel %vm3176, %v3170, %v2825
      %v3204 = vsel %vm3176, %v3171, %v2827
      %v3205 = vsel %vm3176, %v3172, %v2829
      %v3206 = vsel %vm3176, %v3173, %v2831
      %v3207 = vsel %vm3176, %v3174, %v2833
      %v3208 = vsel %vm3176, %v3175, %v2835
      %vm3209 = vcmask 195584
      %v3210 = vsel %vm3209, %v3177, %v2950
      %v3211 = vsel %vm3209, %v3178, %v2952
      %v3212 = vsel %vm3209, %v3179, %v2954
      %v3213 = vsel %vm3209, %v3180, %v2956
      %v3214 = vsel %vm3209, %v3181, %v2958
      %v3215 = vsel %vm3209, %v3182, %v2960
      %v3216 = vsel %vm3209, %v3183, %v2962
      %v3217 = vsel %vm3209, %v3184, %v2964
      %v3218 = vsel %vm3209, %v3185, %v2966
      %v3219 = vsel %vm3209, %v3186, %v2968
      %v3220 = vsel %vm3209, %v3187, %v2970
      %v3221 = vsel %vm3209, %v3188, %v2972
      %v3222 = vsel %vm3209, %v3189, %v2974
      %v3223 = vsel %vm3209, %v3190, %v2976
      %v3224 = vsel %vm3209, %v3191, %v2978
      %v3225 = vsel %vm3209, %v3192, %v2980
      %v3226 = vsel %vm3209, %v3193, %v2982
      %v3227 = vsel %vm3209, %v3194, %v2984
      %v3228 = vsel %vm3209, %v3195, %v2986
      %v3229 = vsel %vm3209, %v3196, %v2988
      %v3230 = vsel %vm3209, %v3197, %v2990
      %v3231 = vsel %vm3209, %v3198, %v2992
      %v3232 = vsel %vm3209, %v3199, %v2994
      %v3233 = vsel %vm3209, %v3200, %v2996
      %v3234 = vsel %vm3209, %v3201, %v2998
      %v3235 = vsel %vm3209, %v3202, %v3000
      %v3236 = vsel %vm3209, %v3203, %v3002
      %v3237 = vsel %vm3209, %v3204, %v3004
      %v3238 = vsel %vm3209, %v3205, %v3006
      %v3239 = vsel %vm3209, %v3206, %v3008
      %v3240 = vsel %vm3209, %v3207, %v3010
      %v3241 = vsel %vm3209, %v3208, %v3012
      %v3242 = vld [vmem:[%s5] sm:$0xff]
      %v3243 = vld [vmem:[%s5 + $0x8] sm:$0xff]
      %v3244 = vld [vmem:[%s5 + $0x10] sm:$0xff]
      %v3245 = vld [vmem:[%s5 + $0x18] sm:$0xf]
      %v3246 = vld [vmem:[%s6] sm:$0x1]
      %v3248 = vlaneseq
      %v3249 = vshrl.u32 %v3248, 7
      %v3250 = vsub.s32 0, %v3249
      %v3251 = vrot.slane %v3246, %v3250
      %vm3253 = vcmask 228352
      %v3255 = vsel %vm3253, %v3210, 0
      %v3258 = vsel %vm3253, %v3211, 0
      %v3261 = vsel %vm3253, %v3212, 0
      %v3264 = vsel %vm3253, %v3213, 0
      %v3267 = vsel %vm3253, %v3214, 0
      %v3270 = vsel %vm3253, %v3215, 0
      %v3273 = vsel %vm3253, %v3216, 0
      %v3276 = vsel %vm3253, %v3217, 0
      %v3279 = vsel %vm3253, %v3218, 0
      %v3282 = vsel %vm3253, %v3219, 0
      %v3285 = vsel %vm3253, %v3220, 0
      %v3288 = vsel %vm3253, %v3221, 0
      %v3291 = vsel %vm3253, %v3222, 0
      %v3294 = vsel %vm3253, %v3223, 0
      %v3297 = vsel %vm3253, %v3224, 0
      %v3300 = vsel %vm3253, %v3225, 0
      %v3303 = vsel %vm3253, %v3226, 0
      %v3306 = vsel %vm3253, %v3227, 0
      %v3309 = vsel %vm3253, %v3228, 0
      %v3312 = vsel %vm3253, %v3229, 0
      %v3315 = vsel %vm3253, %v3230, 0
      %v3318 = vsel %vm3253, %v3231, 0
      %v3321 = vsel %vm3253, %v3232, 0
      %v3324 = vsel %vm3253, %v3233, 0
      %v3327 = vsel %vm3253, %v3234, 0
      %v3330 = vsel %vm3253, %v3235, 0
      %v3333 = vsel %vm3253, %v3236, 0
      %v3336 = vsel %vm3253, %v3237, 0
      %v3339 = vsel %vm3253, %v3238, 0
      %v3342 = vsel %vm3253, %v3239, 0
      %v3345 = vsel %vm3253, %v3240, 0
      %v3348 = vsel %vm3253, %v3241, 0
      %v3351 = vsel %vm686, %v3245, 0
      %3353 = vmatprep.subr.mxu0 0.0
      %3354 = vmatpush1.msra.mxu0 0.0
      %3355 = vmatprep.subr.mxu0 0.0
      %3356 = vmatpush1.msra.mxu0 0.0
      %3357 = vmatprep.subr.mxu0 0.0
      %3358 = vmatpush1.msra.mxu0 0.0
      %3359 = vmatprep.subr.mxu0 0.0
      %3360 = vmatpush1.msra.mxu0 0.0
      %3361 = vmatprep.subr.mxu0 0.0
      %3362 = vmatpush1.msra.mxu0 0.0
      %3363 = vmatprep.subr.mxu0 0.0
      %3364 = vmatpush1.msra.mxu0 0.0
      %3365 = vmatprep.subr.mxu0 0.0
      %3366 = vmatpush1.msra.mxu0 0.0
      %3367 = vmatprep.subr.mxu0 0.0
      %3368 = vmatpush1.msra.mxu0 0.0
      %3369 = vmatprep.subr.mxu0 0.0
      %3370 = vmatpush1.msra.mxu0 0.0
      %3371 = vmatprep.subr.mxu0 0.0
      %3372 = vmatpush1.msra.mxu0 0.0
      %3373 = vmatprep.subr.mxu0 0.0
      %3374 = vmatpush1.msra.mxu0 0.0
      %3375 = vmatprep.subr.mxu0 0.0
      %3376 = vmatpush1.msra.mxu0 0.0
      %3377 = vmatprep.subr.mxu0 0.0
      %3378 = vmatpush1.msra.mxu0 %v3351
      %3379 = vmatprep.subr.mxu0 0.0
      %3380 = vmatpush1.msra.mxu0 %v3244
      %3381 = vmatprep.subr.mxu0 0.0
      %3382 = vmatpush1.msra.mxu0 %v3243
      %3383 = vmatprep.subr.mxu0 0.0
      %3384 = vmatpush1.msra.mxu0 %v3242
      %3385 = vmatprep.subr.mxu0 0.0
      %3386 = vmatpush2.msra.mxu0 0.0
      %3387 = vmatprep.subr.mxu0 0.0
      %3388 = vmatpush2.msra.mxu0 0.0
      %3389 = vmatprep.subr.mxu0 0.0
      %3390 = vmatpush2.msra.mxu0 0.0
      %3391 = vmatprep.subr.mxu0 0.0
      %3392 = vmatpush2.msra.mxu0 0.0
      %3393 = vmatprep.subr.mxu0 0.0
      %3394 = vmatpush2.msra.mxu0 0.0
      %3395 = vmatprep.subr.mxu0 0.0
      %3396 = vmatpush2.msra.mxu0 0.0
      %3397 = vmatprep.subr.mxu0 0.0
      %3398 = vmatpush2.msra.mxu0 0.0
      %3399 = vmatprep.subr.mxu0 0.0
      %3400 = vmatpush2.msra.mxu0 0.0
      %3401 = vmatprep.subr.mxu0 0.0
      %3402 = vmatpush2.msra.mxu0 0.0
      %3403 = vmatprep.subr.mxu0 0.0
      %3404 = vmatpush2.msra.mxu0 0.0
      %3405 = vmatprep.subr.mxu0 0.0
      %3406 = vmatpush2.msra.mxu0 0.0
      %3407 = vmatprep.subr.mxu0 0.0
      %3408 = vmatpush2.msra.mxu0 0.0
      %3409 = vmatprep.subr.mxu0 0.0
      %3410 = vmatpush2.msra.mxu0 0.0
      %3411 = vmatprep.subr.mxu0 0.0
      %3412 = vmatpush2.msra.mxu0 0.0
      %3413 = vmatprep.subr.mxu0 0.0
      %3414 = vmatpush2.msra.mxu0 0.0
      %3415 = vmatprep.subr.mxu0 0.0
      %3416 = vmatpush2.msra.mxu0 0.0
      %3417 = vmatprep.mubr.f32.mxu0 0.0
      %3418 = vmatmul.mubr.f32.gmra.mxu0 %v3255
      %v3419 = vpop.f32.mrf.mxu0
      %v3420 = vadd.f32 %v3251, %v3419
      %v3421 = vpop.f32.mrf.mxu0
      %3422 = vmatprep.mubr.f32.mxu0 0.0
      %3423 = vmatmul.mubr.f32.gmra.mxu0 %v3258
      %v3424 = vpop.f32.mrf.mxu0
      %v3425 = vadd.f32 %v3251, %v3424
      %v3426 = vpop.f32.mrf.mxu0
      %3427 = vmatprep.mubr.f32.mxu0 0.0
      %3428 = vmatmul.mubr.f32.gmra.mxu0 %v3261
      %v3429 = vpop.f32.mrf.mxu0
      %v3430 = vadd.f32 %v3251, %v3429
      %v3431 = vpop.f32.mrf.mxu0
      %3432 = vmatprep.mubr.f32.mxu0 0.0
      %3433 = vmatmul.mubr.f32.gmra.mxu0 %v3264
      %v3434 = vpop.f32.mrf.mxu0
      %v3435 = vadd.f32 %v3251, %v3434
      %v3436 = vpop.f32.mrf.mxu0
      %3437 = vmatprep.mubr.f32.mxu0 0.0
      %3438 = vmatmul.mubr.f32.gmra.mxu0 %v3267
      %v3439 = vpop.f32.mrf.mxu0
      %v3440 = vadd.f32 %v3251, %v3439
      %v3441 = vpop.f32.mrf.mxu0
      %3442 = vmatprep.mubr.f32.mxu0 0.0
      %3443 = vmatmul.mubr.f32.gmra.mxu0 %v3270
      %v3444 = vpop.f32.mrf.mxu0
      %v3445 = vadd.f32 %v3251, %v3444
      %v3446 = vpop.f32.mrf.mxu0
      %3447 = vmatprep.mubr.f32.mxu0 0.0
      %3448 = vmatmul.mubr.f32.gmra.mxu0 %v3273
      %v3449 = vpop.f32.mrf.mxu0
      %v3450 = vadd.f32 %v3251, %v3449
      %v3451 = vpop.f32.mrf.mxu0
      %3452 = vmatprep.mubr.f32.mxu0 0.0
      %3453 = vmatmul.mubr.f32.gmra.mxu0 %v3276
      %v3454 = vpop.f32.mrf.mxu0
      %v3455 = vadd.f32 %v3251, %v3454
      %v3456 = vpop.f32.mrf.mxu0
      %3457 = vmatprep.mubr.f32.mxu0 0.0
      %3458 = vmatmul.mubr.f32.gmra.mxu0 %v3279
      %v3459 = vpop.f32.mrf.mxu0
      %v3460 = vadd.f32 %v3251, %v3459
      %v3461 = vpop.f32.mrf.mxu0
      %3462 = vmatprep.mubr.f32.mxu0 0.0
      %3463 = vmatmul.mubr.f32.gmra.mxu0 %v3282
      %v3464 = vpop.f32.mrf.mxu0
      %v3465 = vadd.f32 %v3251, %v3464
      %v3466 = vpop.f32.mrf.mxu0
      %3467 = vmatprep.mubr.f32.mxu0 0.0
      %3468 = vmatmul.mubr.f32.gmra.mxu0 %v3285
      %v3469 = vpop.f32.mrf.mxu0
      %v3470 = vadd.f32 %v3251, %v3469
      %v3471 = vpop.f32.mrf.mxu0
      %3472 = vmatprep.mubr.f32.mxu0 0.0
      %3473 = vmatmul.mubr.f32.gmra.mxu0 %v3288
      %v3474 = vpop.f32.mrf.mxu0
      %v3475 = vadd.f32 %v3251, %v3474
      %v3476 = vpop.f32.mrf.mxu0
      %3477 = vmatprep.mubr.f32.mxu0 0.0
      %3478 = vmatmul.mubr.f32.gmra.mxu0 %v3291
      %v3479 = vpop.f32.mrf.mxu0
      %v3480 = vadd.f32 %v3251, %v3479
      %v3481 = vpop.f32.mrf.mxu0
      %3482 = vmatprep.mubr.f32.mxu0 0.0
      %3483 = vmatmul.mubr.f32.gmra.mxu0 %v3294
      %v3484 = vpop.f32.mrf.mxu0
      %v3485 = vadd.f32 %v3251, %v3484
      %v3486 = vpop.f32.mrf.mxu0
      %3487 = vmatprep.mubr.f32.mxu0 0.0
      %3488 = vmatmul.mubr.f32.gmra.mxu0 %v3297
      %v3489 = vpop.f32.mrf.mxu0
      %v3490 = vadd.f32 %v3251, %v3489
      %v3491 = vpop.f32.mrf.mxu0
      %3492 = vmatprep.mubr.f32.mxu0 0.0
      %3493 = vmatmul.mubr.f32.gmra.mxu0 %v3300
      %v3494 = vpop.f32.mrf.mxu0
      %v3495 = vadd.f32 %v3251, %v3494
      %v3496 = vpop.f32.mrf.mxu0
      %3497 = vmatprep.mubr.f32.mxu0 0.0
      %3498 = vmatmul.mubr.f32.gmra.mxu0 %v3303
      %v3499 = vpop.f32.mrf.mxu0
      %v3500 = vadd.f32 %v3251, %v3499
      %v3501 = vpop.f32.mrf.mxu0
      %3502 = vmatprep.mubr.f32.mxu0 0.0
      %3503 = vmatmul.mubr.f32.gmra.mxu0 %v3306
      %v3504 = vpop.f32.mrf.mxu0
      %v3505 = vadd.f32 %v3251, %v3504
      %v3506 = vpop.f32.mrf.mxu0
      %3507 = vmatprep.mubr.f32.mxu0 0.0
      %3508 = vmatmul.mubr.f32.gmra.mxu0 %v3309
      %v3509 = vpop.f32.mrf.mxu0
      %v3510 = vadd.f32 %v3251, %v3509
      %v3511 = vpop.f32.mrf.mxu0
      %3512 = vmatprep.mubr.f32.mxu0 0.0
      %3513 = vmatmul.mubr.f32.gmra.mxu0 %v3312
      %v3514 = vpop.f32.mrf.mxu0
      %v3515 = vadd.f32 %v3251, %v3514
      %v3516 = vpop.f32.mrf.mxu0
      %3517 = vmatprep.mubr.f32.mxu0 0.0
      %3518 = vmatmul.mubr.f32.gmra.mxu0 %v3315
      %v3519 = vpop.f32.mrf.mxu0
      %v3520 = vadd.f32 %v3251, %v3519
      %v3521 = vpop.f32.mrf.mxu0
      %3522 = vmatprep.mubr.f32.mxu0 0.0
      %3523 = vmatmul.mubr.f32.gmra.mxu0 %v3318
      %v3524 = vpop.f32.mrf.mxu0
      %v3525 = vadd.f32 %v3251, %v3524
      %v3526 = vpop.f32.mrf.mxu0
      %3527 = vmatprep.mubr.f32.mxu0 0.0
      %3528 = vmatmul.mubr.f32.gmra.mxu0 %v3321
      %v3529 = vpop.f32.mrf.mxu0
      %v3530 = vadd.f32 %v3251, %v3529
      %v3531 = vpop.f32.mrf.mxu0
      %3532 = vmatprep.mubr.f32.mxu0 0.0
      %3533 = vmatmul.mubr.f32.gmra.mxu0 %v3324
      %v3534 = vpop.f32.mrf.mxu0
      %v3535 = vadd.f32 %v3251, %v3534
      %v3536 = vpop.f32.mrf.mxu0
      %3537 = vmatprep.mubr.f32.mxu0 0.0
      %3538 = vmatmul.mubr.f32.gmra.mxu0 %v3327
      %v3539 = vpop.f32.mrf.mxu0
      %v3540 = vadd.f32 %v3251, %v3539
      %v3541 = vpop.f32.mrf.mxu0
      %3542 = vmatprep.mubr.f32.mxu0 0.0
      %3543 = vmatmul.mubr.f32.gmra.mxu0 %v3330
      %v3544 = vpop.f32.mrf.mxu0
      %v3545 = vadd.f32 %v3251, %v3544
      %v3546 = vpop.f32.mrf.mxu0
      %3547 = vmatprep.mubr.f32.mxu0 0.0
      %3548 = vmatmul.mubr.f32.gmra.mxu0 %v3333
      %v3549 = vpop.f32.mrf.mxu0
      %v3550 = vadd.f32 %v3251, %v3549
      %v3551 = vpop.f32.mrf.mxu0
      %3552 = vmatprep.mubr.f32.mxu0 0.0
      %3553 = vmatmul.mubr.f32.gmra.mxu0 %v3336
      %v3554 = vpop.f32.mrf.mxu0
      %v3555 = vadd.f32 %v3251, %v3554
      %v3556 = vpop.f32.mrf.mxu0
      %3557 = vmatprep.mubr.f32.mxu0 0.0
      %3558 = vmatmul.mubr.f32.gmra.mxu0 %v3339
      %v3559 = vpop.f32.mrf.mxu0
      %v3560 = vadd.f32 %v3251, %v3559
      %v3561 = vpop.f32.mrf.mxu0
      %3562 = vmatprep.mubr.f32.mxu0 0.0
      %3563 = vmatmul.mubr.f32.gmra.mxu0 %v3342
      %v3564 = vpop.f32.mrf.mxu0
      %v3565 = vadd.f32 %v3251, %v3564
      %v3566 = vpop.f32.mrf.mxu0
      %3567 = vmatprep.mubr.f32.mxu0 0.0
      %3568 = vmatmul.mubr.f32.gmra.mxu0 %v3345
      %v3569 = vpop.f32.mrf.mxu0
      %v3570 = vadd.f32 %v3251, %v3569
      %v3571 = vpop.f32.mrf.mxu0
      %3572 = vmatprep.mubr.f32.mxu0 0.0
      %3573 = vmatmul.mubr.f32.gmra.mxu0 %v3348
      %v3574 = vpop.f32.mrf.mxu0
      %v3575 = vadd.f32 %v3251, %v3574
      %v3576 = vpop.f32.mrf.mxu0
      %3577 = vdwg.mxu0
      %3607 = vrot.lane.b32.xlu0 0.0, 4
      %v3608 = vpop.permute.xlu0 %3607
      %3609 = vrot.lane.b32.xlu0 %v3420, 4
      %v3610 = vpop.permute.xlu0 %3609
      %3611 = vrot.lane.b32.xlu0 %v3425, 4
      %v3612 = vpop.permute.xlu0 %3611
      %3613 = vrot.lane.b32.xlu0 %v3430, 4
      %v3614 = vpop.permute.xlu0 %3613
      %3615 = vrot.lane.b32.xlu0 %v3435, 4
      %v3616 = vpop.permute.xlu0 %3615
      %3617 = vrot.lane.b32.xlu0 %v3440, 4
      %v3618 = vpop.permute.xlu0 %3617
      %3619 = vrot.lane.b32.xlu0 %v3445, 4
      %v3620 = vpop.permute.xlu0 %3619
      %3621 = vrot.lane.b32.xlu0 %v3450, 4
      %v3622 = vpop.permute.xlu0 %3621
      %3623 = vrot.lane.b32.xlu0 %v3455, 4
      %v3624 = vpop.permute.xlu0 %3623
      %3625 = vrot.lane.b32.xlu0 %v3460, 4
      %v3626 = vpop.permute.xlu0 %3625
      %3627 = vrot.lane.b32.xlu0 %v3465, 4
      %v3628 = vpop.permute.xlu0 %3627
      %3629 = vrot.lane.b32.xlu0 %v3470, 4
      %v3630 = vpop.permute.xlu0 %3629
      %3631 = vrot.lane.b32.xlu0 %v3475, 4
      %v3632 = vpop.permute.xlu0 %3631
      %3633 = vrot.lane.b32.xlu0 %v3480, 4
      %v3634 = vpop.permute.xlu0 %3633
      %3635 = vrot.lane.b32.xlu0 %v3485, 4
      %v3636 = vpop.permute.xlu0 %3635
      %3637 = vrot.lane.b32.xlu0 %v3490, 4
      %v3638 = vpop.permute.xlu0 %3637
      %3639 = vrot.lane.b32.xlu0 %v3495, 4
      %v3640 = vpop.permute.xlu0 %3639
      %3641 = vrot.lane.b32.xlu0 %v3500, 4
      %v3642 = vpop.permute.xlu0 %3641
      %3643 = vrot.lane.b32.xlu0 %v3505, 4
      %v3644 = vpop.permute.xlu0 %3643
      %3645 = vrot.lane.b32.xlu0 %v3510, 4
      %v3646 = vpop.permute.xlu0 %3645
      %3647 = vrot.lane.b32.xlu0 %v3515, 4
      %v3648 = vpop.permute.xlu0 %3647
      %3649 = vrot.lane.b32.xlu0 %v3520, 4
      %v3650 = vpop.permute.xlu0 %3649
      %3651 = vrot.lane.b32.xlu0 %v3525, 4
      %v3652 = vpop.permute.xlu0 %3651
      %3653 = vrot.lane.b32.xlu0 %v3530, 4
      %v3654 = vpop.permute.xlu0 %3653
      %3655 = vrot.lane.b32.xlu0 %v3535, 4
      %v3656 = vpop.permute.xlu0 %3655
      %3657 = vrot.lane.b32.xlu0 %v3540, 4
      %v3658 = vpop.permute.xlu0 %3657
      %3659 = vrot.lane.b32.xlu0 %v3545, 4
      %v3660 = vpop.permute.xlu0 %3659
      %3661 = vrot.lane.b32.xlu0 %v3550, 4
      %v3662 = vpop.permute.xlu0 %3661
      %3663 = vrot.lane.b32.xlu0 %v3555, 4
      %v3664 = vpop.permute.xlu0 %3663
      %3696 = vrot.lane.b32.xlu0 0.0, 8
      %v3697 = vpop.permute.xlu0 %3696
      %3698 = vrot.lane.b32.xlu0 %v3420, 8
      %v3699 = vpop.permute.xlu0 %3698
      %3700 = vrot.lane.b32.xlu0 %v3425, 8
      %v3701 = vpop.permute.xlu0 %3700
      %3702 = vrot.lane.b32.xlu0 %v3430, 8
      %v3703 = vpop.permute.xlu0 %3702
      %3704 = vrot.lane.b32.xlu0 %v3435, 8
      %v3705 = vpop.permute.xlu0 %3704
      %3706 = vrot.lane.b32.xlu0 %v3440, 8
      %v3707 = vpop.permute.xlu0 %3706
      %3708 = vrot.lane.b32.xlu0 %v3445, 8
      %v3709 = vpop.permute.xlu0 %3708
      %3710 = vrot.lane.b32.xlu0 %v3450, 8
      %v3711 = vpop.permute.xlu0 %3710
      %3712 = vrot.lane.b32.xlu0 %v3455, 8
      %v3713 = vpop.permute.xlu0 %3712
      %3714 = vrot.lane.b32.xlu0 %v3460, 8
      %v3715 = vpop.permute.xlu0 %3714
      %3716 = vrot.lane.b32.xlu0 %v3465, 8
      %v3717 = vpop.permute.xlu0 %3716
      %3718 = vrot.lane.b32.xlu0 %v3470, 8
      %v3719 = vpop.permute.xlu0 %3718
      %3720 = vrot.lane.b32.xlu0 %v3475, 8
      %v3721 = vpop.permute.xlu0 %3720
      %3722 = vrot.lane.b32.xlu0 %v3480, 8
      %v3723 = vpop.permute.xlu0 %3722
      %3724 = vrot.lane.b32.xlu0 %v3485, 8
      %v3725 = vpop.permute.xlu0 %3724
      %3726 = vrot.lane.b32.xlu0 %v3490, 8
      %v3727 = vpop.permute.xlu0 %3726
      %3728 = vrot.lane.b32.xlu0 %v3495, 8
      %v3729 = vpop.permute.xlu0 %3728
      %3730 = vrot.lane.b32.xlu0 %v3500, 8
      %v3731 = vpop.permute.xlu0 %3730
      %3732 = vrot.lane.b32.xlu0 %v3505, 8
      %v3733 = vpop.permute.xlu0 %3732
      %3734 = vrot.lane.b32.xlu0 %v3510, 8
      %v3735 = vpop.permute.xlu0 %3734
      %3736 = vrot.lane.b32.xlu0 %v3515, 8
      %v3737 = vpop.permute.xlu0 %3736
      %3738 = vrot.lane.b32.xlu0 %v3520, 8
      %v3739 = vpop.permute.xlu0 %3738
      %3740 = vrot.lane.b32.xlu0 %v3525, 8
      %v3741 = vpop.permute.xlu0 %3740
      %3742 = vrot.lane.b32.xlu0 %v3530, 8
      %v3743 = vpop.permute.xlu0 %3742
      %3744 = vrot.lane.b32.xlu0 %v3535, 8
      %v3745 = vpop.permute.xlu0 %3744
      %3746 = vrot.lane.b32.xlu0 %v3540, 8
      %v3747 = vpop.permute.xlu0 %3746
      %3748 = vrot.lane.b32.xlu0 %v3545, 8
      %v3749 = vpop.permute.xlu0 %3748
      %3750 = vrot.lane.b32.xlu0 %v3550, 8
      %v3751 = vpop.permute.xlu0 %3750
      %3752 = vrot.lane.b32.xlu0 %v3555, 8
      %v3753 = vpop.permute.xlu0 %3752
      %3754 = vrot.lane.b32.xlu0 %v3560, 8
      %v3755 = vpop.permute.xlu0 %3754
      %3756 = vrot.lane.b32.xlu0 %v3565, 8
      %v3757 = vpop.permute.xlu0 %3756
      %3791 = vrot.lane.b32.xlu0 %v3420, 12
      %v3792 = vpop.permute.xlu0 %3791
      %3793 = vrot.lane.b32.xlu0 %v3425, 12
      %v3794 = vpop.permute.xlu0 %3793
      %3795 = vrot.lane.b32.xlu0 %v3430, 12
      %v3796 = vpop.permute.xlu0 %3795
      %3797 = vrot.lane.b32.xlu0 %v3435, 12
      %v3798 = vpop.permute.xlu0 %3797
      %3799 = vrot.lane.b32.xlu0 %v3440, 12
      %v3800 = vpop.permute.xlu0 %3799
      %3801 = vrot.lane.b32.xlu0 %v3445, 12
      %v3802 = vpop.permute.xlu0 %3801
      %3803 = vrot.lane.b32.xlu0 %v3450, 12
      %v3804 = vpop.permute.xlu0 %3803
      %3805 = vrot.lane.b32.xlu0 %v3455, 12
      %v3806 = vpop.permute.xlu0 %3805
      %3807 = vrot.lane.b32.xlu0 %v3460, 12
      %v3808 = vpop.permute.xlu0 %3807
      %3809 = vrot.lane.b32.xlu0 %v3465, 12
      %v3810 = vpop.permute.xlu0 %3809
      %3811 = vrot.lane.b32.xlu0 %v3470, 12
      %v3812 = vpop.permute.xlu0 %3811
      %3813 = vrot.lane.b32.xlu0 %v3475, 12
      %v3814 = vpop.permute.xlu0 %3813
      %3815 = vrot.lane.b32.xlu0 %v3480, 12
      %v3816 = vpop.permute.xlu0 %3815
      %3817 = vrot.lane.b32.xlu0 %v3485, 12
      %v3818 = vpop.permute.xlu0 %3817
      %3819 = vrot.lane.b32.xlu0 %v3490, 12
      %v3820 = vpop.permute.xlu0 %3819
      %3821 = vrot.lane.b32.xlu0 %v3495, 12
      %v3822 = vpop.permute.xlu0 %3821
      %3823 = vrot.lane.b32.xlu0 %v3500, 12
      %v3824 = vpop.permute.xlu0 %3823
      %3825 = vrot.lane.b32.xlu0 %v3505, 12
      %v3826 = vpop.permute.xlu0 %3825
      %3827 = vrot.lane.b32.xlu0 %v3510, 12
      %v3828 = vpop.permute.xlu0 %3827
      %3829 = vrot.lane.b32.xlu0 %v3515, 12
      %v3830 = vpop.permute.xlu0 %3829
      %3831 = vrot.lane.b32.xlu0 %v3520, 12
      %v3832 = vpop.permute.xlu0 %3831
      %3833 = vrot.lane.b32.xlu0 %v3525, 12
      %v3834 = vpop.permute.xlu0 %3833
      %3835 = vrot.lane.b32.xlu0 %v3530, 12
      %v3836 = vpop.permute.xlu0 %3835
      %3837 = vrot.lane.b32.xlu0 %v3535, 12
      %v3838 = vpop.permute.xlu0 %3837
      %3839 = vrot.lane.b32.xlu0 %v3540, 12
      %v3840 = vpop.permute.xlu0 %3839
      %3841 = vrot.lane.b32.xlu0 %v3545, 12
      %v3842 = vpop.permute.xlu0 %3841
      %3843 = vrot.lane.b32.xlu0 %v3550, 12
      %v3844 = vpop.permute.xlu0 %3843
      %3845 = vrot.lane.b32.xlu0 %v3555, 12
      %v3846 = vpop.permute.xlu0 %3845
      %3847 = vrot.lane.b32.xlu0 %v3560, 12
      %v3848 = vpop.permute.xlu0 %3847
      %3849 = vrot.lane.b32.xlu0 %v3565, 12
      %v3850 = vpop.permute.xlu0 %3849
      %3851 = vrot.lane.b32.xlu0 %v3570, 12
      %v3852 = vpop.permute.xlu0 %3851
      %3853 = vrot.lane.b32.xlu0 %v3575, 12
      %v3854 = vpop.permute.xlu0 %3853
      %3887 = vrot.lane.b32.xlu0 %v3430, 16
      %v3888 = vpop.permute.xlu0 %3887
      %3889 = vrot.lane.b32.xlu0 %v3435, 16
      %v3890 = vpop.permute.xlu0 %3889
      %3891 = vrot.lane.b32.xlu0 %v3440, 16
      %v3892 = vpop.permute.xlu0 %3891
      %3893 = vrot.lane.b32.xlu0 %v3445, 16
      %v3894 = vpop.permute.xlu0 %3893
      %3895 = vrot.lane.b32.xlu0 %v3450, 16
      %v3896 = vpop.permute.xlu0 %3895
      %3897 = vrot.lane.b32.xlu0 %v3455, 16
      %v3898 = vpop.permute.xlu0 %3897
      %3899 = vrot.lane.b32.xlu0 %v3460, 16
      %v3900 = vpop.permute.xlu0 %3899
      %3901 = vrot.lane.b32.xlu0 %v3465, 16
      %v3902 = vpop.permute.xlu0 %3901
      %3903 = vrot.lane.b32.xlu0 %v3470, 16
      %v3904 = vpop.permute.xlu0 %3903
      %3905 = vrot.lane.b32.xlu0 %v3475, 16
      %v3906 = vpop.permute.xlu0 %3905
      %3907 = vrot.lane.b32.xlu0 %v3480, 16
      %v3908 = vpop.permute.xlu0 %3907
      %3909 = vrot.lane.b32.xlu0 %v3485, 16
      %v3910 = vpop.permute.xlu0 %3909
      %3911 = vrot.lane.b32.xlu0 %v3490, 16
      %v3912 = vpop.permute.xlu0 %3911
      %3913 = vrot.lane.b32.xlu0 %v3495, 16
      %v3914 = vpop.permute.xlu0 %3913
      %3915 = vrot.lane.b32.xlu0 %v3500, 16
      %v3916 = vpop.permute.xlu0 %3915
      %3917 = vrot.lane.b32.xlu0 %v3505, 16
      %v3918 = vpop.permute.xlu0 %3917
      %3919 = vrot.lane.b32.xlu0 %v3510, 16
      %v3920 = vpop.permute.xlu0 %3919
      %3921 = vrot.lane.b32.xlu0 %v3515, 16
      %v3922 = vpop.permute.xlu0 %3921
      %3923 = vrot.lane.b32.xlu0 %v3520, 16
      %v3924 = vpop.permute.xlu0 %3923
      %3925 = vrot.lane.b32.xlu0 %v3525, 16
      %v3926 = vpop.permute.xlu0 %3925
      %3927 = vrot.lane.b32.xlu0 %v3530, 16
      %v3928 = vpop.permute.xlu0 %3927
      %3929 = vrot.lane.b32.xlu0 %v3535, 16
      %v3930 = vpop.permute.xlu0 %3929
      %3931 = vrot.lane.b32.xlu0 %v3540, 16
      %v3932 = vpop.permute.xlu0 %3931
      %3933 = vrot.lane.b32.xlu0 %v3545, 16
      %v3934 = vpop.permute.xlu0 %3933
      %3935 = vrot.lane.b32.xlu0 %v3550, 16
      %v3936 = vpop.permute.xlu0 %3935
      %3937 = vrot.lane.b32.xlu0 %v3555, 16
      %v3938 = vpop.permute.xlu0 %3937
      %3939 = vrot.lane.b32.xlu0 %v3560, 16
      %v3940 = vpop.permute.xlu0 %3939
      %3941 = vrot.lane.b32.xlu0 %v3565, 16
      %v3942 = vpop.permute.xlu0 %3941
      %3943 = vrot.lane.b32.xlu0 %v3570, 16
      %v3944 = vpop.permute.xlu0 %3943
      %3945 = vrot.lane.b32.xlu0 %v3575, 16
      %v3946 = vpop.permute.xlu0 %3945
      %3947 = vrot.lane.b32.xlu0 0.0, 16
      %v3948 = vpop.permute.xlu0 %3947
      %3980 = vrot.lane.b32.xlu0 %v3440, 20
      %v3981 = vpop.permute.xlu0 %3980
      %3982 = vrot.lane.b32.xlu0 %v3445, 20
      %v3983 = vpop.permute.xlu0 %3982
      %3984 = vrot.lane.b32.xlu0 %v3450, 20
      %v3985 = vpop.permute.xlu0 %3984
      %3986 = vrot.lane.b32.xlu0 %v3455, 20
      %v3987 = vpop.permute.xlu0 %3986
      %3988 = vrot.lane.b32.xlu0 %v3460, 20
      %v3989 = vpop.permute.xlu0 %3988
      %3990 = vrot.lane.b32.xlu0 %v3465, 20
      %v3991 = vpop.permute.xlu0 %3990
      %3992 = vrot.lane.b32.xlu0 %v3470, 20
      %v3993 = vpop.permute.xlu0 %3992
      %3994 = vrot.lane.b32.xlu0 %v3475, 20
      %v3995 = vpop.permute.xlu0 %3994
      %3996 = vrot.lane.b32.xlu0 %v3480, 20
      %v3997 = vpop.permute.xlu0 %3996
      %3998 = vrot.lane.b32.xlu0 %v3485, 20
      %v3999 = vpop.permute.xlu0 %3998
      %4000 = vrot.lane.b32.xlu0 %v3490, 20
      %v4001 = vpop.permute.xlu0 %4000
      %4002 = vrot.lane.b32.xlu0 %v3495, 20
      %v4003 = vpop.permute.xlu0 %4002
      %4004 = vrot.lane.b32.xlu0 %v3500, 20
      %v4005 = vpop.permute.xlu0 %4004
      %4006 = vrot.lane.b32.xlu0 %v3505, 20
      %v4007 = vpop.permute.xlu0 %4006
      %4008 = vrot.lane.b32.xlu0 %v3510, 20
      %v4009 = vpop.permute.xlu0 %4008
      %4010 = vrot.lane.b32.xlu0 %v3515, 20
      %v4011 = vpop.permute.xlu0 %4010
      %4012 = vrot.lane.b32.xlu0 %v3520, 20
      %v4013 = vpop.permute.xlu0 %4012
      %4014 = vrot.lane.b32.xlu0 %v3525, 20
      %v4015 = vpop.permute.xlu0 %4014
      %4016 = vrot.lane.b32.xlu0 %v3530, 20
      %v4017 = vpop.permute.xlu0 %4016
      %4018 = vrot.lane.b32.xlu0 %v3535, 20
      %v4019 = vpop.permute.xlu0 %4018
      %4020 = vrot.lane.b32.xlu0 %v3540, 20
      %v4021 = vpop.permute.xlu0 %4020
      %4022 = vrot.lane.b32.xlu0 %v3545, 20
      %v4023 = vpop.permute.xlu0 %4022
      %4024 = vrot.lane.b32.xlu0 %v3550, 20
      %v4025 = vpop.permute.xlu0 %4024
      %4026 = vrot.lane.b32.xlu0 %v3555, 20
      %v4027 = vpop.permute.xlu0 %4026
      %4028 = vrot.lane.b32.xlu0 %v3560, 20
      %v4029 = vpop.permute.xlu0 %4028
      %4030 = vrot.lane.b32.xlu0 %v3565, 20
      %v4031 = vpop.permute.xlu0 %4030
      %4032 = vrot.lane.b32.xlu0 %v3570, 20
      %v4033 = vpop.permute.xlu0 %4032
      %4034 = vrot.lane.b32.xlu0 %v3575, 20
      %v4035 = vpop.permute.xlu0 %4034
      %4036 = vrot.lane.b32.xlu0 0.0, 20
      %v4037 = vpop.permute.xlu0 %4036
      %4067 = vrot.lane.b32.xlu0 %v3450, 24
      %v4068 = vpop.permute.xlu0 %4067
      %4069 = vrot.lane.b32.xlu0 %v3455, 24
      %v4070 = vpop.permute.xlu0 %4069
      %4071 = vrot.lane.b32.xlu0 %v3460, 24
      %v4072 = vpop.permute.xlu0 %4071
      %4073 = vrot.lane.b32.xlu0 %v3465, 24
      %v4074 = vpop.permute.xlu0 %4073
      %4075 = vrot.lane.b32.xlu0 %v3470, 24
      %v4076 = vpop.permute.xlu0 %4075
      %4077 = vrot.lane.b32.xlu0 %v3475, 24
      %v4078 = vpop.permute.xlu0 %4077
      %4079 = vrot.lane.b32.xlu0 %v3480, 24
      %v4080 = vpop.permute.xlu0 %4079
      %4081 = vrot.lane.b32.xlu0 %v3485, 24
      %v4082 = vpop.permute.xlu0 %4081
      %4083 = vrot.lane.b32.xlu0 %v3490, 24
      %v4084 = vpop.permute.xlu0 %4083
      %4085 = vrot.lane.b32.xlu0 %v3495, 24
      %v4086 = vpop.permute.xlu0 %4085
      %4087 = vrot.lane.b32.xlu0 %v3500, 24
      %v4088 = vpop.permute.xlu0 %4087
      %4089 = vrot.lane.b32.xlu0 %v3505, 24
      %v4090 = vpop.permute.xlu0 %4089
      %4091 = vrot.lane.b32.xlu0 %v3510, 24
      %v4092 = vpop.permute.xlu0 %4091
      %4093 = vrot.lane.b32.xlu0 %v3515, 24
      %v4094 = vpop.permute.xlu0 %4093
      %4095 = vrot.lane.b32.xlu0 %v3520, 24
      %v4096 = vpop.permute.xlu0 %4095
      %4097 = vrot.lane.b32.xlu0 %v3525, 24
      %v4098 = vpop.permute.xlu0 %4097
      %4099 = vrot.lane.b32.xlu0 %v3530, 24
      %v4100 = vpop.permute.xlu0 %4099
      %4101 = vrot.lane.b32.xlu0 %v3535, 24
      %v4102 = vpop.permute.xlu0 %4101
      %4103 = vrot.lane.b32.xlu0 %v3540, 24
      %v4104 = vpop.permute.xlu0 %4103
      %4105 = vrot.lane.b32.xlu0 %v3545, 24
      %v4106 = vpop.permute.xlu0 %4105
      %4107 = vrot.lane.b32.xlu0 %v3550, 24
      %v4108 = vpop.permute.xlu0 %4107
      %4109 = vrot.lane.b32.xlu0 %v3555, 24
      %v4110 = vpop.permute.xlu0 %4109
      %4111 = vrot.lane.b32.xlu0 %v3560, 24
      %v4112 = vpop.permute.xlu0 %4111
      %4113 = vrot.lane.b32.xlu0 %v3565, 24
      %v4114 = vpop.permute.xlu0 %4113
      %4115 = vrot.lane.b32.xlu0 %v3570, 24
      %v4116 = vpop.permute.xlu0 %4115
      %4117 = vrot.lane.b32.xlu0 %v3575, 24
      %v4118 = vpop.permute.xlu0 %4117
      %4119 = vrot.lane.b32.xlu0 0.0, 24
      %v4120 = vpop.permute.xlu0 %4119
      %v4148 = vsel %vm589, 0.0, %v3608
      %v4149 = vsel %vm589, 0.0, %v3610
      %v4150 = vsel %vm589, 0.0, %v3612
      %v4151 = vsel %vm589, %v3420, %v3614
      %v4152 = vsel %vm589, %v3425, %v3616
      %v4153 = vsel %vm589, %v3430, %v3618
      %v4154 = vsel %vm589, %v3435, %v3620
      %v4155 = vsel %vm589, %v3440, %v3622
      %v4156 = vsel %vm589, %v3445, %v3624
      %v4157 = vsel %vm589, %v3450, %v3626
      %v4158 = vsel %vm589, %v3455, %v3628
      %v4159 = vsel %vm589, %v3460, %v3630
      %v4160 = vsel %vm589, %v3465, %v3632
      %v4161 = vsel %vm589, %v3470, %v3634
      %v4162 = vsel %vm589, %v3475, %v3636
      %v4163 = vsel %vm589, %v3480, %v3638
      %v4164 = vsel %vm589, %v3485, %v3640
      %v4165 = vsel %vm589, %v3490, %v3642
      %v4166 = vsel %vm589, %v3495, %v3644
      %v4167 = vsel %vm589, %v3500, %v3646
      %v4168 = vsel %vm589, %v3505, %v3648
      %v4169 = vsel %vm589, %v3510, %v3650
      %v4170 = vsel %vm589, %v3515, %v3652
      %v4171 = vsel %vm589, %v3520, %v3654
      %v4172 = vsel %vm589, %v3525, %v3656
      %v4173 = vsel %vm589, %v3530, %v3658
      %v4174 = vsel %vm589, %v3535, %v3660
      %v4175 = vsel %vm589, %v3540, %v3662
      %v4176 = vsel %vm589, %v3545, %v3664
      %v4177 = vsel %vm3077, %v4148, %v3697
      %v4178 = vsel %vm3077, %v4148, %v3699
      %v4179 = vsel %vm3077, %v4148, %v3701
      %v4180 = vsel %vm3077, %v4149, %v3703
      %v4181 = vsel %vm3077, %v4150, %v3705
      %v4182 = vsel %vm3077, %v4151, %v3707
      %v4183 = vsel %vm3077, %v4152, %v3709
      %v4184 = vsel %vm3077, %v4153, %v3711
      %v4185 = vsel %vm3077, %v4154, %v3713
      %v4186 = vsel %vm3077, %v4155, %v3715
      %v4187 = vsel %vm3077, %v4156, %v3717
      %v4188 = vsel %vm3077, %v4157, %v3719
      %v4189 = vsel %vm3077, %v4158, %v3721
      %v4190 = vsel %vm3077, %v4159, %v3723
      %v4191 = vsel %vm3077, %v4160, %v3725
      %v4192 = vsel %vm3077, %v4161, %v3727
      %v4193 = vsel %vm3077, %v4162, %v3729
      %v4194 = vsel %vm3077, %v4163, %v3731
      %v4195 = vsel %vm3077, %v4164, %v3733
      %v4196 = vsel %vm3077, %v4165, %v3735
      %v4197 = vsel %vm3077, %v4166, %v3737
      %v4198 = vsel %vm3077, %v4167, %v3739
      %v4199 = vsel %vm3077, %v4168, %v3741
      %v4200 = vsel %vm3077, %v4169, %v3743
      %v4201 = vsel %vm3077, %v4170, %v3745
      %v4202 = vsel %vm3077, %v4171, %v3747
      %v4203 = vsel %vm3077, %v4172, %v3749
      %v4204 = vsel %vm3077, %v4173, %v3751
      %v4205 = vsel %vm3077, %v4174, %v3753
      %v4206 = vsel %vm3077, %v4175, %v3755
      %v4207 = vsel %vm3077, %v4176, %v3757
      %v4208 = vsel %vm3110, %v4177, %v3792
      %v4209 = vsel %vm3110, %v4177, %v3794
      %v4210 = vsel %vm3110, %v4178, %v3796
      %v4211 = vsel %vm3110, %v4179, %v3798
      %v4212 = vsel %vm3110, %v4180, %v3800
      %v4213 = vsel %vm3110, %v4181, %v3802
      %v4214 = vsel %vm3110, %v4182, %v3804
      %v4215 = vsel %vm3110, %v4183, %v3806
      %v4216 = vsel %vm3110, %v4184, %v3808
      %v4217 = vsel %vm3110, %v4185, %v3810
      %v4218 = vsel %vm3110, %v4186, %v3812
      %v4219 = vsel %vm3110, %v4187, %v3814
      %v4220 = vsel %vm3110, %v4188, %v3816
      %v4221 = vsel %vm3110, %v4189, %v3818
      %v4222 = vsel %vm3110, %v4190, %v3820
      %v4223 = vsel %vm3110, %v4191, %v3822
      %v4224 = vsel %vm3110, %v4192, %v3824
      %v4225 = vsel %vm3110, %v4193, %v3826
      %v4226 = vsel %vm3110, %v4194, %v3828
      %v4227 = vsel %vm3110, %v4195, %v3830
      %v4228 = vsel %vm3110, %v4196, %v3832
      %v4229 = vsel %vm3110, %v4197, %v3834
      %v4230 = vsel %vm3110, %v4198, %v3836
      %v4231 = vsel %vm3110, %v4199, %v3838
      %v4232 = vsel %vm3110, %v4200, %v3840
      %v4233 = vsel %vm3110, %v4201, %v3842
      %v4234 = vsel %vm3110, %v4202, %v3844
      %v4235 = vsel %vm3110, %v4203, %v3846
      %v4236 = vsel %vm3110, %v4204, %v3848
      %v4237 = vsel %vm3110, %v4205, %v3850
      %v4238 = vsel %vm3110, %v4206, %v3852
      %v4239 = vsel %vm3110, %v4207, %v3854
      %v4240 = vsel %vm3143, %v4208, %v3888
      %v4241 = vsel %vm3143, %v4209, %v3890
      %v4242 = vsel %vm3143, %v4210, %v3892
      %v4243 = vsel %vm3143, %v4211, %v3894
      %v4244 = vsel %vm3143, %v4212, %v3896
      %v4245 = vsel %vm3143, %v4213, %v3898
      %v4246 = vsel %vm3143, %v4214, %v3900
      %v4247 = vsel %vm3143, %v4215, %v3902
      %v4248 = vsel %vm3143, %v4216, %v3904
      %v4249 = vsel %vm3143, %v4217, %v3906
      %v4250 = vsel %vm3143, %v4218, %v3908
      %v4251 = vsel %vm3143, %v4219, %v3910
      %v4252 = vsel %vm3143, %v4220, %v3912
      %v4253 = vsel %vm3143, %v4221, %v3914
      %v4254 = vsel %vm3143, %v4222, %v3916
      %v4255 = vsel %vm3143, %v4223, %v3918
      %v4256 = vsel %vm3143, %v4224, %v3920
      %v4257 = vsel %vm3143, %v4225, %v3922
      %v4258 = vsel %vm3143, %v4226, %v3924
      %v4259 = vsel %vm3143, %v4227, %v3926
      %v4260 = vsel %vm3143, %v4228, %v3928
      %v4261 = vsel %vm3143, %v4229, %v3930
      %v4262 = vsel %vm3143, %v4230, %v3932
      %v4263 = vsel %vm3143, %v4231, %v3934
      %v4264 = vsel %vm3143, %v4232, %v3936
      %v4265 = vsel %vm3143, %v4233, %v3938
      %v4266 = vsel %vm3143, %v4234, %v3940
      %v4267 = vsel %vm3143, %v4235, %v3942
      %v4268 = vsel %vm3143, %v4236, %v3944
      %v4269 = vsel %vm3143, %v4237, %v3946
      %v4270 = vsel %vm3143, %v4238, %v3948
      %v4271 = vsel %vm3143, %v4239, %v3948
      %v4272 = vsel %vm3176, %v4240, %v3981
      %v4273 = vsel %vm3176, %v4241, %v3983
      %v4274 = vsel %vm3176, %v4242, %v3985
      %v4275 = vsel %vm3176, %v4243, %v3987
      %v4276 = vsel %vm3176, %v4244, %v3989
      %v4277 = vsel %vm3176, %v4245, %v3991
      %v4278 = vsel %vm3176, %v4246, %v3993
      %v4279 = vsel %vm3176, %v4247, %v3995
      %v4280 = vsel %vm3176, %v4248, %v3997
      %v4281 = vsel %vm3176, %v4249, %v3999
      %v4282 = vsel %vm3176, %v4250, %v4001
      %v4283 = vsel %vm3176, %v4251, %v4003
      %v4284 = vsel %vm3176, %v4252, %v4005
      %v4285 = vsel %vm3176, %v4253, %v4007
      %v4286 = vsel %vm3176, %v4254, %v4009
      %v4287 = vsel %vm3176, %v4255, %v4011
      %v4288 = vsel %vm3176, %v4256, %v4013
      %v4289 = vsel %vm3176, %v4257, %v4015
      %v4290 = vsel %vm3176, %v4258, %v4017
      %v4291 = vsel %vm3176, %v4259, %v4019
      %v4292 = vsel %vm3176, %v4260, %v4021
      %v4293 = vsel %vm3176, %v4261, %v4023
      %v4294 = vsel %vm3176, %v4262, %v4025
      %v4295 = vsel %vm3176, %v4263, %v4027
      %v4296 = vsel %vm3176, %v4264, %v4029
      %v4297 = vsel %vm3176, %v4265, %v4031
      %v4298 = vsel %vm3176, %v4266, %v4033
      %v4299 = vsel %vm3176, %v4267, %v4035
      %v4300 = vsel %vm3176, %v4268, %v4037
      %v4301 = vsel %vm3176, %v4269, %v4037
      %v4302 = vsel %vm3176, %v4270, %v4037
      %v4303 = vsel %vm3176, %v4271, %v4037
      %v4304 = vsel %vm3209, %v4272, %v4068
      %v4305 = vsel %vm3209, %v4273, %v4070
      %v4306 = vsel %vm3209, %v4274, %v4072
      %v4307 = vsel %vm3209, %v4275, %v4074
      %v4308 = vsel %vm3209, %v4276, %v4076
      %v4309 = vsel %vm3209, %v4277, %v4078
      %v4310 = vsel %vm3209, %v4278, %v4080
      %v4311 = vsel %vm3209, %v4279, %v4082
      %v4312 = vsel %vm3209, %v4280, %v4084
      %v4313 = vsel %vm3209, %v4281, %v4086
      %v4314 = vsel %vm3209, %v4282, %v4088
      %v4315 = vsel %vm3209, %v4283, %v4090
      %v4316 = vsel %vm3209, %v4284, %v4092
      %v4317 = vsel %vm3209, %v4285, %v4094
      %v4318 = vsel %vm3209, %v4286, %v4096
      %v4319 = vsel %vm3209, %v4287, %v4098
      %v4320 = vsel %vm3209, %v4288, %v4100
      %v4321 = vsel %vm3209, %v4289, %v4102
      %v4322 = vsel %vm3209, %v4290, %v4104
      %v4323 = vsel %vm3209, %v4291, %v4106
      %v4324 = vsel %vm3209, %v4292, %v4108
      %v4325 = vsel %vm3209, %v4293, %v4110
      %v4326 = vsel %vm3209, %v4294, %v4112
      %v4327 = vsel %vm3209, %v4295, %v4114
      %v4328 = vsel %vm3209, %v4296, %v4116
      %v4329 = vsel %vm3209, %v4297, %v4118
      %v4330 = vsel %vm3209, %v4298, %v4120
      %v4331 = vsel %vm3209, %v4299, %v4120
      %v4332 = vsel %vm3209, %v4300, %v4120
      %v4333 = vsel %vm3209, %v4301, %v4120
      %v4334 = vsel %vm3209, %v4302, %v4120
      %v4335 = vsel %vm3209, %v4303, %v4120
      %v4336 = vld [vmem:[%s7] sm:$0xff]
      %v4337 = vld [vmem:[%s7 + $0x8] sm:$0xff]
      %v4338 = vld [vmem:[%s7 + $0x10] sm:$0xff]
      %v4339 = vld [vmem:[%s7 + $0x18] sm:$0xf]
      %v4340 = vld [vmem:[%s8] sm:$0x1]
      %v4342 = vlaneseq
      %v4343 = vshrl.u32 %v4342, 7
      %v4344 = vsub.s32 0, %v4343
      %v4345 = vrot.slane %v4340, %v4344
      %v4348 = vsel %vm3253, %v4304, 0
      %v4351 = vsel %vm3253, %v4305, 0
      %v4354 = vsel %vm3253, %v4306, 0
      %v4357 = vsel %vm3253, %v4307, 0
      %v4360 = vsel %vm3253, %v4308, 0
      %v4363 = vsel %vm3253, %v4309, 0
      %v4366 = vsel %vm3253, %v4310, 0
      %v4369 = vsel %vm3253, %v4311, 0
      %v4372 = vsel %vm3253, %v4312, 0
      %v4375 = vsel %vm3253, %v4313, 0
      %v4378 = vsel %vm3253, %v4314, 0
      %v4381 = vsel %vm3253, %v4315, 0
      %v4384 = vsel %vm3253, %v4316, 0
      %v4387 = vsel %vm3253, %v4317, 0
      %v4390 = vsel %vm3253, %v4318, 0
      %v4393 = vsel %vm3253, %v4319, 0
      %v4396 = vsel %vm3253, %v4320, 0
      %v4399 = vsel %vm3253, %v4321, 0
      %v4402 = vsel %vm3253, %v4322, 0
      %v4405 = vsel %vm3253, %v4323, 0
      %v4408 = vsel %vm3253, %v4324, 0
      %v4411 = vsel %vm3253, %v4325, 0
      %v4414 = vsel %vm3253, %v4326, 0
      %v4417 = vsel %vm3253, %v4327, 0
      %v4420 = vsel %vm3253, %v4328, 0
      %v4423 = vsel %vm3253, %v4329, 0
      %v4426 = vsel %vm3253, %v4330, 0
      %v4429 = vsel %vm3253, %v4331, 0
      %v4432 = vsel %vm3253, %v4332, 0
      %v4435 = vsel %vm3253, %v4333, 0
      %v4438 = vsel %vm3253, %v4334, 0
      %v4441 = vsel %vm3253, %v4335, 0
      %v4444 = vsel %vm686, %v4339, 0
      %4446 = vmatprep.subr.mxu0 0.0
      %4447 = vmatpush1.msra.mxu0 0.0
      %4448 = vmatprep.subr.mxu0 0.0
      %4449 = vmatpush1.msra.mxu0 0.0
      %4450 = vmatprep.subr.mxu0 0.0
      %4451 = vmatpush1.msra.mxu0 0.0
      %4452 = vmatprep.subr.mxu0 0.0
      %4453 = vmatpush1.msra.mxu0 0.0
      %4454 = vmatprep.subr.mxu0 0.0
      %4455 = vmatpush1.msra.mxu0 0.0
      %4456 = vmatprep.subr.mxu0 0.0
      %4457 = vmatpush1.msra.mxu0 0.0
      %4458 = vmatprep.subr.mxu0 0.0
      %4459 = vmatpush1.msra.mxu0 0.0
      %4460 = vmatprep.subr.mxu0 0.0
      %4461 = vmatpush1.msra.mxu0 0.0
      %4462 = vmatprep.subr.mxu0 0.0
      %4463 = vmatpush1.msra.mxu0 0.0
      %4464 = vmatprep.subr.mxu0 0.0
      %4465 = vmatpush1.msra.mxu0 0.0
      %4466 = vmatprep.subr.mxu0 0.0
      %4467 = vmatpush1.msra.mxu0 0.0
      %4468 = vmatprep.subr.mxu0 0.0
      %4469 = vmatpush1.msra.mxu0 0.0
      %4470 = vmatprep.subr.mxu0 0.0
      %4471 = vmatpush1.msra.mxu0 %v4444
      %4472 = vmatprep.subr.mxu0 0.0
      %4473 = vmatpush1.msra.mxu0 %v4338
      %4474 = vmatprep.subr.mxu0 0.0
      %4475 = vmatpush1.msra.mxu0 %v4337
      %4476 = vmatprep.subr.mxu0 0.0
      %4477 = vmatpush1.msra.mxu0 %v4336
      %4478 = vmatprep.subr.mxu0 0.0
      %4479 = vmatpush2.msra.mxu0 0.0
      %4480 = vmatprep.subr.mxu0 0.0
      %4481 = vmatpush2.msra.mxu0 0.0
      %4482 = vmatprep.subr.mxu0 0.0
      %4483 = vmatpush2.msra.mxu0 0.0
      %4484 = vmatprep.subr.mxu0 0.0
      %4485 = vmatpush2.msra.mxu0 0.0
      %4486 = vmatprep.subr.mxu0 0.0
      %4487 = vmatpush2.msra.mxu0 0.0
      %4488 = vmatprep.subr.mxu0 0.0
      %4489 = vmatpush2.msra.mxu0 0.0
      %4490 = vmatprep.subr.mxu0 0.0
      %4491 = vmatpush2.msra.mxu0 0.0
      %4492 = vmatprep.subr.mxu0 0.0
      %4493 = vmatpush2.msra.mxu0 0.0
      %4494 = vmatprep.subr.mxu0 0.0
      %4495 = vmatpush2.msra.mxu0 0.0
      %4496 = vmatprep.subr.mxu0 0.0
      %4497 = vmatpush2.msra.mxu0 0.0
      %4498 = vmatprep.subr.mxu0 0.0
      %4499 = vmatpush2.msra.mxu0 0.0
      %4500 = vmatprep.subr.mxu0 0.0
      %4501 = vmatpush2.msra.mxu0 0.0
      %4502 = vmatprep.subr.mxu0 0.0
      %4503 = vmatpush2.msra.mxu0 0.0
      %4504 = vmatprep.subr.mxu0 0.0
      %4505 = vmatpush2.msra.mxu0 0.0
      %4506 = vmatprep.subr.mxu0 0.0
      %4507 = vmatpush2.msra.mxu0 0.0
      %4508 = vmatprep.subr.mxu0 0.0
      %4509 = vmatpush2.msra.mxu0 0.0
      %4510 = vmatprep.mubr.f32.mxu0 0.0
      %4511 = vmatmul.mubr.f32.gmra.mxu0 %v4348
      %v4512 = vpop.f32.mrf.mxu0
      %v4513 = vadd.f32 %v4345, %v4512
      %v4514 = vpop.f32.mrf.mxu0
      %4515 = vmatprep.mubr.f32.mxu0 0.0
      %4516 = vmatmul.mubr.f32.gmra.mxu0 %v4351
      %v4517 = vpop.f32.mrf.mxu0
      %v4518 = vadd.f32 %v4345, %v4517
      %v4519 = vpop.f32.mrf.mxu0
      %4520 = vmatprep.mubr.f32.mxu0 0.0
      %4521 = vmatmul.mubr.f32.gmra.mxu0 %v4354
      %v4522 = vpop.f32.mrf.mxu0
      %v4523 = vadd.f32 %v4345, %v4522
      %v4524 = vpop.f32.mrf.mxu0
      %4525 = vmatprep.mubr.f32.mxu0 0.0
      %4526 = vmatmul.mubr.f32.gmra.mxu0 %v4357
      %v4527 = vpop.f32.mrf.mxu0
      %v4528 = vadd.f32 %v4345, %v4527
      %v4529 = vpop.f32.mrf.mxu0
      %4530 = vmatprep.mubr.f32.mxu0 0.0
      %4531 = vmatmul.mubr.f32.gmra.mxu0 %v4360
      %v4532 = vpop.f32.mrf.mxu0
      %v4533 = vadd.f32 %v4345, %v4532
      %v4534 = vpop.f32.mrf.mxu0
      %4535 = vmatprep.mubr.f32.mxu0 0.0
      %4536 = vmatmul.mubr.f32.gmra.mxu0 %v4363
      %v4537 = vpop.f32.mrf.mxu0
      %v4538 = vadd.f32 %v4345, %v4537
      %v4539 = vpop.f32.mrf.mxu0
      %4540 = vmatprep.mubr.f32.mxu0 0.0
      %4541 = vmatmul.mubr.f32.gmra.mxu0 %v4366
      %v4542 = vpop.f32.mrf.mxu0
      %v4543 = vadd.f32 %v4345, %v4542
      %v4544 = vpop.f32.mrf.mxu0
      %4545 = vmatprep.mubr.f32.mxu0 0.0
      %4546 = vmatmul.mubr.f32.gmra.mxu0 %v4369
      %v4547 = vpop.f32.mrf.mxu0
      %v4548 = vadd.f32 %v4345, %v4547
      %v4549 = vpop.f32.mrf.mxu0
      %4550 = vmatprep.mubr.f32.mxu0 0.0
      %4551 = vmatmul.mubr.f32.gmra.mxu0 %v4372
      %v4552 = vpop.f32.mrf.mxu0
      %v4553 = vadd.f32 %v4345, %v4552
      %v4554 = vpop.f32.mrf.mxu0
      %4555 = vmatprep.mubr.f32.mxu0 0.0
      %4556 = vmatmul.mubr.f32.gmra.mxu0 %v4375
      %v4557 = vpop.f32.mrf.mxu0
      %v4558 = vadd.f32 %v4345, %v4557
      %v4559 = vpop.f32.mrf.mxu0
      %4560 = vmatprep.mubr.f32.mxu0 0.0
      %4561 = vmatmul.mubr.f32.gmra.mxu0 %v4378
      %v4562 = vpop.f32.mrf.mxu0
      %v4563 = vadd.f32 %v4345, %v4562
      %v4564 = vpop.f32.mrf.mxu0
      %4565 = vmatprep.mubr.f32.mxu0 0.0
      %4566 = vmatmul.mubr.f32.gmra.mxu0 %v4381
      %v4567 = vpop.f32.mrf.mxu0
      %v4568 = vadd.f32 %v4345, %v4567
      %v4569 = vpop.f32.mrf.mxu0
      %4570 = vmatprep.mubr.f32.mxu0 0.0
      %4571 = vmatmul.mubr.f32.gmra.mxu0 %v4384
      %v4572 = vpop.f32.mrf.mxu0
      %v4573 = vadd.f32 %v4345, %v4572
      %v4574 = vpop.f32.mrf.mxu0
      %4575 = vmatprep.mubr.f32.mxu0 0.0
      %4576 = vmatmul.mubr.f32.gmra.mxu0 %v4387
      %v4577 = vpop.f32.mrf.mxu0
      %v4578 = vadd.f32 %v4345, %v4577
      %v4579 = vpop.f32.mrf.mxu0
      %4580 = vmatprep.mubr.f32.mxu0 0.0
      %4581 = vmatmul.mubr.f32.gmra.mxu0 %v4390
      %v4582 = vpop.f32.mrf.mxu0
      %v4583 = vadd.f32 %v4345, %v4582
      %v4584 = vpop.f32.mrf.mxu0
      %4585 = vmatprep.mubr.f32.mxu0 0.0
      %4586 = vmatmul.mubr.f32.gmra.mxu0 %v4393
      %v4587 = vpop.f32.mrf.mxu0
      %v4588 = vadd.f32 %v4345, %v4587
      %v4589 = vpop.f32.mrf.mxu0
      %4590 = vmatprep.mubr.f32.mxu0 0.0
      %4591 = vmatmul.mubr.f32.gmra.mxu0 %v4396
      %v4592 = vpop.f32.mrf.mxu0
      %v4593 = vadd.f32 %v4345, %v4592
      %v4594 = vpop.f32.mrf.mxu0
      %4595 = vmatprep.mubr.f32.mxu0 0.0
      %4596 = vmatmul.mubr.f32.gmra.mxu0 %v4399
      %v4597 = vpop.f32.mrf.mxu0
      %v4598 = vadd.f32 %v4345, %v4597
      %v4599 = vpop.f32.mrf.mxu0
      %4600 = vmatprep.mubr.f32.mxu0 0.0
      %4601 = vmatmul.mubr.f32.gmra.mxu0 %v4402
      %v4602 = vpop.f32.mrf.mxu0
      %v4603 = vadd.f32 %v4345, %v4602
      %v4604 = vpop.f32.mrf.mxu0
      %4605 = vmatprep.mubr.f32.mxu0 0.0
      %4606 = vmatmul.mubr.f32.gmra.mxu0 %v4405
      %v4607 = vpop.f32.mrf.mxu0
      %v4608 = vadd.f32 %v4345, %v4607
      %v4609 = vpop.f32.mrf.mxu0
      %4610 = vmatprep.mubr.f32.mxu0 0.0
      %4611 = vmatmul.mubr.f32.gmra.mxu0 %v4408
      %v4612 = vpop.f32.mrf.mxu0
      %v4613 = vadd.f32 %v4345, %v4612
      %v4614 = vpop.f32.mrf.mxu0
      %4615 = vmatprep.mubr.f32.mxu0 0.0
      %4616 = vmatmul.mubr.f32.gmra.mxu0 %v4411
      %v4617 = vpop.f32.mrf.mxu0
      %v4618 = vadd.f32 %v4345, %v4617
      %v4619 = vpop.f32.mrf.mxu0
      %4620 = vmatprep.mubr.f32.mxu0 0.0
      %4621 = vmatmul.mubr.f32.gmra.mxu0 %v4414
      %v4622 = vpop.f32.mrf.mxu0
      %v4623 = vadd.f32 %v4345, %v4622
      %v4624 = vpop.f32.mrf.mxu0
      %4625 = vmatprep.mubr.f32.mxu0 0.0
      %4626 = vmatmul.mubr.f32.gmra.mxu0 %v4417
      %v4627 = vpop.f32.mrf.mxu0
      %v4628 = vadd.f32 %v4345, %v4627
      %v4629 = vpop.f32.mrf.mxu0
      %4630 = vmatprep.mubr.f32.mxu0 0.0
      %4631 = vmatmul.mubr.f32.gmra.mxu0 %v4420
      %v4632 = vpop.f32.mrf.mxu0
      %v4633 = vadd.f32 %v4345, %v4632
      %v4634 = vpop.f32.mrf.mxu0
      %4635 = vmatprep.mubr.f32.mxu0 0.0
      %4636 = vmatmul.mubr.f32.gmra.mxu0 %v4423
      %v4637 = vpop.f32.mrf.mxu0
      %v4638 = vadd.f32 %v4345, %v4637
      %v4639 = vpop.f32.mrf.mxu0
      %4640 = vmatprep.mubr.f32.mxu0 0.0
      %4641 = vmatmul.mubr.f32.gmra.mxu0 %v4426
      %v4642 = vpop.f32.mrf.mxu0
      %v4643 = vadd.f32 %v4345, %v4642
      %v4644 = vpop.f32.mrf.mxu0
      %4645 = vmatprep.mubr.f32.mxu0 0.0
      %4646 = vmatmul.mubr.f32.gmra.mxu0 %v4429
      %v4647 = vpop.f32.mrf.mxu0
      %v4648 = vadd.f32 %v4345, %v4647
      %v4649 = vpop.f32.mrf.mxu0
      %4650 = vmatprep.mubr.f32.mxu0 0.0
      %4651 = vmatmul.mubr.f32.gmra.mxu0 %v4432
      %v4652 = vpop.f32.mrf.mxu0
      %v4653 = vadd.f32 %v4345, %v4652
      %v4654 = vpop.f32.mrf.mxu0
      %4655 = vmatprep.mubr.f32.mxu0 0.0
      %4656 = vmatmul.mubr.f32.gmra.mxu0 %v4435
      %v4657 = vpop.f32.mrf.mxu0
      %v4658 = vadd.f32 %v4345, %v4657
      %v4659 = vpop.f32.mrf.mxu0
      %4660 = vmatprep.mubr.f32.mxu0 0.0
      %4661 = vmatmul.mubr.f32.gmra.mxu0 %v4438
      %v4662 = vpop.f32.mrf.mxu0
      %v4663 = vadd.f32 %v4345, %v4662
      %v4664 = vpop.f32.mrf.mxu0
      %4665 = vmatprep.mubr.f32.mxu0 0.0
      %4666 = vmatmul.mubr.f32.gmra.mxu0 %v4441
      %v4667 = vpop.f32.mrf.mxu0
      %v4668 = vadd.f32 %v4345, %v4667
      %v4669 = vpop.f32.mrf.mxu0
      %4670 = vdwg.mxu0
      %v4703 = vrot.slane %v4513, 5
      %v4704 = vrot.slane %v4518, 5
      %v4705 = vsel %vm1826, %v4703, %v4704
      %v4706 = vrot.slane %v4523, 5
      %v4707 = vrot.slane %v4528, 5
      %v4708 = vsel %vm1826, %v4706, %v4707
      %v4709 = vrot.slane %v4533, 5
      %v4710 = vrot.slane %v4538, 5
      %v4711 = vsel %vm1826, %v4709, %v4710
      %v4712 = vrot.slane %v4543, 5
      %v4713 = vrot.slane %v4548, 5
      %v4714 = vsel %vm1826, %v4712, %v4713
      %v4715 = vrot.slane %v4553, 5
      %v4716 = vrot.slane %v4558, 5
      %v4717 = vsel %vm1826, %v4715, %v4716
      %v4718 = vrot.slane %v4563, 5
      %v4719 = vrot.slane %v4568, 5
      %v4720 = vsel %vm1826, %v4718, %v4719
      %v4721 = vrot.slane %v4573, 5
      %v4722 = vrot.slane %v4578, 5
      %v4723 = vsel %vm1826, %v4721, %v4722
      %v4724 = vrot.slane %v4583, 5
      %v4725 = vrot.slane %v4588, 5
      %v4726 = vsel %vm1826, %v4724, %v4725
      %v4727 = vrot.slane %v4593, 5
      %v4728 = vrot.slane %v4598, 5
      %v4729 = vsel %vm1826, %v4727, %v4728
      %v4730 = vrot.slane %v4603, 5
      %v4731 = vrot.slane %v4608, 5
      %v4732 = vsel %vm1826, %v4730, %v4731
      %v4733 = vrot.slane %v4613, 5
      %v4734 = vrot.slane %v4618, 5
      %v4735 = vsel %vm1826, %v4733, %v4734
      %v4736 = vrot.slane %v4623, 5
      %v4737 = vrot.slane %v4628, 5
      %v4738 = vsel %vm1826, %v4736, %v4737
      %v4739 = vrot.slane %v4633, 5
      %v4740 = vrot.slane %v4638, 5
      %v4741 = vsel %vm1826, %v4739, %v4740
      %v4742 = vrot.slane %v4643, 5
      %v4743 = vrot.slane %v4648, 5
      %v4744 = vsel %vm1826, %v4742, %v4743
      %v4745 = vrot.slane %v4653, 5
      %v4746 = vrot.slane %v4658, 5
      %v4747 = vsel %vm1826, %v4745, %v4746
      %v4748 = vrot.slane %v4663, 5
      %v4749 = vrot.slane %v4668, 5
      %v4750 = vsel %vm1826, %v4748, %v4749
      %v4799 = vsel %vm1826, 0.0, %v4703
      %v4800 = vsel %vm1826, 0.0, %v4706
      %v4801 = vsel %vm1826, 0.0, %v4709
      %v4802 = vsel %vm1826, 0.0, %v4712
      %v4803 = vsel %vm1826, 0.0, %v4715
      %v4804 = vsel %vm1826, 0.0, %v4718
      %v4805 = vsel %vm1826, 0.0, %v4721
      %v4806 = vsel %vm1826, 0.0, %v4724
      %v4807 = vsel %vm1826, 0.0, %v4727
      %v4808 = vsel %vm1826, 0.0, %v4730
      %v4809 = vsel %vm1826, 0.0, %v4733
      %v4810 = vsel %vm1826, 0.0, %v4736
      %v4811 = vsel %vm1826, 0.0, %v4739
      %v4812 = vsel %vm1826, 0.0, %v4742
      %v4813 = vsel %vm1826, 0.0, %v4745
      %v4814 = vsel %vm1826, 0.0, %v4748
      %v4815 = vsel %vm1826, %v4704, 0.0
      %v4816 = vsel %vm1826, %v4707, 0.0
      %v4817 = vsel %vm1826, %v4710, 0.0
      %v4818 = vsel %vm1826, %v4713, 0.0
      %v4819 = vsel %vm1826, %v4716, 0.0
      %v4820 = vsel %vm1826, %v4719, 0.0
      %v4821 = vsel %vm1826, %v4722, 0.0
      %v4822 = vsel %vm1826, %v4725, 0.0
      %v4823 = vsel %vm1826, %v4728, 0.0
      %v4824 = vsel %vm1826, %v4731, 0.0
      %v4825 = vsel %vm1826, %v4734, 0.0
      %v4826 = vsel %vm1826, %v4737, 0.0
      %v4827 = vsel %vm1826, %v4740, 0.0
      %v4828 = vsel %vm1826, %v4743, 0.0
      %v4829 = vsel %vm1826, %v4746, 0.0
      %v4830 = vsel %vm1826, %v4749, 0.0
      %v4863 = vrot.slane %v4799, 1
      %v4864 = vrot.slane %v4705, 1
      %v4865 = vsel %vm1172, %v4863, %v4864
      %v4866 = vrot.slane %v4815, 1
      %v4867 = vsel %vm1172, %v4864, %v4866
      %v4868 = vrot.slane %v4800, 1
      %v4869 = vrot.slane %v4708, 1
      %v4870 = vsel %vm1172, %v4868, %v4869
      %v4871 = vrot.slane %v4816, 1
      %v4872 = vsel %vm1172, %v4869, %v4871
      %v4873 = vrot.slane %v4801, 1
      %v4874 = vrot.slane %v4711, 1
      %v4875 = vsel %vm1172, %v4873, %v4874
      %v4876 = vrot.slane %v4817, 1
      %v4877 = vsel %vm1172, %v4874, %v4876
      %v4878 = vrot.slane %v4802, 1
      %v4879 = vrot.slane %v4714, 1
      %v4880 = vsel %vm1172, %v4878, %v4879
      %v4881 = vrot.slane %v4818, 1
      %v4882 = vsel %vm1172, %v4879, %v4881
      %v4883 = vrot.slane %v4803, 1
      %v4884 = vrot.slane %v4717, 1
      %v4885 = vsel %vm1172, %v4883, %v4884
      %v4886 = vrot.slane %v4819, 1
      %v4887 = vsel %vm1172, %v4884, %v4886
      %v4888 = vrot.slane %v4804, 1
      %v4889 = vrot.slane %v4720, 1
      %v4890 = vsel %vm1172, %v4888, %v4889
      %v4891 = vrot.slane %v4820, 1
      %v4892 = vsel %vm1172, %v4889, %v4891
      %v4893 = vrot.slane %v4805, 1
      %v4894 = vrot.slane %v4723, 1
      %v4895 = vsel %vm1172, %v4893, %v4894
      %v4896 = vrot.slane %v4821, 1
      %v4897 = vsel %vm1172, %v4894, %v4896
      %v4898 = vrot.slane %v4806, 1
      %v4899 = vrot.slane %v4726, 1
      %v4900 = vsel %vm1172, %v4898, %v4899
      %v4901 = vrot.slane %v4822, 1
      %v4902 = vsel %vm1172, %v4899, %v4901
      %v4903 = vrot.slane %v4807, 1
      %v4904 = vrot.slane %v4729, 1
      %v4905 = vsel %vm1172, %v4903, %v4904
      %v4906 = vrot.slane %v4823, 1
      %v4907 = vsel %vm1172, %v4904, %v4906
      %v4908 = vrot.slane %v4808, 1
      %v4909 = vrot.slane %v4732, 1
      %v4910 = vsel %vm1172, %v4908, %v4909
      %v4911 = vrot.slane %v4824, 1
      %v4912 = vsel %vm1172, %v4909, %v4911
      %v4913 = vrot.slane %v4809, 1
      %v4914 = vrot.slane %v4735, 1
      %v4915 = vsel %vm1172, %v4913, %v4914
      %v4916 = vrot.slane %v4825, 1
      %v4917 = vsel %vm1172, %v4914, %v4916
      %v4918 = vrot.slane %v4810, 1
      %v4919 = vrot.slane %v4738, 1
      %v4920 = vsel %vm1172, %v4918, %v4919
      %v4921 = vrot.slane %v4826, 1
      %v4922 = vsel %vm1172, %v4919, %v4921
      %v4923 = vrot.slane %v4811, 1
      %v4924 = vrot.slane %v4741, 1
      %v4925 = vsel %vm1172, %v4923, %v4924
      %v4926 = vrot.slane %v4827, 1
      %v4927 = vsel %vm1172, %v4924, %v4926
      %v4928 = vrot.slane %v4812, 1
      %v4929 = vrot.slane %v4744, 1
      %v4930 = vsel %vm1172, %v4928, %v4929
      %v4931 = vrot.slane %v4828, 1
      %v4932 = vsel %vm1172, %v4929, %v4931
      %v4933 = vrot.slane %v4813, 1
      %v4934 = vrot.slane %v4747, 1
      %v4935 = vsel %vm1172, %v4933, %v4934
      %v4936 = vrot.slane %v4829, 1
      %v4937 = vsel %vm1172, %v4934, %v4936
      %v4938 = vrot.slane %v4814, 1
      %v4939 = vrot.slane %v4750, 1
      %v4940 = vsel %vm1172, %v4938, %v4939
      %v4941 = vrot.slane %v4830, 1
      %v4942 = vsel %vm1172, %v4939, %v4941
      %4943 = vrot.lane.b32.xlu0 %v4865, 4
      %v4944 = vpop.permute.xlu0 %4943
      %4945 = vrot.lane.b32.xlu0 %v4867, 4
      %v4946 = vpop.permute.xlu0 %4945
      %4947 = vrot.lane.b32.xlu0 %v4870, 4
      %v4948 = vpop.permute.xlu0 %4947
      %4949 = vrot.lane.b32.xlu0 %v4872, 4
      %v4950 = vpop.permute.xlu0 %4949
      %4951 = vrot.lane.b32.xlu0 %v4875, 4
      %v4952 = vpop.permute.xlu0 %4951
      %4953 = vrot.lane.b32.xlu0 %v4877, 4
      %v4954 = vpop.permute.xlu0 %4953
      %4955 = vrot.lane.b32.xlu0 %v4880, 4
      %v4956 = vpop.permute.xlu0 %4955
      %4957 = vrot.lane.b32.xlu0 %v4882, 4
      %v4958 = vpop.permute.xlu0 %4957
      %4959 = vrot.lane.b32.xlu0 %v4885, 4
      %v4960 = vpop.permute.xlu0 %4959
      %4961 = vrot.lane.b32.xlu0 %v4887, 4
      %v4962 = vpop.permute.xlu0 %4961
      %4963 = vrot.lane.b32.xlu0 %v4890, 4
      %v4964 = vpop.permute.xlu0 %4963
      %4965 = vrot.lane.b32.xlu0 %v4892, 4
      %v4966 = vpop.permute.xlu0 %4965
      %4967 = vrot.lane.b32.xlu0 %v4895, 4
      %v4968 = vpop.permute.xlu0 %4967
      %4969 = vrot.lane.b32.xlu0 %v4897, 4
      %v4970 = vpop.permute.xlu0 %4969
      %4971 = vrot.lane.b32.xlu0 %v4900, 4
      %v4972 = vpop.permute.xlu0 %4971
      %4973 = vrot.lane.b32.xlu0 %v4902, 4
      %v4974 = vpop.permute.xlu0 %4973
      %4975 = vrot.lane.b32.xlu0 %v4905, 4
      %v4976 = vpop.permute.xlu0 %4975
      %4977 = vrot.lane.b32.xlu0 %v4907, 4
      %v4978 = vpop.permute.xlu0 %4977
      %4979 = vrot.lane.b32.xlu0 %v4910, 4
      %v4980 = vpop.permute.xlu0 %4979
      %4981 = vrot.lane.b32.xlu0 %v4912, 4
      %v4982 = vpop.permute.xlu0 %4981
      %4983 = vrot.lane.b32.xlu0 %v4915, 4
      %v4984 = vpop.permute.xlu0 %4983
      %4985 = vrot.lane.b32.xlu0 %v4917, 4
      %v4986 = vpop.permute.xlu0 %4985
      %4987 = vrot.lane.b32.xlu0 %v4920, 4
      %v4988 = vpop.permute.xlu0 %4987
      %4989 = vrot.lane.b32.xlu0 %v4922, 4
      %v4990 = vpop.permute.xlu0 %4989
      %4991 = vrot.lane.b32.xlu0 %v4925, 4
      %v4992 = vpop.permute.xlu0 %4991
      %4993 = vrot.lane.b32.xlu0 %v4927, 4
      %v4994 = vpop.permute.xlu0 %4993
      %4995 = vrot.lane.b32.xlu0 %v4930, 4
      %v4996 = vpop.permute.xlu0 %4995
      %4997 = vrot.lane.b32.xlu0 %v4932, 4
      %v4998 = vpop.permute.xlu0 %4997
      %4999 = vrot.lane.b32.xlu0 %v4935, 4
      %v5000 = vpop.permute.xlu0 %4999
      %5001 = vrot.lane.b32.xlu0 %v4937, 4
      %v5002 = vpop.permute.xlu0 %5001
      %5003 = vrot.lane.b32.xlu0 %v4940, 4
      %v5004 = vpop.permute.xlu0 %5003
      %5005 = vrot.lane.b32.xlu0 %v4942, 4
      %v5006 = vpop.permute.xlu0 %5005
      %v5039 = vrot.slane %v4799, 2
      %v5040 = vrot.slane %v4705, 2
      %v5041 = vsel %vm1317, %v5039, %v5040
      %v5042 = vrot.slane %v4815, 2
      %v5043 = vsel %vm1317, %v5040, %v5042
      %v5044 = vrot.slane %v4800, 2
      %v5045 = vrot.slane %v4708, 2
      %v5046 = vsel %vm1317, %v5044, %v5045
      %v5047 = vrot.slane %v4816, 2
      %v5048 = vsel %vm1317, %v5045, %v5047
      %v5049 = vrot.slane %v4801, 2
      %v5050 = vrot.slane %v4711, 2
      %v5051 = vsel %vm1317, %v5049, %v5050
      %v5052 = vrot.slane %v4817, 2
      %v5053 = vsel %vm1317, %v5050, %v5052
      %v5054 = vrot.slane %v4802, 2
      %v5055 = vrot.slane %v4714, 2
      %v5056 = vsel %vm1317, %v5054, %v5055
      %v5057 = vrot.slane %v4818, 2
      %v5058 = vsel %vm1317, %v5055, %v5057
      %v5059 = vrot.slane %v4803, 2
      %v5060 = vrot.slane %v4717, 2
      %v5061 = vsel %vm1317, %v5059, %v5060
      %v5062 = vrot.slane %v4819, 2
      %v5063 = vsel %vm1317, %v5060, %v5062
      %v5064 = vrot.slane %v4804, 2
      %v5065 = vrot.slane %v4720, 2
      %v5066 = vsel %vm1317, %v5064, %v5065
      %v5067 = vrot.slane %v4820, 2
      %v5068 = vsel %vm1317, %v5065, %v5067
      %v5069 = vrot.slane %v4805, 2
      %v5070 = vrot.slane %v4723, 2
      %v5071 = vsel %vm1317, %v5069, %v5070
      %v5072 = vrot.slane %v4821, 2
      %v5073 = vsel %vm1317, %v5070, %v5072
      %v5074 = vrot.slane %v4806, 2
      %v5075 = vrot.slane %v4726, 2
      %v5076 = vsel %vm1317, %v5074, %v5075
      %v5077 = vrot.slane %v4822, 2
      %v5078 = vsel %vm1317, %v5075, %v5077
      %v5079 = vrot.slane %v4807, 2
      %v5080 = vrot.slane %v4729, 2
      %v5081 = vsel %vm1317, %v5079, %v5080
      %v5082 = vrot.slane %v4823, 2
      %v5083 = vsel %vm1317, %v5080, %v5082
      %v5084 = vrot.slane %v4808, 2
      %v5085 = vrot.slane %v4732, 2
      %v5086 = vsel %vm1317, %v5084, %v5085
      %v5087 = vrot.slane %v4824, 2
      %v5088 = vsel %vm1317, %v5085, %v5087
      %v5089 = vrot.slane %v4809, 2
      %v5090 = vrot.slane %v4735, 2
      %v5091 = vsel %vm1317, %v5089, %v5090
      %v5092 = vrot.slane %v4825, 2
      %v5093 = vsel %vm1317, %v5090, %v5092
      %v5094 = vrot.slane %v4810, 2
      %v5095 = vrot.slane %v4738, 2
      %v5096 = vsel %vm1317, %v5094, %v5095
      %v5097 = vrot.slane %v4826, 2
      %v5098 = vsel %vm1317, %v5095, %v5097
      %v5099 = vrot.slane %v4811, 2
      %v5100 = vrot.slane %v4741, 2
      %v5101 = vsel %vm1317, %v5099, %v5100
      %v5102 = vrot.slane %v4827, 2
      %v5103 = vsel %vm1317, %v5100, %v5102
      %v5104 = vrot.slane %v4812, 2
      %v5105 = vrot.slane %v4744, 2
      %v5106 = vsel %vm1317, %v5104, %v5105
      %v5107 = vrot.slane %v4828, 2
      %v5108 = vsel %vm1317, %v5105, %v5107
      %v5109 = vrot.slane %v4813, 2
      %v5110 = vrot.slane %v4747, 2
      %v5111 = vsel %vm1317, %v5109, %v5110
      %v5112 = vrot.slane %v4829, 2
      %v5113 = vsel %vm1317, %v5110, %v5112
      %v5114 = vrot.slane %v4814, 2
      %v5115 = vrot.slane %v4750, 2
      %v5116 = vsel %vm1317, %v5114, %v5115
      %v5117 = vrot.slane %v4830, 2
      %v5118 = vsel %vm1317, %v5115, %v5117
      %5119 = vrot.lane.b32.xlu0 %v5041, 8
      %v5120 = vpop.permute.xlu0 %5119
      %5121 = vrot.lane.b32.xlu0 %v5043, 8
      %v5122 = vpop.permute.xlu0 %5121
      %5123 = vrot.lane.b32.xlu0 %v5046, 8
      %v5124 = vpop.permute.xlu0 %5123
      %5125 = vrot.lane.b32.xlu0 %v5048, 8
      %v5126 = vpop.permute.xlu0 %5125
      %5127 = vrot.lane.b32.xlu0 %v5051, 8
      %v5128 = vpop.permute.xlu0 %5127
      %5129 = vrot.lane.b32.xlu0 %v5053, 8
      %v5130 = vpop.permute.xlu0 %5129
      %5131 = vrot.lane.b32.xlu0 %v5056, 8
      %v5132 = vpop.permute.xlu0 %5131
      %5133 = vrot.lane.b32.xlu0 %v5058, 8
      %v5134 = vpop.permute.xlu0 %5133
      %5135 = vrot.lane.b32.xlu0 %v5061, 8
      %v5136 = vpop.permute.xlu0 %5135
      %5137 = vrot.lane.b32.xlu0 %v5063, 8
      %v5138 = vpop.permute.xlu0 %5137
      %5139 = vrot.lane.b32.xlu0 %v5066, 8
      %v5140 = vpop.permute.xlu0 %5139
      %5141 = vrot.lane.b32.xlu0 %v5068, 8
      %v5142 = vpop.permute.xlu0 %5141
      %5143 = vrot.lane.b32.xlu0 %v5071, 8
      %v5144 = vpop.permute.xlu0 %5143
      %5145 = vrot.lane.b32.xlu0 %v5073, 8
      %v5146 = vpop.permute.xlu0 %5145
      %5147 = vrot.lane.b32.xlu0 %v5076, 8
      %v5148 = vpop.permute.xlu0 %5147
      %5149 = vrot.lane.b32.xlu0 %v5078, 8
      %v5150 = vpop.permute.xlu0 %5149
      %5151 = vrot.lane.b32.xlu0 %v5081, 8
      %v5152 = vpop.permute.xlu0 %5151
      %5153 = vrot.lane.b32.xlu0 %v5083, 8
      %v5154 = vpop.permute.xlu0 %5153
      %5155 = vrot.lane.b32.xlu0 %v5086, 8
      %v5156 = vpop.permute.xlu0 %5155
      %5157 = vrot.lane.b32.xlu0 %v5088, 8
      %v5158 = vpop.permute.xlu0 %5157
      %5159 = vrot.lane.b32.xlu0 %v5091, 8
      %v5160 = vpop.permute.xlu0 %5159
      %5161 = vrot.lane.b32.xlu0 %v5093, 8
      %v5162 = vpop.permute.xlu0 %5161
      %5163 = vrot.lane.b32.xlu0 %v5096, 8
      %v5164 = vpop.permute.xlu0 %5163
      %5165 = vrot.lane.b32.xlu0 %v5098, 8
      %v5166 = vpop.permute.xlu0 %5165
      %5167 = vrot.lane.b32.xlu0 %v5101, 8
      %v5168 = vpop.permute.xlu0 %5167
      %5169 = vrot.lane.b32.xlu0 %v5103, 8
      %v5170 = vpop.permute.xlu0 %5169
      %5171 = vrot.lane.b32.xlu0 %v5106, 8
      %v5172 = vpop.permute.xlu0 %5171
      %5173 = vrot.lane.b32.xlu0 %v5108, 8
      %v5174 = vpop.permute.xlu0 %5173
      %5175 = vrot.lane.b32.xlu0 %v5111, 8
      %v5176 = vpop.permute.xlu0 %5175
      %5177 = vrot.lane.b32.xlu0 %v5113, 8
      %v5178 = vpop.permute.xlu0 %5177
      %5179 = vrot.lane.b32.xlu0 %v5116, 8
      %v5180 = vpop.permute.xlu0 %5179
      %5181 = vrot.lane.b32.xlu0 %v5118, 8
      %v5182 = vpop.permute.xlu0 %5181
      %v5215 = vrot.slane %v4799, 3
      %v5216 = vrot.slane %v4705, 3
      %v5217 = vsel %vm2339, %v5215, %v5216
      %v5218 = vrot.slane %v4815, 3
      %v5219 = vsel %vm2339, %v5216, %v5218
      %v5220 = vrot.slane %v4800, 3
      %v5221 = vrot.slane %v4708, 3
      %v5222 = vsel %vm2339, %v5220, %v5221
      %v5223 = vrot.slane %v4816, 3
      %v5224 = vsel %vm2339, %v5221, %v5223
      %v5225 = vrot.slane %v4801, 3
      %v5226 = vrot.slane %v4711, 3
      %v5227 = vsel %vm2339, %v5225, %v5226
      %v5228 = vrot.slane %v4817, 3
      %v5229 = vsel %vm2339, %v5226, %v5228
      %v5230 = vrot.slane %v4802, 3
      %v5231 = vrot.slane %v4714, 3
      %v5232 = vsel %vm2339, %v5230, %v5231
      %v5233 = vrot.slane %v4818, 3
      %v5234 = vsel %vm2339, %v5231, %v5233
      %v5235 = vrot.slane %v4803, 3
      %v5236 = vrot.slane %v4717, 3
      %v5237 = vsel %vm2339, %v5235, %v5236
      %v5238 = vrot.slane %v4819, 3
      %v5239 = vsel %vm2339, %v5236, %v5238
      %v5240 = vrot.slane %v4804, 3
      %v5241 = vrot.slane %v4720, 3
      %v5242 = vsel %vm2339, %v5240, %v5241
      %v5243 = vrot.slane %v4820, 3
      %v5244 = vsel %vm2339, %v5241, %v5243
      %v5245 = vrot.slane %v4805, 3
      %v5246 = vrot.slane %v4723, 3
      %v5247 = vsel %vm2339, %v5245, %v5246
      %v5248 = vrot.slane %v4821, 3
      %v5249 = vsel %vm2339, %v5246, %v5248
      %v5250 = vrot.slane %v4806, 3
      %v5251 = vrot.slane %v4726, 3
      %v5252 = vsel %vm2339, %v5250, %v5251
      %v5253 = vrot.slane %v4822, 3
      %v5254 = vsel %vm2339, %v5251, %v5253
      %v5255 = vrot.slane %v4807, 3
      %v5256 = vrot.slane %v4729, 3
      %v5257 = vsel %vm2339, %v5255, %v5256
      %v5258 = vrot.slane %v4823, 3
      %v5259 = vsel %vm2339, %v5256, %v5258
      %v5260 = vrot.slane %v4808, 3
      %v5261 = vrot.slane %v4732, 3
      %v5262 = vsel %vm2339, %v5260, %v5261
      %v5263 = vrot.slane %v4824, 3
      %v5264 = vsel %vm2339, %v5261, %v5263
      %v5265 = vrot.slane %v4809, 3
      %v5266 = vrot.slane %v4735, 3
      %v5267 = vsel %vm2339, %v5265, %v5266
      %v5268 = vrot.slane %v4825, 3
      %v5269 = vsel %vm2339, %v5266, %v5268
      %v5270 = vrot.slane %v4810, 3
      %v5271 = vrot.slane %v4738, 3
      %v5272 = vsel %vm2339, %v5270, %v5271
      %v5273 = vrot.slane %v4826, 3
      %v5274 = vsel %vm2339, %v5271, %v5273
      %v5275 = vrot.slane %v4811, 3
      %v5276 = vrot.slane %v4741, 3
      %v5277 = vsel %vm2339, %v5275, %v5276
      %v5278 = vrot.slane %v4827, 3
      %v5279 = vsel %vm2339, %v5276, %v5278
      %v5280 = vrot.slane %v4812, 3
      %v5281 = vrot.slane %v4744, 3
      %v5282 = vsel %vm2339, %v5280, %v5281
      %v5283 = vrot.slane %v4828, 3
      %v5284 = vsel %vm2339, %v5281, %v5283
      %v5285 = vrot.slane %v4813, 3
      %v5286 = vrot.slane %v4747, 3
      %v5287 = vsel %vm2339, %v5285, %v5286
      %v5288 = vrot.slane %v4829, 3
      %v5289 = vsel %vm2339, %v5286, %v5288
      %v5290 = vrot.slane %v4814, 3
      %v5291 = vrot.slane %v4750, 3
      %v5292 = vsel %vm2339, %v5290, %v5291
      %v5293 = vrot.slane %v4830, 3
      %v5294 = vsel %vm2339, %v5291, %v5293
      %5295 = vrot.lane.b32.xlu0 %v5217, 12
      %v5296 = vpop.permute.xlu0 %5295
      %5297 = vrot.lane.b32.xlu0 %v5219, 12
      %v5298 = vpop.permute.xlu0 %5297
      %5299 = vrot.lane.b32.xlu0 %v5222, 12
      %v5300 = vpop.permute.xlu0 %5299
      %5301 = vrot.lane.b32.xlu0 %v5224, 12
      %v5302 = vpop.permute.xlu0 %5301
      %5303 = vrot.lane.b32.xlu0 %v5227, 12
      %v5304 = vpop.permute.xlu0 %5303
      %5305 = vrot.lane.b32.xlu0 %v5229, 12
      %v5306 = vpop.permute.xlu0 %5305
      %5307 = vrot.lane.b32.xlu0 %v5232, 12
      %v5308 = vpop.permute.xlu0 %5307
      %5309 = vrot.lane.b32.xlu0 %v5234, 12
      %v5310 = vpop.permute.xlu0 %5309
      %5311 = vrot.lane.b32.xlu0 %v5237, 12
      %v5312 = vpop.permute.xlu0 %5311
      %5313 = vrot.lane.b32.xlu0 %v5239, 12
      %v5314 = vpop.permute.xlu0 %5313
      %5315 = vrot.lane.b32.xlu0 %v5242, 12
      %v5316 = vpop.permute.xlu0 %5315
      %5317 = vrot.lane.b32.xlu0 %v5244, 12
      %v5318 = vpop.permute.xlu0 %5317
      %5319 = vrot.lane.b32.xlu0 %v5247, 12
      %v5320 = vpop.permute.xlu0 %5319
      %5321 = vrot.lane.b32.xlu0 %v5249, 12
      %v5322 = vpop.permute.xlu0 %5321
      %5323 = vrot.lane.b32.xlu0 %v5252, 12
      %v5324 = vpop.permute.xlu0 %5323
      %5325 = vrot.lane.b32.xlu0 %v5254, 12
      %v5326 = vpop.permute.xlu0 %5325
      %5327 = vrot.lane.b32.xlu0 %v5257, 12
      %v5328 = vpop.permute.xlu0 %5327
      %5329 = vrot.lane.b32.xlu0 %v5259, 12
      %v5330 = vpop.permute.xlu0 %5329
      %5331 = vrot.lane.b32.xlu0 %v5262, 12
      %v5332 = vpop.permute.xlu0 %5331
      %5333 = vrot.lane.b32.xlu0 %v5264, 12
      %v5334 = vpop.permute.xlu0 %5333
      %5335 = vrot.lane.b32.xlu0 %v5267, 12
      %v5336 = vpop.permute.xlu0 %5335
      %5337 = vrot.lane.b32.xlu0 %v5269, 12
      %v5338 = vpop.permute.xlu0 %5337
      %5339 = vrot.lane.b32.xlu0 %v5272, 12
      %v5340 = vpop.permute.xlu0 %5339
      %5341 = vrot.lane.b32.xlu0 %v5274, 12
      %v5342 = vpop.permute.xlu0 %5341
      %5343 = vrot.lane.b32.xlu0 %v5277, 12
      %v5344 = vpop.permute.xlu0 %5343
      %5345 = vrot.lane.b32.xlu0 %v5279, 12
      %v5346 = vpop.permute.xlu0 %5345
      %5347 = vrot.lane.b32.xlu0 %v5282, 12
      %v5348 = vpop.permute.xlu0 %5347
      %5349 = vrot.lane.b32.xlu0 %v5284, 12
      %v5350 = vpop.permute.xlu0 %5349
      %5351 = vrot.lane.b32.xlu0 %v5287, 12
      %v5352 = vpop.permute.xlu0 %5351
      %5353 = vrot.lane.b32.xlu0 %v5289, 12
      %v5354 = vpop.permute.xlu0 %5353
      %5355 = vrot.lane.b32.xlu0 %v5292, 12
      %v5356 = vpop.permute.xlu0 %5355
      %5357 = vrot.lane.b32.xlu0 %v5294, 12
      %v5358 = vpop.permute.xlu0 %5357
      %v5391 = vrot.slane %v4799, 4
      %v5392 = vrot.slane %v4705, 4
      %v5393 = vsel %vm686, %v5391, %v5392
      %v5394 = vrot.slane %v4815, 4
      %v5395 = vsel %vm686, %v5392, %v5394
      %v5396 = vrot.slane %v4800, 4
      %v5397 = vrot.slane %v4708, 4
      %v5398 = vsel %vm686, %v5396, %v5397
      %v5399 = vrot.slane %v4816, 4
      %v5400 = vsel %vm686, %v5397, %v5399
      %v5401 = vrot.slane %v4801, 4
      %v5402 = vrot.slane %v4711, 4
      %v5403 = vsel %vm686, %v5401, %v5402
      %v5404 = vrot.slane %v4817, 4
      %v5405 = vsel %vm686, %v5402, %v5404
      %v5406 = vrot.slane %v4802, 4
      %v5407 = vrot.slane %v4714, 4
      %v5408 = vsel %vm686, %v5406, %v5407
      %v5409 = vrot.slane %v4818, 4
      %v5410 = vsel %vm686, %v5407, %v5409
      %v5411 = vrot.slane %v4803, 4
      %v5412 = vrot.slane %v4717, 4
      %v5413 = vsel %vm686, %v5411, %v5412
      %v5414 = vrot.slane %v4819, 4
      %v5415 = vsel %vm686, %v5412, %v5414
      %v5416 = vrot.slane %v4804, 4
      %v5417 = vrot.slane %v4720, 4
      %v5418 = vsel %vm686, %v5416, %v5417
      %v5419 = vrot.slane %v4820, 4
      %v5420 = vsel %vm686, %v5417, %v5419
      %v5421 = vrot.slane %v4805, 4
      %v5422 = vrot.slane %v4723, 4
      %v5423 = vsel %vm686, %v5421, %v5422
      %v5424 = vrot.slane %v4821, 4
      %v5425 = vsel %vm686, %v5422, %v5424
      %v5426 = vrot.slane %v4806, 4
      %v5427 = vrot.slane %v4726, 4
      %v5428 = vsel %vm686, %v5426, %v5427
      %v5429 = vrot.slane %v4822, 4
      %v5430 = vsel %vm686, %v5427, %v5429
      %v5431 = vrot.slane %v4807, 4
      %v5432 = vrot.slane %v4729, 4
      %v5433 = vsel %vm686, %v5431, %v5432
      %v5434 = vrot.slane %v4823, 4
      %v5435 = vsel %vm686, %v5432, %v5434
      %v5436 = vrot.slane %v4808, 4
      %v5437 = vrot.slane %v4732, 4
      %v5438 = vsel %vm686, %v5436, %v5437
      %v5439 = vrot.slane %v4824, 4
      %v5440 = vsel %vm686, %v5437, %v5439
      %v5441 = vrot.slane %v4809, 4
      %v5442 = vrot.slane %v4735, 4
      %v5443 = vsel %vm686, %v5441, %v5442
      %v5444 = vrot.slane %v4825, 4
      %v5445 = vsel %vm686, %v5442, %v5444
      %v5446 = vrot.slane %v4810, 4
      %v5447 = vrot.slane %v4738, 4
      %v5448 = vsel %vm686, %v5446, %v5447
      %v5449 = vrot.slane %v4826, 4
      %v5450 = vsel %vm686, %v5447, %v5449
      %v5451 = vrot.slane %v4811, 4
      %v5452 = vrot.slane %v4741, 4
      %v5453 = vsel %vm686, %v5451, %v5452
      %v5454 = vrot.slane %v4827, 4
      %v5455 = vsel %vm686, %v5452, %v5454
      %v5456 = vrot.slane %v4812, 4
      %v5457 = vrot.slane %v4744, 4
      %v5458 = vsel %vm686, %v5456, %v5457
      %v5459 = vrot.slane %v4828, 4
      %v5460 = vsel %vm686, %v5457, %v5459
      %v5461 = vrot.slane %v4813, 4
      %v5462 = vrot.slane %v4747, 4
      %v5463 = vsel %vm686, %v5461, %v5462
      %v5464 = vrot.slane %v4829, 4
      %v5465 = vsel %vm686, %v5462, %v5464
      %v5466 = vrot.slane %v4814, 4
      %v5467 = vrot.slane %v4750, 4
      %v5468 = vsel %vm686, %v5466, %v5467
      %v5469 = vrot.slane %v4830, 4
      %v5470 = vsel %vm686, %v5467, %v5469
      %5471 = vrot.lane.b32.xlu0 %v5393, 16
      %v5472 = vpop.permute.xlu0 %5471
      %5473 = vrot.lane.b32.xlu0 %v5395, 16
      %v5474 = vpop.permute.xlu0 %5473
      %5475 = vrot.lane.b32.xlu0 %v5398, 16
      %v5476 = vpop.permute.xlu0 %5475
      %5477 = vrot.lane.b32.xlu0 %v5400, 16
      %v5478 = vpop.permute.xlu0 %5477
      %5479 = vrot.lane.b32.xlu0 %v5403, 16
      %v5480 = vpop.permute.xlu0 %5479
      %5481 = vrot.lane.b32.xlu0 %v5405, 16
      %v5482 = vpop.permute.xlu0 %5481
      %5483 = vrot.lane.b32.xlu0 %v5408, 16
      %v5484 = vpop.permute.xlu0 %5483
      %5485 = vrot.lane.b32.xlu0 %v5410, 16
      %v5486 = vpop.permute.xlu0 %5485
      %5487 = vrot.lane.b32.xlu0 %v5413, 16
      %v5488 = vpop.permute.xlu0 %5487
      %5489 = vrot.lane.b32.xlu0 %v5415, 16
      %v5490 = vpop.permute.xlu0 %5489
      %5491 = vrot.lane.b32.xlu0 %v5418, 16
      %v5492 = vpop.permute.xlu0 %5491
      %5493 = vrot.lane.b32.xlu0 %v5420, 16
      %v5494 = vpop.permute.xlu0 %5493
      %5495 = vrot.lane.b32.xlu0 %v5423, 16
      %v5496 = vpop.permute.xlu0 %5495
      %5497 = vrot.lane.b32.xlu0 %v5425, 16
      %v5498 = vpop.permute.xlu0 %5497
      %5499 = vrot.lane.b32.xlu0 %v5428, 16
      %v5500 = vpop.permute.xlu0 %5499
      %5501 = vrot.lane.b32.xlu0 %v5430, 16
      %v5502 = vpop.permute.xlu0 %5501
      %5503 = vrot.lane.b32.xlu0 %v5433, 16
      %v5504 = vpop.permute.xlu0 %5503
      %5505 = vrot.lane.b32.xlu0 %v5435, 16
      %v5506 = vpop.permute.xlu0 %5505
      %5507 = vrot.lane.b32.xlu0 %v5438, 16
      %v5508 = vpop.permute.xlu0 %5507
      %5509 = vrot.lane.b32.xlu0 %v5440, 16
      %v5510 = vpop.permute.xlu0 %5509
      %5511 = vrot.lane.b32.xlu0 %v5443, 16
      %v5512 = vpop.permute.xlu0 %5511
      %5513 = vrot.lane.b32.xlu0 %v5445, 16
      %v5514 = vpop.permute.xlu0 %5513
      %5515 = vrot.lane.b32.xlu0 %v5448, 16
      %v5516 = vpop.permute.xlu0 %5515
      %5517 = vrot.lane.b32.xlu0 %v5450, 16
      %v5518 = vpop.permute.xlu0 %5517
      %5519 = vrot.lane.b32.xlu0 %v5453, 16
      %v5520 = vpop.permute.xlu0 %5519
      %5521 = vrot.lane.b32.xlu0 %v5455, 16
      %v5522 = vpop.permute.xlu0 %5521
      %5523 = vrot.lane.b32.xlu0 %v5458, 16
      %v5524 = vpop.permute.xlu0 %5523
      %5525 = vrot.lane.b32.xlu0 %v5460, 16
      %v5526 = vpop.permute.xlu0 %5525
      %5527 = vrot.lane.b32.xlu0 %v5463, 16
      %v5528 = vpop.permute.xlu0 %5527
      %5529 = vrot.lane.b32.xlu0 %v5465, 16
      %v5530 = vpop.permute.xlu0 %5529
      %5531 = vrot.lane.b32.xlu0 %v5468, 16
      %v5532 = vpop.permute.xlu0 %5531
      %5533 = vrot.lane.b32.xlu0 %v5470, 16
      %v5534 = vpop.permute.xlu0 %5533
      %v5567 = vrot.slane %v4799, 5
      %v5568 = vrot.slane %v4705, 5
      %v5569 = vsel %vm1826, %v5567, %v5568
      %v5570 = vrot.slane %v4815, 5
      %v5571 = vsel %vm1826, %v5568, %v5570
      %v5572 = vrot.slane %v4800, 5
      %v5573 = vrot.slane %v4708, 5
      %v5574 = vsel %vm1826, %v5572, %v5573
      %v5575 = vrot.slane %v4816, 5
      %v5576 = vsel %vm1826, %v5573, %v5575
      %v5577 = vrot.slane %v4801, 5
      %v5578 = vrot.slane %v4711, 5
      %v5579 = vsel %vm1826, %v5577, %v5578
      %v5580 = vrot.slane %v4817, 5
      %v5581 = vsel %vm1826, %v5578, %v5580
      %v5582 = vrot.slane %v4802, 5
      %v5583 = vrot.slane %v4714, 5
      %v5584 = vsel %vm1826, %v5582, %v5583
      %v5585 = vrot.slane %v4818, 5
      %v5586 = vsel %vm1826, %v5583, %v5585
      %v5587 = vrot.slane %v4803, 5
      %v5588 = vrot.slane %v4717, 5
      %v5589 = vsel %vm1826, %v5587, %v5588
      %v5590 = vrot.slane %v4819, 5
      %v5591 = vsel %vm1826, %v5588, %v5590
      %v5592 = vrot.slane %v4804, 5
      %v5593 = vrot.slane %v4720, 5
      %v5594 = vsel %vm1826, %v5592, %v5593
      %v5595 = vrot.slane %v4820, 5
      %v5596 = vsel %vm1826, %v5593, %v5595
      %v5597 = vrot.slane %v4805, 5
      %v5598 = vrot.slane %v4723, 5
      %v5599 = vsel %vm1826, %v5597, %v5598
      %v5600 = vrot.slane %v4821, 5
      %v5601 = vsel %vm1826, %v5598, %v5600
      %v5602 = vrot.slane %v4806, 5
      %v5603 = vrot.slane %v4726, 5
      %v5604 = vsel %vm1826, %v5602, %v5603
      %v5605 = vrot.slane %v4822, 5
      %v5606 = vsel %vm1826, %v5603, %v5605
      %v5607 = vrot.slane %v4807, 5
      %v5608 = vrot.slane %v4729, 5
      %v5609 = vsel %vm1826, %v5607, %v5608
      %v5610 = vrot.slane %v4823, 5
      %v5611 = vsel %vm1826, %v5608, %v5610
      %v5612 = vrot.slane %v4808, 5
      %v5613 = vrot.slane %v4732, 5
      %v5614 = vsel %vm1826, %v5612, %v5613
      %v5615 = vrot.slane %v4824, 5
      %v5616 = vsel %vm1826, %v5613, %v5615
      %v5617 = vrot.slane %v4809, 5
      %v5618 = vrot.slane %v4735, 5
      %v5619 = vsel %vm1826, %v5617, %v5618
      %v5620 = vrot.slane %v4825, 5
      %v5621 = vsel %vm1826, %v5618, %v5620
      %v5622 = vrot.slane %v4810, 5
      %v5623 = vrot.slane %v4738, 5
      %v5624 = vsel %vm1826, %v5622, %v5623
      %v5625 = vrot.slane %v4826, 5
      %v5626 = vsel %vm1826, %v5623, %v5625
      %v5627 = vrot.slane %v4811, 5
      %v5628 = vrot.slane %v4741, 5
      %v5629 = vsel %vm1826, %v5627, %v5628
      %v5630 = vrot.slane %v4827, 5
      %v5631 = vsel %vm1826, %v5628, %v5630
      %v5632 = vrot.slane %v4812, 5
      %v5633 = vrot.slane %v4744, 5
      %v5634 = vsel %vm1826, %v5632, %v5633
      %v5635 = vrot.slane %v4828, 5
      %v5636 = vsel %vm1826, %v5633, %v5635
      %v5637 = vrot.slane %v4813, 5
      %v5638 = vrot.slane %v4747, 5
      %v5639 = vsel %vm1826, %v5637, %v5638
      %v5640 = vrot.slane %v4829, 5
      %v5641 = vsel %vm1826, %v5638, %v5640
      %v5642 = vrot.slane %v4814, 5
      %v5643 = vrot.slane %v4750, 5
      %v5644 = vsel %vm1826, %v5642, %v5643
      %v5645 = vrot.slane %v4830, 5
      %v5646 = vsel %vm1826, %v5643, %v5645
      %5647 = vrot.lane.b32.xlu0 %v5569, 20
      %v5648 = vpop.permute.xlu0 %5647
      %5649 = vrot.lane.b32.xlu0 %v5571, 20
      %v5650 = vpop.permute.xlu0 %5649
      %5651 = vrot.lane.b32.xlu0 %v5574, 20
      %v5652 = vpop.permute.xlu0 %5651
      %5653 = vrot.lane.b32.xlu0 %v5576, 20
      %v5654 = vpop.permute.xlu0 %5653
      %5655 = vrot.lane.b32.xlu0 %v5579, 20
      %v5656 = vpop.permute.xlu0 %5655
      %5657 = vrot.lane.b32.xlu0 %v5581, 20
      %v5658 = vpop.permute.xlu0 %5657
      %5659 = vrot.lane.b32.xlu0 %v5584, 20
      %v5660 = vpop.permute.xlu0 %5659
      %5661 = vrot.lane.b32.xlu0 %v5586, 20
      %v5662 = vpop.permute.xlu0 %5661
      %5663 = vrot.lane.b32.xlu0 %v5589, 20
      %v5664 = vpop.permute.xlu0 %5663
      %5665 = vrot.lane.b32.xlu0 %v5591, 20
      %v5666 = vpop.permute.xlu0 %5665
      %5667 = vrot.lane.b32.xlu0 %v5594, 20
      %v5668 = vpop.permute.xlu0 %5667
      %5669 = vrot.lane.b32.xlu0 %v5596, 20
      %v5670 = vpop.permute.xlu0 %5669
      %5671 = vrot.lane.b32.xlu0 %v5599, 20
      %v5672 = vpop.permute.xlu0 %5671
      %5673 = vrot.lane.b32.xlu0 %v5601, 20
      %v5674 = vpop.permute.xlu0 %5673
      %5675 = vrot.lane.b32.xlu0 %v5604, 20
      %v5676 = vpop.permute.xlu0 %5675
      %5677 = vrot.lane.b32.xlu0 %v5606, 20
      %v5678 = vpop.permute.xlu0 %5677
      %5679 = vrot.lane.b32.xlu0 %v5609, 20
      %v5680 = vpop.permute.xlu0 %5679
      %5681 = vrot.lane.b32.xlu0 %v5611, 20
      %v5682 = vpop.permute.xlu0 %5681
      %5683 = vrot.lane.b32.xlu0 %v5614, 20
      %v5684 = vpop.permute.xlu0 %5683
      %5685 = vrot.lane.b32.xlu0 %v5616, 20
      %v5686 = vpop.permute.xlu0 %5685
      %5687 = vrot.lane.b32.xlu0 %v5619, 20
      %v5688 = vpop.permute.xlu0 %5687
      %5689 = vrot.lane.b32.xlu0 %v5621, 20
      %v5690 = vpop.permute.xlu0 %5689
      %5691 = vrot.lane.b32.xlu0 %v5624, 20
      %v5692 = vpop.permute.xlu0 %5691
      %5693 = vrot.lane.b32.xlu0 %v5626, 20
      %v5694 = vpop.permute.xlu0 %5693
      %5695 = vrot.lane.b32.xlu0 %v5629, 20
      %v5696 = vpop.permute.xlu0 %5695
      %5697 = vrot.lane.b32.xlu0 %v5631, 20
      %v5698 = vpop.permute.xlu0 %5697
      %5699 = vrot.lane.b32.xlu0 %v5634, 20
      %v5700 = vpop.permute.xlu0 %5699
      %5701 = vrot.lane.b32.xlu0 %v5636, 20
      %v5702 = vpop.permute.xlu0 %5701
      %5703 = vrot.lane.b32.xlu0 %v5639, 20
      %v5704 = vpop.permute.xlu0 %5703
      %5705 = vrot.lane.b32.xlu0 %v5641, 20
      %v5706 = vpop.permute.xlu0 %5705
      %5707 = vrot.lane.b32.xlu0 %v5644, 20
      %v5708 = vpop.permute.xlu0 %5707
      %5709 = vrot.lane.b32.xlu0 %v5646, 20
      %v5710 = vpop.permute.xlu0 %5709
      %v5743 = vrot.slane %v4799, 6
      %v5744 = vrot.slane %v4705, 6
      %v5745 = vsel %vm2868, %v5743, %v5744
      %v5746 = vrot.slane %v4815, 6
      %v5747 = vsel %vm2868, %v5744, %v5746
      %v5748 = vrot.slane %v4800, 6
      %v5749 = vrot.slane %v4708, 6
      %v5750 = vsel %vm2868, %v5748, %v5749
      %v5751 = vrot.slane %v4816, 6
      %v5752 = vsel %vm2868, %v5749, %v5751
      %v5753 = vrot.slane %v4801, 6
      %v5754 = vrot.slane %v4711, 6
      %v5755 = vsel %vm2868, %v5753, %v5754
      %v5756 = vrot.slane %v4817, 6
      %v5757 = vsel %vm2868, %v5754, %v5756
      %v5758 = vrot.slane %v4802, 6
      %v5759 = vrot.slane %v4714, 6
      %v5760 = vsel %vm2868, %v5758, %v5759
      %v5761 = vrot.slane %v4818, 6
      %v5762 = vsel %vm2868, %v5759, %v5761
      %v5763 = vrot.slane %v4803, 6
      %v5764 = vrot.slane %v4717, 6
      %v5765 = vsel %vm2868, %v5763, %v5764
      %v5766 = vrot.slane %v4819, 6
      %v5767 = vsel %vm2868, %v5764, %v5766
      %v5768 = vrot.slane %v4804, 6
      %v5769 = vrot.slane %v4720, 6
      %v5770 = vsel %vm2868, %v5768, %v5769
      %v5771 = vrot.slane %v4820, 6
      %v5772 = vsel %vm2868, %v5769, %v5771
      %v5773 = vrot.slane %v4805, 6
      %v5774 = vrot.slane %v4723, 6
      %v5775 = vsel %vm2868, %v5773, %v5774
      %v5776 = vrot.slane %v4821, 6
      %v5777 = vsel %vm2868, %v5774, %v5776
      %v5778 = vrot.slane %v4806, 6
      %v5779 = vrot.slane %v4726, 6
      %v5780 = vsel %vm2868, %v5778, %v5779
      %v5781 = vrot.slane %v4822, 6
      %v5782 = vsel %vm2868, %v5779, %v5781
      %v5783 = vrot.slane %v4807, 6
      %v5784 = vrot.slane %v4729, 6
      %v5785 = vsel %vm2868, %v5783, %v5784
      %v5786 = vrot.slane %v4823, 6
      %v5787 = vsel %vm2868, %v5784, %v5786
      %v5788 = vrot.slane %v4808, 6
      %v5789 = vrot.slane %v4732, 6
      %v5790 = vsel %vm2868, %v5788, %v5789
      %v5791 = vrot.slane %v4824, 6
      %v5792 = vsel %vm2868, %v5789, %v5791
      %v5793 = vrot.slane %v4809, 6
      %v5794 = vrot.slane %v4735, 6
      %v5795 = vsel %vm2868, %v5793, %v5794
      %v5796 = vrot.slane %v4825, 6
      %v5797 = vsel %vm2868, %v5794, %v5796
      %v5798 = vrot.slane %v4810, 6
      %v5799 = vrot.slane %v4738, 6
      %v5800 = vsel %vm2868, %v5798, %v5799
      %v5801 = vrot.slane %v4826, 6
      %v5802 = vsel %vm2868, %v5799, %v5801
      %v5803 = vrot.slane %v4811, 6
      %v5804 = vrot.slane %v4741, 6
      %v5805 = vsel %vm2868, %v5803, %v5804
      %v5806 = vrot.slane %v4827, 6
      %v5807 = vsel %vm2868, %v5804, %v5806
      %v5808 = vrot.slane %v4812, 6
      %v5809 = vrot.slane %v4744, 6
      %v5810 = vsel %vm2868, %v5808, %v5809
      %v5811 = vrot.slane %v4828, 6
      %v5812 = vsel %vm2868, %v5809, %v5811
      %v5813 = vrot.slane %v4813, 6
      %v5814 = vrot.slane %v4747, 6
      %v5815 = vsel %vm2868, %v5813, %v5814
      %v5816 = vrot.slane %v4829, 6
      %v5817 = vsel %vm2868, %v5814, %v5816
      %v5818 = vrot.slane %v4814, 6
      %v5819 = vrot.slane %v4750, 6
      %v5820 = vsel %vm2868, %v5818, %v5819
      %v5821 = vrot.slane %v4830, 6
      %v5822 = vsel %vm2868, %v5819, %v5821
      %5823 = vrot.lane.b32.xlu0 %v5745, 24
      %v5824 = vpop.permute.xlu0 %5823
      %5825 = vrot.lane.b32.xlu0 %v5747, 24
      %v5826 = vpop.permute.xlu0 %5825
      %5827 = vrot.lane.b32.xlu0 %v5750, 24
      %v5828 = vpop.permute.xlu0 %5827
      %5829 = vrot.lane.b32.xlu0 %v5752, 24
      %v5830 = vpop.permute.xlu0 %5829
      %5831 = vrot.lane.b32.xlu0 %v5755, 24
      %v5832 = vpop.permute.xlu0 %5831
      %5833 = vrot.lane.b32.xlu0 %v5757, 24
      %v5834 = vpop.permute.xlu0 %5833
      %5835 = vrot.lane.b32.xlu0 %v5760, 24
      %v5836 = vpop.permute.xlu0 %5835
      %5837 = vrot.lane.b32.xlu0 %v5762, 24
      %v5838 = vpop.permute.xlu0 %5837
      %5839 = vrot.lane.b32.xlu0 %v5765, 24
      %v5840 = vpop.permute.xlu0 %5839
      %5841 = vrot.lane.b32.xlu0 %v5767, 24
      %v5842 = vpop.permute.xlu0 %5841
      %5843 = vrot.lane.b32.xlu0 %v5770, 24
      %v5844 = vpop.permute.xlu0 %5843
      %5845 = vrot.lane.b32.xlu0 %v5772, 24
      %v5846 = vpop.permute.xlu0 %5845
      %5847 = vrot.lane.b32.xlu0 %v5775, 24
      %v5848 = vpop.permute.xlu0 %5847
      %5849 = vrot.lane.b32.xlu0 %v5777, 24
      %v5850 = vpop.permute.xlu0 %5849
      %5851 = vrot.lane.b32.xlu0 %v5780, 24
      %v5852 = vpop.permute.xlu0 %5851
      %5853 = vrot.lane.b32.xlu0 %v5782, 24
      %v5854 = vpop.permute.xlu0 %5853
      %5855 = vrot.lane.b32.xlu0 %v5785, 24
      %v5856 = vpop.permute.xlu0 %5855
      %5857 = vrot.lane.b32.xlu0 %v5787, 24
      %v5858 = vpop.permute.xlu0 %5857
      %5859 = vrot.lane.b32.xlu0 %v5790, 24
      %v5860 = vpop.permute.xlu0 %5859
      %5861 = vrot.lane.b32.xlu0 %v5792, 24
      %v5862 = vpop.permute.xlu0 %5861
      %5863 = vrot.lane.b32.xlu0 %v5795, 24
      %v5864 = vpop.permute.xlu0 %5863
      %5865 = vrot.lane.b32.xlu0 %v5797, 24
      %v5866 = vpop.permute.xlu0 %5865
      %5867 = vrot.lane.b32.xlu0 %v5800, 24
      %v5868 = vpop.permute.xlu0 %5867
      %5869 = vrot.lane.b32.xlu0 %v5802, 24
      %v5870 = vpop.permute.xlu0 %5869
      %5871 = vrot.lane.b32.xlu0 %v5805, 24
      %v5872 = vpop.permute.xlu0 %5871
      %5873 = vrot.lane.b32.xlu0 %v5807, 24
      %v5874 = vpop.permute.xlu0 %5873
      %5875 = vrot.lane.b32.xlu0 %v5810, 24
      %v5876 = vpop.permute.xlu0 %5875
      %5877 = vrot.lane.b32.xlu0 %v5812, 24
      %v5878 = vpop.permute.xlu0 %5877
      %5879 = vrot.lane.b32.xlu0 %v5815, 24
      %v5880 = vpop.permute.xlu0 %5879
      %5881 = vrot.lane.b32.xlu0 %v5817, 24
      %v5882 = vpop.permute.xlu0 %5881
      %5883 = vrot.lane.b32.xlu0 %v5820, 24
      %v5884 = vpop.permute.xlu0 %5883
      %5885 = vrot.lane.b32.xlu0 %v5822, 24
      %v5886 = vpop.permute.xlu0 %5885
      %v5919 = vsel %vm589, %v4799, %v4944
      %v5920 = vsel %vm589, %v4705, %v4946
      %v5921 = vsel %vm589, %v4800, %v4948
      %v5922 = vsel %vm589, %v4708, %v4950
      %v5923 = vsel %vm589, %v4801, %v4952
      %v5924 = vsel %vm589, %v4711, %v4954
      %v5925 = vsel %vm589, %v4802, %v4956
      %v5926 = vsel %vm589, %v4714, %v4958
      %v5927 = vsel %vm589, %v4803, %v4960
      %v5928 = vsel %vm589, %v4717, %v4962
      %v5929 = vsel %vm589, %v4804, %v4964
      %v5930 = vsel %vm589, %v4720, %v4966
      %v5931 = vsel %vm589, %v4805, %v4968
      %v5932 = vsel %vm589, %v4723, %v4970
      %v5933 = vsel %vm589, %v4806, %v4972
      %v5934 = vsel %vm589, %v4726, %v4974
      %v5935 = vsel %vm589, %v4807, %v4976
      %v5936 = vsel %vm589, %v4729, %v4978
      %v5937 = vsel %vm589, %v4808, %v4980
      %v5938 = vsel %vm589, %v4732, %v4982
      %v5939 = vsel %vm589, %v4809, %v4984
      %v5940 = vsel %vm589, %v4735, %v4986
      %v5941 = vsel %vm589, %v4810, %v4988
      %v5942 = vsel %vm589, %v4738, %v4990
      %v5943 = vsel %vm589, %v4811, %v4992
      %v5944 = vsel %vm589, %v4741, %v4994
      %v5945 = vsel %vm589, %v4812, %v4996
      %v5946 = vsel %vm589, %v4744, %v4998
      %v5947 = vsel %vm589, %v4813, %v5000
      %v5948 = vsel %vm589, %v4747, %v5002
      %v5949 = vsel %vm589, %v4814, %v5004
      %v5950 = vsel %vm589, %v4750, %v5006
      %v5951 = vsel %vm3077, %v5919, %v5120
      %v5952 = vsel %vm3077, %v5920, %v5122
      %v5953 = vsel %vm3077, %v5921, %v5124
      %v5954 = vsel %vm3077, %v5922, %v5126
      %v5955 = vsel %vm3077, %v5923, %v5128
      %v5956 = vsel %vm3077, %v5924, %v5130
      %v5957 = vsel %vm3077, %v5925, %v5132
      %v5958 = vsel %vm3077, %v5926, %v5134
      %v5959 = vsel %vm3077, %v5927, %v5136
      %v5960 = vsel %vm3077, %v5928, %v5138
      %v5961 = vsel %vm3077, %v5929, %v5140
      %v5962 = vsel %vm3077, %v5930, %v5142
      %v5963 = vsel %vm3077, %v5931, %v5144
      %v5964 = vsel %vm3077, %v5932, %v5146
      %v5965 = vsel %vm3077, %v5933, %v5148
      %v5966 = vsel %vm3077, %v5934, %v5150
      %v5967 = vsel %vm3077, %v5935, %v5152
      %v5968 = vsel %vm3077, %v5936, %v5154
      %v5969 = vsel %vm3077, %v5937, %v5156
      %v5970 = vsel %vm3077, %v5938, %v5158
      %v5971 = vsel %vm3077, %v5939, %v5160
      %v5972 = vsel %vm3077, %v5940, %v5162
      %v5973 = vsel %vm3077, %v5941, %v5164
      %v5974 = vsel %vm3077, %v5942, %v5166
      %v5975 = vsel %vm3077, %v5943, %v5168
      %v5976 = vsel %vm3077, %v5944, %v5170
      %v5977 = vsel %vm3077, %v5945, %v5172
      %v5978 = vsel %vm3077, %v5946, %v5174
      %v5979 = vsel %vm3077, %v5947, %v5176
      %v5980 = vsel %vm3077, %v5948, %v5178
      %v5981 = vsel %vm3077, %v5949, %v5180
      %v5982 = vsel %vm3077, %v5950, %v5182
      %v5983 = vsel %vm3110, %v5951, %v5296
      %v5984 = vsel %vm3110, %v5952, %v5298
      %v5985 = vsel %vm3110, %v5953, %v5300
      %v5986 = vsel %vm3110, %v5954, %v5302
      %v5987 = vsel %vm3110, %v5955, %v5304
      %v5988 = vsel %vm3110, %v5956, %v5306
      %v5989 = vsel %vm3110, %v5957, %v5308
      %v5990 = vsel %vm3110, %v5958, %v5310
      %v5991 = vsel %vm3110, %v5959, %v5312
      %v5992 = vsel %vm3110, %v5960, %v5314
      %v5993 = vsel %vm3110, %v5961, %v5316
      %v5994 = vsel %vm3110, %v5962, %v5318
      %v5995 = vsel %vm3110, %v5963, %v5320
      %v5996 = vsel %vm3110, %v5964, %v5322
      %v5997 = vsel %vm3110, %v5965, %v5324
      %v5998 = vsel %vm3110, %v5966, %v5326
      %v5999 = vsel %vm3110, %v5967, %v5328
      %v6000 = vsel %vm3110, %v5968, %v5330
      %v6001 = vsel %vm3110, %v5969, %v5332
      %v6002 = vsel %vm3110, %v5970, %v5334
      %v6003 = vsel %vm3110, %v5971, %v5336
      %v6004 = vsel %vm3110, %v5972, %v5338
      %v6005 = vsel %vm3110, %v5973, %v5340
      %v6006 = vsel %vm3110, %v5974, %v5342
      %v6007 = vsel %vm3110, %v5975, %v5344
      %v6008 = vsel %vm3110, %v5976, %v5346
      %v6009 = vsel %vm3110, %v5977, %v5348
      %v6010 = vsel %vm3110, %v5978, %v5350
      %v6011 = vsel %vm3110, %v5979, %v5352
      %v6012 = vsel %vm3110, %v5980, %v5354
      %v6013 = vsel %vm3110, %v5981, %v5356
      %v6014 = vsel %vm3110, %v5982, %v5358
      %v6015 = vsel %vm3143, %v5983, %v5472
      %v6016 = vsel %vm3143, %v5984, %v5474
      %v6017 = vsel %vm3143, %v5985, %v5476
      %v6018 = vsel %vm3143, %v5986, %v5478
      %v6019 = vsel %vm3143, %v5987, %v5480
      %v6020 = vsel %vm3143, %v5988, %v5482
      %v6021 = vsel %vm3143, %v5989, %v5484
      %v6022 = vsel %vm3143, %v5990, %v5486
      %v6023 = vsel %vm3143, %v5991, %v5488
      %v6024 = vsel %vm3143, %v5992, %v5490
      %v6025 = vsel %vm3143, %v5993, %v5492
      %v6026 = vsel %vm3143, %v5994, %v5494
      %v6027 = vsel %vm3143, %v5995, %v5496
      %v6028 = vsel %vm3143, %v5996, %v5498
      %v6029 = vsel %vm3143, %v5997, %v5500
      %v6030 = vsel %vm3143, %v5998, %v5502
      %v6031 = vsel %vm3143, %v5999, %v5504
      %v6032 = vsel %vm3143, %v6000, %v5506
      %v6033 = vsel %vm3143, %v6001, %v5508
      %v6034 = vsel %vm3143, %v6002, %v5510
      %v6035 = vsel %vm3143, %v6003, %v5512
      %v6036 = vsel %vm3143, %v6004, %v5514
      %v6037 = vsel %vm3143, %v6005, %v5516
      %v6038 = vsel %vm3143, %v6006, %v5518
      %v6039 = vsel %vm3143, %v6007, %v5520
      %v6040 = vsel %vm3143, %v6008, %v5522
      %v6041 = vsel %vm3143, %v6009, %v5524
      %v6042 = vsel %vm3143, %v6010, %v5526
      %v6043 = vsel %vm3143, %v6011, %v5528
      %v6044 = vsel %vm3143, %v6012, %v5530
      %v6045 = vsel %vm3143, %v6013, %v5532
      %v6046 = vsel %vm3143, %v6014, %v5534
      %v6047 = vsel %vm3176, %v6015, %v5648
      %v6048 = vsel %vm3176, %v6016, %v5650
      %v6049 = vsel %vm3176, %v6017, %v5652
      %v6050 = vsel %vm3176, %v6018, %v5654
      %v6051 = vsel %vm3176, %v6019, %v5656
      %v6052 = vsel %vm3176, %v6020, %v5658
      %v6053 = vsel %vm3176, %v6021, %v5660
      %v6054 = vsel %vm3176, %v6022, %v5662
      %v6055 = vsel %vm3176, %v6023, %v5664
      %v6056 = vsel %vm3176, %v6024, %v5666
      %v6057 = vsel %vm3176, %v6025, %v5668
      %v6058 = vsel %vm3176, %v6026, %v5670
      %v6059 = vsel %vm3176, %v6027, %v5672
      %v6060 = vsel %vm3176, %v6028, %v5674
      %v6061 = vsel %vm3176, %v6029, %v5676
      %v6062 = vsel %vm3176, %v6030, %v5678
      %v6063 = vsel %vm3176, %v6031, %v5680
      %v6064 = vsel %vm3176, %v6032, %v5682
      %v6065 = vsel %vm3176, %v6033, %v5684
      %v6066 = vsel %vm3176, %v6034, %v5686
      %v6067 = vsel %vm3176, %v6035, %v5688
      %v6068 = vsel %vm3176, %v6036, %v5690
      %v6069 = vsel %vm3176, %v6037, %v5692
      %v6070 = vsel %vm3176, %v6038, %v5694
      %v6071 = vsel %vm3176, %v6039, %v5696
      %v6072 = vsel %vm3176, %v6040, %v5698
      %v6073 = vsel %vm3176, %v6041, %v5700
      %v6074 = vsel %vm3176, %v6042, %v5702
      %v6075 = vsel %vm3176, %v6043, %v5704
      %v6076 = vsel %vm3176, %v6044, %v5706
      %v6077 = vsel %vm3176, %v6045, %v5708
      %v6078 = vsel %vm3176, %v6046, %v5710
      %v6079 = vsel %vm3209, %v6047, %v5824
      %v6080 = vsel %vm3209, %v6048, %v5826
      %v6081 = vsel %vm3209, %v6049, %v5828
      %v6082 = vsel %vm3209, %v6050, %v5830
      %v6083 = vsel %vm3209, %v6051, %v5832
      %v6084 = vsel %vm3209, %v6052, %v5834
      %v6085 = vsel %vm3209, %v6053, %v5836
      %v6086 = vsel %vm3209, %v6054, %v5838
      %v6087 = vsel %vm3209, %v6055, %v5840
      %v6088 = vsel %vm3209, %v6056, %v5842
      %v6089 = vsel %vm3209, %v6057, %v5844
      %v6090 = vsel %vm3209, %v6058, %v5846
      %v6091 = vsel %vm3209, %v6059, %v5848
      %v6092 = vsel %vm3209, %v6060, %v5850
      %v6093 = vsel %vm3209, %v6061, %v5852
      %v6094 = vsel %vm3209, %v6062, %v5854
      %v6095 = vsel %vm3209, %v6063, %v5856
      %v6096 = vsel %vm3209, %v6064, %v5858
      %v6097 = vsel %vm3209, %v6065, %v5860
      %v6098 = vsel %vm3209, %v6066, %v5862
      %v6099 = vsel %vm3209, %v6067, %v5864
      %v6100 = vsel %vm3209, %v6068, %v5866
      %v6101 = vsel %vm3209, %v6069, %v5868
      %v6102 = vsel %vm3209, %v6070, %v5870
      %v6103 = vsel %vm3209, %v6071, %v5872
      %v6104 = vsel %vm3209, %v6072, %v5874
      %v6105 = vsel %vm3209, %v6073, %v5876
      %v6106 = vsel %vm3209, %v6074, %v5878
      %v6107 = vsel %vm3209, %v6075, %v5880
      %v6108 = vsel %vm3209, %v6076, %v5882
      %v6109 = vsel %vm3209, %v6077, %v5884
      %v6110 = vsel %vm3209, %v6078, %v5886
      %v6111 = vld [vmem:[%s9] sm:$0xff]
      %v6112 = vld [vmem:[%s9 + $0x8] sm:$0xff]
      %v6113 = vld [vmem:[%s9 + $0x10] sm:$0xff]
      %v6114 = vld [vmem:[%s9 + $0x18] sm:$0xf]
      %v6115 = vld [vmem:[%s10] sm:$0x1]
      %v6117 = vlaneseq
      %v6118 = vshrl.u32 %v6117, 7
      %v6119 = vsub.s32 0, %v6118
      %v6120 = vrot.slane %v6115, %v6119
      %v6123 = vsel %vm3253, %v6079, 0
      %v6126 = vsel %vm3253, %v6080, 0
      %v6129 = vsel %vm3253, %v6081, 0
      %v6132 = vsel %vm3253, %v6082, 0
      %v6135 = vsel %vm3253, %v6083, 0
      %v6138 = vsel %vm3253, %v6084, 0
      %v6141 = vsel %vm3253, %v6085, 0
      %v6144 = vsel %vm3253, %v6086, 0
      %v6147 = vsel %vm3253, %v6087, 0
      %v6150 = vsel %vm3253, %v6088, 0
      %v6153 = vsel %vm3253, %v6089, 0
      %v6156 = vsel %vm3253, %v6090, 0
      %v6159 = vsel %vm3253, %v6091, 0
      %v6162 = vsel %vm3253, %v6092, 0
      %v6165 = vsel %vm3253, %v6093, 0
      %v6168 = vsel %vm3253, %v6094, 0
      %v6171 = vsel %vm3253, %v6095, 0
      %v6174 = vsel %vm3253, %v6096, 0
      %v6177 = vsel %vm3253, %v6097, 0
      %v6180 = vsel %vm3253, %v6098, 0
      %v6183 = vsel %vm3253, %v6099, 0
      %v6186 = vsel %vm3253, %v6100, 0
      %v6189 = vsel %vm3253, %v6101, 0
      %v6192 = vsel %vm3253, %v6102, 0
      %v6195 = vsel %vm3253, %v6103, 0
      %v6198 = vsel %vm3253, %v6104, 0
      %v6201 = vsel %vm3253, %v6105, 0
      %v6204 = vsel %vm3253, %v6106, 0
      %v6207 = vsel %vm3253, %v6107, 0
      %v6210 = vsel %vm3253, %v6108, 0
      %v6213 = vsel %vm3253, %v6109, 0
      %v6216 = vsel %vm3253, %v6110, 0
      %v6219 = vsel %vm686, %v6114, 0
      %6221 = vmatprep.subr.mxu0 0.0
      %6222 = vmatpush1.msra.mxu0 0.0
      %6223 = vmatprep.subr.mxu0 0.0
      %6224 = vmatpush1.msra.mxu0 0.0
      %6225 = vmatprep.subr.mxu0 0.0
      %6226 = vmatpush1.msra.mxu0 0.0
      %6227 = vmatprep.subr.mxu0 0.0
      %6228 = vmatpush1.msra.mxu0 0.0
      %6229 = vmatprep.subr.mxu0 0.0
      %6230 = vmatpush1.msra.mxu0 0.0
      %6231 = vmatprep.subr.mxu0 0.0
      %6232 = vmatpush1.msra.mxu0 0.0
      %6233 = vmatprep.subr.mxu0 0.0
      %6234 = vmatpush1.msra.mxu0 0.0
      %6235 = vmatprep.subr.mxu0 0.0
      %6236 = vmatpush1.msra.mxu0 0.0
      %6237 = vmatprep.subr.mxu0 0.0
      %6238 = vmatpush1.msra.mxu0 0.0
      %6239 = vmatprep.subr.mxu0 0.0
      %6240 = vmatpush1.msra.mxu0 0.0
      %6241 = vmatprep.subr.mxu0 0.0
      %6242 = vmatpush1.msra.mxu0 0.0
      %6243 = vmatprep.subr.mxu0 0.0
      %6244 = vmatpush1.msra.mxu0 0.0
      %6245 = vmatprep.subr.mxu0 0.0
      %6246 = vmatpush1.msra.mxu0 %v6219
      %6247 = vmatprep.subr.mxu0 0.0
      %6248 = vmatpush1.msra.mxu0 %v6113
      %6249 = vmatprep.subr.mxu0 0.0
      %6250 = vmatpush1.msra.mxu0 %v6112
      %6251 = vmatprep.subr.mxu0 0.0
      %6252 = vmatpush1.msra.mxu0 %v6111
      %6253 = vmatprep.subr.mxu0 0.0
      %6254 = vmatpush2.msra.mxu0 0.0
      %6255 = vmatprep.subr.mxu0 0.0
      %6256 = vmatpush2.msra.mxu0 0.0
      %6257 = vmatprep.subr.mxu0 0.0
      %6258 = vmatpush2.msra.mxu0 0.0
      %6259 = vmatprep.subr.mxu0 0.0
      %6260 = vmatpush2.msra.mxu0 0.0
      %6261 = vmatprep.subr.mxu0 0.0
      %6262 = vmatpush2.msra.mxu0 0.0
      %6263 = vmatprep.subr.mxu0 0.0
      %6264 = vmatpush2.msra.mxu0 0.0
      %6265 = vmatprep.subr.mxu0 0.0
      %6266 = vmatpush2.msra.mxu0 0.0
      %6267 = vmatprep.subr.mxu0 0.0
      %6268 = vmatpush2.msra.mxu0 0.0
      %6269 = vmatprep.subr.mxu0 0.0
      %6270 = vmatpush2.msra.mxu0 0.0
      %6271 = vmatprep.subr.mxu0 0.0
      %6272 = vmatpush2.msra.mxu0 0.0
      %6273 = vmatprep.subr.mxu0 0.0
      %6274 = vmatpush2.msra.mxu0 0.0
      %6275 = vmatprep.subr.mxu0 0.0
      %6276 = vmatpush2.msra.mxu0 0.0
      %6277 = vmatprep.subr.mxu0 0.0
      %6278 = vmatpush2.msra.mxu0 0.0
      %6279 = vmatprep.subr.mxu0 0.0
      %6280 = vmatpush2.msra.mxu0 0.0
      %6281 = vmatprep.subr.mxu0 0.0
      %6282 = vmatpush2.msra.mxu0 0.0
      %6283 = vmatprep.subr.mxu0 0.0
      %6284 = vmatpush2.msra.mxu0 0.0
      %6285 = vmatprep.mubr.f32.mxu0 0.0
      %6286 = vmatmul.mubr.f32.gmra.mxu0 %v6123
      %v6287 = vpop.f32.mrf.mxu0
      %v6288 = vadd.f32 %v6120, %v6287
      %v6289 = vpop.f32.mrf.mxu0
      %6290 = vmatprep.mubr.f32.mxu0 0.0
      %6291 = vmatmul.mubr.f32.gmra.mxu0 %v6126
      %v6292 = vpop.f32.mrf.mxu0
      %v6293 = vadd.f32 %v6120, %v6292
      %v6294 = vpop.f32.mrf.mxu0
      %6295 = vmatprep.mubr.f32.mxu0 0.0
      %6296 = vmatmul.mubr.f32.gmra.mxu0 %v6129
      %v6297 = vpop.f32.mrf.mxu0
      %v6298 = vadd.f32 %v6120, %v6297
      %v6299 = vpop.f32.mrf.mxu0
      %6300 = vmatprep.mubr.f32.mxu0 0.0
      %6301 = vmatmul.mubr.f32.gmra.mxu0 %v6132
      %v6302 = vpop.f32.mrf.mxu0
      %v6303 = vadd.f32 %v6120, %v6302
      %v6304 = vpop.f32.mrf.mxu0
      %6305 = vmatprep.mubr.f32.mxu0 0.0
      %6306 = vmatmul.mubr.f32.gmra.mxu0 %v6135
      %v6307 = vpop.f32.mrf.mxu0
      %v6308 = vadd.f32 %v6120, %v6307
      %v6309 = vpop.f32.mrf.mxu0
      %6310 = vmatprep.mubr.f32.mxu0 0.0
      %6311 = vmatmul.mubr.f32.gmra.mxu0 %v6138
      %v6312 = vpop.f32.mrf.mxu0
      %v6313 = vadd.f32 %v6120, %v6312
      %v6314 = vpop.f32.mrf.mxu0
      %6315 = vmatprep.mubr.f32.mxu0 0.0
      %6316 = vmatmul.mubr.f32.gmra.mxu0 %v6141
      %v6317 = vpop.f32.mrf.mxu0
      %v6318 = vadd.f32 %v6120, %v6317
      %v6319 = vpop.f32.mrf.mxu0
      %6320 = vmatprep.mubr.f32.mxu0 0.0
      %6321 = vmatmul.mubr.f32.gmra.mxu0 %v6144
      %v6322 = vpop.f32.mrf.mxu0
      %v6323 = vadd.f32 %v6120, %v6322
      %v6324 = vpop.f32.mrf.mxu0
      %6325 = vmatprep.mubr.f32.mxu0 0.0
      %6326 = vmatmul.mubr.f32.gmra.mxu0 %v6147
      %v6327 = vpop.f32.mrf.mxu0
      %v6328 = vadd.f32 %v6120, %v6327
      %v6329 = vpop.f32.mrf.mxu0
      %6330 = vmatprep.mubr.f32.mxu0 0.0
      %6331 = vmatmul.mubr.f32.gmra.mxu0 %v6150
      %v6332 = vpop.f32.mrf.mxu0
      %v6333 = vadd.f32 %v6120, %v6332
      %v6334 = vpop.f32.mrf.mxu0
      %6335 = vmatprep.mubr.f32.mxu0 0.0
      %6336 = vmatmul.mubr.f32.gmra.mxu0 %v6153
      %v6337 = vpop.f32.mrf.mxu0
      %v6338 = vadd.f32 %v6120, %v6337
      %v6339 = vpop.f32.mrf.mxu0
      %6340 = vmatprep.mubr.f32.mxu0 0.0
      %6341 = vmatmul.mubr.f32.gmra.mxu0 %v6156
      %v6342 = vpop.f32.mrf.mxu0
      %v6343 = vadd.f32 %v6120, %v6342
      %v6344 = vpop.f32.mrf.mxu0
      %6345 = vmatprep.mubr.f32.mxu0 0.0
      %6346 = vmatmul.mubr.f32.gmra.mxu0 %v6159
      %v6347 = vpop.f32.mrf.mxu0
      %v6348 = vadd.f32 %v6120, %v6347
      %v6349 = vpop.f32.mrf.mxu0
      %6350 = vmatprep.mubr.f32.mxu0 0.0
      %6351 = vmatmul.mubr.f32.gmra.mxu0 %v6162
      %v6352 = vpop.f32.mrf.mxu0
      %v6353 = vadd.f32 %v6120, %v6352
      %v6354 = vpop.f32.mrf.mxu0
      %6355 = vmatprep.mubr.f32.mxu0 0.0
      %6356 = vmatmul.mubr.f32.gmra.mxu0 %v6165
      %v6357 = vpop.f32.mrf.mxu0
      %v6358 = vadd.f32 %v6120, %v6357
      %v6359 = vpop.f32.mrf.mxu0
      %6360 = vmatprep.mubr.f32.mxu0 0.0
      %6361 = vmatmul.mubr.f32.gmra.mxu0 %v6168
      %v6362 = vpop.f32.mrf.mxu0
      %v6363 = vadd.f32 %v6120, %v6362
      %v6364 = vpop.f32.mrf.mxu0
      %6365 = vmatprep.mubr.f32.mxu0 0.0
      %6366 = vmatmul.mubr.f32.gmra.mxu0 %v6171
      %v6367 = vpop.f32.mrf.mxu0
      %v6368 = vadd.f32 %v6120, %v6367
      %v6369 = vpop.f32.mrf.mxu0
      %6370 = vmatprep.mubr.f32.mxu0 0.0
      %6371 = vmatmul.mubr.f32.gmra.mxu0 %v6174
      %v6372 = vpop.f32.mrf.mxu0
      %v6373 = vadd.f32 %v6120, %v6372
      %v6374 = vpop.f32.mrf.mxu0
      %6375 = vmatprep.mubr.f32.mxu0 0.0
      %6376 = vmatmul.mubr.f32.gmra.mxu0 %v6177
      %v6377 = vpop.f32.mrf.mxu0
      %v6378 = vadd.f32 %v6120, %v6377
      %v6379 = vpop.f32.mrf.mxu0
      %6380 = vmatprep.mubr.f32.mxu0 0.0
      %6381 = vmatmul.mubr.f32.gmra.mxu0 %v6180
      %v6382 = vpop.f32.mrf.mxu0
      %v6383 = vadd.f32 %v6120, %v6382
      %v6384 = vpop.f32.mrf.mxu0
      %6385 = vmatprep.mubr.f32.mxu0 0.0
      %6386 = vmatmul.mubr.f32.gmra.mxu0 %v6183
      %v6387 = vpop.f32.mrf.mxu0
      %v6388 = vadd.f32 %v6120, %v6387
      %v6389 = vpop.f32.mrf.mxu0
      %6390 = vmatprep.mubr.f32.mxu0 0.0
      %6391 = vmatmul.mubr.f32.gmra.mxu0 %v6186
      %v6392 = vpop.f32.mrf.mxu0
      %v6393 = vadd.f32 %v6120, %v6392
      %v6394 = vpop.f32.mrf.mxu0
      %6395 = vmatprep.mubr.f32.mxu0 0.0
      %6396 = vmatmul.mubr.f32.gmra.mxu0 %v6189
      %v6397 = vpop.f32.mrf.mxu0
      %v6398 = vadd.f32 %v6120, %v6397
      %v6399 = vpop.f32.mrf.mxu0
      %6400 = vmatprep.mubr.f32.mxu0 0.0
      %6401 = vmatmul.mubr.f32.gmra.mxu0 %v6192
      %v6402 = vpop.f32.mrf.mxu0
      %v6403 = vadd.f32 %v6120, %v6402
      %v6404 = vpop.f32.mrf.mxu0
      %6405 = vmatprep.mubr.f32.mxu0 0.0
      %6406 = vmatmul.mubr.f32.gmra.mxu0 %v6195
      %v6407 = vpop.f32.mrf.mxu0
      %v6408 = vadd.f32 %v6120, %v6407
      %v6409 = vpop.f32.mrf.mxu0
      %6410 = vmatprep.mubr.f32.mxu0 0.0
      %6411 = vmatmul.mubr.f32.gmra.mxu0 %v6198
      %v6412 = vpop.f32.mrf.mxu0
      %v6413 = vadd.f32 %v6120, %v6412
      %v6414 = vpop.f32.mrf.mxu0
      %6415 = vmatprep.mubr.f32.mxu0 0.0
      %6416 = vmatmul.mubr.f32.gmra.mxu0 %v6201
      %v6417 = vpop.f32.mrf.mxu0
      %v6418 = vadd.f32 %v6120, %v6417
      %v6419 = vpop.f32.mrf.mxu0
      %6420 = vmatprep.mubr.f32.mxu0 0.0
      %6421 = vmatmul.mubr.f32.gmra.mxu0 %v6204
      %v6422 = vpop.f32.mrf.mxu0
      %v6423 = vadd.f32 %v6120, %v6422
      %v6424 = vpop.f32.mrf.mxu0
      %6425 = vmatprep.mubr.f32.mxu0 0.0
      %6426 = vmatmul.mubr.f32.gmra.mxu0 %v6207
      %v6427 = vpop.f32.mrf.mxu0
      %v6428 = vadd.f32 %v6120, %v6427
      %v6429 = vpop.f32.mrf.mxu0
      %6430 = vmatprep.mubr.f32.mxu0 0.0
      %6431 = vmatmul.mubr.f32.gmra.mxu0 %v6210
      %v6432 = vpop.f32.mrf.mxu0
      %v6433 = vadd.f32 %v6120, %v6432
      %v6434 = vpop.f32.mrf.mxu0
      %6435 = vmatprep.mubr.f32.mxu0 0.0
      %6436 = vmatmul.mubr.f32.gmra.mxu0 %v6213
      %v6437 = vpop.f32.mrf.mxu0
      %v6438 = vadd.f32 %v6120, %v6437
      %v6439 = vpop.f32.mrf.mxu0
      %6440 = vmatprep.mubr.f32.mxu0 0.0
      %6441 = vmatmul.mubr.f32.gmra.mxu0 %v6216
      %v6442 = vpop.f32.mrf.mxu0
      %v6443 = vadd.f32 %v6120, %v6442
      %v6444 = vpop.f32.mrf.mxu0
      %6445 = vdwg.mxu0
      %6474 = vrot.lane.b32.xlu0 %v6288, 4
      %v6475 = vpop.permute.xlu0 %6474
      %6476 = vrot.lane.b32.xlu0 %v6293, 4
      %v6477 = vpop.permute.xlu0 %6476
      %6478 = vrot.lane.b32.xlu0 %v6298, 4
      %v6479 = vpop.permute.xlu0 %6478
      %6480 = vrot.lane.b32.xlu0 %v6303, 4
      %v6481 = vpop.permute.xlu0 %6480
      %6482 = vrot.lane.b32.xlu0 %v6308, 4
      %v6483 = vpop.permute.xlu0 %6482
      %6484 = vrot.lane.b32.xlu0 %v6313, 4
      %v6485 = vpop.permute.xlu0 %6484
      %6486 = vrot.lane.b32.xlu0 %v6318, 4
      %v6487 = vpop.permute.xlu0 %6486
      %6488 = vrot.lane.b32.xlu0 %v6323, 4
      %v6489 = vpop.permute.xlu0 %6488
      %6490 = vrot.lane.b32.xlu0 %v6328, 4
      %v6491 = vpop.permute.xlu0 %6490
      %6492 = vrot.lane.b32.xlu0 %v6333, 4
      %v6493 = vpop.permute.xlu0 %6492
      %6494 = vrot.lane.b32.xlu0 %v6338, 4
      %v6495 = vpop.permute.xlu0 %6494
      %6496 = vrot.lane.b32.xlu0 %v6343, 4
      %v6497 = vpop.permute.xlu0 %6496
      %6498 = vrot.lane.b32.xlu0 %v6348, 4
      %v6499 = vpop.permute.xlu0 %6498
      %6500 = vrot.lane.b32.xlu0 %v6353, 4
      %v6501 = vpop.permute.xlu0 %6500
      %6502 = vrot.lane.b32.xlu0 %v6358, 4
      %v6503 = vpop.permute.xlu0 %6502
      %6504 = vrot.lane.b32.xlu0 %v6363, 4
      %v6505 = vpop.permute.xlu0 %6504
      %6506 = vrot.lane.b32.xlu0 %v6368, 4
      %v6507 = vpop.permute.xlu0 %6506
      %6508 = vrot.lane.b32.xlu0 %v6373, 4
      %v6509 = vpop.permute.xlu0 %6508
      %6510 = vrot.lane.b32.xlu0 %v6378, 4
      %v6511 = vpop.permute.xlu0 %6510
      %6512 = vrot.lane.b32.xlu0 %v6383, 4
      %v6513 = vpop.permute.xlu0 %6512
      %6514 = vrot.lane.b32.xlu0 %v6388, 4
      %v6515 = vpop.permute.xlu0 %6514
      %6516 = vrot.lane.b32.xlu0 %v6393, 4
      %v6517 = vpop.permute.xlu0 %6516
      %6518 = vrot.lane.b32.xlu0 %v6398, 4
      %v6519 = vpop.permute.xlu0 %6518
      %6520 = vrot.lane.b32.xlu0 %v6403, 4
      %v6521 = vpop.permute.xlu0 %6520
      %6522 = vrot.lane.b32.xlu0 %v6408, 4
      %v6523 = vpop.permute.xlu0 %6522
      %6524 = vrot.lane.b32.xlu0 %v6413, 4
      %v6525 = vpop.permute.xlu0 %6524
      %6526 = vrot.lane.b32.xlu0 %v6418, 4
      %v6527 = vpop.permute.xlu0 %6526
      %6528 = vrot.lane.b32.xlu0 %v6423, 4
      %v6529 = vpop.permute.xlu0 %6528
      %6560 = vrot.lane.b32.xlu0 %v6288, 8
      %v6561 = vpop.permute.xlu0 %6560
      %6562 = vrot.lane.b32.xlu0 %v6293, 8
      %v6563 = vpop.permute.xlu0 %6562
      %6564 = vrot.lane.b32.xlu0 %v6298, 8
      %v6565 = vpop.permute.xlu0 %6564
      %6566 = vrot.lane.b32.xlu0 %v6303, 8
      %v6567 = vpop.permute.xlu0 %6566
      %6568 = vrot.lane.b32.xlu0 %v6308, 8
      %v6569 = vpop.permute.xlu0 %6568
      %6570 = vrot.lane.b32.xlu0 %v6313, 8
      %v6571 = vpop.permute.xlu0 %6570
      %6572 = vrot.lane.b32.xlu0 %v6318, 8
      %v6573 = vpop.permute.xlu0 %6572
      %6574 = vrot.lane.b32.xlu0 %v6323, 8
      %v6575 = vpop.permute.xlu0 %6574
      %6576 = vrot.lane.b32.xlu0 %v6328, 8
      %v6577 = vpop.permute.xlu0 %6576
      %6578 = vrot.lane.b32.xlu0 %v6333, 8
      %v6579 = vpop.permute.xlu0 %6578
      %6580 = vrot.lane.b32.xlu0 %v6338, 8
      %v6581 = vpop.permute.xlu0 %6580
      %6582 = vrot.lane.b32.xlu0 %v6343, 8
      %v6583 = vpop.permute.xlu0 %6582
      %6584 = vrot.lane.b32.xlu0 %v6348, 8
      %v6585 = vpop.permute.xlu0 %6584
      %6586 = vrot.lane.b32.xlu0 %v6353, 8
      %v6587 = vpop.permute.xlu0 %6586
      %6588 = vrot.lane.b32.xlu0 %v6358, 8
      %v6589 = vpop.permute.xlu0 %6588
      %6590 = vrot.lane.b32.xlu0 %v6363, 8
      %v6591 = vpop.permute.xlu0 %6590
      %6592 = vrot.lane.b32.xlu0 %v6368, 8
      %v6593 = vpop.permute.xlu0 %6592
      %6594 = vrot.lane.b32.xlu0 %v6373, 8
      %v6595 = vpop.permute.xlu0 %6594
      %6596 = vrot.lane.b32.xlu0 %v6378, 8
      %v6597 = vpop.permute.xlu0 %6596
      %6598 = vrot.lane.b32.xlu0 %v6383, 8
      %v6599 = vpop.permute.xlu0 %6598
      %6600 = vrot.lane.b32.xlu0 %v6388, 8
      %v6601 = vpop.permute.xlu0 %6600
      %6602 = vrot.lane.b32.xlu0 %v6393, 8
      %v6603 = vpop.permute.xlu0 %6602
      %6604 = vrot.lane.b32.xlu0 %v6398, 8
      %v6605 = vpop.permute.xlu0 %6604
      %6606 = vrot.lane.b32.xlu0 %v6403, 8
      %v6607 = vpop.permute.xlu0 %6606
      %6608 = vrot.lane.b32.xlu0 %v6408, 8
      %v6609 = vpop.permute.xlu0 %6608
      %6610 = vrot.lane.b32.xlu0 %v6413, 8
      %v6611 = vpop.permute.xlu0 %6610
      %6612 = vrot.lane.b32.xlu0 %v6418, 8
      %v6613 = vpop.permute.xlu0 %6612
      %6614 = vrot.lane.b32.xlu0 %v6423, 8
      %v6615 = vpop.permute.xlu0 %6614
      %6616 = vrot.lane.b32.xlu0 %v6428, 8
      %v6617 = vpop.permute.xlu0 %6616
      %6618 = vrot.lane.b32.xlu0 %v6433, 8
      %v6619 = vpop.permute.xlu0 %6618
      %6652 = vrot.lane.b32.xlu0 %v6288, 12
      %v6653 = vpop.permute.xlu0 %6652
      %6654 = vrot.lane.b32.xlu0 %v6293, 12
      %v6655 = vpop.permute.xlu0 %6654
      %6656 = vrot.lane.b32.xlu0 %v6298, 12
      %v6657 = vpop.permute.xlu0 %6656
      %6658 = vrot.lane.b32.xlu0 %v6303, 12
      %v6659 = vpop.permute.xlu0 %6658
      %6660 = vrot.lane.b32.xlu0 %v6308, 12
      %v6661 = vpop.permute.xlu0 %6660
      %6662 = vrot.lane.b32.xlu0 %v6313, 12
      %v6663 = vpop.permute.xlu0 %6662
      %6664 = vrot.lane.b32.xlu0 %v6318, 12
      %v6665 = vpop.permute.xlu0 %6664
      %6666 = vrot.lane.b32.xlu0 %v6323, 12
      %v6667 = vpop.permute.xlu0 %6666
      %6668 = vrot.lane.b32.xlu0 %v6328, 12
      %v6669 = vpop.permute.xlu0 %6668
      %6670 = vrot.lane.b32.xlu0 %v6333, 12
      %v6671 = vpop.permute.xlu0 %6670
      %6672 = vrot.lane.b32.xlu0 %v6338, 12
      %v6673 = vpop.permute.xlu0 %6672
      %6674 = vrot.lane.b32.xlu0 %v6343, 12
      %v6675 = vpop.permute.xlu0 %6674
      %6676 = vrot.lane.b32.xlu0 %v6348, 12
      %v6677 = vpop.permute.xlu0 %6676
      %6678 = vrot.lane.b32.xlu0 %v6353, 12
      %v6679 = vpop.permute.xlu0 %6678
      %6680 = vrot.lane.b32.xlu0 %v6358, 12
      %v6681 = vpop.permute.xlu0 %6680
      %6682 = vrot.lane.b32.xlu0 %v6363, 12
      %v6683 = vpop.permute.xlu0 %6682
      %6684 = vrot.lane.b32.xlu0 %v6368, 12
      %v6685 = vpop.permute.xlu0 %6684
      %6686 = vrot.lane.b32.xlu0 %v6373, 12
      %v6687 = vpop.permute.xlu0 %6686
      %6688 = vrot.lane.b32.xlu0 %v6378, 12
      %v6689 = vpop.permute.xlu0 %6688
      %6690 = vrot.lane.b32.xlu0 %v6383, 12
      %v6691 = vpop.permute.xlu0 %6690
      %6692 = vrot.lane.b32.xlu0 %v6388, 12
      %v6693 = vpop.permute.xlu0 %6692
      %6694 = vrot.lane.b32.xlu0 %v6393, 12
      %v6695 = vpop.permute.xlu0 %6694
      %6696 = vrot.lane.b32.xlu0 %v6398, 12
      %v6697 = vpop.permute.xlu0 %6696
      %6698 = vrot.lane.b32.xlu0 %v6403, 12
      %v6699 = vpop.permute.xlu0 %6698
      %6700 = vrot.lane.b32.xlu0 %v6408, 12
      %v6701 = vpop.permute.xlu0 %6700
      %6702 = vrot.lane.b32.xlu0 %v6413, 12
      %v6703 = vpop.permute.xlu0 %6702
      %6704 = vrot.lane.b32.xlu0 %v6418, 12
      %v6705 = vpop.permute.xlu0 %6704
      %6706 = vrot.lane.b32.xlu0 %v6423, 12
      %v6707 = vpop.permute.xlu0 %6706
      %6708 = vrot.lane.b32.xlu0 %v6428, 12
      %v6709 = vpop.permute.xlu0 %6708
      %6710 = vrot.lane.b32.xlu0 %v6433, 12
      %v6711 = vpop.permute.xlu0 %6710
      %6712 = vrot.lane.b32.xlu0 %v6438, 12
      %v6713 = vpop.permute.xlu0 %6712
      %6714 = vrot.lane.b32.xlu0 %v6443, 12
      %v6715 = vpop.permute.xlu0 %6714
      %6748 = vrot.lane.b32.xlu0 %v6298, 16
      %v6749 = vpop.permute.xlu0 %6748
      %6750 = vrot.lane.b32.xlu0 %v6303, 16
      %v6751 = vpop.permute.xlu0 %6750
      %6752 = vrot.lane.b32.xlu0 %v6308, 16
      %v6753 = vpop.permute.xlu0 %6752
      %6754 = vrot.lane.b32.xlu0 %v6313, 16
      %v6755 = vpop.permute.xlu0 %6754
      %6756 = vrot.lane.b32.xlu0 %v6318, 16
      %v6757 = vpop.permute.xlu0 %6756
      %6758 = vrot.lane.b32.xlu0 %v6323, 16
      %v6759 = vpop.permute.xlu0 %6758
      %6760 = vrot.lane.b32.xlu0 %v6328, 16
      %v6761 = vpop.permute.xlu0 %6760
      %6762 = vrot.lane.b32.xlu0 %v6333, 16
      %v6763 = vpop.permute.xlu0 %6762
      %6764 = vrot.lane.b32.xlu0 %v6338, 16
      %v6765 = vpop.permute.xlu0 %6764
      %6766 = vrot.lane.b32.xlu0 %v6343, 16
      %v6767 = vpop.permute.xlu0 %6766
      %6768 = vrot.lane.b32.xlu0 %v6348, 16
      %v6769 = vpop.permute.xlu0 %6768
      %6770 = vrot.lane.b32.xlu0 %v6353, 16
      %v6771 = vpop.permute.xlu0 %6770
      %6772 = vrot.lane.b32.xlu0 %v6358, 16
      %v6773 = vpop.permute.xlu0 %6772
      %6774 = vrot.lane.b32.xlu0 %v6363, 16
      %v6775 = vpop.permute.xlu0 %6774
      %6776 = vrot.lane.b32.xlu0 %v6368, 16
      %v6777 = vpop.permute.xlu0 %6776
      %6778 = vrot.lane.b32.xlu0 %v6373, 16
      %v6779 = vpop.permute.xlu0 %6778
      %6780 = vrot.lane.b32.xlu0 %v6378, 16
      %v6781 = vpop.permute.xlu0 %6780
      %6782 = vrot.lane.b32.xlu0 %v6383, 16
      %v6783 = vpop.permute.xlu0 %6782
      %6784 = vrot.lane.b32.xlu0 %v6388, 16
      %v6785 = vpop.permute.xlu0 %6784
      %6786 = vrot.lane.b32.xlu0 %v6393, 16
      %v6787 = vpop.permute.xlu0 %6786
      %6788 = vrot.lane.b32.xlu0 %v6398, 16
      %v6789 = vpop.permute.xlu0 %6788
      %6790 = vrot.lane.b32.xlu0 %v6403, 16
      %v6791 = vpop.permute.xlu0 %6790
      %6792 = vrot.lane.b32.xlu0 %v6408, 16
      %v6793 = vpop.permute.xlu0 %6792
      %6794 = vrot.lane.b32.xlu0 %v6413, 16
      %v6795 = vpop.permute.xlu0 %6794
      %6796 = vrot.lane.b32.xlu0 %v6418, 16
      %v6797 = vpop.permute.xlu0 %6796
      %6798 = vrot.lane.b32.xlu0 %v6423, 16
      %v6799 = vpop.permute.xlu0 %6798
      %6800 = vrot.lane.b32.xlu0 %v6428, 16
      %v6801 = vpop.permute.xlu0 %6800
      %6802 = vrot.lane.b32.xlu0 %v6433, 16
      %v6803 = vpop.permute.xlu0 %6802
      %6804 = vrot.lane.b32.xlu0 %v6438, 16
      %v6805 = vpop.permute.xlu0 %6804
      %6806 = vrot.lane.b32.xlu0 %v6443, 16
      %v6807 = vpop.permute.xlu0 %6806
      %6838 = vrot.lane.b32.xlu0 %v6308, 20
      %v6839 = vpop.permute.xlu0 %6838
      %6840 = vrot.lane.b32.xlu0 %v6313, 20
      %v6841 = vpop.permute.xlu0 %6840
      %6842 = vrot.lane.b32.xlu0 %v6318, 20
      %v6843 = vpop.permute.xlu0 %6842
      %6844 = vrot.lane.b32.xlu0 %v6323, 20
      %v6845 = vpop.permute.xlu0 %6844
      %6846 = vrot.lane.b32.xlu0 %v6328, 20
      %v6847 = vpop.permute.xlu0 %6846
      %6848 = vrot.lane.b32.xlu0 %v6333, 20
      %v6849 = vpop.permute.xlu0 %6848
      %6850 = vrot.lane.b32.xlu0 %v6338, 20
      %v6851 = vpop.permute.xlu0 %6850
      %6852 = vrot.lane.b32.xlu0 %v6343, 20
      %v6853 = vpop.permute.xlu0 %6852
      %6854 = vrot.lane.b32.xlu0 %v6348, 20
      %v6855 = vpop.permute.xlu0 %6854
      %6856 = vrot.lane.b32.xlu0 %v6353, 20
      %v6857 = vpop.permute.xlu0 %6856
      %6858 = vrot.lane.b32.xlu0 %v6358, 20
      %v6859 = vpop.permute.xlu0 %6858
      %6860 = vrot.lane.b32.xlu0 %v6363, 20
      %v6861 = vpop.permute.xlu0 %6860
      %6862 = vrot.lane.b32.xlu0 %v6368, 20
      %v6863 = vpop.permute.xlu0 %6862
      %6864 = vrot.lane.b32.xlu0 %v6373, 20
      %v6865 = vpop.permute.xlu0 %6864
      %6866 = vrot.lane.b32.xlu0 %v6378, 20
      %v6867 = vpop.permute.xlu0 %6866
      %6868 = vrot.lane.b32.xlu0 %v6383, 20
      %v6869 = vpop.permute.xlu0 %6868
      %6870 = vrot.lane.b32.xlu0 %v6388, 20
      %v6871 = vpop.permute.xlu0 %6870
      %6872 = vrot.lane.b32.xlu0 %v6393, 20
      %v6873 = vpop.permute.xlu0 %6872
      %6874 = vrot.lane.b32.xlu0 %v6398, 20
      %v6875 = vpop.permute.xlu0 %6874
      %6876 = vrot.lane.b32.xlu0 %v6403, 20
      %v6877 = vpop.permute.xlu0 %6876
      %6878 = vrot.lane.b32.xlu0 %v6408, 20
      %v6879 = vpop.permute.xlu0 %6878
      %6880 = vrot.lane.b32.xlu0 %v6413, 20
      %v6881 = vpop.permute.xlu0 %6880
      %6882 = vrot.lane.b32.xlu0 %v6418, 20
      %v6883 = vpop.permute.xlu0 %6882
      %6884 = vrot.lane.b32.xlu0 %v6423, 20
      %v6885 = vpop.permute.xlu0 %6884
      %6886 = vrot.lane.b32.xlu0 %v6428, 20
      %v6887 = vpop.permute.xlu0 %6886
      %6888 = vrot.lane.b32.xlu0 %v6433, 20
      %v6889 = vpop.permute.xlu0 %6888
      %6890 = vrot.lane.b32.xlu0 %v6438, 20
      %v6891 = vpop.permute.xlu0 %6890
      %6892 = vrot.lane.b32.xlu0 %v6443, 20
      %v6893 = vpop.permute.xlu0 %6892
      %6922 = vrot.lane.b32.xlu0 %v6318, 24
      %v6923 = vpop.permute.xlu0 %6922
      %6924 = vrot.lane.b32.xlu0 %v6323, 24
      %v6925 = vpop.permute.xlu0 %6924
      %6926 = vrot.lane.b32.xlu0 %v6328, 24
      %v6927 = vpop.permute.xlu0 %6926
      %6928 = vrot.lane.b32.xlu0 %v6333, 24
      %v6929 = vpop.permute.xlu0 %6928
      %6930 = vrot.lane.b32.xlu0 %v6338, 24
      %v6931 = vpop.permute.xlu0 %6930
      %6932 = vrot.lane.b32.xlu0 %v6343, 24
      %v6933 = vpop.permute.xlu0 %6932
      %6934 = vrot.lane.b32.xlu0 %v6348, 24
      %v6935 = vpop.permute.xlu0 %6934
      %6936 = vrot.lane.b32.xlu0 %v6353, 24
      %v6937 = vpop.permute.xlu0 %6936
      %6938 = vrot.lane.b32.xlu0 %v6358, 24
      %v6939 = vpop.permute.xlu0 %6938
      %6940 = vrot.lane.b32.xlu0 %v6363, 24
      %v6941 = vpop.permute.xlu0 %6940
      %6942 = vrot.lane.b32.xlu0 %v6368, 24
      %v6943 = vpop.permute.xlu0 %6942
      %6944 = vrot.lane.b32.xlu0 %v6373, 24
      %v6945 = vpop.permute.xlu0 %6944
      %6946 = vrot.lane.b32.xlu0 %v6378, 24
      %v6947 = vpop.permute.xlu0 %6946
      %6948 = vrot.lane.b32.xlu0 %v6383, 24
      %v6949 = vpop.permute.xlu0 %6948
      %6950 = vrot.lane.b32.xlu0 %v6388, 24
      %v6951 = vpop.permute.xlu0 %6950
      %6952 = vrot.lane.b32.xlu0 %v6393, 24
      %v6953 = vpop.permute.xlu0 %6952
      %6954 = vrot.lane.b32.xlu0 %v6398, 24
      %v6955 = vpop.permute.xlu0 %6954
      %6956 = vrot.lane.b32.xlu0 %v6403, 24
      %v6957 = vpop.permute.xlu0 %6956
      %6958 = vrot.lane.b32.xlu0 %v6408, 24
      %v6959 = vpop.permute.xlu0 %6958
      %6960 = vrot.lane.b32.xlu0 %v6413, 24
      %v6961 = vpop.permute.xlu0 %6960
      %6962 = vrot.lane.b32.xlu0 %v6418, 24
      %v6963 = vpop.permute.xlu0 %6962
      %6964 = vrot.lane.b32.xlu0 %v6423, 24
      %v6965 = vpop.permute.xlu0 %6964
      %6966 = vrot.lane.b32.xlu0 %v6428, 24
      %v6967 = vpop.permute.xlu0 %6966
      %6968 = vrot.lane.b32.xlu0 %v6433, 24
      %v6969 = vpop.permute.xlu0 %6968
      %6970 = vrot.lane.b32.xlu0 %v6438, 24
      %v6971 = vpop.permute.xlu0 %6970
      %6972 = vrot.lane.b32.xlu0 %v6443, 24
      %v6973 = vpop.permute.xlu0 %6972
      %v7000 = vsel %vm589, 0.0, %v6475
      %v7001 = vsel %vm589, 0.0, %v6477
      %v7002 = vsel %vm589, %v6288, %v6479
      %v7003 = vsel %vm589, %v6293, %v6481
      %v7004 = vsel %vm589, %v6298, %v6483
      %v7005 = vsel %vm589, %v6303, %v6485
      %v7006 = vsel %vm589, %v6308, %v6487
      %v7007 = vsel %vm589, %v6313, %v6489
      %v7008 = vsel %vm589, %v6318, %v6491
      %v7009 = vsel %vm589, %v6323, %v6493
      %v7010 = vsel %vm589, %v6328, %v6495
      %v7011 = vsel %vm589, %v6333, %v6497
      %v7012 = vsel %vm589, %v6338, %v6499
      %v7013 = vsel %vm589, %v6343, %v6501
      %v7014 = vsel %vm589, %v6348, %v6503
      %v7015 = vsel %vm589, %v6353, %v6505
      %v7016 = vsel %vm589, %v6358, %v6507
      %v7017 = vsel %vm589, %v6363, %v6509
      %v7018 = vsel %vm589, %v6368, %v6511
      %v7019 = vsel %vm589, %v6373, %v6513
      %v7020 = vsel %vm589, %v6378, %v6515
      %v7021 = vsel %vm589, %v6383, %v6517
      %v7022 = vsel %vm589, %v6388, %v6519
      %v7023 = vsel %vm589, %v6393, %v6521
      %v7024 = vsel %vm589, %v6398, %v6523
      %v7025 = vsel %vm589, %v6403, %v6525
      %v7026 = vsel %vm589, %v6408, %v6527
      %v7027 = vsel %vm589, %v6413, %v6529
      %v7028 = vsel %vm3077, %v4148, %v6561
      %v7029 = vsel %vm3077, %v4148, %v6563
      %v7030 = vsel %vm3077, %v7000, %v6565
      %v7031 = vsel %vm3077, %v7001, %v6567
      %v7032 = vsel %vm3077, %v7002, %v6569
      %v7033 = vsel %vm3077, %v7003, %v6571
      %v7034 = vsel %vm3077, %v7004, %v6573
      %v7035 = vsel %vm3077, %v7005, %v6575
      %v7036 = vsel %vm3077, %v7006, %v6577
      %v7037 = vsel %vm3077, %v7007, %v6579
      %v7038 = vsel %vm3077, %v7008, %v6581
      %v7039 = vsel %vm3077, %v7009, %v6583
      %v7040 = vsel %vm3077, %v7010, %v6585
      %v7041 = vsel %vm3077, %v7011, %v6587
      %v7042 = vsel %vm3077, %v7012, %v6589
      %v7043 = vsel %vm3077, %v7013, %v6591
      %v7044 = vsel %vm3077, %v7014, %v6593
      %v7045 = vsel %vm3077, %v7015, %v6595
      %v7046 = vsel %vm3077, %v7016, %v6597
      %v7047 = vsel %vm3077, %v7017, %v6599
      %v7048 = vsel %vm3077, %v7018, %v6601
      %v7049 = vsel %vm3077, %v7019, %v6603
      %v7050 = vsel %vm3077, %v7020, %v6605
      %v7051 = vsel %vm3077, %v7021, %v6607
      %v7052 = vsel %vm3077, %v7022, %v6609
      %v7053 = vsel %vm3077, %v7023, %v6611
      %v7054 = vsel %vm3077, %v7024, %v6613
      %v7055 = vsel %vm3077, %v7025, %v6615
      %v7056 = vsel %vm3077, %v7026, %v6617
      %v7057 = vsel %vm3077, %v7027, %v6619
      %v7058 = vsel %vm3110, %v4177, %v6653
      %v7059 = vsel %vm3110, %v4177, %v6655
      %v7060 = vsel %vm3110, %v7028, %v6657
      %v7061 = vsel %vm3110, %v7029, %v6659
      %v7062 = vsel %vm3110, %v7030, %v6661
      %v7063 = vsel %vm3110, %v7031, %v6663
      %v7064 = vsel %vm3110, %v7032, %v6665
      %v7065 = vsel %vm3110, %v7033, %v6667
      %v7066 = vsel %vm3110, %v7034, %v6669
      %v7067 = vsel %vm3110, %v7035, %v6671
      %v7068 = vsel %vm3110, %v7036, %v6673
      %v7069 = vsel %vm3110, %v7037, %v6675
      %v7070 = vsel %vm3110, %v7038, %v6677
      %v7071 = vsel %vm3110, %v7039, %v6679
      %v7072 = vsel %vm3110, %v7040, %v6681
      %v7073 = vsel %vm3110, %v7041, %v6683
      %v7074 = vsel %vm3110, %v7042, %v6685
      %v7075 = vsel %vm3110, %v7043, %v6687
      %v7076 = vsel %vm3110, %v7044, %v6689
      %v7077 = vsel %vm3110, %v7045, %v6691
      %v7078 = vsel %vm3110, %v7046, %v6693
      %v7079 = vsel %vm3110, %v7047, %v6695
      %v7080 = vsel %vm3110, %v7048, %v6697
      %v7081 = vsel %vm3110, %v7049, %v6699
      %v7082 = vsel %vm3110, %v7050, %v6701
      %v7083 = vsel %vm3110, %v7051, %v6703
      %v7084 = vsel %vm3110, %v7052, %v6705
      %v7085 = vsel %vm3110, %v7053, %v6707
      %v7086 = vsel %vm3110, %v7054, %v6709
      %v7087 = vsel %vm3110, %v7055, %v6711
      %v7088 = vsel %vm3110, %v7056, %v6713
      %v7089 = vsel %vm3110, %v7057, %v6715
      %v7090 = vsel %vm3143, %v7058, %v6749
      %v7091 = vsel %vm3143, %v7059, %v6751
      %v7092 = vsel %vm3143, %v7060, %v6753
      %v7093 = vsel %vm3143, %v7061, %v6755
      %v7094 = vsel %vm3143, %v7062, %v6757
      %v7095 = vsel %vm3143, %v7063, %v6759
      %v7096 = vsel %vm3143, %v7064, %v6761
      %v7097 = vsel %vm3143, %v7065, %v6763
      %v7098 = vsel %vm3143, %v7066, %v6765
      %v7099 = vsel %vm3143, %v7067, %v6767
      %v7100 = vsel %vm3143, %v7068, %v6769
      %v7101 = vsel %vm3143, %v7069, %v6771
      %v7102 = vsel %vm3143, %v7070, %v6773
      %v7103 = vsel %vm3143, %v7071, %v6775
      %v7104 = vsel %vm3143, %v7072, %v6777
      %v7105 = vsel %vm3143, %v7073, %v6779
      %v7106 = vsel %vm3143, %v7074, %v6781
      %v7107 = vsel %vm3143, %v7075, %v6783
      %v7108 = vsel %vm3143, %v7076, %v6785
      %v7109 = vsel %vm3143, %v7077, %v6787
      %v7110 = vsel %vm3143, %v7078, %v6789
      %v7111 = vsel %vm3143, %v7079, %v6791
      %v7112 = vsel %vm3143, %v7080, %v6793
      %v7113 = vsel %vm3143, %v7081, %v6795
      %v7114 = vsel %vm3143, %v7082, %v6797
      %v7115 = vsel %vm3143, %v7083, %v6799
      %v7116 = vsel %vm3143, %v7084, %v6801
      %v7117 = vsel %vm3143, %v7085, %v6803
      %v7118 = vsel %vm3143, %v7086, %v6805
      %v7119 = vsel %vm3143, %v7087, %v6807
      %v7120 = vsel %vm3143, %v7088, %v3948
      %v7121 = vsel %vm3143, %v7089, %v3948
      %v7122 = vsel %vm3176, %v7090, %v6839
      %v7123 = vsel %vm3176, %v7091, %v6841
      %v7124 = vsel %vm3176, %v7092, %v6843
      %v7125 = vsel %vm3176, %v7093, %v6845
      %v7126 = vsel %vm3176, %v7094, %v6847
      %v7127 = vsel %vm3176, %v7095, %v6849
      %v7128 = vsel %vm3176, %v7096, %v6851
      %v7129 = vsel %vm3176, %v7097, %v6853
      %v7130 = vsel %vm3176, %v7098, %v6855
      %v7131 = vsel %vm3176, %v7099, %v6857
      %v7132 = vsel %vm3176, %v7100, %v6859
      %v7133 = vsel %vm3176, %v7101, %v6861
      %v7134 = vsel %vm3176, %v7102, %v6863
      %v7135 = vsel %vm3176, %v7103, %v6865
      %v7136 = vsel %vm3176, %v7104, %v6867
      %v7137 = vsel %vm3176, %v7105, %v6869
      %v7138 = vsel %vm3176, %v7106, %v6871
      %v7139 = vsel %vm3176, %v7107, %v6873
      %v7140 = vsel %vm3176, %v7108, %v6875
      %v7141 = vsel %vm3176, %v7109, %v6877
      %v7142 = vsel %vm3176, %v7110, %v6879
      %v7143 = vsel %vm3176, %v7111, %v6881
      %v7144 = vsel %vm3176, %v7112, %v6883
      %v7145 = vsel %vm3176, %v7113, %v6885
      %v7146 = vsel %vm3176, %v7114, %v6887
      %v7147 = vsel %vm3176, %v7115, %v6889
      %v7148 = vsel %vm3176, %v7116, %v6891
      %v7149 = vsel %vm3176, %v7117, %v6893
      %v7150 = vsel %vm3176, %v7118, %v4037
      %v7151 = vsel %vm3176, %v7119, %v4037
      %v7152 = vsel %vm3176, %v7120, %v4037
      %v7153 = vsel %vm3176, %v7121, %v4037
      %v7154 = vsel %vm3209, %v7122, %v6923
      %v7155 = vsel %vm3209, %v7123, %v6925
      %v7156 = vsel %vm3209, %v7124, %v6927
      %v7157 = vsel %vm3209, %v7125, %v6929
      %v7158 = vsel %vm3209, %v7126, %v6931
      %v7159 = vsel %vm3209, %v7127, %v6933
      %v7160 = vsel %vm3209, %v7128, %v6935
      %v7161 = vsel %vm3209, %v7129, %v6937
      %v7162 = vsel %vm3209, %v7130, %v6939
      %v7163 = vsel %vm3209, %v7131, %v6941
      %v7164 = vsel %vm3209, %v7132, %v6943
      %v7165 = vsel %vm3209, %v7133, %v6945
      %v7166 = vsel %vm3209, %v7134, %v6947
      %v7167 = vsel %vm3209, %v7135, %v6949
      %v7168 = vsel %vm3209, %v7136, %v6951
      %v7169 = vsel %vm3209, %v7137, %v6953
      %v7170 = vsel %vm3209, %v7138, %v6955
      %v7171 = vsel %vm3209, %v7139, %v6957
      %v7172 = vsel %vm3209, %v7140, %v6959
      %v7173 = vsel %vm3209, %v7141, %v6961
      %v7174 = vsel %vm3209, %v7142, %v6963
      %v7175 = vsel %vm3209, %v7143, %v6965
      %v7176 = vsel %vm3209, %v7144, %v6967
      %v7177 = vsel %vm3209, %v7145, %v6969
      %v7178 = vsel %vm3209, %v7146, %v6971
      %v7179 = vsel %vm3209, %v7147, %v6973
      %v7180 = vsel %vm3209, %v7148, %v4120
      %v7181 = vsel %vm3209, %v7149, %v4120
      %v7182 = vsel %vm3209, %v7150, %v4120
      %v7183 = vsel %vm3209, %v7151, %v4120
      %v7184 = vsel %vm3209, %v7152, %v4120
      %v7185 = vsel %vm3209, %v7153, %v4120
      %v7186 = vld [vmem:[%s11] sm:$0xff]
      %v7187 = vld [vmem:[%s11 + $0x8] sm:$0xff]
      %v7188 = vld [vmem:[%s11 + $0x10] sm:$0xff]
      %v7189 = vld [vmem:[%s11 + $0x18] sm:$0xf]
      %v7190 = vld [vmem:[%s12] sm:$0x1]
      %v7192 = vlaneseq
      %v7193 = vshrl.u32 %v7192, 7
      %v7194 = vsub.s32 0, %v7193
      %v7195 = vrot.slane %v7190, %v7194
      %v7198 = vsel %vm3253, %v7154, 0
      %v7201 = vsel %vm3253, %v7155, 0
      %v7204 = vsel %vm3253, %v7156, 0
      %v7207 = vsel %vm3253, %v7157, 0
      %v7210 = vsel %vm3253, %v7158, 0
      %v7213 = vsel %vm3253, %v7159, 0
      %v7216 = vsel %vm3253, %v7160, 0
      %v7219 = vsel %vm3253, %v7161, 0
      %v7222 = vsel %vm3253, %v7162, 0
      %v7225 = vsel %vm3253, %v7163, 0
      %v7228 = vsel %vm3253, %v7164, 0
      %v7231 = vsel %vm3253, %v7165, 0
      %v7234 = vsel %vm3253, %v7166, 0
      %v7237 = vsel %vm3253, %v7167, 0
      %v7240 = vsel %vm3253, %v7168, 0
      %v7243 = vsel %vm3253, %v7169, 0
      %v7246 = vsel %vm3253, %v7170, 0
      %v7249 = vsel %vm3253, %v7171, 0
      %v7252 = vsel %vm3253, %v7172, 0
      %v7255 = vsel %vm3253, %v7173, 0
      %v7258 = vsel %vm3253, %v7174, 0
      %v7261 = vsel %vm3253, %v7175, 0
      %v7264 = vsel %vm3253, %v7176, 0
      %v7267 = vsel %vm3253, %v7177, 0
      %v7270 = vsel %vm3253, %v7178, 0
      %v7273 = vsel %vm3253, %v7179, 0
      %v7276 = vsel %vm3253, %v7180, 0
      %v7279 = vsel %vm3253, %v7181, 0
      %v7282 = vsel %vm3253, %v7182, 0
      %v7285 = vsel %vm3253, %v7183, 0
      %v7288 = vsel %vm3253, %v7184, 0
      %v7291 = vsel %vm3253, %v7185, 0
      %v7294 = vsel %vm686, %v7189, 0
      %7296 = vmatprep.subr.mxu0 0.0
      %7297 = vmatpush1.msra.mxu0 0.0
      %7298 = vmatprep.subr.mxu0 0.0
      %7299 = vmatpush1.msra.mxu0 0.0
      %7300 = vmatprep.subr.mxu0 0.0
      %7301 = vmatpush1.msra.mxu0 0.0
      %7302 = vmatprep.subr.mxu0 0.0
      %7303 = vmatpush1.msra.mxu0 0.0
      %7304 = vmatprep.subr.mxu0 0.0
      %7305 = vmatpush1.msra.mxu0 0.0
      %7306 = vmatprep.subr.mxu0 0.0
      %7307 = vmatpush1.msra.mxu0 0.0
      %7308 = vmatprep.subr.mxu0 0.0
      %7309 = vmatpush1.msra.mxu0 0.0
      %7310 = vmatprep.subr.mxu0 0.0
      %7311 = vmatpush1.msra.mxu0 0.0
      %7312 = vmatprep.subr.mxu0 0.0
      %7313 = vmatpush1.msra.mxu0 0.0
      %7314 = vmatprep.subr.mxu0 0.0
      %7315 = vmatpush1.msra.mxu0 0.0
      %7316 = vmatprep.subr.mxu0 0.0
      %7317 = vmatpush1.msra.mxu0 0.0
      %7318 = vmatprep.subr.mxu0 0.0
      %7319 = vmatpush1.msra.mxu0 0.0
      %7320 = vmatprep.subr.mxu0 0.0
      %7321 = vmatpush1.msra.mxu0 %v7294
      %7322 = vmatprep.subr.mxu0 0.0
      %7323 = vmatpush1.msra.mxu0 %v7188
      %7324 = vmatprep.subr.mxu0 0.0
      %7325 = vmatpush1.msra.mxu0 %v7187
      %7326 = vmatprep.subr.mxu0 0.0
      %7327 = vmatpush1.msra.mxu0 %v7186
      %7328 = vmatprep.subr.mxu0 0.0
      %7329 = vmatpush2.msra.mxu0 0.0
      %7330 = vmatprep.subr.mxu0 0.0
      %7331 = vmatpush2.msra.mxu0 0.0
      %7332 = vmatprep.subr.mxu0 0.0
      %7333 = vmatpush2.msra.mxu0 0.0
      %7334 = vmatprep.subr.mxu0 0.0
      %7335 = vmatpush2.msra.mxu0 0.0
      %7336 = vmatprep.subr.mxu0 0.0
      %7337 = vmatpush2.msra.mxu0 0.0
      %7338 = vmatprep.subr.mxu0 0.0
      %7339 = vmatpush2.msra.mxu0 0.0
      %7340 = vmatprep.subr.mxu0 0.0
      %7341 = vmatpush2.msra.mxu0 0.0
      %7342 = vmatprep.subr.mxu0 0.0
      %7343 = vmatpush2.msra.mxu0 0.0
      %7344 = vmatprep.subr.mxu0 0.0
      %7345 = vmatpush2.msra.mxu0 0.0
      %7346 = vmatprep.subr.mxu0 0.0
      %7347 = vmatpush2.msra.mxu0 0.0
      %7348 = vmatprep.subr.mxu0 0.0
      %7349 = vmatpush2.msra.mxu0 0.0
      %7350 = vmatprep.subr.mxu0 0.0
      %7351 = vmatpush2.msra.mxu0 0.0
      %7352 = vmatprep.subr.mxu0 0.0
      %7353 = vmatpush2.msra.mxu0 0.0
      %7354 = vmatprep.subr.mxu0 0.0
      %7355 = vmatpush2.msra.mxu0 0.0
      %7356 = vmatprep.subr.mxu0 0.0
      %7357 = vmatpush2.msra.mxu0 0.0
      %7358 = vmatprep.subr.mxu0 0.0
      %7359 = vmatpush2.msra.mxu0 0.0
      %7360 = vmatprep.mubr.f32.mxu0 0.0
      %7361 = vmatmul.mubr.f32.gmra.mxu0 %v7198
      %v7362 = vpop.f32.mrf.mxu0
      %v7363 = vadd.f32 %v7195, %v7362
      %v7364 = vpop.f32.mrf.mxu0
      %7365 = vmatprep.mubr.f32.mxu0 0.0
      %7366 = vmatmul.mubr.f32.gmra.mxu0 %v7201
      %v7367 = vpop.f32.mrf.mxu0
      %v7368 = vadd.f32 %v7195, %v7367
      %v7369 = vpop.f32.mrf.mxu0
      %7370 = vmatprep.mubr.f32.mxu0 0.0
      %7371 = vmatmul.mubr.f32.gmra.mxu0 %v7204
      %v7372 = vpop.f32.mrf.mxu0
      %v7373 = vadd.f32 %v7195, %v7372
      %v7374 = vpop.f32.mrf.mxu0
      %7375 = vmatprep.mubr.f32.mxu0 0.0
      %7376 = vmatmul.mubr.f32.gmra.mxu0 %v7207
      %v7377 = vpop.f32.mrf.mxu0
      %v7378 = vadd.f32 %v7195, %v7377
      %v7379 = vpop.f32.mrf.mxu0
      %7380 = vmatprep.mubr.f32.mxu0 0.0
      %7381 = vmatmul.mubr.f32.gmra.mxu0 %v7210
      %v7382 = vpop.f32.mrf.mxu0
      %v7383 = vadd.f32 %v7195, %v7382
      %v7384 = vpop.f32.mrf.mxu0
      %7385 = vmatprep.mubr.f32.mxu0 0.0
      %7386 = vmatmul.mubr.f32.gmra.mxu0 %v7213
      %v7387 = vpop.f32.mrf.mxu0
      %v7388 = vadd.f32 %v7195, %v7387
      %v7389 = vpop.f32.mrf.mxu0
      %7390 = vmatprep.mubr.f32.mxu0 0.0
      %7391 = vmatmul.mubr.f32.gmra.mxu0 %v7216
      %v7392 = vpop.f32.mrf.mxu0
      %v7393 = vadd.f32 %v7195, %v7392
      %v7394 = vpop.f32.mrf.mxu0
      %7395 = vmatprep.mubr.f32.mxu0 0.0
      %7396 = vmatmul.mubr.f32.gmra.mxu0 %v7219
      %v7397 = vpop.f32.mrf.mxu0
      %v7398 = vadd.f32 %v7195, %v7397
      %v7399 = vpop.f32.mrf.mxu0
      %7400 = vmatprep.mubr.f32.mxu0 0.0
      %7401 = vmatmul.mubr.f32.gmra.mxu0 %v7222
      %v7402 = vpop.f32.mrf.mxu0
      %v7403 = vadd.f32 %v7195, %v7402
      %v7404 = vpop.f32.mrf.mxu0
      %7405 = vmatprep.mubr.f32.mxu0 0.0
      %7406 = vmatmul.mubr.f32.gmra.mxu0 %v7225
      %v7407 = vpop.f32.mrf.mxu0
      %v7408 = vadd.f32 %v7195, %v7407
      %v7409 = vpop.f32.mrf.mxu0
      %7410 = vmatprep.mubr.f32.mxu0 0.0
      %7411 = vmatmul.mubr.f32.gmra.mxu0 %v7228
      %v7412 = vpop.f32.mrf.mxu0
      %v7413 = vadd.f32 %v7195, %v7412
      %v7414 = vpop.f32.mrf.mxu0
      %7415 = vmatprep.mubr.f32.mxu0 0.0
      %7416 = vmatmul.mubr.f32.gmra.mxu0 %v7231
      %v7417 = vpop.f32.mrf.mxu0
      %v7418 = vadd.f32 %v7195, %v7417
      %v7419 = vpop.f32.mrf.mxu0
      %7420 = vmatprep.mubr.f32.mxu0 0.0
      %7421 = vmatmul.mubr.f32.gmra.mxu0 %v7234
      %v7422 = vpop.f32.mrf.mxu0
      %v7423 = vadd.f32 %v7195, %v7422
      %v7424 = vpop.f32.mrf.mxu0
      %7425 = vmatprep.mubr.f32.mxu0 0.0
      %7426 = vmatmul.mubr.f32.gmra.mxu0 %v7237
      %v7427 = vpop.f32.mrf.mxu0
      %v7428 = vadd.f32 %v7195, %v7427
      %v7429 = vpop.f32.mrf.mxu0
      %7430 = vmatprep.mubr.f32.mxu0 0.0
      %7431 = vmatmul.mubr.f32.gmra.mxu0 %v7240
      %v7432 = vpop.f32.mrf.mxu0
      %v7433 = vadd.f32 %v7195, %v7432
      %v7434 = vpop.f32.mrf.mxu0
      %7435 = vmatprep.mubr.f32.mxu0 0.0
      %7436 = vmatmul.mubr.f32.gmra.mxu0 %v7243
      %v7437 = vpop.f32.mrf.mxu0
      %v7438 = vadd.f32 %v7195, %v7437
      %v7439 = vpop.f32.mrf.mxu0
      %7440 = vmatprep.mubr.f32.mxu0 0.0
      %7441 = vmatmul.mubr.f32.gmra.mxu0 %v7246
      %v7442 = vpop.f32.mrf.mxu0
      %v7443 = vadd.f32 %v7195, %v7442
      %v7444 = vpop.f32.mrf.mxu0
      %7445 = vmatprep.mubr.f32.mxu0 0.0
      %7446 = vmatmul.mubr.f32.gmra.mxu0 %v7249
      %v7447 = vpop.f32.mrf.mxu0
      %v7448 = vadd.f32 %v7195, %v7447
      %v7449 = vpop.f32.mrf.mxu0
      %7450 = vmatprep.mubr.f32.mxu0 0.0
      %7451 = vmatmul.mubr.f32.gmra.mxu0 %v7252
      %v7452 = vpop.f32.mrf.mxu0
      %v7453 = vadd.f32 %v7195, %v7452
      %v7454 = vpop.f32.mrf.mxu0
      %7455 = vmatprep.mubr.f32.mxu0 0.0
      %7456 = vmatmul.mubr.f32.gmra.mxu0 %v7255
      %v7457 = vpop.f32.mrf.mxu0
      %v7458 = vadd.f32 %v7195, %v7457
      %v7459 = vpop.f32.mrf.mxu0
      %7460 = vmatprep.mubr.f32.mxu0 0.0
      %7461 = vmatmul.mubr.f32.gmra.mxu0 %v7258
      %v7462 = vpop.f32.mrf.mxu0
      %v7463 = vadd.f32 %v7195, %v7462
      %v7464 = vpop.f32.mrf.mxu0
      %7465 = vmatprep.mubr.f32.mxu0 0.0
      %7466 = vmatmul.mubr.f32.gmra.mxu0 %v7261
      %v7467 = vpop.f32.mrf.mxu0
      %v7468 = vadd.f32 %v7195, %v7467
      %v7469 = vpop.f32.mrf.mxu0
      %7470 = vmatprep.mubr.f32.mxu0 0.0
      %7471 = vmatmul.mubr.f32.gmra.mxu0 %v7264
      %v7472 = vpop.f32.mrf.mxu0
      %v7473 = vadd.f32 %v7195, %v7472
      %v7474 = vpop.f32.mrf.mxu0
      %7475 = vmatprep.mubr.f32.mxu0 0.0
      %7476 = vmatmul.mubr.f32.gmra.mxu0 %v7267
      %v7477 = vpop.f32.mrf.mxu0
      %v7478 = vadd.f32 %v7195, %v7477
      %v7479 = vpop.f32.mrf.mxu0
      %7480 = vmatprep.mubr.f32.mxu0 0.0
      %7481 = vmatmul.mubr.f32.gmra.mxu0 %v7270
      %v7482 = vpop.f32.mrf.mxu0
      %v7483 = vadd.f32 %v7195, %v7482
      %v7484 = vpop.f32.mrf.mxu0
      %7485 = vmatprep.mubr.f32.mxu0 0.0
      %7486 = vmatmul.mubr.f32.gmra.mxu0 %v7273
      %v7487 = vpop.f32.mrf.mxu0
      %v7488 = vadd.f32 %v7195, %v7487
      %v7489 = vpop.f32.mrf.mxu0
      %7490 = vmatprep.mubr.f32.mxu0 0.0
      %7491 = vmatmul.mubr.f32.gmra.mxu0 %v7276
      %v7492 = vpop.f32.mrf.mxu0
      %v7493 = vadd.f32 %v7195, %v7492
      %v7494 = vpop.f32.mrf.mxu0
      %7495 = vmatprep.mubr.f32.mxu0 0.0
      %7496 = vmatmul.mubr.f32.gmra.mxu0 %v7279
      %v7497 = vpop.f32.mrf.mxu0
      %v7498 = vadd.f32 %v7195, %v7497
      %v7499 = vpop.f32.mrf.mxu0
      %7500 = vmatprep.mubr.f32.mxu0 0.0
      %7501 = vmatmul.mubr.f32.gmra.mxu0 %v7282
      %v7502 = vpop.f32.mrf.mxu0
      %v7503 = vadd.f32 %v7195, %v7502
      %v7504 = vpop.f32.mrf.mxu0
      %7505 = vmatprep.mubr.f32.mxu0 0.0
      %7506 = vmatmul.mubr.f32.gmra.mxu0 %v7285
      %v7507 = vpop.f32.mrf.mxu0
      %v7508 = vadd.f32 %v7195, %v7507
      %v7509 = vpop.f32.mrf.mxu0
      %7510 = vmatprep.mubr.f32.mxu0 0.0
      %7511 = vmatmul.mubr.f32.gmra.mxu0 %v7288
      %v7512 = vpop.f32.mrf.mxu0
      %v7513 = vadd.f32 %v7195, %v7512
      %v7514 = vpop.f32.mrf.mxu0
      %7515 = vmatprep.mubr.f32.mxu0 0.0
      %7516 = vmatmul.mubr.f32.gmra.mxu0 %v7291
      %v7517 = vpop.f32.mrf.mxu0
      %v7518 = vadd.f32 %v7195, %v7517
      %v7519 = vpop.f32.mrf.mxu0
      %7520 = vdwg.mxu0
      %7521 = vrot.lane.b32.xlu0 %v1827, 124
      %v7522 = vpop.permute.xlu0 %7521
      %7523 = vrot.lane.b32.xlu0 %v1829, 124
      %v7524 = vpop.permute.xlu0 %7523
      %7525 = vrot.lane.b32.xlu0 %v1828, 124
      %v7526 = vpop.permute.xlu0 %7525
      %7527 = vrot.lane.b32.xlu0 %v1830, 124
      %v7528 = vpop.permute.xlu0 %7527
      %7529 = vrot.lane.b32.xlu0 %v1832, 124
      %v7530 = vpop.permute.xlu0 %7529
      %7531 = vrot.lane.b32.xlu0 %v1831, 124
      %v7532 = vpop.permute.xlu0 %7531
      %7533 = vrot.lane.b32.xlu0 %v1833, 124
      %v7534 = vpop.permute.xlu0 %7533
      %7535 = vrot.lane.b32.xlu0 %v1835, 124
      %v7536 = vpop.permute.xlu0 %7535
      %7537 = vrot.lane.b32.xlu0 %v1834, 124
      %v7538 = vpop.permute.xlu0 %7537
      %7539 = vrot.lane.b32.xlu0 %v1836, 124
      %v7540 = vpop.permute.xlu0 %7539
      %7541 = vrot.lane.b32.xlu0 %v1838, 124
      %v7542 = vpop.permute.xlu0 %7541
      %7543 = vrot.lane.b32.xlu0 %v1837, 124
      %v7544 = vpop.permute.xlu0 %7543
      %7545 = vrot.lane.b32.xlu0 %v1839, 124
      %v7546 = vpop.permute.xlu0 %7545
      %7547 = vrot.lane.b32.xlu0 %v1841, 124
      %v7548 = vpop.permute.xlu0 %7547
      %7549 = vrot.lane.b32.xlu0 %v1840, 124
      %v7550 = vpop.permute.xlu0 %7549
      %7551 = vrot.lane.b32.xlu0 %v1842, 124
      %v7552 = vpop.permute.xlu0 %7551
      %7553 = vrot.lane.b32.xlu0 %v1844, 124
      %v7554 = vpop.permute.xlu0 %7553
      %7555 = vrot.lane.b32.xlu0 %v1843, 124
      %v7556 = vpop.permute.xlu0 %7555
      %7557 = vrot.lane.b32.xlu0 %v1845, 124
      %v7558 = vpop.permute.xlu0 %7557
      %7559 = vrot.lane.b32.xlu0 %v1847, 124
      %v7560 = vpop.permute.xlu0 %7559
      %7561 = vrot.lane.b32.xlu0 %v1846, 124
      %v7562 = vpop.permute.xlu0 %7561
      %7563 = vrot.lane.b32.xlu0 %v1848, 124
      %v7564 = vpop.permute.xlu0 %7563
      %7565 = vrot.lane.b32.xlu0 %v1850, 124
      %v7566 = vpop.permute.xlu0 %7565
      %7567 = vrot.lane.b32.xlu0 %v1849, 124
      %v7568 = vpop.permute.xlu0 %7567
      %7569 = vrot.lane.b32.xlu0 %v1851, 124
      %v7570 = vpop.permute.xlu0 %7569
      %7571 = vrot.lane.b32.xlu0 %v1853, 124
      %v7572 = vpop.permute.xlu0 %7571
      %7573 = vrot.lane.b32.xlu0 %v1852, 124
      %v7574 = vpop.permute.xlu0 %7573
      %7575 = vrot.lane.b32.xlu0 %v1854, 124
      %v7576 = vpop.permute.xlu0 %7575
      %7577 = vrot.lane.b32.xlu0 %v1856, 124
      %v7578 = vpop.permute.xlu0 %7577
      %7579 = vrot.lane.b32.xlu0 %v1855, 124
      %v7580 = vpop.permute.xlu0 %7579
      %7581 = vrot.lane.b32.xlu0 %v1857, 124
      %v7582 = vpop.permute.xlu0 %7581
      %7583 = vrot.lane.b32.xlu0 %v1859, 124
      %v7584 = vpop.permute.xlu0 %7583
      %7585 = vrot.lane.b32.xlu0 %v1858, 124
      %v7586 = vpop.permute.xlu0 %7585
      %7587 = vrot.lane.b32.xlu0 %v1860, 124
      %v7588 = vpop.permute.xlu0 %7587
      %7589 = vrot.lane.b32.xlu0 %v1862, 124
      %v7590 = vpop.permute.xlu0 %7589
      %7591 = vrot.lane.b32.xlu0 %v1861, 124
      %v7592 = vpop.permute.xlu0 %7591
      %7593 = vrot.lane.b32.xlu0 %v1863, 124
      %v7594 = vpop.permute.xlu0 %7593
      %7595 = vrot.lane.b32.xlu0 %v1865, 124
      %v7596 = vpop.permute.xlu0 %7595
      %7597 = vrot.lane.b32.xlu0 %v1864, 124
      %v7598 = vpop.permute.xlu0 %7597
      %7599 = vrot.lane.b32.xlu0 %v1866, 124
      %v7600 = vpop.permute.xlu0 %7599
      %7601 = vrot.lane.b32.xlu0 %v1868, 124
      %v7602 = vpop.permute.xlu0 %7601
      %7603 = vrot.lane.b32.xlu0 %v1867, 124
      %v7604 = vpop.permute.xlu0 %7603
      %7605 = vrot.lane.b32.xlu0 %v1869, 124
      %v7606 = vpop.permute.xlu0 %7605
      %7607 = vrot.lane.b32.xlu0 %v1871, 124
      %v7608 = vpop.permute.xlu0 %7607
      %7609 = vrot.lane.b32.xlu0 %v1870, 124
      %v7610 = vpop.permute.xlu0 %7609
      %7611 = vrot.lane.b32.xlu0 %v1872, 124
      %v7612 = vpop.permute.xlu0 %7611
      %7613 = vrot.lane.b32.xlu0 %v1874, 124
      %v7614 = vpop.permute.xlu0 %7613
      %7615 = vrot.lane.b32.xlu0 %v1873, 124
      %v7616 = vpop.permute.xlu0 %7615
      %v7665 = vsel %vm1826, 0.0, %v7522
      %v7666 = vsel %vm1826, 0.0, %v7528
      %v7667 = vsel %vm1826, 0.0, %v7534
      %v7668 = vsel %vm1826, 0.0, %v7540
      %v7669 = vsel %vm1826, 0.0, %v7546
      %v7670 = vsel %vm1826, 0.0, %v7552
      %v7671 = vsel %vm1826, 0.0, %v7558
      %v7672 = vsel %vm1826, 0.0, %v7564
      %v7673 = vsel %vm1826, 0.0, %v7570
      %v7674 = vsel %vm1826, 0.0, %v7576
      %v7675 = vsel %vm1826, 0.0, %v7582
      %v7676 = vsel %vm1826, 0.0, %v7588
      %v7677 = vsel %vm1826, 0.0, %v7594
      %v7678 = vsel %vm1826, 0.0, %v7600
      %v7679 = vsel %vm1826, 0.0, %v7606
      %v7680 = vsel %vm1826, 0.0, %v7612
      %v7681 = vsel %vm1826, %v7526, 0.0
      %v7682 = vsel %vm1826, %v7532, 0.0
      %v7683 = vsel %vm1826, %v7538, 0.0
      %v7684 = vsel %vm1826, %v7544, 0.0
      %v7685 = vsel %vm1826, %v7550, 0.0
      %v7686 = vsel %vm1826, %v7556, 0.0
      %v7687 = vsel %vm1826, %v7562, 0.0
      %v7688 = vsel %vm1826, %v7568, 0.0
      %v7689 = vsel %vm1826, %v7574, 0.0
      %v7690 = vsel %vm1826, %v7580, 0.0
      %v7691 = vsel %vm1826, %v7586, 0.0
      %v7692 = vsel %vm1826, %v7592, 0.0
      %v7693 = vsel %vm1826, %v7598, 0.0
      %v7694 = vsel %vm1826, %v7604, 0.0
      %v7695 = vsel %vm1826, %v7610, 0.0
      %v7696 = vsel %vm1826, %v7616, 0.0
      %v7729 = vrot.slane %v7665, 1
      %v7730 = vrot.slane %v7524, 1
      %v7731 = vsel %vm1172, %v7729, %v7730
      %v7732 = vrot.slane %v7681, 1
      %v7733 = vsel %vm1172, %v7730, %v7732
      %v7734 = vrot.slane %v7666, 1
      %v7735 = vrot.slane %v7530, 1
      %v7736 = vsel %vm1172, %v7734, %v7735
      %v7737 = vrot.slane %v7682, 1
      %v7738 = vsel %vm1172, %v7735, %v7737
      %v7739 = vrot.slane %v7667, 1
      %v7740 = vrot.slane %v7536, 1
      %v7741 = vsel %vm1172, %v7739, %v7740
      %v7742 = vrot.slane %v7683, 1
      %v7743 = vsel %vm1172, %v7740, %v7742
      %v7744 = vrot.slane %v7668, 1
      %v7745 = vrot.slane %v7542, 1
      %v7746 = vsel %vm1172, %v7744, %v7745
      %v7747 = vrot.slane %v7684, 1
      %v7748 = vsel %vm1172, %v7745, %v7747
      %v7749 = vrot.slane %v7669, 1
      %v7750 = vrot.slane %v7548, 1
      %v7751 = vsel %vm1172, %v7749, %v7750
      %v7752 = vrot.slane %v7685, 1
      %v7753 = vsel %vm1172, %v7750, %v7752
      %v7754 = vrot.slane %v7670, 1
      %v7755 = vrot.slane %v7554, 1
      %v7756 = vsel %vm1172, %v7754, %v7755
      %v7757 = vrot.slane %v7686, 1
      %v7758 = vsel %vm1172, %v7755, %v7757
      %v7759 = vrot.slane %v7671, 1
      %v7760 = vrot.slane %v7560, 1
      %v7761 = vsel %vm1172, %v7759, %v7760
      %v7762 = vrot.slane %v7687, 1
      %v7763 = vsel %vm1172, %v7760, %v7762
      %v7764 = vrot.slane %v7672, 1
      %v7765 = vrot.slane %v7566, 1
      %v7766 = vsel %vm1172, %v7764, %v7765
      %v7767 = vrot.slane %v7688, 1
      %v7768 = vsel %vm1172, %v7765, %v7767
      %v7769 = vrot.slane %v7673, 1
      %v7770 = vrot.slane %v7572, 1
      %v7771 = vsel %vm1172, %v7769, %v7770
      %v7772 = vrot.slane %v7689, 1
      %v7773 = vsel %vm1172, %v7770, %v7772
      %v7774 = vrot.slane %v7674, 1
      %v7775 = vrot.slane %v7578, 1
      %v7776 = vsel %vm1172, %v7774, %v7775
      %v7777 = vrot.slane %v7690, 1
      %v7778 = vsel %vm1172, %v7775, %v7777
      %v7779 = vrot.slane %v7675, 1
      %v7780 = vrot.slane %v7584, 1
      %v7781 = vsel %vm1172, %v7779, %v7780
      %v7782 = vrot.slane %v7691, 1
      %v7783 = vsel %vm1172, %v7780, %v7782
      %v7784 = vrot.slane %v7676, 1
      %v7785 = vrot.slane %v7590, 1
      %v7786 = vsel %vm1172, %v7784, %v7785
      %v7787 = vrot.slane %v7692, 1
      %v7788 = vsel %vm1172, %v7785, %v7787
      %v7789 = vrot.slane %v7677, 1
      %v7790 = vrot.slane %v7596, 1
      %v7791 = vsel %vm1172, %v7789, %v7790
      %v7792 = vrot.slane %v7693, 1
      %v7793 = vsel %vm1172, %v7790, %v7792
      %v7794 = vrot.slane %v7678, 1
      %v7795 = vrot.slane %v7602, 1
      %v7796 = vsel %vm1172, %v7794, %v7795
      %v7797 = vrot.slane %v7694, 1
      %v7798 = vsel %vm1172, %v7795, %v7797
      %v7799 = vrot.slane %v7679, 1
      %v7800 = vrot.slane %v7608, 1
      %v7801 = vsel %vm1172, %v7799, %v7800
      %v7802 = vrot.slane %v7695, 1
      %v7803 = vsel %vm1172, %v7800, %v7802
      %v7804 = vrot.slane %v7680, 1
      %v7805 = vrot.slane %v7614, 1
      %v7806 = vsel %vm1172, %v7804, %v7805
      %v7807 = vrot.slane %v7696, 1
      %v7808 = vsel %vm1172, %v7805, %v7807
      %7809 = vrot.lane.b32.xlu0 %v7731, 4
      %v7810 = vpop.permute.xlu0 %7809
      %7811 = vrot.lane.b32.xlu0 %v7733, 4
      %v7812 = vpop.permute.xlu0 %7811
      %7813 = vrot.lane.b32.xlu0 %v7736, 4
      %v7814 = vpop.permute.xlu0 %7813
      %7815 = vrot.lane.b32.xlu0 %v7738, 4
      %v7816 = vpop.permute.xlu0 %7815
      %7817 = vrot.lane.b32.xlu0 %v7741, 4
      %v7818 = vpop.permute.xlu0 %7817
      %7819 = vrot.lane.b32.xlu0 %v7743, 4
      %v7820 = vpop.permute.xlu0 %7819
      %7821 = vrot.lane.b32.xlu0 %v7746, 4
      %v7822 = vpop.permute.xlu0 %7821
      %7823 = vrot.lane.b32.xlu0 %v7748, 4
      %v7824 = vpop.permute.xlu0 %7823
      %7825 = vrot.lane.b32.xlu0 %v7751, 4
      %v7826 = vpop.permute.xlu0 %7825
      %7827 = vrot.lane.b32.xlu0 %v7753, 4
      %v7828 = vpop.permute.xlu0 %7827
      %7829 = vrot.lane.b32.xlu0 %v7756, 4
      %v7830 = vpop.permute.xlu0 %7829
      %7831 = vrot.lane.b32.xlu0 %v7758, 4
      %v7832 = vpop.permute.xlu0 %7831
      %7833 = vrot.lane.b32.xlu0 %v7761, 4
      %v7834 = vpop.permute.xlu0 %7833
      %7835 = vrot.lane.b32.xlu0 %v7763, 4
      %v7836 = vpop.permute.xlu0 %7835
      %7837 = vrot.lane.b32.xlu0 %v7766, 4
      %v7838 = vpop.permute.xlu0 %7837
      %7839 = vrot.lane.b32.xlu0 %v7768, 4
      %v7840 = vpop.permute.xlu0 %7839
      %7841 = vrot.lane.b32.xlu0 %v7771, 4
      %v7842 = vpop.permute.xlu0 %7841
      %7843 = vrot.lane.b32.xlu0 %v7773, 4
      %v7844 = vpop.permute.xlu0 %7843
      %7845 = vrot.lane.b32.xlu0 %v7776, 4
      %v7846 = vpop.permute.xlu0 %7845
      %7847 = vrot.lane.b32.xlu0 %v7778, 4
      %v7848 = vpop.permute.xlu0 %7847
      %7849 = vrot.lane.b32.xlu0 %v7781, 4
      %v7850 = vpop.permute.xlu0 %7849
      %7851 = vrot.lane.b32.xlu0 %v7783, 4
      %v7852 = vpop.permute.xlu0 %7851
      %7853 = vrot.lane.b32.xlu0 %v7786, 4
      %v7854 = vpop.permute.xlu0 %7853
      %7855 = vrot.lane.b32.xlu0 %v7788, 4
      %v7856 = vpop.permute.xlu0 %7855
      %7857 = vrot.lane.b32.xlu0 %v7791, 4
      %v7858 = vpop.permute.xlu0 %7857
      %7859 = vrot.lane.b32.xlu0 %v7793, 4
      %v7860 = vpop.permute.xlu0 %7859
      %7861 = vrot.lane.b32.xlu0 %v7796, 4
      %v7862 = vpop.permute.xlu0 %7861
      %7863 = vrot.lane.b32.xlu0 %v7798, 4
      %v7864 = vpop.permute.xlu0 %7863
      %7865 = vrot.lane.b32.xlu0 %v7801, 4
      %v7866 = vpop.permute.xlu0 %7865
      %7867 = vrot.lane.b32.xlu0 %v7803, 4
      %v7868 = vpop.permute.xlu0 %7867
      %7869 = vrot.lane.b32.xlu0 %v7806, 4
      %v7870 = vpop.permute.xlu0 %7869
      %7871 = vrot.lane.b32.xlu0 %v7808, 4
      %v7872 = vpop.permute.xlu0 %7871
      %v7905 = vrot.slane %v7665, 2
      %v7906 = vrot.slane %v7524, 2
      %v7907 = vsel %vm1317, %v7905, %v7906
      %v7908 = vrot.slane %v7681, 2
      %v7909 = vsel %vm1317, %v7906, %v7908
      %v7910 = vrot.slane %v7666, 2
      %v7911 = vrot.slane %v7530, 2
      %v7912 = vsel %vm1317, %v7910, %v7911
      %v7913 = vrot.slane %v7682, 2
      %v7914 = vsel %vm1317, %v7911, %v7913
      %v7915 = vrot.slane %v7667, 2
      %v7916 = vrot.slane %v7536, 2
      %v7917 = vsel %vm1317, %v7915, %v7916
      %v7918 = vrot.slane %v7683, 2
      %v7919 = vsel %vm1317, %v7916, %v7918
      %v7920 = vrot.slane %v7668, 2
      %v7921 = vrot.slane %v7542, 2
      %v7922 = vsel %vm1317, %v7920, %v7921
      %v7923 = vrot.slane %v7684, 2
      %v7924 = vsel %vm1317, %v7921, %v7923
      %v7925 = vrot.slane %v7669, 2
      %v7926 = vrot.slane %v7548, 2
      %v7927 = vsel %vm1317, %v7925, %v7926
      %v7928 = vrot.slane %v7685, 2
      %v7929 = vsel %vm1317, %v7926, %v7928
      %v7930 = vrot.slane %v7670, 2
      %v7931 = vrot.slane %v7554, 2
      %v7932 = vsel %vm1317, %v7930, %v7931
      %v7933 = vrot.slane %v7686, 2
      %v7934 = vsel %vm1317, %v7931, %v7933
      %v7935 = vrot.slane %v7671, 2
      %v7936 = vrot.slane %v7560, 2
      %v7937 = vsel %vm1317, %v7935, %v7936
      %v7938 = vrot.slane %v7687, 2
      %v7939 = vsel %vm1317, %v7936, %v7938
      %v7940 = vrot.slane %v7672, 2
      %v7941 = vrot.slane %v7566, 2
      %v7942 = vsel %vm1317, %v7940, %v7941
      %v7943 = vrot.slane %v7688, 2
      %v7944 = vsel %vm1317, %v7941, %v7943
      %v7945 = vrot.slane %v7673, 2
      %v7946 = vrot.slane %v7572, 2
      %v7947 = vsel %vm1317, %v7945, %v7946
      %v7948 = vrot.slane %v7689, 2
      %v7949 = vsel %vm1317, %v7946, %v7948
      %v7950 = vrot.slane %v7674, 2
      %v7951 = vrot.slane %v7578, 2
      %v7952 = vsel %vm1317, %v7950, %v7951
      %v7953 = vrot.slane %v7690, 2
      %v7954 = vsel %vm1317, %v7951, %v7953
      %v7955 = vrot.slane %v7675, 2
      %v7956 = vrot.slane %v7584, 2
      %v7957 = vsel %vm1317, %v7955, %v7956
      %v7958 = vrot.slane %v7691, 2
      %v7959 = vsel %vm1317, %v7956, %v7958
      %v7960 = vrot.slane %v7676, 2
      %v7961 = vrot.slane %v7590, 2
      %v7962 = vsel %vm1317, %v7960, %v7961
      %v7963 = vrot.slane %v7692, 2
      %v7964 = vsel %vm1317, %v7961, %v7963
      %v7965 = vrot.slane %v7677, 2
      %v7966 = vrot.slane %v7596, 2
      %v7967 = vsel %vm1317, %v7965, %v7966
      %v7968 = vrot.slane %v7693, 2
      %v7969 = vsel %vm1317, %v7966, %v7968
      %v7970 = vrot.slane %v7678, 2
      %v7971 = vrot.slane %v7602, 2
      %v7972 = vsel %vm1317, %v7970, %v7971
      %v7973 = vrot.slane %v7694, 2
      %v7974 = vsel %vm1317, %v7971, %v7973
      %v7975 = vrot.slane %v7679, 2
      %v7976 = vrot.slane %v7608, 2
      %v7977 = vsel %vm1317, %v7975, %v7976
      %v7978 = vrot.slane %v7695, 2
      %v7979 = vsel %vm1317, %v7976, %v7978
      %v7980 = vrot.slane %v7680, 2
      %v7981 = vrot.slane %v7614, 2
      %v7982 = vsel %vm1317, %v7980, %v7981
      %v7983 = vrot.slane %v7696, 2
      %v7984 = vsel %vm1317, %v7981, %v7983
      %7985 = vrot.lane.b32.xlu0 %v7907, 8
      %v7986 = vpop.permute.xlu0 %7985
      %7987 = vrot.lane.b32.xlu0 %v7909, 8
      %v7988 = vpop.permute.xlu0 %7987
      %7989 = vrot.lane.b32.xlu0 %v7912, 8
      %v7990 = vpop.permute.xlu0 %7989
      %7991 = vrot.lane.b32.xlu0 %v7914, 8
      %v7992 = vpop.permute.xlu0 %7991
      %7993 = vrot.lane.b32.xlu0 %v7917, 8
      %v7994 = vpop.permute.xlu0 %7993
      %7995 = vrot.lane.b32.xlu0 %v7919, 8
      %v7996 = vpop.permute.xlu0 %7995
      %7997 = vrot.lane.b32.xlu0 %v7922, 8
      %v7998 = vpop.permute.xlu0 %7997
      %7999 = vrot.lane.b32.xlu0 %v7924, 8
      %v8000 = vpop.permute.xlu0 %7999
      %8001 = vrot.lane.b32.xlu0 %v7927, 8
      %v8002 = vpop.permute.xlu0 %8001
      %8003 = vrot.lane.b32.xlu0 %v7929, 8
      %v8004 = vpop.permute.xlu0 %8003
      %8005 = vrot.lane.b32.xlu0 %v7932, 8
      %v8006 = vpop.permute.xlu0 %8005
      %8007 = vrot.lane.b32.xlu0 %v7934, 8
      %v8008 = vpop.permute.xlu0 %8007
      %8009 = vrot.lane.b32.xlu0 %v7937, 8
      %v8010 = vpop.permute.xlu0 %8009
      %8011 = vrot.lane.b32.xlu0 %v7939, 8
      %v8012 = vpop.permute.xlu0 %8011
      %8013 = vrot.lane.b32.xlu0 %v7942, 8
      %v8014 = vpop.permute.xlu0 %8013
      %8015 = vrot.lane.b32.xlu0 %v7944, 8
      %v8016 = vpop.permute.xlu0 %8015
      %8017 = vrot.lane.b32.xlu0 %v7947, 8
      %v8018 = vpop.permute.xlu0 %8017
      %8019 = vrot.lane.b32.xlu0 %v7949, 8
      %v8020 = vpop.permute.xlu0 %8019
      %8021 = vrot.lane.b32.xlu0 %v7952, 8
      %v8022 = vpop.permute.xlu0 %8021
      %8023 = vrot.lane.b32.xlu0 %v7954, 8
      %v8024 = vpop.permute.xlu0 %8023
      %8025 = vrot.lane.b32.xlu0 %v7957, 8
      %v8026 = vpop.permute.xlu0 %8025
      %8027 = vrot.lane.b32.xlu0 %v7959, 8
      %v8028 = vpop.permute.xlu0 %8027
      %8029 = vrot.lane.b32.xlu0 %v7962, 8
      %v8030 = vpop.permute.xlu0 %8029
      %8031 = vrot.lane.b32.xlu0 %v7964, 8
      %v8032 = vpop.permute.xlu0 %8031
      %8033 = vrot.lane.b32.xlu0 %v7967, 8
      %v8034 = vpop.permute.xlu0 %8033
      %8035 = vrot.lane.b32.xlu0 %v7969, 8
      %v8036 = vpop.permute.xlu0 %8035
      %8037 = vrot.lane.b32.xlu0 %v7972, 8
      %v8038 = vpop.permute.xlu0 %8037
      %8039 = vrot.lane.b32.xlu0 %v7974, 8
      %v8040 = vpop.permute.xlu0 %8039
      %8041 = vrot.lane.b32.xlu0 %v7977, 8
      %v8042 = vpop.permute.xlu0 %8041
      %8043 = vrot.lane.b32.xlu0 %v7979, 8
      %v8044 = vpop.permute.xlu0 %8043
      %8045 = vrot.lane.b32.xlu0 %v7982, 8
      %v8046 = vpop.permute.xlu0 %8045
      %8047 = vrot.lane.b32.xlu0 %v7984, 8
      %v8048 = vpop.permute.xlu0 %8047
      %v8081 = vrot.slane %v7665, 3
      %v8082 = vrot.slane %v7524, 3
      %v8083 = vsel %vm2339, %v8081, %v8082
      %v8084 = vrot.slane %v7681, 3
      %v8085 = vsel %vm2339, %v8082, %v8084
      %v8086 = vrot.slane %v7666, 3
      %v8087 = vrot.slane %v7530, 3
      %v8088 = vsel %vm2339, %v8086, %v8087
      %v8089 = vrot.slane %v7682, 3
      %v8090 = vsel %vm2339, %v8087, %v8089
      %v8091 = vrot.slane %v7667, 3
      %v8092 = vrot.slane %v7536, 3
      %v8093 = vsel %vm2339, %v8091, %v8092
      %v8094 = vrot.slane %v7683, 3
      %v8095 = vsel %vm2339, %v8092, %v8094
      %v8096 = vrot.slane %v7668, 3
      %v8097 = vrot.slane %v7542, 3
      %v8098 = vsel %vm2339, %v8096, %v8097
      %v8099 = vrot.slane %v7684, 3
      %v8100 = vsel %vm2339, %v8097, %v8099
      %v8101 = vrot.slane %v7669, 3
      %v8102 = vrot.slane %v7548, 3
      %v8103 = vsel %vm2339, %v8101, %v8102
      %v8104 = vrot.slane %v7685, 3
      %v8105 = vsel %vm2339, %v8102, %v8104
      %v8106 = vrot.slane %v7670, 3
      %v8107 = vrot.slane %v7554, 3
      %v8108 = vsel %vm2339, %v8106, %v8107
      %v8109 = vrot.slane %v7686, 3
      %v8110 = vsel %vm2339, %v8107, %v8109
      %v8111 = vrot.slane %v7671, 3
      %v8112 = vrot.slane %v7560, 3
      %v8113 = vsel %vm2339, %v8111, %v8112
      %v8114 = vrot.slane %v7687, 3
      %v8115 = vsel %vm2339, %v8112, %v8114
      %v8116 = vrot.slane %v7672, 3
      %v8117 = vrot.slane %v7566, 3
      %v8118 = vsel %vm2339, %v8116, %v8117
      %v8119 = vrot.slane %v7688, 3
      %v8120 = vsel %vm2339, %v8117, %v8119
      %v8121 = vrot.slane %v7673, 3
      %v8122 = vrot.slane %v7572, 3
      %v8123 = vsel %vm2339, %v8121, %v8122
      %v8124 = vrot.slane %v7689, 3
      %v8125 = vsel %vm2339, %v8122, %v8124
      %v8126 = vrot.slane %v7674, 3
      %v8127 = vrot.slane %v7578, 3
      %v8128 = vsel %vm2339, %v8126, %v8127
      %v8129 = vrot.slane %v7690, 3
      %v8130 = vsel %vm2339, %v8127, %v8129
      %v8131 = vrot.slane %v7675, 3
      %v8132 = vrot.slane %v7584, 3
      %v8133 = vsel %vm2339, %v8131, %v8132
      %v8134 = vrot.slane %v7691, 3
      %v8135 = vsel %vm2339, %v8132, %v8134
      %v8136 = vrot.slane %v7676, 3
      %v8137 = vrot.slane %v7590, 3
      %v8138 = vsel %vm2339, %v8136, %v8137
      %v8139 = vrot.slane %v7692, 3
      %v8140 = vsel %vm2339, %v8137, %v8139
      %v8141 = vrot.slane %v7677, 3
      %v8142 = vrot.slane %v7596, 3
      %v8143 = vsel %vm2339, %v8141, %v8142
      %v8144 = vrot.slane %v7693, 3
      %v8145 = vsel %vm2339, %v8142, %v8144
      %v8146 = vrot.slane %v7678, 3
      %v8147 = vrot.slane %v7602, 3
      %v8148 = vsel %vm2339, %v8146, %v8147
      %v8149 = vrot.slane %v7694, 3
      %v8150 = vsel %vm2339, %v8147, %v8149
      %v8151 = vrot.slane %v7679, 3
      %v8152 = vrot.slane %v7608, 3
      %v8153 = vsel %vm2339, %v8151, %v8152
      %v8154 = vrot.slane %v7695, 3
      %v8155 = vsel %vm2339, %v8152, %v8154
      %v8156 = vrot.slane %v7680, 3
      %v8157 = vrot.slane %v7614, 3
      %v8158 = vsel %vm2339, %v8156, %v8157
      %v8159 = vrot.slane %v7696, 3
      %v8160 = vsel %vm2339, %v8157, %v8159
      %8161 = vrot.lane.b32.xlu0 %v8083, 12
      %v8162 = vpop.permute.xlu0 %8161
      %8163 = vrot.lane.b32.xlu0 %v8085, 12
      %v8164 = vpop.permute.xlu0 %8163
      %8165 = vrot.lane.b32.xlu0 %v8088, 12
      %v8166 = vpop.permute.xlu0 %8165
      %8167 = vrot.lane.b32.xlu0 %v8090, 12
      %v8168 = vpop.permute.xlu0 %8167
      %8169 = vrot.lane.b32.xlu0 %v8093, 12
      %v8170 = vpop.permute.xlu0 %8169
      %8171 = vrot.lane.b32.xlu0 %v8095, 12
      %v8172 = vpop.permute.xlu0 %8171
      %8173 = vrot.lane.b32.xlu0 %v8098, 12
      %v8174 = vpop.permute.xlu0 %8173
      %8175 = vrot.lane.b32.xlu0 %v8100, 12
      %v8176 = vpop.permute.xlu0 %8175
      %8177 = vrot.lane.b32.xlu0 %v8103, 12
      %v8178 = vpop.permute.xlu0 %8177
      %8179 = vrot.lane.b32.xlu0 %v8105, 12
      %v8180 = vpop.permute.xlu0 %8179
      %8181 = vrot.lane.b32.xlu0 %v8108, 12
      %v8182 = vpop.permute.xlu0 %8181
      %8183 = vrot.lane.b32.xlu0 %v8110, 12
      %v8184 = vpop.permute.xlu0 %8183
      %8185 = vrot.lane.b32.xlu0 %v8113, 12
      %v8186 = vpop.permute.xlu0 %8185
      %8187 = vrot.lane.b32.xlu0 %v8115, 12
      %v8188 = vpop.permute.xlu0 %8187
      %8189 = vrot.lane.b32.xlu0 %v8118, 12
      %v8190 = vpop.permute.xlu0 %8189
      %8191 = vrot.lane.b32.xlu0 %v8120, 12
      %v8192 = vpop.permute.xlu0 %8191
      %8193 = vrot.lane.b32.xlu0 %v8123, 12
      %v8194 = vpop.permute.xlu0 %8193
      %8195 = vrot.lane.b32.xlu0 %v8125, 12
      %v8196 = vpop.permute.xlu0 %8195
      %8197 = vrot.lane.b32.xlu0 %v8128, 12
      %v8198 = vpop.permute.xlu0 %8197
      %8199 = vrot.lane.b32.xlu0 %v8130, 12
      %v8200 = vpop.permute.xlu0 %8199
      %8201 = vrot.lane.b32.xlu0 %v8133, 12
      %v8202 = vpop.permute.xlu0 %8201
      %8203 = vrot.lane.b32.xlu0 %v8135, 12
      %v8204 = vpop.permute.xlu0 %8203
      %8205 = vrot.lane.b32.xlu0 %v8138, 12
      %v8206 = vpop.permute.xlu0 %8205
      %8207 = vrot.lane.b32.xlu0 %v8140, 12
      %v8208 = vpop.permute.xlu0 %8207
      %8209 = vrot.lane.b32.xlu0 %v8143, 12
      %v8210 = vpop.permute.xlu0 %8209
      %8211 = vrot.lane.b32.xlu0 %v8145, 12
      %v8212 = vpop.permute.xlu0 %8211
      %8213 = vrot.lane.b32.xlu0 %v8148, 12
      %v8214 = vpop.permute.xlu0 %8213
      %8215 = vrot.lane.b32.xlu0 %v8150, 12
      %v8216 = vpop.permute.xlu0 %8215
      %8217 = vrot.lane.b32.xlu0 %v8153, 12
      %v8218 = vpop.permute.xlu0 %8217
      %8219 = vrot.lane.b32.xlu0 %v8155, 12
      %v8220 = vpop.permute.xlu0 %8219
      %8221 = vrot.lane.b32.xlu0 %v8158, 12
      %v8222 = vpop.permute.xlu0 %8221
      %8223 = vrot.lane.b32.xlu0 %v8160, 12
      %v8224 = vpop.permute.xlu0 %8223
      %v8257 = vrot.slane %v7665, 4
      %v8258 = vrot.slane %v7524, 4
      %v8259 = vsel %vm686, %v8257, %v8258
      %v8260 = vrot.slane %v7681, 4
      %v8261 = vsel %vm686, %v8258, %v8260
      %v8262 = vrot.slane %v7666, 4
      %v8263 = vrot.slane %v7530, 4
      %v8264 = vsel %vm686, %v8262, %v8263
      %v8265 = vrot.slane %v7682, 4
      %v8266 = vsel %vm686, %v8263, %v8265
      %v8267 = vrot.slane %v7667, 4
      %v8268 = vrot.slane %v7536, 4
      %v8269 = vsel %vm686, %v8267, %v8268
      %v8270 = vrot.slane %v7683, 4
      %v8271 = vsel %vm686, %v8268, %v8270
      %v8272 = vrot.slane %v7668, 4
      %v8273 = vrot.slane %v7542, 4
      %v8274 = vsel %vm686, %v8272, %v8273
      %v8275 = vrot.slane %v7684, 4
      %v8276 = vsel %vm686, %v8273, %v8275
      %v8277 = vrot.slane %v7669, 4
      %v8278 = vrot.slane %v7548, 4
      %v8279 = vsel %vm686, %v8277, %v8278
      %v8280 = vrot.slane %v7685, 4
      %v8281 = vsel %vm686, %v8278, %v8280
      %v8282 = vrot.slane %v7670, 4
      %v8283 = vrot.slane %v7554, 4
      %v8284 = vsel %vm686, %v8282, %v8283
      %v8285 = vrot.slane %v7686, 4
      %v8286 = vsel %vm686, %v8283, %v8285
      %v8287 = vrot.slane %v7671, 4
      %v8288 = vrot.slane %v7560, 4
      %v8289 = vsel %vm686, %v8287, %v8288
      %v8290 = vrot.slane %v7687, 4
      %v8291 = vsel %vm686, %v8288, %v8290
      %v8292 = vrot.slane %v7672, 4
      %v8293 = vrot.slane %v7566, 4
      %v8294 = vsel %vm686, %v8292, %v8293
      %v8295 = vrot.slane %v7688, 4
      %v8296 = vsel %vm686, %v8293, %v8295
      %v8297 = vrot.slane %v7673, 4
      %v8298 = vrot.slane %v7572, 4
      %v8299 = vsel %vm686, %v8297, %v8298
      %v8300 = vrot.slane %v7689, 4
      %v8301 = vsel %vm686, %v8298, %v8300
      %v8302 = vrot.slane %v7674, 4
      %v8303 = vrot.slane %v7578, 4
      %v8304 = vsel %vm686, %v8302, %v8303
      %v8305 = vrot.slane %v7690, 4
      %v8306 = vsel %vm686, %v8303, %v8305
      %v8307 = vrot.slane %v7675, 4
      %v8308 = vrot.slane %v7584, 4
      %v8309 = vsel %vm686, %v8307, %v8308
      %v8310 = vrot.slane %v7691, 4
      %v8311 = vsel %vm686, %v8308, %v8310
      %v8312 = vrot.slane %v7676, 4
      %v8313 = vrot.slane %v7590, 4
      %v8314 = vsel %vm686, %v8312, %v8313
      %v8315 = vrot.slane %v7692, 4
      %v8316 = vsel %vm686, %v8313, %v8315
      %v8317 = vrot.slane %v7677, 4
      %v8318 = vrot.slane %v7596, 4
      %v8319 = vsel %vm686, %v8317, %v8318
      %v8320 = vrot.slane %v7693, 4
      %v8321 = vsel %vm686, %v8318, %v8320
      %v8322 = vrot.slane %v7678, 4
      %v8323 = vrot.slane %v7602, 4
      %v8324 = vsel %vm686, %v8322, %v8323
      %v8325 = vrot.slane %v7694, 4
      %v8326 = vsel %vm686, %v8323, %v8325
      %v8327 = vrot.slane %v7679, 4
      %v8328 = vrot.slane %v7608, 4
      %v8329 = vsel %vm686, %v8327, %v8328
      %v8330 = vrot.slane %v7695, 4
      %v8331 = vsel %vm686, %v8328, %v8330
      %v8332 = vrot.slane %v7680, 4
      %v8333 = vrot.slane %v7614, 4
      %v8334 = vsel %vm686, %v8332, %v8333
      %v8335 = vrot.slane %v7696, 4
      %v8336 = vsel %vm686, %v8333, %v8335
      %8337 = vrot.lane.b32.xlu0 %v8259, 16
      %v8338 = vpop.permute.xlu0 %8337
      %8339 = vrot.lane.b32.xlu0 %v8261, 16
      %v8340 = vpop.permute.xlu0 %8339
      %8341 = vrot.lane.b32.xlu0 %v8264, 16
      %v8342 = vpop.permute.xlu0 %8341
      %8343 = vrot.lane.b32.xlu0 %v8266, 16
      %v8344 = vpop.permute.xlu0 %8343
      %8345 = vrot.lane.b32.xlu0 %v8269, 16
      %v8346 = vpop.permute.xlu0 %8345
      %8347 = vrot.lane.b32.xlu0 %v8271, 16
      %v8348 = vpop.permute.xlu0 %8347
      %8349 = vrot.lane.b32.xlu0 %v8274, 16
      %v8350 = vpop.permute.xlu0 %8349
      %8351 = vrot.lane.b32.xlu0 %v8276, 16
      %v8352 = vpop.permute.xlu0 %8351
      %8353 = vrot.lane.b32.xlu0 %v8279, 16
      %v8354 = vpop.permute.xlu0 %8353
      %8355 = vrot.lane.b32.xlu0 %v8281, 16
      %v8356 = vpop.permute.xlu0 %8355
      %8357 = vrot.lane.b32.xlu0 %v8284, 16
      %v8358 = vpop.permute.xlu0 %8357
      %8359 = vrot.lane.b32.xlu0 %v8286, 16
      %v8360 = vpop.permute.xlu0 %8359
      %8361 = vrot.lane.b32.xlu0 %v8289, 16
      %v8362 = vpop.permute.xlu0 %8361
      %8363 = vrot.lane.b32.xlu0 %v8291, 16
      %v8364 = vpop.permute.xlu0 %8363
      %8365 = vrot.lane.b32.xlu0 %v8294, 16
      %v8366 = vpop.permute.xlu0 %8365
      %8367 = vrot.lane.b32.xlu0 %v8296, 16
      %v8368 = vpop.permute.xlu0 %8367
      %8369 = vrot.lane.b32.xlu0 %v8299, 16
      %v8370 = vpop.permute.xlu0 %8369
      %8371 = vrot.lane.b32.xlu0 %v8301, 16
      %v8372 = vpop.permute.xlu0 %8371
      %8373 = vrot.lane.b32.xlu0 %v8304, 16
      %v8374 = vpop.permute.xlu0 %8373
      %8375 = vrot.lane.b32.xlu0 %v8306, 16
      %v8376 = vpop.permute.xlu0 %8375
      %8377 = vrot.lane.b32.xlu0 %v8309, 16
      %v8378 = vpop.permute.xlu0 %8377
      %8379 = vrot.lane.b32.xlu0 %v8311, 16
      %v8380 = vpop.permute.xlu0 %8379
      %8381 = vrot.lane.b32.xlu0 %v8314, 16
      %v8382 = vpop.permute.xlu0 %8381
      %8383 = vrot.lane.b32.xlu0 %v8316, 16
      %v8384 = vpop.permute.xlu0 %8383
      %8385 = vrot.lane.b32.xlu0 %v8319, 16
      %v8386 = vpop.permute.xlu0 %8385
      %8387 = vrot.lane.b32.xlu0 %v8321, 16
      %v8388 = vpop.permute.xlu0 %8387
      %8389 = vrot.lane.b32.xlu0 %v8324, 16
      %v8390 = vpop.permute.xlu0 %8389
      %8391 = vrot.lane.b32.xlu0 %v8326, 16
      %v8392 = vpop.permute.xlu0 %8391
      %8393 = vrot.lane.b32.xlu0 %v8329, 16
      %v8394 = vpop.permute.xlu0 %8393
      %8395 = vrot.lane.b32.xlu0 %v8331, 16
      %v8396 = vpop.permute.xlu0 %8395
      %8397 = vrot.lane.b32.xlu0 %v8334, 16
      %v8398 = vpop.permute.xlu0 %8397
      %8399 = vrot.lane.b32.xlu0 %v8336, 16
      %v8400 = vpop.permute.xlu0 %8399
      %v8433 = vrot.slane %v7665, 5
      %v8434 = vrot.slane %v7524, 5
      %v8435 = vsel %vm1826, %v8433, %v8434
      %v8436 = vrot.slane %v7681, 5
      %v8437 = vsel %vm1826, %v8434, %v8436
      %v8438 = vrot.slane %v7666, 5
      %v8439 = vrot.slane %v7530, 5
      %v8440 = vsel %vm1826, %v8438, %v8439
      %v8441 = vrot.slane %v7682, 5
      %v8442 = vsel %vm1826, %v8439, %v8441
      %v8443 = vrot.slane %v7667, 5
      %v8444 = vrot.slane %v7536, 5
      %v8445 = vsel %vm1826, %v8443, %v8444
      %v8446 = vrot.slane %v7683, 5
      %v8447 = vsel %vm1826, %v8444, %v8446
      %v8448 = vrot.slane %v7668, 5
      %v8449 = vrot.slane %v7542, 5
      %v8450 = vsel %vm1826, %v8448, %v8449
      %v8451 = vrot.slane %v7684, 5
      %v8452 = vsel %vm1826, %v8449, %v8451
      %v8453 = vrot.slane %v7669, 5
      %v8454 = vrot.slane %v7548, 5
      %v8455 = vsel %vm1826, %v8453, %v8454
      %v8456 = vrot.slane %v7685, 5
      %v8457 = vsel %vm1826, %v8454, %v8456
      %v8458 = vrot.slane %v7670, 5
      %v8459 = vrot.slane %v7554, 5
      %v8460 = vsel %vm1826, %v8458, %v8459
      %v8461 = vrot.slane %v7686, 5
      %v8462 = vsel %vm1826, %v8459, %v8461
      %v8463 = vrot.slane %v7671, 5
      %v8464 = vrot.slane %v7560, 5
      %v8465 = vsel %vm1826, %v8463, %v8464
      %v8466 = vrot.slane %v7687, 5
      %v8467 = vsel %vm1826, %v8464, %v8466
      %v8468 = vrot.slane %v7672, 5
      %v8469 = vrot.slane %v7566, 5
      %v8470 = vsel %vm1826, %v8468, %v8469
      %v8471 = vrot.slane %v7688, 5
      %v8472 = vsel %vm1826, %v8469, %v8471
      %v8473 = vrot.slane %v7673, 5
      %v8474 = vrot.slane %v7572, 5
      %v8475 = vsel %vm1826, %v8473, %v8474
      %v8476 = vrot.slane %v7689, 5
      %v8477 = vsel %vm1826, %v8474, %v8476
      %v8478 = vrot.slane %v7674, 5
      %v8479 = vrot.slane %v7578, 5
      %v8480 = vsel %vm1826, %v8478, %v8479
      %v8481 = vrot.slane %v7690, 5
      %v8482 = vsel %vm1826, %v8479, %v8481
      %v8483 = vrot.slane %v7675, 5
      %v8484 = vrot.slane %v7584, 5
      %v8485 = vsel %vm1826, %v8483, %v8484
      %v8486 = vrot.slane %v7691, 5
      %v8487 = vsel %vm1826, %v8484, %v8486
      %v8488 = vrot.slane %v7676, 5
      %v8489 = vrot.slane %v7590, 5
      %v8490 = vsel %vm1826, %v8488, %v8489
      %v8491 = vrot.slane %v7692, 5
      %v8492 = vsel %vm1826, %v8489, %v8491
      %v8493 = vrot.slane %v7677, 5
      %v8494 = vrot.slane %v7596, 5
      %v8495 = vsel %vm1826, %v8493, %v8494
      %v8496 = vrot.slane %v7693, 5
      %v8497 = vsel %vm1826, %v8494, %v8496
      %v8498 = vrot.slane %v7678, 5
      %v8499 = vrot.slane %v7602, 5
      %v8500 = vsel %vm1826, %v8498, %v8499
      %v8501 = vrot.slane %v7694, 5
      %v8502 = vsel %vm1826, %v8499, %v8501
      %v8503 = vrot.slane %v7679, 5
      %v8504 = vrot.slane %v7608, 5
      %v8505 = vsel %vm1826, %v8503, %v8504
      %v8506 = vrot.slane %v7695, 5
      %v8507 = vsel %vm1826, %v8504, %v8506
      %v8508 = vrot.slane %v7680, 5
      %v8509 = vrot.slane %v7614, 5
      %v8510 = vsel %vm1826, %v8508, %v8509
      %v8511 = vrot.slane %v7696, 5
      %v8512 = vsel %vm1826, %v8509, %v8511
      %8513 = vrot.lane.b32.xlu0 %v8435, 20
      %v8514 = vpop.permute.xlu0 %8513
      %8515 = vrot.lane.b32.xlu0 %v8437, 20
      %v8516 = vpop.permute.xlu0 %8515
      %8517 = vrot.lane.b32.xlu0 %v8440, 20
      %v8518 = vpop.permute.xlu0 %8517
      %8519 = vrot.lane.b32.xlu0 %v8442, 20
      %v8520 = vpop.permute.xlu0 %8519
      %8521 = vrot.lane.b32.xlu0 %v8445, 20
      %v8522 = vpop.permute.xlu0 %8521
      %8523 = vrot.lane.b32.xlu0 %v8447, 20
      %v8524 = vpop.permute.xlu0 %8523
      %8525 = vrot.lane.b32.xlu0 %v8450, 20
      %v8526 = vpop.permute.xlu0 %8525
      %8527 = vrot.lane.b32.xlu0 %v8452, 20
      %v8528 = vpop.permute.xlu0 %8527
      %8529 = vrot.lane.b32.xlu0 %v8455, 20
      %v8530 = vpop.permute.xlu0 %8529
      %8531 = vrot.lane.b32.xlu0 %v8457, 20
      %v8532 = vpop.permute.xlu0 %8531
      %8533 = vrot.lane.b32.xlu0 %v8460, 20
      %v8534 = vpop.permute.xlu0 %8533
      %8535 = vrot.lane.b32.xlu0 %v8462, 20
      %v8536 = vpop.permute.xlu0 %8535
      %8537 = vrot.lane.b32.xlu0 %v8465, 20
      %v8538 = vpop.permute.xlu0 %8537
      %8539 = vrot.lane.b32.xlu0 %v8467, 20
      %v8540 = vpop.permute.xlu0 %8539
      %8541 = vrot.lane.b32.xlu0 %v8470, 20
      %v8542 = vpop.permute.xlu0 %8541
      %8543 = vrot.lane.b32.xlu0 %v8472, 20
      %v8544 = vpop.permute.xlu0 %8543
      %8545 = vrot.lane.b32.xlu0 %v8475, 20
      %v8546 = vpop.permute.xlu0 %8545
      %8547 = vrot.lane.b32.xlu0 %v8477, 20
      %v8548 = vpop.permute.xlu0 %8547
      %8549 = vrot.lane.b32.xlu0 %v8480, 20
      %v8550 = vpop.permute.xlu0 %8549
      %8551 = vrot.lane.b32.xlu0 %v8482, 20
      %v8552 = vpop.permute.xlu0 %8551
      %8553 = vrot.lane.b32.xlu0 %v8485, 20
      %v8554 = vpop.permute.xlu0 %8553
      %8555 = vrot.lane.b32.xlu0 %v8487, 20
      %v8556 = vpop.permute.xlu0 %8555
      %8557 = vrot.lane.b32.xlu0 %v8490, 20
      %v8558 = vpop.permute.xlu0 %8557
      %8559 = vrot.lane.b32.xlu0 %v8492, 20
      %v8560 = vpop.permute.xlu0 %8559
      %8561 = vrot.lane.b32.xlu0 %v8495, 20
      %v8562 = vpop.permute.xlu0 %8561
      %8563 = vrot.lane.b32.xlu0 %v8497, 20
      %v8564 = vpop.permute.xlu0 %8563
      %8565 = vrot.lane.b32.xlu0 %v8500, 20
      %v8566 = vpop.permute.xlu0 %8565
      %8567 = vrot.lane.b32.xlu0 %v8502, 20
      %v8568 = vpop.permute.xlu0 %8567
      %8569 = vrot.lane.b32.xlu0 %v8505, 20
      %v8570 = vpop.permute.xlu0 %8569
      %8571 = vrot.lane.b32.xlu0 %v8507, 20
      %v8572 = vpop.permute.xlu0 %8571
      %8573 = vrot.lane.b32.xlu0 %v8510, 20
      %v8574 = vpop.permute.xlu0 %8573
      %8575 = vrot.lane.b32.xlu0 %v8512, 20
      %v8576 = vpop.permute.xlu0 %8575
      %v8609 = vrot.slane %v7665, 6
      %v8610 = vrot.slane %v7524, 6
      %v8611 = vsel %vm2868, %v8609, %v8610
      %v8612 = vrot.slane %v7681, 6
      %v8613 = vsel %vm2868, %v8610, %v8612
      %v8614 = vrot.slane %v7666, 6
      %v8615 = vrot.slane %v7530, 6
      %v8616 = vsel %vm2868, %v8614, %v8615
      %v8617 = vrot.slane %v7682, 6
      %v8618 = vsel %vm2868, %v8615, %v8617
      %v8619 = vrot.slane %v7667, 6
      %v8620 = vrot.slane %v7536, 6
      %v8621 = vsel %vm2868, %v8619, %v8620
      %v8622 = vrot.slane %v7683, 6
      %v8623 = vsel %vm2868, %v8620, %v8622
      %v8624 = vrot.slane %v7668, 6
      %v8625 = vrot.slane %v7542, 6
      %v8626 = vsel %vm2868, %v8624, %v8625
      %v8627 = vrot.slane %v7684, 6
      %v8628 = vsel %vm2868, %v8625, %v8627
      %v8629 = vrot.slane %v7669, 6
      %v8630 = vrot.slane %v7548, 6
      %v8631 = vsel %vm2868, %v8629, %v8630
      %v8632 = vrot.slane %v7685, 6
      %v8633 = vsel %vm2868, %v8630, %v8632
      %v8634 = vrot.slane %v7670, 6
      %v8635 = vrot.slane %v7554, 6
      %v8636 = vsel %vm2868, %v8634, %v8635
      %v8637 = vrot.slane %v7686, 6
      %v8638 = vsel %vm2868, %v8635, %v8637
      %v8639 = vrot.slane %v7671, 6
      %v8640 = vrot.slane %v7560, 6
      %v8641 = vsel %vm2868, %v8639, %v8640
      %v8642 = vrot.slane %v7687, 6
      %v8643 = vsel %vm2868, %v8640, %v8642
      %v8644 = vrot.slane %v7672, 6
      %v8645 = vrot.slane %v7566, 6
      %v8646 = vsel %vm2868, %v8644, %v8645
      %v8647 = vrot.slane %v7688, 6
      %v8648 = vsel %vm2868, %v8645, %v8647
      %v8649 = vrot.slane %v7673, 6
      %v8650 = vrot.slane %v7572, 6
      %v8651 = vsel %vm2868, %v8649, %v8650
      %v8652 = vrot.slane %v7689, 6
      %v8653 = vsel %vm2868, %v8650, %v8652
      %v8654 = vrot.slane %v7674, 6
      %v8655 = vrot.slane %v7578, 6
      %v8656 = vsel %vm2868, %v8654, %v8655
      %v8657 = vrot.slane %v7690, 6
      %v8658 = vsel %vm2868, %v8655, %v8657
      %v8659 = vrot.slane %v7675, 6
      %v8660 = vrot.slane %v7584, 6
      %v8661 = vsel %vm2868, %v8659, %v8660
      %v8662 = vrot.slane %v7691, 6
      %v8663 = vsel %vm2868, %v8660, %v8662
      %v8664 = vrot.slane %v7676, 6
      %v8665 = vrot.slane %v7590, 6
      %v8666 = vsel %vm2868, %v8664, %v8665
      %v8667 = vrot.slane %v7692, 6
      %v8668 = vsel %vm2868, %v8665, %v8667
      %v8669 = vrot.slane %v7677, 6
      %v8670 = vrot.slane %v7596, 6
      %v8671 = vsel %vm2868, %v8669, %v8670
      %v8672 = vrot.slane %v7693, 6
      %v8673 = vsel %vm2868, %v8670, %v8672
      %v8674 = vrot.slane %v7678, 6
      %v8675 = vrot.slane %v7602, 6
      %v8676 = vsel %vm2868, %v8674, %v8675
      %v8677 = vrot.slane %v7694, 6
      %v8678 = vsel %vm2868, %v8675, %v8677
      %v8679 = vrot.slane %v7679, 6
      %v8680 = vrot.slane %v7608, 6
      %v8681 = vsel %vm2868, %v8679, %v8680
      %v8682 = vrot.slane %v7695, 6
      %v8683 = vsel %vm2868, %v8680, %v8682
      %v8684 = vrot.slane %v7680, 6
      %v8685 = vrot.slane %v7614, 6
      %v8686 = vsel %vm2868, %v8684, %v8685
      %v8687 = vrot.slane %v7696, 6
      %v8688 = vsel %vm2868, %v8685, %v8687
      %8689 = vrot.lane.b32.xlu0 %v8611, 24
      %v8690 = vpop.permute.xlu0 %8689
      %8691 = vrot.lane.b32.xlu0 %v8613, 24
      %v8692 = vpop.permute.xlu0 %8691
      %8693 = vrot.lane.b32.xlu0 %v8616, 24
      %v8694 = vpop.permute.xlu0 %8693
      %8695 = vrot.lane.b32.xlu0 %v8618, 24
      %v8696 = vpop.permute.xlu0 %8695
      %8697 = vrot.lane.b32.xlu0 %v8621, 24
      %v8698 = vpop.permute.xlu0 %8697
      %8699 = vrot.lane.b32.xlu0 %v8623, 24
      %v8700 = vpop.permute.xlu0 %8699
      %8701 = vrot.lane.b32.xlu0 %v8626, 24
      %v8702 = vpop.permute.xlu0 %8701
      %8703 = vrot.lane.b32.xlu0 %v8628, 24
      %v8704 = vpop.permute.xlu0 %8703
      %8705 = vrot.lane.b32.xlu0 %v8631, 24
      %v8706 = vpop.permute.xlu0 %8705
      %8707 = vrot.lane.b32.xlu0 %v8633, 24
      %v8708 = vpop.permute.xlu0 %8707
      %8709 = vrot.lane.b32.xlu0 %v8636, 24
      %v8710 = vpop.permute.xlu0 %8709
      %8711 = vrot.lane.b32.xlu0 %v8638, 24
      %v8712 = vpop.permute.xlu0 %8711
      %8713 = vrot.lane.b32.xlu0 %v8641, 24
      %v8714 = vpop.permute.xlu0 %8713
      %8715 = vrot.lane.b32.xlu0 %v8643, 24
      %v8716 = vpop.permute.xlu0 %8715
      %8717 = vrot.lane.b32.xlu0 %v8646, 24
      %v8718 = vpop.permute.xlu0 %8717
      %8719 = vrot.lane.b32.xlu0 %v8648, 24
      %v8720 = vpop.permute.xlu0 %8719
      %8721 = vrot.lane.b32.xlu0 %v8651, 24
      %v8722 = vpop.permute.xlu0 %8721
      %8723 = vrot.lane.b32.xlu0 %v8653, 24
      %v8724 = vpop.permute.xlu0 %8723
      %8725 = vrot.lane.b32.xlu0 %v8656, 24
      %v8726 = vpop.permute.xlu0 %8725
      %8727 = vrot.lane.b32.xlu0 %v8658, 24
      %v8728 = vpop.permute.xlu0 %8727
      %8729 = vrot.lane.b32.xlu0 %v8661, 24
      %v8730 = vpop.permute.xlu0 %8729
      %8731 = vrot.lane.b32.xlu0 %v8663, 24
      %v8732 = vpop.permute.xlu0 %8731
      %8733 = vrot.lane.b32.xlu0 %v8666, 24
      %v8734 = vpop.permute.xlu0 %8733
      %8735 = vrot.lane.b32.xlu0 %v8668, 24
      %v8736 = vpop.permute.xlu0 %8735
      %8737 = vrot.lane.b32.xlu0 %v8671, 24
      %v8738 = vpop.permute.xlu0 %8737
      %8739 = vrot.lane.b32.xlu0 %v8673, 24
      %v8740 = vpop.permute.xlu0 %8739
      %8741 = vrot.lane.b32.xlu0 %v8676, 24
      %v8742 = vpop.permute.xlu0 %8741
      %8743 = vrot.lane.b32.xlu0 %v8678, 24
      %v8744 = vpop.permute.xlu0 %8743
      %8745 = vrot.lane.b32.xlu0 %v8681, 24
      %v8746 = vpop.permute.xlu0 %8745
      %8747 = vrot.lane.b32.xlu0 %v8683, 24
      %v8748 = vpop.permute.xlu0 %8747
      %8749 = vrot.lane.b32.xlu0 %v8686, 24
      %v8750 = vpop.permute.xlu0 %8749
      %8751 = vrot.lane.b32.xlu0 %v8688, 24
      %v8752 = vpop.permute.xlu0 %8751
      %v8785 = vsel %vm589, %v7665, %v7810
      %v8786 = vsel %vm589, %v7524, %v7812
      %v8787 = vsel %vm589, %v7666, %v7814
      %v8788 = vsel %vm589, %v7530, %v7816
      %v8789 = vsel %vm589, %v7667, %v7818
      %v8790 = vsel %vm589, %v7536, %v7820
      %v8791 = vsel %vm589, %v7668, %v7822
      %v8792 = vsel %vm589, %v7542, %v7824
      %v8793 = vsel %vm589, %v7669, %v7826
      %v8794 = vsel %vm589, %v7548, %v7828
      %v8795 = vsel %vm589, %v7670, %v7830
      %v8796 = vsel %vm589, %v7554, %v7832
      %v8797 = vsel %vm589, %v7671, %v7834
      %v8798 = vsel %vm589, %v7560, %v7836
      %v8799 = vsel %vm589, %v7672, %v7838
      %v8800 = vsel %vm589, %v7566, %v7840
      %v8801 = vsel %vm589, %v7673, %v7842
      %v8802 = vsel %vm589, %v7572, %v7844
      %v8803 = vsel %vm589, %v7674, %v7846
      %v8804 = vsel %vm589, %v7578, %v7848
      %v8805 = vsel %vm589, %v7675, %v7850
      %v8806 = vsel %vm589, %v7584, %v7852
      %v8807 = vsel %vm589, %v7676, %v7854
      %v8808 = vsel %vm589, %v7590, %v7856
      %v8809 = vsel %vm589, %v7677, %v7858
      %v8810 = vsel %vm589, %v7596, %v7860
      %v8811 = vsel %vm589, %v7678, %v7862
      %v8812 = vsel %vm589, %v7602, %v7864
      %v8813 = vsel %vm589, %v7679, %v7866
      %v8814 = vsel %vm589, %v7608, %v7868
      %v8815 = vsel %vm589, %v7680, %v7870
      %v8816 = vsel %vm589, %v7614, %v7872
      %v8817 = vsel %vm3077, %v8785, %v7986
      %v8818 = vsel %vm3077, %v8786, %v7988
      %v8819 = vsel %vm3077, %v8787, %v7990
      %v8820 = vsel %vm3077, %v8788, %v7992
      %v8821 = vsel %vm3077, %v8789, %v7994
      %v8822 = vsel %vm3077, %v8790, %v7996
      %v8823 = vsel %vm3077, %v8791, %v7998
      %v8824 = vsel %vm3077, %v8792, %v8000
      %v8825 = vsel %vm3077, %v8793, %v8002
      %v8826 = vsel %vm3077, %v8794, %v8004
      %v8827 = vsel %vm3077, %v8795, %v8006
      %v8828 = vsel %vm3077, %v8796, %v8008
      %v8829 = vsel %vm3077, %v8797, %v8010
      %v8830 = vsel %vm3077, %v8798, %v8012
      %v8831 = vsel %vm3077, %v8799, %v8014
      %v8832 = vsel %vm3077, %v8800, %v8016
      %v8833 = vsel %vm3077, %v8801, %v8018
      %v8834 = vsel %vm3077, %v8802, %v8020
      %v8835 = vsel %vm3077, %v8803, %v8022
      %v8836 = vsel %vm3077, %v8804, %v8024
      %v8837 = vsel %vm3077, %v8805, %v8026
      %v8838 = vsel %vm3077, %v8806, %v8028
      %v8839 = vsel %vm3077, %v8807, %v8030
      %v8840 = vsel %vm3077, %v8808, %v8032
      %v8841 = vsel %vm3077, %v8809, %v8034
      %v8842 = vsel %vm3077, %v8810, %v8036
      %v8843 = vsel %vm3077, %v8811, %v8038
      %v8844 = vsel %vm3077, %v8812, %v8040
      %v8845 = vsel %vm3077, %v8813, %v8042
      %v8846 = vsel %vm3077, %v8814, %v8044
      %v8847 = vsel %vm3077, %v8815, %v8046
      %v8848 = vsel %vm3077, %v8816, %v8048
      %v8849 = vsel %vm3110, %v8817, %v8162
      %v8850 = vsel %vm3110, %v8818, %v8164
      %v8851 = vsel %vm3110, %v8819, %v8166
      %v8852 = vsel %vm3110, %v8820, %v8168
      %v8853 = vsel %vm3110, %v8821, %v8170
      %v8854 = vsel %vm3110, %v8822, %v8172
      %v8855 = vsel %vm3110, %v8823, %v8174
      %v8856 = vsel %vm3110, %v8824, %v8176
      %v8857 = vsel %vm3110, %v8825, %v8178
      %v8858 = vsel %vm3110, %v8826, %v8180
      %v8859 = vsel %vm3110, %v8827, %v8182
      %v8860 = vsel %vm3110, %v8828, %v8184
      %v8861 = vsel %vm3110, %v8829, %v8186
      %v8862 = vsel %vm3110, %v8830, %v8188
      %v8863 = vsel %vm3110, %v8831, %v8190
      %v8864 = vsel %vm3110, %v8832, %v8192
      %v8865 = vsel %vm3110, %v8833, %v8194
      %v8866 = vsel %vm3110, %v8834, %v8196
      %v8867 = vsel %vm3110, %v8835, %v8198
      %v8868 = vsel %vm3110, %v8836, %v8200
      %v8869 = vsel %vm3110, %v8837, %v8202
      %v8870 = vsel %vm3110, %v8838, %v8204
      %v8871 = vsel %vm3110, %v8839, %v8206
      %v8872 = vsel %vm3110, %v8840, %v8208
      %v8873 = vsel %vm3110, %v8841, %v8210
      %v8874 = vsel %vm3110, %v8842, %v8212
      %v8875 = vsel %vm3110, %v8843, %v8214
      %v8876 = vsel %vm3110, %v8844, %v8216
      %v8877 = vsel %vm3110, %v8845, %v8218
      %v8878 = vsel %vm3110, %v8846, %v8220
      %v8879 = vsel %vm3110, %v8847, %v8222
      %v8880 = vsel %vm3110, %v8848, %v8224
      %v8881 = vsel %vm3143, %v8849, %v8338
      %v8882 = vsel %vm3143, %v8850, %v8340
      %v8883 = vsel %vm3143, %v8851, %v8342
      %v8884 = vsel %vm3143, %v8852, %v8344
      %v8885 = vsel %vm3143, %v8853, %v8346
      %v8886 = vsel %vm3143, %v8854, %v8348
      %v8887 = vsel %vm3143, %v8855, %v8350
      %v8888 = vsel %vm3143, %v8856, %v8352
      %v8889 = vsel %vm3143, %v8857, %v8354
      %v8890 = vsel %vm3143, %v8858, %v8356
      %v8891 = vsel %vm3143, %v8859, %v8358
      %v8892 = vsel %vm3143, %v8860, %v8360
      %v8893 = vsel %vm3143, %v8861, %v8362
      %v8894 = vsel %vm3143, %v8862, %v8364
      %v8895 = vsel %vm3143, %v8863, %v8366
      %v8896 = vsel %vm3143, %v8864, %v8368
      %v8897 = vsel %vm3143, %v8865, %v8370
      %v8898 = vsel %vm3143, %v8866, %v8372
      %v8899 = vsel %vm3143, %v8867, %v8374
      %v8900 = vsel %vm3143, %v8868, %v8376
      %v8901 = vsel %vm3143, %v8869, %v8378
      %v8902 = vsel %vm3143, %v8870, %v8380
      %v8903 = vsel %vm3143, %v8871, %v8382
      %v8904 = vsel %vm3143, %v8872, %v8384
      %v8905 = vsel %vm3143, %v8873, %v8386
      %v8906 = vsel %vm3143, %v8874, %v8388
      %v8907 = vsel %vm3143, %v8875, %v8390
      %v8908 = vsel %vm3143, %v8876, %v8392
      %v8909 = vsel %vm3143, %v8877, %v8394
      %v8910 = vsel %vm3143, %v8878, %v8396
      %v8911 = vsel %vm3143, %v8879, %v8398
      %v8912 = vsel %vm3143, %v8880, %v8400
      %v8913 = vsel %vm3176, %v8881, %v8514
      %v8914 = vsel %vm3176, %v8882, %v8516
      %v8915 = vsel %vm3176, %v8883, %v8518
      %v8916 = vsel %vm3176, %v8884, %v8520
      %v8917 = vsel %vm3176, %v8885, %v8522
      %v8918 = vsel %vm3176, %v8886, %v8524
      %v8919 = vsel %vm3176, %v8887, %v8526
      %v8920 = vsel %vm3176, %v8888, %v8528
      %v8921 = vsel %vm3176, %v8889, %v8530
      %v8922 = vsel %vm3176, %v8890, %v8532
      %v8923 = vsel %vm3176, %v8891, %v8534
      %v8924 = vsel %vm3176, %v8892, %v8536
      %v8925 = vsel %vm3176, %v8893, %v8538
      %v8926 = vsel %vm3176, %v8894, %v8540
      %v8927 = vsel %vm3176, %v8895, %v8542
      %v8928 = vsel %vm3176, %v8896, %v8544
      %v8929 = vsel %vm3176, %v8897, %v8546
      %v8930 = vsel %vm3176, %v8898, %v8548
      %v8931 = vsel %vm3176, %v8899, %v8550
      %v8932 = vsel %vm3176, %v8900, %v8552
      %v8933 = vsel %vm3176, %v8901, %v8554
      %v8934 = vsel %vm3176, %v8902, %v8556
      %v8935 = vsel %vm3176, %v8903, %v8558
      %v8936 = vsel %vm3176, %v8904, %v8560
      %v8937 = vsel %vm3176, %v8905, %v8562
      %v8938 = vsel %vm3176, %v8906, %v8564
      %v8939 = vsel %vm3176, %v8907, %v8566
      %v8940 = vsel %vm3176, %v8908, %v8568
      %v8941 = vsel %vm3176, %v8909, %v8570
      %v8942 = vsel %vm3176, %v8910, %v8572
      %v8943 = vsel %vm3176, %v8911, %v8574
      %v8944 = vsel %vm3176, %v8912, %v8576
      %v8945 = vsel %vm3209, %v8913, %v8690
      %v8946 = vsel %vm3209, %v8914, %v8692
      %v8947 = vsel %vm3209, %v8915, %v8694
      %v8948 = vsel %vm3209, %v8916, %v8696
      %v8949 = vsel %vm3209, %v8917, %v8698
      %v8950 = vsel %vm3209, %v8918, %v8700
      %v8951 = vsel %vm3209, %v8919, %v8702
      %v8952 = vsel %vm3209, %v8920, %v8704
      %v8953 = vsel %vm3209, %v8921, %v8706
      %v8954 = vsel %vm3209, %v8922, %v8708
      %v8955 = vsel %vm3209, %v8923, %v8710
      %v8956 = vsel %vm3209, %v8924, %v8712
      %v8957 = vsel %vm3209, %v8925, %v8714
      %v8958 = vsel %vm3209, %v8926, %v8716
      %v8959 = vsel %vm3209, %v8927, %v8718
      %v8960 = vsel %vm3209, %v8928, %v8720
      %v8961 = vsel %vm3209, %v8929, %v8722
      %v8962 = vsel %vm3209, %v8930, %v8724
      %v8963 = vsel %vm3209, %v8931, %v8726
      %v8964 = vsel %vm3209, %v8932, %v8728
      %v8965 = vsel %vm3209, %v8933, %v8730
      %v8966 = vsel %vm3209, %v8934, %v8732
      %v8967 = vsel %vm3209, %v8935, %v8734
      %v8968 = vsel %vm3209, %v8936, %v8736
      %v8969 = vsel %vm3209, %v8937, %v8738
      %v8970 = vsel %vm3209, %v8938, %v8740
      %v8971 = vsel %vm3209, %v8939, %v8742
      %v8972 = vsel %vm3209, %v8940, %v8744
      %v8973 = vsel %vm3209, %v8941, %v8746
      %v8974 = vsel %vm3209, %v8942, %v8748
      %v8975 = vsel %vm3209, %v8943, %v8750
      %v8976 = vsel %vm3209, %v8944, %v8752
      %v8977 = vld [vmem:[%s13] sm:$0xff]
      %v8978 = vld [vmem:[%s13 + $0x8] sm:$0xff]
      %v8979 = vld [vmem:[%s13 + $0x10] sm:$0xff]
      %v8980 = vld [vmem:[%s13 + $0x18] sm:$0xf]
      %v8981 = vld [vmem:[%s14] sm:$0x1]
      %v8983 = vlaneseq
      %v8984 = vshrl.u32 %v8983, 7
      %v8985 = vsub.s32 0, %v8984
      %v8986 = vrot.slane %v8981, %v8985
      %v8989 = vsel %vm3253, %v8945, 0
      %v8992 = vsel %vm3253, %v8946, 0
      %v8995 = vsel %vm3253, %v8947, 0
      %v8998 = vsel %vm3253, %v8948, 0
      %v9001 = vsel %vm3253, %v8949, 0
      %v9004 = vsel %vm3253, %v8950, 0
      %v9007 = vsel %vm3253, %v8951, 0
      %v9010 = vsel %vm3253, %v8952, 0
      %v9013 = vsel %vm3253, %v8953, 0
      %v9016 = vsel %vm3253, %v8954, 0
      %v9019 = vsel %vm3253, %v8955, 0
      %v9022 = vsel %vm3253, %v8956, 0
      %v9025 = vsel %vm3253, %v8957, 0
      %v9028 = vsel %vm3253, %v8958, 0
      %v9031 = vsel %vm3253, %v8959, 0
      %v9034 = vsel %vm3253, %v8960, 0
      %v9037 = vsel %vm3253, %v8961, 0
      %v9040 = vsel %vm3253, %v8962, 0
      %v9043 = vsel %vm3253, %v8963, 0
      %v9046 = vsel %vm3253, %v8964, 0
      %v9049 = vsel %vm3253, %v8965, 0
      %v9052 = vsel %vm3253, %v8966, 0
      %v9055 = vsel %vm3253, %v8967, 0
      %v9058 = vsel %vm3253, %v8968, 0
      %v9061 = vsel %vm3253, %v8969, 0
      %v9064 = vsel %vm3253, %v8970, 0
      %v9067 = vsel %vm3253, %v8971, 0
      %v9070 = vsel %vm3253, %v8972, 0
      %v9073 = vsel %vm3253, %v8973, 0
      %v9076 = vsel %vm3253, %v8974, 0
      %v9079 = vsel %vm3253, %v8975, 0
      %v9082 = vsel %vm3253, %v8976, 0
      %v9085 = vsel %vm686, %v8980, 0
      %9087 = vmatprep.subr.mxu0 0.0
      %9088 = vmatpush1.msra.mxu0 0.0
      %9089 = vmatprep.subr.mxu0 0.0
      %9090 = vmatpush1.msra.mxu0 0.0
      %9091 = vmatprep.subr.mxu0 0.0
      %9092 = vmatpush1.msra.mxu0 0.0
      %9093 = vmatprep.subr.mxu0 0.0
      %9094 = vmatpush1.msra.mxu0 0.0
      %9095 = vmatprep.subr.mxu0 0.0
      %9096 = vmatpush1.msra.mxu0 0.0
      %9097 = vmatprep.subr.mxu0 0.0
      %9098 = vmatpush1.msra.mxu0 0.0
      %9099 = vmatprep.subr.mxu0 0.0
      %9100 = vmatpush1.msra.mxu0 0.0
      %9101 = vmatprep.subr.mxu0 0.0
      %9102 = vmatpush1.msra.mxu0 0.0
      %9103 = vmatprep.subr.mxu0 0.0
      %9104 = vmatpush1.msra.mxu0 0.0
      %9105 = vmatprep.subr.mxu0 0.0
      %9106 = vmatpush1.msra.mxu0 0.0
      %9107 = vmatprep.subr.mxu0 0.0
      %9108 = vmatpush1.msra.mxu0 0.0
      %9109 = vmatprep.subr.mxu0 0.0
      %9110 = vmatpush1.msra.mxu0 0.0
      %9111 = vmatprep.subr.mxu0 0.0
      %9112 = vmatpush1.msra.mxu0 %v9085
      %9113 = vmatprep.subr.mxu0 0.0
      %9114 = vmatpush1.msra.mxu0 %v8979
      %9115 = vmatprep.subr.mxu0 0.0
      %9116 = vmatpush1.msra.mxu0 %v8978
      %9117 = vmatprep.subr.mxu0 0.0
      %9118 = vmatpush1.msra.mxu0 %v8977
      %9119 = vmatprep.subr.mxu0 0.0
      %9120 = vmatpush2.msra.mxu0 0.0
      %9121 = vmatprep.subr.mxu0 0.0
      %9122 = vmatpush2.msra.mxu0 0.0
      %9123 = vmatprep.subr.mxu0 0.0
      %9124 = vmatpush2.msra.mxu0 0.0
      %9125 = vmatprep.subr.mxu0 0.0
      %9126 = vmatpush2.msra.mxu0 0.0
      %9127 = vmatprep.subr.mxu0 0.0
      %9128 = vmatpush2.msra.mxu0 0.0
      %9129 = vmatprep.subr.mxu0 0.0
      %9130 = vmatpush2.msra.mxu0 0.0
      %9131 = vmatprep.subr.mxu0 0.0
      %9132 = vmatpush2.msra.mxu0 0.0
      %9133 = vmatprep.subr.mxu0 0.0
      %9134 = vmatpush2.msra.mxu0 0.0
      %9135 = vmatprep.subr.mxu0 0.0
      %9136 = vmatpush2.msra.mxu0 0.0
      %9137 = vmatprep.subr.mxu0 0.0
      %9138 = vmatpush2.msra.mxu0 0.0
      %9139 = vmatprep.subr.mxu0 0.0
      %9140 = vmatpush2.msra.mxu0 0.0
      %9141 = vmatprep.subr.mxu0 0.0
      %9142 = vmatpush2.msra.mxu0 0.0
      %9143 = vmatprep.subr.mxu0 0.0
      %9144 = vmatpush2.msra.mxu0 0.0
      %9145 = vmatprep.subr.mxu0 0.0
      %9146 = vmatpush2.msra.mxu0 0.0
      %9147 = vmatprep.subr.mxu0 0.0
      %9148 = vmatpush2.msra.mxu0 0.0
      %9149 = vmatprep.subr.mxu0 0.0
      %9150 = vmatpush2.msra.mxu0 0.0
      %9151 = vmatprep.mubr.f32.mxu0 0.0
      %9152 = vmatmul.mubr.f32.gmra.mxu0 %v8989
      %v9153 = vpop.f32.mrf.mxu0
      %v9154 = vadd.f32 %v8986, %v9153
      %v9155 = vpop.f32.mrf.mxu0
      %9156 = vmatprep.mubr.f32.mxu0 0.0
      %9157 = vmatmul.mubr.f32.gmra.mxu0 %v8992
      %v9158 = vpop.f32.mrf.mxu0
      %v9159 = vadd.f32 %v8986, %v9158
      %v9160 = vpop.f32.mrf.mxu0
      %9161 = vmatprep.mubr.f32.mxu0 0.0
      %9162 = vmatmul.mubr.f32.gmra.mxu0 %v8995
      %v9163 = vpop.f32.mrf.mxu0
      %v9164 = vadd.f32 %v8986, %v9163
      %v9165 = vpop.f32.mrf.mxu0
      %9166 = vmatprep.mubr.f32.mxu0 0.0
      %9167 = vmatmul.mubr.f32.gmra.mxu0 %v8998
      %v9168 = vpop.f32.mrf.mxu0
      %v9169 = vadd.f32 %v8986, %v9168
      %v9170 = vpop.f32.mrf.mxu0
      %9171 = vmatprep.mubr.f32.mxu0 0.0
      %9172 = vmatmul.mubr.f32.gmra.mxu0 %v9001
      %v9173 = vpop.f32.mrf.mxu0
      %v9174 = vadd.f32 %v8986, %v9173
      %v9175 = vpop.f32.mrf.mxu0
      %9176 = vmatprep.mubr.f32.mxu0 0.0
      %9177 = vmatmul.mubr.f32.gmra.mxu0 %v9004
      %v9178 = vpop.f32.mrf.mxu0
      %v9179 = vadd.f32 %v8986, %v9178
      %v9180 = vpop.f32.mrf.mxu0
      %9181 = vmatprep.mubr.f32.mxu0 0.0
      %9182 = vmatmul.mubr.f32.gmra.mxu0 %v9007
      %v9183 = vpop.f32.mrf.mxu0
      %v9184 = vadd.f32 %v8986, %v9183
      %v9185 = vpop.f32.mrf.mxu0
      %9186 = vmatprep.mubr.f32.mxu0 0.0
      %9187 = vmatmul.mubr.f32.gmra.mxu0 %v9010
      %v9188 = vpop.f32.mrf.mxu0
      %v9189 = vadd.f32 %v8986, %v9188
      %v9190 = vpop.f32.mrf.mxu0
      %9191 = vmatprep.mubr.f32.mxu0 0.0
      %9192 = vmatmul.mubr.f32.gmra.mxu0 %v9013
      %v9193 = vpop.f32.mrf.mxu0
      %v9194 = vadd.f32 %v8986, %v9193
      %v9195 = vpop.f32.mrf.mxu0
      %9196 = vmatprep.mubr.f32.mxu0 0.0
      %9197 = vmatmul.mubr.f32.gmra.mxu0 %v9016
      %v9198 = vpop.f32.mrf.mxu0
      %v9199 = vadd.f32 %v8986, %v9198
      %v9200 = vpop.f32.mrf.mxu0
      %9201 = vmatprep.mubr.f32.mxu0 0.0
      %9202 = vmatmul.mubr.f32.gmra.mxu0 %v9019
      %v9203 = vpop.f32.mrf.mxu0
      %v9204 = vadd.f32 %v8986, %v9203
      %v9205 = vpop.f32.mrf.mxu0
      %9206 = vmatprep.mubr.f32.mxu0 0.0
      %9207 = vmatmul.mubr.f32.gmra.mxu0 %v9022
      %v9208 = vpop.f32.mrf.mxu0
      %v9209 = vadd.f32 %v8986, %v9208
      %v9210 = vpop.f32.mrf.mxu0
      %9211 = vmatprep.mubr.f32.mxu0 0.0
      %9212 = vmatmul.mubr.f32.gmra.mxu0 %v9025
      %v9213 = vpop.f32.mrf.mxu0
      %v9214 = vadd.f32 %v8986, %v9213
      %v9215 = vpop.f32.mrf.mxu0
      %9216 = vmatprep.mubr.f32.mxu0 0.0
      %9217 = vmatmul.mubr.f32.gmra.mxu0 %v9028
      %v9218 = vpop.f32.mrf.mxu0
      %v9219 = vadd.f32 %v8986, %v9218
      %v9220 = vpop.f32.mrf.mxu0
      %9221 = vmatprep.mubr.f32.mxu0 0.0
      %9222 = vmatmul.mubr.f32.gmra.mxu0 %v9031
      %v9223 = vpop.f32.mrf.mxu0
      %v9224 = vadd.f32 %v8986, %v9223
      %v9225 = vpop.f32.mrf.mxu0
      %9226 = vmatprep.mubr.f32.mxu0 0.0
      %9227 = vmatmul.mubr.f32.gmra.mxu0 %v9034
      %v9228 = vpop.f32.mrf.mxu0
      %v9229 = vadd.f32 %v8986, %v9228
      %v9230 = vpop.f32.mrf.mxu0
      %9231 = vmatprep.mubr.f32.mxu0 0.0
      %9232 = vmatmul.mubr.f32.gmra.mxu0 %v9037
      %v9233 = vpop.f32.mrf.mxu0
      %v9234 = vadd.f32 %v8986, %v9233
      %v9235 = vpop.f32.mrf.mxu0
      %9236 = vmatprep.mubr.f32.mxu0 0.0
      %9237 = vmatmul.mubr.f32.gmra.mxu0 %v9040
      %v9238 = vpop.f32.mrf.mxu0
      %v9239 = vadd.f32 %v8986, %v9238
      %v9240 = vpop.f32.mrf.mxu0
      %9241 = vmatprep.mubr.f32.mxu0 0.0
      %9242 = vmatmul.mubr.f32.gmra.mxu0 %v9043
      %v9243 = vpop.f32.mrf.mxu0
      %v9244 = vadd.f32 %v8986, %v9243
      %v9245 = vpop.f32.mrf.mxu0
      %9246 = vmatprep.mubr.f32.mxu0 0.0
      %9247 = vmatmul.mubr.f32.gmra.mxu0 %v9046
      %v9248 = vpop.f32.mrf.mxu0
      %v9249 = vadd.f32 %v8986, %v9248
      %v9250 = vpop.f32.mrf.mxu0
      %9251 = vmatprep.mubr.f32.mxu0 0.0
      %9252 = vmatmul.mubr.f32.gmra.mxu0 %v9049
      %v9253 = vpop.f32.mrf.mxu0
      %v9254 = vadd.f32 %v8986, %v9253
      %v9255 = vpop.f32.mrf.mxu0
      %9256 = vmatprep.mubr.f32.mxu0 0.0
      %9257 = vmatmul.mubr.f32.gmra.mxu0 %v9052
      %v9258 = vpop.f32.mrf.mxu0
      %v9259 = vadd.f32 %v8986, %v9258
      %v9260 = vpop.f32.mrf.mxu0
      %9261 = vmatprep.mubr.f32.mxu0 0.0
      %9262 = vmatmul.mubr.f32.gmra.mxu0 %v9055
      %v9263 = vpop.f32.mrf.mxu0
      %v9264 = vadd.f32 %v8986, %v9263
      %v9265 = vpop.f32.mrf.mxu0
      %9266 = vmatprep.mubr.f32.mxu0 0.0
      %9267 = vmatmul.mubr.f32.gmra.mxu0 %v9058
      %v9268 = vpop.f32.mrf.mxu0
      %v9269 = vadd.f32 %v8986, %v9268
      %v9270 = vpop.f32.mrf.mxu0
      %9271 = vmatprep.mubr.f32.mxu0 0.0
      %9272 = vmatmul.mubr.f32.gmra.mxu0 %v9061
      %v9273 = vpop.f32.mrf.mxu0
      %v9274 = vadd.f32 %v8986, %v9273
      %v9275 = vpop.f32.mrf.mxu0
      %9276 = vmatprep.mubr.f32.mxu0 0.0
      %9277 = vmatmul.mubr.f32.gmra.mxu0 %v9064
      %v9278 = vpop.f32.mrf.mxu0
      %v9279 = vadd.f32 %v8986, %v9278
      %v9280 = vpop.f32.mrf.mxu0
      %9281 = vmatprep.mubr.f32.mxu0 0.0
      %9282 = vmatmul.mubr.f32.gmra.mxu0 %v9067
      %v9283 = vpop.f32.mrf.mxu0
      %v9284 = vadd.f32 %v8986, %v9283
      %v9285 = vpop.f32.mrf.mxu0
      %9286 = vmatprep.mubr.f32.mxu0 0.0
      %9287 = vmatmul.mubr.f32.gmra.mxu0 %v9070
      %v9288 = vpop.f32.mrf.mxu0
      %v9289 = vadd.f32 %v8986, %v9288
      %v9290 = vpop.f32.mrf.mxu0
      %9291 = vmatprep.mubr.f32.mxu0 0.0
      %9292 = vmatmul.mubr.f32.gmra.mxu0 %v9073
      %v9293 = vpop.f32.mrf.mxu0
      %v9294 = vadd.f32 %v8986, %v9293
      %v9295 = vpop.f32.mrf.mxu0
      %9296 = vmatprep.mubr.f32.mxu0 0.0
      %9297 = vmatmul.mubr.f32.gmra.mxu0 %v9076
      %v9298 = vpop.f32.mrf.mxu0
      %v9299 = vadd.f32 %v8986, %v9298
      %v9300 = vpop.f32.mrf.mxu0
      %9301 = vmatprep.mubr.f32.mxu0 0.0
      %9302 = vmatmul.mubr.f32.gmra.mxu0 %v9079
      %v9303 = vpop.f32.mrf.mxu0
      %v9304 = vadd.f32 %v8986, %v9303
      %v9305 = vpop.f32.mrf.mxu0
      %9306 = vmatprep.mubr.f32.mxu0 0.0
      %9307 = vmatmul.mubr.f32.gmra.mxu0 %v9082
      %v9308 = vpop.f32.mrf.mxu0
      %v9309 = vadd.f32 %v8986, %v9308
      %v9310 = vpop.f32.mrf.mxu0
      %9311 = vdwg.mxu0
      %9340 = vrot.lane.b32.xlu0 %v9154, 4
      %v9341 = vpop.permute.xlu0 %9340
      %9342 = vrot.lane.b32.xlu0 %v9159, 4
      %v9343 = vpop.permute.xlu0 %9342
      %9344 = vrot.lane.b32.xlu0 %v9164, 4
      %v9345 = vpop.permute.xlu0 %9344
      %9346 = vrot.lane.b32.xlu0 %v9169, 4
      %v9347 = vpop.permute.xlu0 %9346
      %9348 = vrot.lane.b32.xlu0 %v9174, 4
      %v9349 = vpop.permute.xlu0 %9348
      %9350 = vrot.lane.b32.xlu0 %v9179, 4
      %v9351 = vpop.permute.xlu0 %9350
      %9352 = vrot.lane.b32.xlu0 %v9184, 4
      %v9353 = vpop.permute.xlu0 %9352
      %9354 = vrot.lane.b32.xlu0 %v9189, 4
      %v9355 = vpop.permute.xlu0 %9354
      %9356 = vrot.lane.b32.xlu0 %v9194, 4
      %v9357 = vpop.permute.xlu0 %9356
      %9358 = vrot.lane.b32.xlu0 %v9199, 4
      %v9359 = vpop.permute.xlu0 %9358
      %9360 = vrot.lane.b32.xlu0 %v9204, 4
      %v9361 = vpop.permute.xlu0 %9360
      %9362 = vrot.lane.b32.xlu0 %v9209, 4
      %v9363 = vpop.permute.xlu0 %9362
      %9364 = vrot.lane.b32.xlu0 %v9214, 4
      %v9365 = vpop.permute.xlu0 %9364
      %9366 = vrot.lane.b32.xlu0 %v9219, 4
      %v9367 = vpop.permute.xlu0 %9366
      %9368 = vrot.lane.b32.xlu0 %v9224, 4
      %v9369 = vpop.permute.xlu0 %9368
      %9370 = vrot.lane.b32.xlu0 %v9229, 4
      %v9371 = vpop.permute.xlu0 %9370
      %9372 = vrot.lane.b32.xlu0 %v9234, 4
      %v9373 = vpop.permute.xlu0 %9372
      %9374 = vrot.lane.b32.xlu0 %v9239, 4
      %v9375 = vpop.permute.xlu0 %9374
      %9376 = vrot.lane.b32.xlu0 %v9244, 4
      %v9377 = vpop.permute.xlu0 %9376
      %9378 = vrot.lane.b32.xlu0 %v9249, 4
      %v9379 = vpop.permute.xlu0 %9378
      %9380 = vrot.lane.b32.xlu0 %v9254, 4
      %v9381 = vpop.permute.xlu0 %9380
      %9382 = vrot.lane.b32.xlu0 %v9259, 4
      %v9383 = vpop.permute.xlu0 %9382
      %9384 = vrot.lane.b32.xlu0 %v9264, 4
      %v9385 = vpop.permute.xlu0 %9384
      %9386 = vrot.lane.b32.xlu0 %v9269, 4
      %v9387 = vpop.permute.xlu0 %9386
      %9388 = vrot.lane.b32.xlu0 %v9274, 4
      %v9389 = vpop.permute.xlu0 %9388
      %9390 = vrot.lane.b32.xlu0 %v9279, 4
      %v9391 = vpop.permute.xlu0 %9390
      %9392 = vrot.lane.b32.xlu0 %v9284, 4
      %v9393 = vpop.permute.xlu0 %9392
      %9394 = vrot.lane.b32.xlu0 %v9289, 4
      %v9395 = vpop.permute.xlu0 %9394
      %9426 = vrot.lane.b32.xlu0 %v9154, 8
      %v9427 = vpop.permute.xlu0 %9426
      %9428 = vrot.lane.b32.xlu0 %v9159, 8
      %v9429 = vpop.permute.xlu0 %9428
      %9430 = vrot.lane.b32.xlu0 %v9164, 8
      %v9431 = vpop.permute.xlu0 %9430
      %9432 = vrot.lane.b32.xlu0 %v9169, 8
      %v9433 = vpop.permute.xlu0 %9432
      %9434 = vrot.lane.b32.xlu0 %v9174, 8
      %v9435 = vpop.permute.xlu0 %9434
      %9436 = vrot.lane.b32.xlu0 %v9179, 8
      %v9437 = vpop.permute.xlu0 %9436
      %9438 = vrot.lane.b32.xlu0 %v9184, 8
      %v9439 = vpop.permute.xlu0 %9438
      %9440 = vrot.lane.b32.xlu0 %v9189, 8
      %v9441 = vpop.permute.xlu0 %9440
      %9442 = vrot.lane.b32.xlu0 %v9194, 8
      %v9443 = vpop.permute.xlu0 %9442
      %9444 = vrot.lane.b32.xlu0 %v9199, 8
      %v9445 = vpop.permute.xlu0 %9444
      %9446 = vrot.lane.b32.xlu0 %v9204, 8
      %v9447 = vpop.permute.xlu0 %9446
      %9448 = vrot.lane.b32.xlu0 %v9209, 8
      %v9449 = vpop.permute.xlu0 %9448
      %9450 = vrot.lane.b32.xlu0 %v9214, 8
      %v9451 = vpop.permute.xlu0 %9450
      %9452 = vrot.lane.b32.xlu0 %v9219, 8
      %v9453 = vpop.permute.xlu0 %9452
      %9454 = vrot.lane.b32.xlu0 %v9224, 8
      %v9455 = vpop.permute.xlu0 %9454
      %9456 = vrot.lane.b32.xlu0 %v9229, 8
      %v9457 = vpop.permute.xlu0 %9456
      %9458 = vrot.lane.b32.xlu0 %v9234, 8
      %v9459 = vpop.permute.xlu0 %9458
      %9460 = vrot.lane.b32.xlu0 %v9239, 8
      %v9461 = vpop.permute.xlu0 %9460
      %9462 = vrot.lane.b32.xlu0 %v9244, 8
      %v9463 = vpop.permute.xlu0 %9462
      %9464 = vrot.lane.b32.xlu0 %v9249, 8
      %v9465 = vpop.permute.xlu0 %9464
      %9466 = vrot.lane.b32.xlu0 %v9254, 8
      %v9467 = vpop.permute.xlu0 %9466
      %9468 = vrot.lane.b32.xlu0 %v9259, 8
      %v9469 = vpop.permute.xlu0 %9468
      %9470 = vrot.lane.b32.xlu0 %v9264, 8
      %v9471 = vpop.permute.xlu0 %9470
      %9472 = vrot.lane.b32.xlu0 %v9269, 8
      %v9473 = vpop.permute.xlu0 %9472
      %9474 = vrot.lane.b32.xlu0 %v9274, 8
      %v9475 = vpop.permute.xlu0 %9474
      %9476 = vrot.lane.b32.xlu0 %v9279, 8
      %v9477 = vpop.permute.xlu0 %9476
      %9478 = vrot.lane.b32.xlu0 %v9284, 8
      %v9479 = vpop.permute.xlu0 %9478
      %9480 = vrot.lane.b32.xlu0 %v9289, 8
      %v9481 = vpop.permute.xlu0 %9480
      %9482 = vrot.lane.b32.xlu0 %v9294, 8
      %v9483 = vpop.permute.xlu0 %9482
      %9484 = vrot.lane.b32.xlu0 %v9299, 8
      %v9485 = vpop.permute.xlu0 %9484
      %9518 = vrot.lane.b32.xlu0 %v9154, 12
      %v9519 = vpop.permute.xlu0 %9518
      %9520 = vrot.lane.b32.xlu0 %v9159, 12
      %v9521 = vpop.permute.xlu0 %9520
      %9522 = vrot.lane.b32.xlu0 %v9164, 12
      %v9523 = vpop.permute.xlu0 %9522
      %9524 = vrot.lane.b32.xlu0 %v9169, 12
      %v9525 = vpop.permute.xlu0 %9524
      %9526 = vrot.lane.b32.xlu0 %v9174, 12
      %v9527 = vpop.permute.xlu0 %9526
      %9528 = vrot.lane.b32.xlu0 %v9179, 12
      %v9529 = vpop.permute.xlu0 %9528
      %9530 = vrot.lane.b32.xlu0 %v9184, 12
      %v9531 = vpop.permute.xlu0 %9530
      %9532 = vrot.lane.b32.xlu0 %v9189, 12
      %v9533 = vpop.permute.xlu0 %9532
      %9534 = vrot.lane.b32.xlu0 %v9194, 12
      %v9535 = vpop.permute.xlu0 %9534
      %9536 = vrot.lane.b32.xlu0 %v9199, 12
      %v9537 = vpop.permute.xlu0 %9536
      %9538 = vrot.lane.b32.xlu0 %v9204, 12
      %v9539 = vpop.permute.xlu0 %9538
      %9540 = vrot.lane.b32.xlu0 %v9209, 12
      %v9541 = vpop.permute.xlu0 %9540
      %9542 = vrot.lane.b32.xlu0 %v9214, 12
      %v9543 = vpop.permute.xlu0 %9542
      %9544 = vrot.lane.b32.xlu0 %v9219, 12
      %v9545 = vpop.permute.xlu0 %9544
      %9546 = vrot.lane.b32.xlu0 %v9224, 12
      %v9547 = vpop.permute.xlu0 %9546
      %9548 = vrot.lane.b32.xlu0 %v9229, 12
      %v9549 = vpop.permute.xlu0 %9548
      %9550 = vrot.lane.b32.xlu0 %v9234, 12
      %v9551 = vpop.permute.xlu0 %9550
      %9552 = vrot.lane.b32.xlu0 %v9239, 12
      %v9553 = vpop.permute.xlu0 %9552
      %9554 = vrot.lane.b32.xlu0 %v9244, 12
      %v9555 = vpop.permute.xlu0 %9554
      %9556 = vrot.lane.b32.xlu0 %v9249, 12
      %v9557 = vpop.permute.xlu0 %9556
      %9558 = vrot.lane.b32.xlu0 %v9254, 12
      %v9559 = vpop.permute.xlu0 %9558
      %9560 = vrot.lane.b32.xlu0 %v9259, 12
      %v9561 = vpop.permute.xlu0 %9560
      %9562 = vrot.lane.b32.xlu0 %v9264, 12
      %v9563 = vpop.permute.xlu0 %9562
      %9564 = vrot.lane.b32.xlu0 %v9269, 12
      %v9565 = vpop.permute.xlu0 %9564
      %9566 = vrot.lane.b32.xlu0 %v9274, 12
      %v9567 = vpop.permute.xlu0 %9566
      %9568 = vrot.lane.b32.xlu0 %v9279, 12
      %v9569 = vpop.permute.xlu0 %9568
      %9570 = vrot.lane.b32.xlu0 %v9284, 12
      %v9571 = vpop.permute.xlu0 %9570
      %9572 = vrot.lane.b32.xlu0 %v9289, 12
      %v9573 = vpop.permute.xlu0 %9572
      %9574 = vrot.lane.b32.xlu0 %v9294, 12
      %v9575 = vpop.permute.xlu0 %9574
      %9576 = vrot.lane.b32.xlu0 %v9299, 12
      %v9577 = vpop.permute.xlu0 %9576
      %9578 = vrot.lane.b32.xlu0 %v9304, 12
      %v9579 = vpop.permute.xlu0 %9578
      %9580 = vrot.lane.b32.xlu0 %v9309, 12
      %v9581 = vpop.permute.xlu0 %9580
      %9614 = vrot.lane.b32.xlu0 %v9164, 16
      %v9615 = vpop.permute.xlu0 %9614
      %9616 = vrot.lane.b32.xlu0 %v9169, 16
      %v9617 = vpop.permute.xlu0 %9616
      %9618 = vrot.lane.b32.xlu0 %v9174, 16
      %v9619 = vpop.permute.xlu0 %9618
      %9620 = vrot.lane.b32.xlu0 %v9179, 16
      %v9621 = vpop.permute.xlu0 %9620
      %9622 = vrot.lane.b32.xlu0 %v9184, 16
      %v9623 = vpop.permute.xlu0 %9622
      %9624 = vrot.lane.b32.xlu0 %v9189, 16
      %v9625 = vpop.permute.xlu0 %9624
      %9626 = vrot.lane.b32.xlu0 %v9194, 16
      %v9627 = vpop.permute.xlu0 %9626
      %9628 = vrot.lane.b32.xlu0 %v9199, 16
      %v9629 = vpop.permute.xlu0 %9628
      %9630 = vrot.lane.b32.xlu0 %v9204, 16
      %v9631 = vpop.permute.xlu0 %9630
      %9632 = vrot.lane.b32.xlu0 %v9209, 16
      %v9633 = vpop.permute.xlu0 %9632
      %9634 = vrot.lane.b32.xlu0 %v9214, 16
      %v9635 = vpop.permute.xlu0 %9634
      %9636 = vrot.lane.b32.xlu0 %v9219, 16
      %v9637 = vpop.permute.xlu0 %9636
      %9638 = vrot.lane.b32.xlu0 %v9224, 16
      %v9639 = vpop.permute.xlu0 %9638
      %9640 = vrot.lane.b32.xlu0 %v9229, 16
      %v9641 = vpop.permute.xlu0 %9640
      %9642 = vrot.lane.b32.xlu0 %v9234, 16
      %v9643 = vpop.permute.xlu0 %9642
      %9644 = vrot.lane.b32.xlu0 %v9239, 16
      %v9645 = vpop.permute.xlu0 %9644
      %9646 = vrot.lane.b32.xlu0 %v9244, 16
      %v9647 = vpop.permute.xlu0 %9646
      %9648 = vrot.lane.b32.xlu0 %v9249, 16
      %v9649 = vpop.permute.xlu0 %9648
      %9650 = vrot.lane.b32.xlu0 %v9254, 16
      %v9651 = vpop.permute.xlu0 %9650
      %9652 = vrot.lane.b32.xlu0 %v9259, 16
      %v9653 = vpop.permute.xlu0 %9652
      %9654 = vrot.lane.b32.xlu0 %v9264, 16
      %v9655 = vpop.permute.xlu0 %9654
      %9656 = vrot.lane.b32.xlu0 %v9269, 16
      %v9657 = vpop.permute.xlu0 %9656
      %9658 = vrot.lane.b32.xlu0 %v9274, 16
      %v9659 = vpop.permute.xlu0 %9658
      %9660 = vrot.lane.b32.xlu0 %v9279, 16
      %v9661 = vpop.permute.xlu0 %9660
      %9662 = vrot.lane.b32.xlu0 %v9284, 16
      %v9663 = vpop.permute.xlu0 %9662
      %9664 = vrot.lane.b32.xlu0 %v9289, 16
      %v9665 = vpop.permute.xlu0 %9664
      %9666 = vrot.lane.b32.xlu0 %v9294, 16
      %v9667 = vpop.permute.xlu0 %9666
      %9668 = vrot.lane.b32.xlu0 %v9299, 16
      %v9669 = vpop.permute.xlu0 %9668
      %9670 = vrot.lane.b32.xlu0 %v9304, 16
      %v9671 = vpop.permute.xlu0 %9670
      %9672 = vrot.lane.b32.xlu0 %v9309, 16
      %v9673 = vpop.permute.xlu0 %9672
      %9704 = vrot.lane.b32.xlu0 %v9174, 20
      %v9705 = vpop.permute.xlu0 %9704
      %9706 = vrot.lane.b32.xlu0 %v9179, 20
      %v9707 = vpop.permute.xlu0 %9706
      %9708 = vrot.lane.b32.xlu0 %v9184, 20
      %v9709 = vpop.permute.xlu0 %9708
      %9710 = vrot.lane.b32.xlu0 %v9189, 20
      %v9711 = vpop.permute.xlu0 %9710
      %9712 = vrot.lane.b32.xlu0 %v9194, 20
      %v9713 = vpop.permute.xlu0 %9712
      %9714 = vrot.lane.b32.xlu0 %v9199, 20
      %v9715 = vpop.permute.xlu0 %9714
      %9716 = vrot.lane.b32.xlu0 %v9204, 20
      %v9717 = vpop.permute.xlu0 %9716
      %9718 = vrot.lane.b32.xlu0 %v9209, 20
      %v9719 = vpop.permute.xlu0 %9718
      %9720 = vrot.lane.b32.xlu0 %v9214, 20
      %v9721 = vpop.permute.xlu0 %9720
      %9722 = vrot.lane.b32.xlu0 %v9219, 20
      %v9723 = vpop.permute.xlu0 %9722
      %9724 = vrot.lane.b32.xlu0 %v9224, 20
      %v9725 = vpop.permute.xlu0 %9724
      %9726 = vrot.lane.b32.xlu0 %v9229, 20
      %v9727 = vpop.permute.xlu0 %9726
      %9728 = vrot.lane.b32.xlu0 %v9234, 20
      %v9729 = vpop.permute.xlu0 %9728
      %9730 = vrot.lane.b32.xlu0 %v9239, 20
      %v9731 = vpop.permute.xlu0 %9730
      %9732 = vrot.lane.b32.xlu0 %v9244, 20
      %v9733 = vpop.permute.xlu0 %9732
      %9734 = vrot.lane.b32.xlu0 %v9249, 20
      %v9735 = vpop.permute.xlu0 %9734
      %9736 = vrot.lane.b32.xlu0 %v9254, 20
      %v9737 = vpop.permute.xlu0 %9736
      %9738 = vrot.lane.b32.xlu0 %v9259, 20
      %v9739 = vpop.permute.xlu0 %9738
      %9740 = vrot.lane.b32.xlu0 %v9264, 20
      %v9741 = vpop.permute.xlu0 %9740
      %9742 = vrot.lane.b32.xlu0 %v9269, 20
      %v9743 = vpop.permute.xlu0 %9742
      %9744 = vrot.lane.b32.xlu0 %v9274, 20
      %v9745 = vpop.permute.xlu0 %9744
      %9746 = vrot.lane.b32.xlu0 %v9279, 20
      %v9747 = vpop.permute.xlu0 %9746
      %9748 = vrot.lane.b32.xlu0 %v9284, 20
      %v9749 = vpop.permute.xlu0 %9748
      %9750 = vrot.lane.b32.xlu0 %v9289, 20
      %v9751 = vpop.permute.xlu0 %9750
      %9752 = vrot.lane.b32.xlu0 %v9294, 20
      %v9753 = vpop.permute.xlu0 %9752
      %9754 = vrot.lane.b32.xlu0 %v9299, 20
      %v9755 = vpop.permute.xlu0 %9754
      %9756 = vrot.lane.b32.xlu0 %v9304, 20
      %v9757 = vpop.permute.xlu0 %9756
      %9758 = vrot.lane.b32.xlu0 %v9309, 20
      %v9759 = vpop.permute.xlu0 %9758
      %9788 = vrot.lane.b32.xlu0 %v9184, 24
      %v9789 = vpop.permute.xlu0 %9788
      %9790 = vrot.lane.b32.xlu0 %v9189, 24
      %v9791 = vpop.permute.xlu0 %9790
      %9792 = vrot.lane.b32.xlu0 %v9194, 24
      %v9793 = vpop.permute.xlu0 %9792
      %9794 = vrot.lane.b32.xlu0 %v9199, 24
      %v9795 = vpop.permute.xlu0 %9794
      %9796 = vrot.lane.b32.xlu0 %v9204, 24
      %v9797 = vpop.permute.xlu0 %9796
      %9798 = vrot.lane.b32.xlu0 %v9209, 24
      %v9799 = vpop.permute.xlu0 %9798
      %9800 = vrot.lane.b32.xlu0 %v9214, 24
      %v9801 = vpop.permute.xlu0 %9800
      %9802 = vrot.lane.b32.xlu0 %v9219, 24
      %v9803 = vpop.permute.xlu0 %9802
      %9804 = vrot.lane.b32.xlu0 %v9224, 24
      %v9805 = vpop.permute.xlu0 %9804
      %9806 = vrot.lane.b32.xlu0 %v9229, 24
      %v9807 = vpop.permute.xlu0 %9806
      %9808 = vrot.lane.b32.xlu0 %v9234, 24
      %v9809 = vpop.permute.xlu0 %9808
      %9810 = vrot.lane.b32.xlu0 %v9239, 24
      %v9811 = vpop.permute.xlu0 %9810
      %9812 = vrot.lane.b32.xlu0 %v9244, 24
      %v9813 = vpop.permute.xlu0 %9812
      %9814 = vrot.lane.b32.xlu0 %v9249, 24
      %v9815 = vpop.permute.xlu0 %9814
      %9816 = vrot.lane.b32.xlu0 %v9254, 24
      %v9817 = vpop.permute.xlu0 %9816
      %9818 = vrot.lane.b32.xlu0 %v9259, 24
      %v9819 = vpop.permute.xlu0 %9818
      %9820 = vrot.lane.b32.xlu0 %v9264, 24
      %v9821 = vpop.permute.xlu0 %9820
      %9822 = vrot.lane.b32.xlu0 %v9269, 24
      %v9823 = vpop.permute.xlu0 %9822
      %9824 = vrot.lane.b32.xlu0 %v9274, 24
      %v9825 = vpop.permute.xlu0 %9824
      %9826 = vrot.lane.b32.xlu0 %v9279, 24
      %v9827 = vpop.permute.xlu0 %9826
      %9828 = vrot.lane.b32.xlu0 %v9284, 24
      %v9829 = vpop.permute.xlu0 %9828
      %9830 = vrot.lane.b32.xlu0 %v9289, 24
      %v9831 = vpop.permute.xlu0 %9830
      %9832 = vrot.lane.b32.xlu0 %v9294, 24
      %v9833 = vpop.permute.xlu0 %9832
      %9834 = vrot.lane.b32.xlu0 %v9299, 24
      %v9835 = vpop.permute.xlu0 %9834
      %9836 = vrot.lane.b32.xlu0 %v9304, 24
      %v9837 = vpop.permute.xlu0 %9836
      %9838 = vrot.lane.b32.xlu0 %v9309, 24
      %v9839 = vpop.permute.xlu0 %9838
      %v9866 = vsel %vm589, 0.0, %v9341
      %v9867 = vsel %vm589, 0.0, %v9343
      %v9868 = vsel %vm589, %v9154, %v9345
      %v9869 = vsel %vm589, %v9159, %v9347
      %v9870 = vsel %vm589, %v9164, %v9349
      %v9871 = vsel %vm589, %v9169, %v9351
      %v9872 = vsel %vm589, %v9174, %v9353
      %v9873 = vsel %vm589, %v9179, %v9355
      %v9874 = vsel %vm589, %v9184, %v9357
      %v9875 = vsel %vm589, %v9189, %v9359
      %v9876 = vsel %vm589, %v9194, %v9361
      %v9877 = vsel %vm589, %v9199, %v9363
      %v9878 = vsel %vm589, %v9204, %v9365
      %v9879 = vsel %vm589, %v9209, %v9367
      %v9880 = vsel %vm589, %v9214, %v9369
      %v9881 = vsel %vm589, %v9219, %v9371
      %v9882 = vsel %vm589, %v9224, %v9373
      %v9883 = vsel %vm589, %v9229, %v9375
      %v9884 = vsel %vm589, %v9234, %v9377
      %v9885 = vsel %vm589, %v9239, %v9379
      %v9886 = vsel %vm589, %v9244, %v9381
      %v9887 = vsel %vm589, %v9249, %v9383
      %v9888 = vsel %vm589, %v9254, %v9385
      %v9889 = vsel %vm589, %v9259, %v9387
      %v9890 = vsel %vm589, %v9264, %v9389
      %v9891 = vsel %vm589, %v9269, %v9391
      %v9892 = vsel %vm589, %v9274, %v9393
      %v9893 = vsel %vm589, %v9279, %v9395
      %v9894 = vsel %vm3077, %v4148, %v9427
      %v9895 = vsel %vm3077, %v4148, %v9429
      %v9896 = vsel %vm3077, %v9866, %v9431
      %v9897 = vsel %vm3077, %v9867, %v9433
      %v9898 = vsel %vm3077, %v9868, %v9435
      %v9899 = vsel %vm3077, %v9869, %v9437
      %v9900 = vsel %vm3077, %v9870, %v9439
      %v9901 = vsel %vm3077, %v9871, %v9441
      %v9902 = vsel %vm3077, %v9872, %v9443
      %v9903 = vsel %vm3077, %v9873, %v9445
      %v9904 = vsel %vm3077, %v9874, %v9447
      %v9905 = vsel %vm3077, %v9875, %v9449
      %v9906 = vsel %vm3077, %v9876, %v9451
      %v9907 = vsel %vm3077, %v9877, %v9453
      %v9908 = vsel %vm3077, %v9878, %v9455
      %v9909 = vsel %vm3077, %v9879, %v9457
      %v9910 = vsel %vm3077, %v9880, %v9459
      %v9911 = vsel %vm3077, %v9881, %v9461
      %v9912 = vsel %vm3077, %v9882, %v9463
      %v9913 = vsel %vm3077, %v9883, %v9465
      %v9914 = vsel %vm3077, %v9884, %v9467
      %v9915 = vsel %vm3077, %v9885, %v9469
      %v9916 = vsel %vm3077, %v9886, %v9471
      %v9917 = vsel %vm3077, %v9887, %v9473
      %v9918 = vsel %vm3077, %v9888, %v9475
      %v9919 = vsel %vm3077, %v9889, %v9477
      %v9920 = vsel %vm3077, %v9890, %v9479
      %v9921 = vsel %vm3077, %v9891, %v9481
      %v9922 = vsel %vm3077, %v9892, %v9483
      %v9923 = vsel %vm3077, %v9893, %v9485
      %v9924 = vsel %vm3110, %v4177, %v9519
      %v9925 = vsel %vm3110, %v4177, %v9521
      %v9926 = vsel %vm3110, %v9894, %v9523
      %v9927 = vsel %vm3110, %v9895, %v9525
      %v9928 = vsel %vm3110, %v9896, %v9527
      %v9929 = vsel %vm3110, %v9897, %v9529
      %v9930 = vsel %vm3110, %v9898, %v9531
      %v9931 = vsel %vm3110, %v9899, %v9533
      %v9932 = vsel %vm3110, %v9900, %v9535
      %v9933 = vsel %vm3110, %v9901, %v9537
      %v9934 = vsel %vm3110, %v9902, %v9539
      %v9935 = vsel %vm3110, %v9903, %v9541
      %v9936 = vsel %vm3110, %v9904, %v9543
      %v9937 = vsel %vm3110, %v9905, %v9545
      %v9938 = vsel %vm3110, %v9906, %v9547
      %v9939 = vsel %vm3110, %v9907, %v9549
      %v9940 = vsel %vm3110, %v9908, %v9551
      %v9941 = vsel %vm3110, %v9909, %v9553
      %v9942 = vsel %vm3110, %v9910, %v9555
      %v9943 = vsel %vm3110, %v9911, %v9557
      %v9944 = vsel %vm3110, %v9912, %v9559
      %v9945 = vsel %vm3110, %v9913, %v9561
      %v9946 = vsel %vm3110, %v9914, %v9563
      %v9947 = vsel %vm3110, %v9915, %v9565
      %v9948 = vsel %vm3110, %v9916, %v9567
      %v9949 = vsel %vm3110, %v9917, %v9569
      %v9950 = vsel %vm3110, %v9918, %v9571
      %v9951 = vsel %vm3110, %v9919, %v9573
      %v9952 = vsel %vm3110, %v9920, %v9575
      %v9953 = vsel %vm3110, %v9921, %v9577
      %v9954 = vsel %vm3110, %v9922, %v9579
      %v9955 = vsel %vm3110, %v9923, %v9581
      %v9956 = vsel %vm3143, %v9924, %v9615
      %v9957 = vsel %vm3143, %v9925, %v9617
      %v9958 = vsel %vm3143, %v9926, %v9619
      %v9959 = vsel %vm3143, %v9927, %v9621
      %v9960 = vsel %vm3143, %v9928, %v9623
      %v9961 = vsel %vm3143, %v9929, %v9625
      %v9962 = vsel %vm3143, %v9930, %v9627
      %v9963 = vsel %vm3143, %v9931, %v9629
      %v9964 = vsel %vm3143, %v9932, %v9631
      %v9965 = vsel %vm3143, %v9933, %v9633
      %v9966 = vsel %vm3143, %v9934, %v9635
      %v9967 = vsel %vm3143, %v9935, %v9637
      %v9968 = vsel %vm3143, %v9936, %v9639
      %v9969 = vsel %vm3143, %v9937, %v9641
      %v9970 = vsel %vm3143, %v9938, %v9643
      %v9971 = vsel %vm3143, %v9939, %v9645
      %v9972 = vsel %vm3143, %v9940, %v9647
      %v9973 = vsel %vm3143, %v9941, %v9649
      %v9974 = vsel %vm3143, %v9942, %v9651
      %v9975 = vsel %vm3143, %v9943, %v9653
      %v9976 = vsel %vm3143, %v9944, %v9655
      %v9977 = vsel %vm3143, %v9945, %v9657
      %v9978 = vsel %vm3143, %v9946, %v9659
      %v9979 = vsel %vm3143, %v9947, %v9661
      %v9980 = vsel %vm3143, %v9948, %v9663
      %v9981 = vsel %vm3143, %v9949, %v9665
      %v9982 = vsel %vm3143, %v9950, %v9667
      %v9983 = vsel %vm3143, %v9951, %v9669
      %v9984 = vsel %vm3143, %v9952, %v9671
      %v9985 = vsel %vm3143, %v9953, %v9673
      %v9986 = vsel %vm3143, %v9954, %v3948
      %v9987 = vsel %vm3143, %v9955, %v3948
      %v9988 = vsel %vm3176, %v9956, %v9705
      %v9989 = vsel %vm3176, %v9957, %v9707
      %v9990 = vsel %vm3176, %v9958, %v9709
      %v9991 = vsel %vm3176, %v9959, %v9711
      %v9992 = vsel %vm3176, %v9960, %v9713
      %v9993 = vsel %vm3176, %v9961, %v9715
      %v9994 = vsel %vm3176, %v9962, %v9717
      %v9995 = vsel %vm3176, %v9963, %v9719
      %v9996 = vsel %vm3176, %v9964, %v9721
      %v9997 = vsel %vm3176, %v9965, %v9723
      %v9998 = vsel %vm3176, %v9966, %v9725
      %v9999 = vsel %vm3176, %v9967, %v9727
      %v10000 = vsel %vm3176, %v9968, %v9729
      %v10001 = vsel %vm3176, %v9969, %v9731
      %v10002 = vsel %vm3176, %v9970, %v9733
      %v10003 = vsel %vm3176, %v9971, %v9735
      %v10004 = vsel %vm3176, %v9972, %v9737
      %v10005 = vsel %vm3176, %v9973, %v9739
      %v10006 = vsel %vm3176, %v9974, %v9741
      %v10007 = vsel %vm3176, %v9975, %v9743
      %v10008 = vsel %vm3176, %v9976, %v9745
      %v10009 = vsel %vm3176, %v9977, %v9747
      %v10010 = vsel %vm3176, %v9978, %v9749
      %v10011 = vsel %vm3176, %v9979, %v9751
      %v10012 = vsel %vm3176, %v9980, %v9753
      %v10013 = vsel %vm3176, %v9981, %v9755
      %v10014 = vsel %vm3176, %v9982, %v9757
      %v10015 = vsel %vm3176, %v9983, %v9759
      %v10016 = vsel %vm3176, %v9984, %v4037
      %v10017 = vsel %vm3176, %v9985, %v4037
      %v10018 = vsel %vm3176, %v9986, %v4037
      %v10019 = vsel %vm3176, %v9987, %v4037
      %v10020 = vsel %vm3209, %v9988, %v9789
      %v10021 = vsel %vm3209, %v9989, %v9791
      %v10022 = vsel %vm3209, %v9990, %v9793
      %v10023 = vsel %vm3209, %v9991, %v9795
      %v10024 = vsel %vm3209, %v9992, %v9797
      %v10025 = vsel %vm3209, %v9993, %v9799
      %v10026 = vsel %vm3209, %v9994, %v9801
      %v10027 = vsel %vm3209, %v9995, %v9803
      %v10028 = vsel %vm3209, %v9996, %v9805
      %v10029 = vsel %vm3209, %v9997, %v9807
      %v10030 = vsel %vm3209, %v9998, %v9809
      %v10031 = vsel %vm3209, %v9999, %v9811
      %v10032 = vsel %vm3209, %v10000, %v9813
      %v10033 = vsel %vm3209, %v10001, %v9815
      %v10034 = vsel %vm3209, %v10002, %v9817
      %v10035 = vsel %vm3209, %v10003, %v9819
      %v10036 = vsel %vm3209, %v10004, %v9821
      %v10037 = vsel %vm3209, %v10005, %v9823
      %v10038 = vsel %vm3209, %v10006, %v9825
      %v10039 = vsel %vm3209, %v10007, %v9827
      %v10040 = vsel %vm3209, %v10008, %v9829
      %v10041 = vsel %vm3209, %v10009, %v9831
      %v10042 = vsel %vm3209, %v10010, %v9833
      %v10043 = vsel %vm3209, %v10011, %v9835
      %v10044 = vsel %vm3209, %v10012, %v9837
      %v10045 = vsel %vm3209, %v10013, %v9839
      %v10046 = vsel %vm3209, %v10014, %v4120
      %v10047 = vsel %vm3209, %v10015, %v4120
      %v10048 = vsel %vm3209, %v10016, %v4120
      %v10049 = vsel %vm3209, %v10017, %v4120
      %v10050 = vsel %vm3209, %v10018, %v4120
      %v10051 = vsel %vm3209, %v10019, %v4120
      %v10052 = vld [vmem:[%s15] sm:$0xff]
      %v10053 = vld [vmem:[%s15 + $0x8] sm:$0xff]
      %v10054 = vld [vmem:[%s15 + $0x10] sm:$0xff]
      %v10055 = vld [vmem:[%s15 + $0x18] sm:$0xf]
      %v10056 = vld [vmem:[%s16] sm:$0x1]
      %v10058 = vlaneseq
      %v10059 = vshrl.u32 %v10058, 7
      %v10060 = vsub.s32 0, %v10059
      %v10061 = vrot.slane %v10056, %v10060
      %v10064 = vsel %vm3253, %v10020, 0
      %v10067 = vsel %vm3253, %v10021, 0
      %v10070 = vsel %vm3253, %v10022, 0
      %v10073 = vsel %vm3253, %v10023, 0
      %v10076 = vsel %vm3253, %v10024, 0
      %v10079 = vsel %vm3253, %v10025, 0
      %v10082 = vsel %vm3253, %v10026, 0
      %v10085 = vsel %vm3253, %v10027, 0
      %v10088 = vsel %vm3253, %v10028, 0
      %v10091 = vsel %vm3253, %v10029, 0
      %v10094 = vsel %vm3253, %v10030, 0
      %v10097 = vsel %vm3253, %v10031, 0
      %v10100 = vsel %vm3253, %v10032, 0
      %v10103 = vsel %vm3253, %v10033, 0
      %v10106 = vsel %vm3253, %v10034, 0
      %v10109 = vsel %vm3253, %v10035, 0
      %v10112 = vsel %vm3253, %v10036, 0
      %v10115 = vsel %vm3253, %v10037, 0
      %v10118 = vsel %vm3253, %v10038, 0
      %v10121 = vsel %vm3253, %v10039, 0
      %v10124 = vsel %vm3253, %v10040, 0
      %v10127 = vsel %vm3253, %v10041, 0
      %v10130 = vsel %vm3253, %v10042, 0
      %v10133 = vsel %vm3253, %v10043, 0
      %v10136 = vsel %vm3253, %v10044, 0
      %v10139 = vsel %vm3253, %v10045, 0
      %v10142 = vsel %vm3253, %v10046, 0
      %v10145 = vsel %vm3253, %v10047, 0
      %v10148 = vsel %vm3253, %v10048, 0
      %v10151 = vsel %vm3253, %v10049, 0
      %v10154 = vsel %vm3253, %v10050, 0
      %v10157 = vsel %vm3253, %v10051, 0
      %v10160 = vsel %vm686, %v10055, 0
      %10162 = vmatprep.subr.mxu0 0.0
      %10163 = vmatpush1.msra.mxu0 0.0
      %10164 = vmatprep.subr.mxu0 0.0
      %10165 = vmatpush1.msra.mxu0 0.0
      %10166 = vmatprep.subr.mxu0 0.0
      %10167 = vmatpush1.msra.mxu0 0.0
      %10168 = vmatprep.subr.mxu0 0.0
      %10169 = vmatpush1.msra.mxu0 0.0
      %10170 = vmatprep.subr.mxu0 0.0
      %10171 = vmatpush1.msra.mxu0 0.0
      %10172 = vmatprep.subr.mxu0 0.0
      %10173 = vmatpush1.msra.mxu0 0.0
      %10174 = vmatprep.subr.mxu0 0.0
      %10175 = vmatpush1.msra.mxu0 0.0
      %10176 = vmatprep.subr.mxu0 0.0
      %10177 = vmatpush1.msra.mxu0 0.0
      %10178 = vmatprep.subr.mxu0 0.0
      %10179 = vmatpush1.msra.mxu0 0.0
      %10180 = vmatprep.subr.mxu0 0.0
      %10181 = vmatpush1.msra.mxu0 0.0
      %10182 = vmatprep.subr.mxu0 0.0
      %10183 = vmatpush1.msra.mxu0 0.0
      %10184 = vmatprep.subr.mxu0 0.0
      %10185 = vmatpush1.msra.mxu0 0.0
      %10186 = vmatprep.subr.mxu0 0.0
      %10187 = vmatpush1.msra.mxu0 %v10160
      %10188 = vmatprep.subr.mxu0 0.0
      %10189 = vmatpush1.msra.mxu0 %v10054
      %10190 = vmatprep.subr.mxu0 0.0
      %10191 = vmatpush1.msra.mxu0 %v10053
      %10192 = vmatprep.subr.mxu0 0.0
      %10193 = vmatpush1.msra.mxu0 %v10052
      %10194 = vmatprep.subr.mxu0 0.0
      %10195 = vmatpush2.msra.mxu0 0.0
      %10196 = vmatprep.subr.mxu0 0.0
      %10197 = vmatpush2.msra.mxu0 0.0
      %10198 = vmatprep.subr.mxu0 0.0
      %10199 = vmatpush2.msra.mxu0 0.0
      %10200 = vmatprep.subr.mxu0 0.0
      %10201 = vmatpush2.msra.mxu0 0.0
      %10202 = vmatprep.subr.mxu0 0.0
      %10203 = vmatpush2.msra.mxu0 0.0
      %10204 = vmatprep.subr.mxu0 0.0
      %10205 = vmatpush2.msra.mxu0 0.0
      %10206 = vmatprep.subr.mxu0 0.0
      %10207 = vmatpush2.msra.mxu0 0.0
      %10208 = vmatprep.subr.mxu0 0.0
      %10209 = vmatpush2.msra.mxu0 0.0
      %10210 = vmatprep.subr.mxu0 0.0
      %10211 = vmatpush2.msra.mxu0 0.0
      %10212 = vmatprep.subr.mxu0 0.0
      %10213 = vmatpush2.msra.mxu0 0.0
      %10214 = vmatprep.subr.mxu0 0.0
      %10215 = vmatpush2.msra.mxu0 0.0
      %10216 = vmatprep.subr.mxu0 0.0
      %10217 = vmatpush2.msra.mxu0 0.0
      %10218 = vmatprep.subr.mxu0 0.0
      %10219 = vmatpush2.msra.mxu0 0.0
      %10220 = vmatprep.subr.mxu0 0.0
      %10221 = vmatpush2.msra.mxu0 0.0
      %10222 = vmatprep.subr.mxu0 0.0
      %10223 = vmatpush2.msra.mxu0 0.0
      %10224 = vmatprep.subr.mxu0 0.0
      %10225 = vmatpush2.msra.mxu0 0.0
      %10226 = vmatprep.mubr.f32.mxu0 0.0
      %10227 = vmatmul.mubr.f32.gmra.mxu0 %v10064
      %v10228 = vpop.f32.mrf.mxu0
      %v10229 = vadd.f32 %v10061, %v10228
      %v10230 = vpop.f32.mrf.mxu0
      %10231 = vmatprep.mubr.f32.mxu0 0.0
      %10232 = vmatmul.mubr.f32.gmra.mxu0 %v10067
      %v10233 = vpop.f32.mrf.mxu0
      %v10234 = vadd.f32 %v10061, %v10233
      %v10235 = vpop.f32.mrf.mxu0
      %10236 = vmatprep.mubr.f32.mxu0 0.0
      %10237 = vmatmul.mubr.f32.gmra.mxu0 %v10070
      %v10238 = vpop.f32.mrf.mxu0
      %v10239 = vadd.f32 %v10061, %v10238
      %v10240 = vpop.f32.mrf.mxu0
      %10241 = vmatprep.mubr.f32.mxu0 0.0
      %10242 = vmatmul.mubr.f32.gmra.mxu0 %v10073
      %v10243 = vpop.f32.mrf.mxu0
      %v10244 = vadd.f32 %v10061, %v10243
      %v10245 = vpop.f32.mrf.mxu0
      %10246 = vmatprep.mubr.f32.mxu0 0.0
      %10247 = vmatmul.mubr.f32.gmra.mxu0 %v10076
      %v10248 = vpop.f32.mrf.mxu0
      %v10249 = vadd.f32 %v10061, %v10248
      %v10250 = vpop.f32.mrf.mxu0
      %10251 = vmatprep.mubr.f32.mxu0 0.0
      %10252 = vmatmul.mubr.f32.gmra.mxu0 %v10079
      %v10253 = vpop.f32.mrf.mxu0
      %v10254 = vadd.f32 %v10061, %v10253
      %v10255 = vpop.f32.mrf.mxu0
      %10256 = vmatprep.mubr.f32.mxu0 0.0
      %10257 = vmatmul.mubr.f32.gmra.mxu0 %v10082
      %v10258 = vpop.f32.mrf.mxu0
      %v10259 = vadd.f32 %v10061, %v10258
      %v10260 = vpop.f32.mrf.mxu0
      %10261 = vmatprep.mubr.f32.mxu0 0.0
      %10262 = vmatmul.mubr.f32.gmra.mxu0 %v10085
      %v10263 = vpop.f32.mrf.mxu0
      %v10264 = vadd.f32 %v10061, %v10263
      %v10265 = vpop.f32.mrf.mxu0
      %10266 = vmatprep.mubr.f32.mxu0 0.0
      %10267 = vmatmul.mubr.f32.gmra.mxu0 %v10088
      %v10268 = vpop.f32.mrf.mxu0
      %v10269 = vadd.f32 %v10061, %v10268
      %v10270 = vpop.f32.mrf.mxu0
      %10271 = vmatprep.mubr.f32.mxu0 0.0
      %10272 = vmatmul.mubr.f32.gmra.mxu0 %v10091
      %v10273 = vpop.f32.mrf.mxu0
      %v10274 = vadd.f32 %v10061, %v10273
      %v10275 = vpop.f32.mrf.mxu0
      %10276 = vmatprep.mubr.f32.mxu0 0.0
      %10277 = vmatmul.mubr.f32.gmra.mxu0 %v10094
      %v10278 = vpop.f32.mrf.mxu0
      %v10279 = vadd.f32 %v10061, %v10278
      %v10280 = vpop.f32.mrf.mxu0
      %10281 = vmatprep.mubr.f32.mxu0 0.0
      %10282 = vmatmul.mubr.f32.gmra.mxu0 %v10097
      %v10283 = vpop.f32.mrf.mxu0
      %v10284 = vadd.f32 %v10061, %v10283
      %v10285 = vpop.f32.mrf.mxu0
      %10286 = vmatprep.mubr.f32.mxu0 0.0
      %10287 = vmatmul.mubr.f32.gmra.mxu0 %v10100
      %v10288 = vpop.f32.mrf.mxu0
      %v10289 = vadd.f32 %v10061, %v10288
      %v10290 = vpop.f32.mrf.mxu0
      %10291 = vmatprep.mubr.f32.mxu0 0.0
      %10292 = vmatmul.mubr.f32.gmra.mxu0 %v10103
      %v10293 = vpop.f32.mrf.mxu0
      %v10294 = vadd.f32 %v10061, %v10293
      %v10295 = vpop.f32.mrf.mxu0
      %10296 = vmatprep.mubr.f32.mxu0 0.0
      %10297 = vmatmul.mubr.f32.gmra.mxu0 %v10106
      %v10298 = vpop.f32.mrf.mxu0
      %v10299 = vadd.f32 %v10061, %v10298
      %v10300 = vpop.f32.mrf.mxu0
      %10301 = vmatprep.mubr.f32.mxu0 0.0
      %10302 = vmatmul.mubr.f32.gmra.mxu0 %v10109
      %v10303 = vpop.f32.mrf.mxu0
      %v10304 = vadd.f32 %v10061, %v10303
      %v10305 = vpop.f32.mrf.mxu0
      %10306 = vmatprep.mubr.f32.mxu0 0.0
      %10307 = vmatmul.mubr.f32.gmra.mxu0 %v10112
      %v10308 = vpop.f32.mrf.mxu0
      %v10309 = vadd.f32 %v10061, %v10308
      %v10310 = vpop.f32.mrf.mxu0
      %10311 = vmatprep.mubr.f32.mxu0 0.0
      %10312 = vmatmul.mubr.f32.gmra.mxu0 %v10115
      %v10313 = vpop.f32.mrf.mxu0
      %v10314 = vadd.f32 %v10061, %v10313
      %v10315 = vpop.f32.mrf.mxu0
      %10316 = vmatprep.mubr.f32.mxu0 0.0
      %10317 = vmatmul.mubr.f32.gmra.mxu0 %v10118
      %v10318 = vpop.f32.mrf.mxu0
      %v10319 = vadd.f32 %v10061, %v10318
      %v10320 = vpop.f32.mrf.mxu0
      %10321 = vmatprep.mubr.f32.mxu0 0.0
      %10322 = vmatmul.mubr.f32.gmra.mxu0 %v10121
      %v10323 = vpop.f32.mrf.mxu0
      %v10324 = vadd.f32 %v10061, %v10323
      %v10325 = vpop.f32.mrf.mxu0
      %10326 = vmatprep.mubr.f32.mxu0 0.0
      %10327 = vmatmul.mubr.f32.gmra.mxu0 %v10124
      %v10328 = vpop.f32.mrf.mxu0
      %v10329 = vadd.f32 %v10061, %v10328
      %v10330 = vpop.f32.mrf.mxu0
      %10331 = vmatprep.mubr.f32.mxu0 0.0
      %10332 = vmatmul.mubr.f32.gmra.mxu0 %v10127
      %v10333 = vpop.f32.mrf.mxu0
      %v10334 = vadd.f32 %v10061, %v10333
      %v10335 = vpop.f32.mrf.mxu0
      %10336 = vmatprep.mubr.f32.mxu0 0.0
      %10337 = vmatmul.mubr.f32.gmra.mxu0 %v10130
      %v10338 = vpop.f32.mrf.mxu0
      %v10339 = vadd.f32 %v10061, %v10338
      %v10340 = vpop.f32.mrf.mxu0
      %10341 = vmatprep.mubr.f32.mxu0 0.0
      %10342 = vmatmul.mubr.f32.gmra.mxu0 %v10133
      %v10343 = vpop.f32.mrf.mxu0
      %v10344 = vadd.f32 %v10061, %v10343
      %v10345 = vpop.f32.mrf.mxu0
      %10346 = vmatprep.mubr.f32.mxu0 0.0
      %10347 = vmatmul.mubr.f32.gmra.mxu0 %v10136
      %v10348 = vpop.f32.mrf.mxu0
      %v10349 = vadd.f32 %v10061, %v10348
      %v10350 = vpop.f32.mrf.mxu0
      %10351 = vmatprep.mubr.f32.mxu0 0.0
      %10352 = vmatmul.mubr.f32.gmra.mxu0 %v10139
      %v10353 = vpop.f32.mrf.mxu0
      %v10354 = vadd.f32 %v10061, %v10353
      %v10355 = vpop.f32.mrf.mxu0
      %10356 = vmatprep.mubr.f32.mxu0 0.0
      %10357 = vmatmul.mubr.f32.gmra.mxu0 %v10142
      %v10358 = vpop.f32.mrf.mxu0
      %v10359 = vadd.f32 %v10061, %v10358
      %v10360 = vpop.f32.mrf.mxu0
      %10361 = vmatprep.mubr.f32.mxu0 0.0
      %10362 = vmatmul.mubr.f32.gmra.mxu0 %v10145
      %v10363 = vpop.f32.mrf.mxu0
      %v10364 = vadd.f32 %v10061, %v10363
      %v10365 = vpop.f32.mrf.mxu0
      %10366 = vmatprep.mubr.f32.mxu0 0.0
      %10367 = vmatmul.mubr.f32.gmra.mxu0 %v10148
      %v10368 = vpop.f32.mrf.mxu0
      %v10369 = vadd.f32 %v10061, %v10368
      %v10370 = vpop.f32.mrf.mxu0
      %10371 = vmatprep.mubr.f32.mxu0 0.0
      %10372 = vmatmul.mubr.f32.gmra.mxu0 %v10151
      %v10373 = vpop.f32.mrf.mxu0
      %v10374 = vadd.f32 %v10061, %v10373
      %v10375 = vpop.f32.mrf.mxu0
      %10376 = vmatprep.mubr.f32.mxu0 0.0
      %10377 = vmatmul.mubr.f32.gmra.mxu0 %v10154
      %v10378 = vpop.f32.mrf.mxu0
      %v10379 = vadd.f32 %v10061, %v10378
      %v10380 = vpop.f32.mrf.mxu0
      %10381 = vmatprep.mubr.f32.mxu0 0.0
      %10382 = vmatmul.mubr.f32.gmra.mxu0 %v10157
      %v10383 = vpop.f32.mrf.mxu0
      %v10384 = vadd.f32 %v10061, %v10383
      %v10385 = vpop.f32.mrf.mxu0
      %10386 = vdwg.mxu0
      %10419 = vrot.lane.b32.xlu0 %v10229, 4
      %v10420 = vpop.permute.xlu0 %10419
      %10421 = vrot.lane.b32.xlu0 %v10234, 4
      %v10422 = vpop.permute.xlu0 %10421
      %10423 = vrot.lane.b32.xlu0 %v10239, 4
      %v10424 = vpop.permute.xlu0 %10423
      %10425 = vrot.lane.b32.xlu0 %v10244, 4
      %v10426 = vpop.permute.xlu0 %10425
      %10427 = vrot.lane.b32.xlu0 %v10249, 4
      %v10428 = vpop.permute.xlu0 %10427
      %10429 = vrot.lane.b32.xlu0 %v10254, 4
      %v10430 = vpop.permute.xlu0 %10429
      %10431 = vrot.lane.b32.xlu0 %v10259, 4
      %v10432 = vpop.permute.xlu0 %10431
      %10433 = vrot.lane.b32.xlu0 %v10264, 4
      %v10434 = vpop.permute.xlu0 %10433
      %10435 = vrot.lane.b32.xlu0 %v10269, 4
      %v10436 = vpop.permute.xlu0 %10435
      %10437 = vrot.lane.b32.xlu0 %v10274, 4
      %v10438 = vpop.permute.xlu0 %10437
      %10439 = vrot.lane.b32.xlu0 %v10279, 4
      %v10440 = vpop.permute.xlu0 %10439
      %10441 = vrot.lane.b32.xlu0 %v10284, 4
      %v10442 = vpop.permute.xlu0 %10441
      %10443 = vrot.lane.b32.xlu0 %v10289, 4
      %v10444 = vpop.permute.xlu0 %10443
      %10445 = vrot.lane.b32.xlu0 %v10294, 4
      %v10446 = vpop.permute.xlu0 %10445
      %10447 = vrot.lane.b32.xlu0 %v10299, 4
      %v10448 = vpop.permute.xlu0 %10447
      %10449 = vrot.lane.b32.xlu0 %v10304, 4
      %v10450 = vpop.permute.xlu0 %10449
      %10451 = vrot.lane.b32.xlu0 %v10309, 4
      %v10452 = vpop.permute.xlu0 %10451
      %10453 = vrot.lane.b32.xlu0 %v10314, 4
      %v10454 = vpop.permute.xlu0 %10453
      %10455 = vrot.lane.b32.xlu0 %v10319, 4
      %v10456 = vpop.permute.xlu0 %10455
      %10457 = vrot.lane.b32.xlu0 %v10324, 4
      %v10458 = vpop.permute.xlu0 %10457
      %10459 = vrot.lane.b32.xlu0 %v10329, 4
      %v10460 = vpop.permute.xlu0 %10459
      %10461 = vrot.lane.b32.xlu0 %v10334, 4
      %v10462 = vpop.permute.xlu0 %10461
      %10463 = vrot.lane.b32.xlu0 %v10339, 4
      %v10464 = vpop.permute.xlu0 %10463
      %10465 = vrot.lane.b32.xlu0 %v10344, 4
      %v10466 = vpop.permute.xlu0 %10465
      %10467 = vrot.lane.b32.xlu0 %v10349, 4
      %v10468 = vpop.permute.xlu0 %10467
      %10469 = vrot.lane.b32.xlu0 %v10354, 4
      %v10470 = vpop.permute.xlu0 %10469
      %10471 = vrot.lane.b32.xlu0 %v10359, 4
      %v10472 = vpop.permute.xlu0 %10471
      %10473 = vrot.lane.b32.xlu0 %v10364, 4
      %v10474 = vpop.permute.xlu0 %10473
      %10475 = vrot.lane.b32.xlu0 %v10369, 4
      %v10476 = vpop.permute.xlu0 %10475
      %10477 = vrot.lane.b32.xlu0 %v10374, 4
      %v10478 = vpop.permute.xlu0 %10477
      %10479 = vrot.lane.b32.xlu0 %v10379, 4
      %v10480 = vpop.permute.xlu0 %10479
      %10481 = vrot.lane.b32.xlu0 %v10384, 4
      %v10482 = vpop.permute.xlu0 %10481
      %10547 = vrot.lane.b32.xlu0 %v1636, 8
      %v10548 = vpop.permute.xlu0 %10547
      %10549 = vrot.lane.b32.xlu0 %v1641, 8
      %v10550 = vpop.permute.xlu0 %10549
      %10551 = vrot.lane.b32.xlu0 %v1646, 8
      %v10552 = vpop.permute.xlu0 %10551
      %10553 = vrot.lane.b32.xlu0 %v1651, 8
      %v10554 = vpop.permute.xlu0 %10553
      %10555 = vrot.lane.b32.xlu0 %v1656, 8
      %v10556 = vpop.permute.xlu0 %10555
      %10557 = vrot.lane.b32.xlu0 %v1661, 8
      %v10558 = vpop.permute.xlu0 %10557
      %10559 = vrot.lane.b32.xlu0 %v1666, 8
      %v10560 = vpop.permute.xlu0 %10559
      %10561 = vrot.lane.b32.xlu0 %v1671, 8
      %v10562 = vpop.permute.xlu0 %10561
      %10563 = vrot.lane.b32.xlu0 %v1676, 8
      %v10564 = vpop.permute.xlu0 %10563
      %10565 = vrot.lane.b32.xlu0 %v1681, 8
      %v10566 = vpop.permute.xlu0 %10565
      %10567 = vrot.lane.b32.xlu0 %v1686, 8
      %v10568 = vpop.permute.xlu0 %10567
      %10569 = vrot.lane.b32.xlu0 %v1691, 8
      %v10570 = vpop.permute.xlu0 %10569
      %10571 = vrot.lane.b32.xlu0 %v1696, 8
      %v10572 = vpop.permute.xlu0 %10571
      %10573 = vrot.lane.b32.xlu0 %v1701, 8
      %v10574 = vpop.permute.xlu0 %10573
      %10575 = vrot.lane.b32.xlu0 %v1706, 8
      %v10576 = vpop.permute.xlu0 %10575
      %10577 = vrot.lane.b32.xlu0 %v1711, 8
      %v10578 = vpop.permute.xlu0 %10577
      %10579 = vrot.lane.b32.xlu0 %v1716, 8
      %v10580 = vpop.permute.xlu0 %10579
      %10581 = vrot.lane.b32.xlu0 %v1721, 8
      %v10582 = vpop.permute.xlu0 %10581
      %10583 = vrot.lane.b32.xlu0 %v1726, 8
      %v10584 = vpop.permute.xlu0 %10583
      %10585 = vrot.lane.b32.xlu0 %v1731, 8
      %v10586 = vpop.permute.xlu0 %10585
      %10587 = vrot.lane.b32.xlu0 %v1736, 8
      %v10588 = vpop.permute.xlu0 %10587
      %10589 = vrot.lane.b32.xlu0 %v1741, 8
      %v10590 = vpop.permute.xlu0 %10589
      %10591 = vrot.lane.b32.xlu0 %v1746, 8
      %v10592 = vpop.permute.xlu0 %10591
      %10593 = vrot.lane.b32.xlu0 %v1751, 8
      %v10594 = vpop.permute.xlu0 %10593
      %10595 = vrot.lane.b32.xlu0 %v1756, 8
      %v10596 = vpop.permute.xlu0 %10595
      %10597 = vrot.lane.b32.xlu0 %v1761, 8
      %v10598 = vpop.permute.xlu0 %10597
      %10599 = vrot.lane.b32.xlu0 %v1766, 8
      %v10600 = vpop.permute.xlu0 %10599
      %10601 = vrot.lane.b32.xlu0 %v1771, 8
      %v10602 = vpop.permute.xlu0 %10601
      %10603 = vrot.lane.b32.xlu0 %v1776, 8
      %v10604 = vpop.permute.xlu0 %10603
      %10605 = vrot.lane.b32.xlu0 %v1781, 8
      %v10606 = vpop.permute.xlu0 %10605
      %10607 = vrot.lane.b32.xlu0 %v1786, 8
      %v10608 = vpop.permute.xlu0 %10607
      %10609 = vrot.lane.b32.xlu0 %v1791, 8
      %v10610 = vpop.permute.xlu0 %10609
      %10643 = vrot.lane.b32.xlu0 %v757, 4
      %v10644 = vpop.permute.xlu0 %10643
      %10645 = vrot.lane.b32.xlu0 %v762, 4
      %v10646 = vpop.permute.xlu0 %10645
      %10647 = vrot.lane.b32.xlu0 %v767, 4
      %v10648 = vpop.permute.xlu0 %10647
      %10649 = vrot.lane.b32.xlu0 %v772, 4
      %v10650 = vpop.permute.xlu0 %10649
      %10651 = vrot.lane.b32.xlu0 %v777, 4
      %v10652 = vpop.permute.xlu0 %10651
      %10653 = vrot.lane.b32.xlu0 %v782, 4
      %v10654 = vpop.permute.xlu0 %10653
      %10655 = vrot.lane.b32.xlu0 %v787, 4
      %v10656 = vpop.permute.xlu0 %10655
      %10657 = vrot.lane.b32.xlu0 %v792, 4
      %v10658 = vpop.permute.xlu0 %10657
      %10659 = vrot.lane.b32.xlu0 %v797, 4
      %v10660 = vpop.permute.xlu0 %10659
      %10661 = vrot.lane.b32.xlu0 %v802, 4
      %v10662 = vpop.permute.xlu0 %10661
      %10663 = vrot.lane.b32.xlu0 %v807, 4
      %v10664 = vpop.permute.xlu0 %10663
      %10665 = vrot.lane.b32.xlu0 %v812, 4
      %v10666 = vpop.permute.xlu0 %10665
      %10667 = vrot.lane.b32.xlu0 %v817, 4
      %v10668 = vpop.permute.xlu0 %10667
      %10669 = vrot.lane.b32.xlu0 %v822, 4
      %v10670 = vpop.permute.xlu0 %10669
      %10671 = vrot.lane.b32.xlu0 %v827, 4
      %v10672 = vpop.permute.xlu0 %10671
      %10673 = vrot.lane.b32.xlu0 %v832, 4
      %v10674 = vpop.permute.xlu0 %10673
      %10675 = vrot.lane.b32.xlu0 %v837, 4
      %v10676 = vpop.permute.xlu0 %10675
      %10677 = vrot.lane.b32.xlu0 %v842, 4
      %v10678 = vpop.permute.xlu0 %10677
      %10679 = vrot.lane.b32.xlu0 %v847, 4
      %v10680 = vpop.permute.xlu0 %10679
      %10681 = vrot.lane.b32.xlu0 %v852, 4
      %v10682 = vpop.permute.xlu0 %10681
      %10683 = vrot.lane.b32.xlu0 %v857, 4
      %v10684 = vpop.permute.xlu0 %10683
      %10685 = vrot.lane.b32.xlu0 %v862, 4
      %v10686 = vpop.permute.xlu0 %10685
      %10687 = vrot.lane.b32.xlu0 %v867, 4
      %v10688 = vpop.permute.xlu0 %10687
      %10689 = vrot.lane.b32.xlu0 %v872, 4
      %v10690 = vpop.permute.xlu0 %10689
      %10691 = vrot.lane.b32.xlu0 %v877, 4
      %v10692 = vpop.permute.xlu0 %10691
      %10693 = vrot.lane.b32.xlu0 %v882, 4
      %v10694 = vpop.permute.xlu0 %10693
      %10695 = vrot.lane.b32.xlu0 %v887, 4
      %v10696 = vpop.permute.xlu0 %10695
      %10697 = vrot.lane.b32.xlu0 %v892, 4
      %v10698 = vpop.permute.xlu0 %10697
      %10699 = vrot.lane.b32.xlu0 %v897, 4
      %v10700 = vpop.permute.xlu0 %10699
      %10701 = vrot.lane.b32.xlu0 %v902, 4
      %v10702 = vpop.permute.xlu0 %10701
      %10703 = vrot.lane.b32.xlu0 %v907, 4
      %v10704 = vpop.permute.xlu0 %10703
      %10705 = vrot.lane.b32.xlu0 %v912, 4
      %v10706 = vpop.permute.xlu0 %10705
      %v10739 = vsel %vm589, %v7363, %v10420
      %v10740 = vsel %vm589, %v7368, %v10422
      %v10741 = vsel %vm589, %v7373, %v10424
      %v10742 = vsel %vm589, %v7378, %v10426
      %v10743 = vsel %vm589, %v7383, %v10428
      %v10744 = vsel %vm589, %v7388, %v10430
      %v10745 = vsel %vm589, %v7393, %v10432
      %v10746 = vsel %vm589, %v7398, %v10434
      %v10747 = vsel %vm589, %v7403, %v10436
      %v10748 = vsel %vm589, %v7408, %v10438
      %v10749 = vsel %vm589, %v7413, %v10440
      %v10750 = vsel %vm589, %v7418, %v10442
      %v10751 = vsel %vm589, %v7423, %v10444
      %v10752 = vsel %vm589, %v7428, %v10446
      %v10753 = vsel %vm589, %v7433, %v10448
      %v10754 = vsel %vm589, %v7438, %v10450
      %v10755 = vsel %vm589, %v7443, %v10452
      %v10756 = vsel %vm589, %v7448, %v10454
      %v10757 = vsel %vm589, %v7453, %v10456
      %v10758 = vsel %vm589, %v7458, %v10458
      %v10759 = vsel %vm589, %v7463, %v10460
      %v10760 = vsel %vm589, %v7468, %v10462
      %v10761 = vsel %vm589, %v7473, %v10464
      %v10762 = vsel %vm589, %v7478, %v10466
      %v10763 = vsel %vm589, %v7483, %v10468
      %v10764 = vsel %vm589, %v7488, %v10470
      %v10765 = vsel %vm589, %v7493, %v10472
      %v10766 = vsel %vm589, %v7498, %v10474
      %v10767 = vsel %vm589, %v7503, %v10476
      %v10768 = vsel %vm589, %v7508, %v10478
      %v10769 = vsel %vm589, %v7513, %v10480
      %v10770 = vsel %vm589, %v7518, %v10482
      %v10771 = vsel %vm3077, %v10739, %v10548
      %v10772 = vsel %vm3077, %v10740, %v10550
      %v10773 = vsel %vm3077, %v10741, %v10552
      %v10774 = vsel %vm3077, %v10742, %v10554
      %v10775 = vsel %vm3077, %v10743, %v10556
      %v10776 = vsel %vm3077, %v10744, %v10558
      %v10777 = vsel %vm3077, %v10745, %v10560
      %v10778 = vsel %vm3077, %v10746, %v10562
      %v10779 = vsel %vm3077, %v10747, %v10564
      %v10780 = vsel %vm3077, %v10748, %v10566
      %v10781 = vsel %vm3077, %v10749, %v10568
      %v10782 = vsel %vm3077, %v10750, %v10570
      %v10783 = vsel %vm3077, %v10751, %v10572
      %v10784 = vsel %vm3077, %v10752, %v10574
      %v10785 = vsel %vm3077, %v10753, %v10576
      %v10786 = vsel %vm3077, %v10754, %v10578
      %v10787 = vsel %vm3077, %v10755, %v10580
      %v10788 = vsel %vm3077, %v10756, %v10582
      %v10789 = vsel %vm3077, %v10757, %v10584
      %v10790 = vsel %vm3077, %v10758, %v10586
      %v10791 = vsel %vm3077, %v10759, %v10588
      %v10792 = vsel %vm3077, %v10760, %v10590
      %v10793 = vsel %vm3077, %v10761, %v10592
      %v10794 = vsel %vm3077, %v10762, %v10594
      %v10795 = vsel %vm3077, %v10763, %v10596
      %v10796 = vsel %vm3077, %v10764, %v10598
      %v10797 = vsel %vm3077, %v10765, %v10600
      %v10798 = vsel %vm3077, %v10766, %v10602
      %v10799 = vsel %vm3077, %v10767, %v10604
      %v10800 = vsel %vm3077, %v10768, %v10606
      %v10801 = vsel %vm3077, %v10769, %v10608
      %v10802 = vsel %vm3077, %v10770, %v10610
      %v10803 = vsel %vm3110, %v10771, %v10644
      %v10804 = vsel %vm3110, %v10772, %v10646
      %v10805 = vsel %vm3110, %v10773, %v10648
      %v10806 = vsel %vm3110, %v10774, %v10650
      %v10807 = vsel %vm3110, %v10775, %v10652
      %v10808 = vsel %vm3110, %v10776, %v10654
      %v10809 = vsel %vm3110, %v10777, %v10656
      %v10810 = vsel %vm3110, %v10778, %v10658
      %v10811 = vsel %vm3110, %v10779, %v10660
      %v10812 = vsel %vm3110, %v10780, %v10662
      %v10813 = vsel %vm3110, %v10781, %v10664
      %v10814 = vsel %vm3110, %v10782, %v10666
      %v10815 = vsel %vm3110, %v10783, %v10668
      %v10816 = vsel %vm3110, %v10784, %v10670
      %v10817 = vsel %vm3110, %v10785, %v10672
      %v10818 = vsel %vm3110, %v10786, %v10674
      %v10819 = vsel %vm3110, %v10787, %v10676
      %v10820 = vsel %vm3110, %v10788, %v10678
      %v10821 = vsel %vm3110, %v10789, %v10680
      %v10822 = vsel %vm3110, %v10790, %v10682
      %v10823 = vsel %vm3110, %v10791, %v10684
      %v10824 = vsel %vm3110, %v10792, %v10686
      %v10825 = vsel %vm3110, %v10793, %v10688
      %v10826 = vsel %vm3110, %v10794, %v10690
      %v10827 = vsel %vm3110, %v10795, %v10692
      %v10828 = vsel %vm3110, %v10796, %v10694
      %v10829 = vsel %vm3110, %v10797, %v10696
      %v10830 = vsel %vm3110, %v10798, %v10698
      %v10831 = vsel %vm3110, %v10799, %v10700
      %v10832 = vsel %vm3110, %v10800, %v10702
      %v10833 = vsel %vm3110, %v10801, %v10704
      %v10834 = vsel %vm3110, %v10802, %v10706
      %10835 = vst.msk [vmem:[%s548] sm:$0xff] %vm3143, %v10803
      %10836 = vst.msk [vmem:[%s548 + $0x8] sm:$0xff] %vm3143, %v10804
      %10837 = vst.msk [vmem:[%s548 + $0x10] sm:$0xff] %vm3143, %v10805
      %10838 = vst.msk [vmem:[%s548 + $0x18] sm:$0xff] %vm3143, %v10806
      %10839 = vst.msk [vmem:[%s548 + $0x20] sm:$0xff] %vm3143, %v10807
      %10840 = vst.msk [vmem:[%s548 + $0x28] sm:$0xff] %vm3143, %v10808
      %10841 = vst.msk [vmem:[%s548 + $0x30] sm:$0xff] %vm3143, %v10809
      %10842 = vst.msk [vmem:[%s548 + $0x38] sm:$0xff] %vm3143, %v10810
      %10843 = vst.msk [vmem:[%s548 + $0x40] sm:$0xff] %vm3143, %v10811
      %10844 = vst.msk [vmem:[%s548 + $0x48] sm:$0xff] %vm3143, %v10812
      %10845 = vst.msk [vmem:[%s548 + $0x50] sm:$0xff] %vm3143, %v10813
      %10846 = vst.msk [vmem:[%s548 + $0x58] sm:$0xff] %vm3143, %v10814
      %10847 = vst.msk [vmem:[%s548 + $0x60] sm:$0xff] %vm3143, %v10815
      %10848 = vst.msk [vmem:[%s548 + $0x68] sm:$0xff] %vm3143, %v10816
      %10849 = vst.msk [vmem:[%s548 + $0x70] sm:$0xff] %vm3143, %v10817
      %10850 = vst.msk [vmem:[%s548 + $0x78] sm:$0xff] %vm3143, %v10818
      %10851 = vst.msk [vmem:[%s548 + $0x80] sm:$0xff] %vm3143, %v10819
      %10852 = vst.msk [vmem:[%s548 + $0x88] sm:$0xff] %vm3143, %v10820
      %10853 = vst.msk [vmem:[%s548 + $0x90] sm:$0xff] %vm3143, %v10821
      %10854 = vst.msk [vmem:[%s548 + $0x98] sm:$0xff] %vm3143, %v10822
      %10855 = vst.msk [vmem:[%s548 + $0xa0] sm:$0xff] %vm3143, %v10823
      %10856 = vst.msk [vmem:[%s548 + $0xa8] sm:$0xff] %vm3143, %v10824
      %10857 = vst.msk [vmem:[%s548 + $0xb0] sm:$0xff] %vm3143, %v10825
      %10858 = vst.msk [vmem:[%s548 + $0xb8] sm:$0xff] %vm3143, %v10826
      %10859 = vst.msk [vmem:[%s548 + $0xc0] sm:$0xff] %vm3143, %v10827
      %10860 = vst.msk [vmem:[%s548 + $0xc8] sm:$0xff] %vm3143, %v10828
      %10861 = vst.msk [vmem:[%s548 + $0xd0] sm:$0xff] %vm3143, %v10829
      %10862 = vst.msk [vmem:[%s548 + $0xd8] sm:$0xff] %vm3143, %v10830
      %10863 = vst.msk [vmem:[%s548 + $0xe0] sm:$0xff] %vm3143, %v10831
      %10864 = vst.msk [vmem:[%s548 + $0xe8] sm:$0xff] %vm3143, %v10832
      %10865 = vst.msk [vmem:[%s548 + $0xf0] sm:$0xff] %vm3143, %v10833
      %10866 = vst.msk [vmem:[%s548 + $0xf8] sm:$0xff] %vm3143, %v10834
      %p10867 = scmp.lt.s32.totalorder %s28, 1
      %s10868 = scalar_select %p10867, %s28, 1
      %s10869 = smul.addr %s10868, 32
      %s10870 = smul.addr %s10869, 8
      %s10871 = scalar_lea.vmem %s17, %s10870
      // Predicated region
      $region89: #{_lambda_.1} parent=87 // pred_check
        %p10872 = pneg %p408
      $region90: #{_lambda_.1} parent=87 // pred_check_branch
        %10874 = sbr.rel (%p10872) target = $region92
      $region91: #{_lambda_.1} parent=87 // pred_region
        _
      $region92: #{_lambda_.1} parent=87 // pred_fallthru
        _
    $region88: #{_lambda_.1} parent=5 // pred_fallthru
      _
    %p10875 = scmp.le.s32.totalorder 2, %s23
    // Predicated region
    $region93: #{_lambda_.1} parent=5 // pred_check
      %p10876 = pneg %p10875
    $region94: #{_lambda_.1} parent=5 // pred_check_branch
      %10878 = sbr.rel (%p10876) target = $region96
    $region95: #{_lambda_.1} parent=5 // pred_region
      %s10879 = ssub.s32 %s23, 2
      // Predicated region
      $region97: #{_lambda_.1} parent=95 // pred_check
        %p10880 = pneg %p414
      $region98: #{_lambda_.1} parent=95 // pred_check_branch
        %10882 = sbr.rel (%p10880) target = $region100
      $region99: #{_lambda_.1} parent=95 // pred_region
        %p10883 = scmp.lt.s32.totalorder %s29, 1
        %s10884 = scalar_select %p10883, %s29, 1
        %s10885 = smul.addr %s10884, 32
        %s10886 = smul.addr %s10885, 8
        %s10887 = scalar_lea.vmem %s17, %s10886
      $region100: #{_lambda_.1} parent=95 // pred_fallthru
        _
    $region96: #{_lambda_.1} parent=5 // pred_fallthru
      _
  $region6: #{_lambda_.1} parent=0 // loop_footer
    %s27 = sadd.s32 1, %s23
  $region7: #{_lambda_.1} parent=0 // loop_footer_branch
    %22 = sbr.rel target = $region3
  $region8: #{_lambda_.1} parent=0 // loop_exit
    _

</llo_original>
